<compile_context>
chip_gen: v6e
topology: v6e:2x2x1
jax: 0.10.0
libtpu: 0.0.40
codegen_flags: <defaults>
</compile_context>

<pallas_src>
import jax
import jax.numpy as jnp
import numpy as np
from jax import lax
from jax.experimental import pallas as pl
from jax.experimental.pallas import tpu as pltpu

INPUT_SIZE = 28
HIDDEN = 64
NUM_CLASSES = 10
LANE = 128


def lstm_linear_kernel(x_ref, wih_ref, whh_ref, b_ref, wout_ref, bout_ref,
                       out_ref, xw_ref):
    """LSTM over the full sequence + final Linear, transposed layout.

    Batch rides the lane axis, features ride the sublane axis.

    x_ref   : (T, I, Bt)   time-major input tile (f32)
    wih_ref : (4H, I)      weight_ih_l0 (PyTorch layout; f32 or bf16)
    whh_ref : (4H, H)      weight_hh_l0 (PyTorch layout; f32 or bf16)
    b_ref   : (4H, 1)      b_ih + b_hh (f32)
    wout_ref: (C, H)       Linear weight (PyTorch layout; f32 or bf16)
    bout_ref: (C, 1)       Linear bias (f32)
    out_ref : (C, Bt)      logits^T (lane-dense store)
    xw_ref  : (T, 4H, Bt)  VMEM scratch: precomputed input projection + bias
    """
    T, _, Bt = x_ref.shape
    H = whh_ref.shape[1]
    G = 4 * H
    w_dt = whh_ref.dtype

    # ---- Hoisted input projection (off the serial recurrence path) --------
    w_ih = wih_ref[...]
    # Broadcast the bias once (don't re-broadcast inside the loop).
    bias_b = jnp.broadcast_to(b_ref[...], (G, Bt))
    for t in range(T):                       # static unroll, independent matmuls
        xw_ref[t] = (
            jnp.dot(w_ih, x_ref[t].astype(w_dt),
                    preferred_element_type=jnp.float32)
            + bias_b
        )

    # Recurrent weight loaded once, kept live across the unrolled loop.
    w_hh = whh_ref[...]

    def step(t, carry):
        h, c = carry
        gates = xw_ref[t] + jnp.dot(w_hh, h.astype(w_dt),
                                    preferred_element_type=jnp.float32)
        # PyTorch gate order along the sublane axis: i, f, g, o.
        # H = 64 -> every slice is a multiple-of-8 sublane slice; lanes stay
        # fully dense, so no XLU / masked ops inside the serial chain.
        i = jax.nn.sigmoid(gates[0 * H:1 * H, :])
        f = jax.nn.sigmoid(gates[1 * H:2 * H, :])
        g = jnp.tanh(gates[2 * H:3 * H, :])
        o = jax.nn.sigmoid(gates[3 * H:4 * H, :])
        c_new = f * c + i * g
        h_new = o * jnp.tanh(c_new)
        return (h_new, c_new)

    h0 = jnp.zeros((H, Bt), jnp.float32)
    c0 = jnp.zeros((H, Bt), jnp.float32)
    # T is static -> fully unrolled so the LLO scheduler can overlap MXU/EUP/
    # VPU work across timesteps.
    h_last, _ = lax.fori_loop(0, T, step, (h0, c0), unroll=True)

    # Final Linear, also transposed: (C, H) @ (H, Bt) -> (C, Bt), lane-dense.
    out_ref[...] = (
        jnp.dot(wout_ref[...], h_last.astype(w_dt),
                preferred_element_type=jnp.float32)
        + bout_ref[...]
    )


def rnn_forward(x, params, *, weights_dtype=jnp.float32):
    """x: (B, T, 28) float32 (batch_first).  Returns (B, 10) float32.

    weights_dtype=jnp.bfloat16 runs the matmuls on the bf16 MXU path
    (f32 state / f32 accumulation); the default f32 matches PyTorch to ~1e-5.
    """
    w_ih, w_hh, b_ih, b_hh, w_out, b_out = params
    B, T, I = x.shape
    assert I == INPUT_SIZE
    g4 = 4 * HIDDEN

    # Transposed layout: time-major, feature-on-sublane, batch-on-lane.
    x_t = jnp.transpose(x, (1, 2, 0)).astype(jnp.float32)       # (T, I, B)

    # Batch tile rides the lane axis: 128 lanes (256 for large B so each
    # per-step matmul has more independent columns to hide MXU/EUP latency).
    # B in (128, 256] already yields >=2 grid points for v7x megacore; for
    # tiny B a single full-lane tile is preferable to splitting cores.
    b_tile = 2 * LANE if B >= 3 * LANE else LANE
    b_pad = pl.cdiv(B, b_tile) * b_tile
    if b_pad != B:
        x_t = jnp.pad(x_t, ((0, 0), (0, 0), (0, b_pad - B)))
    grid = (b_pad // b_tile,)

    wdt = jnp.dtype(weights_dtype)
    b_comb = (b_ih + b_hh).astype(jnp.float32).reshape(g4, 1)

    in_specs = [
        pl.BlockSpec((T, INPUT_SIZE, b_tile), lambda b: (0, 0, b)),   # x tile
        pl.BlockSpec((g4, INPUT_SIZE), lambda b: (0, 0)),             # W_ih
        pl.BlockSpec((g4, HIDDEN), lambda b: (0, 0)),                 # W_hh
        pl.BlockSpec((g4, 1), lambda b: (0, 0)),                      # bias
        pl.BlockSpec((NUM_CLASSES, HIDDEN), lambda b: (0, 0)),        # W_out
        pl.BlockSpec((NUM_CLASSES, 1), lambda b: (0, 0)),             # b_out
    ]
    out_specs = pl.BlockSpec((NUM_CLASSES, b_tile), lambda b: (0, b))

    # VMEM budget guard: xw scratch + double-buffered x/out tiles + weights.
    F32 = 4
    vmem_needed = (
        T * g4 * b_tile * F32                        # xw scratch
        + 2 * T * INPUT_SIZE * b_tile * F32          # x tile (double-buffered)
        + 2 * NUM_CLASSES * b_tile * F32             # out tile
        + 2 * (g4 * (INPUT_SIZE + HIDDEN) + NUM_CLASSES * HIDDEN) * wdt.itemsize
        + 2 * (g4 + NUM_CLASSES) * F32               # biases
    )
    vmem_limit = int(min(max(2 * vmem_needed, 32 << 20), 64 << 20))

    out_t = pl.pallas_call(
        lstm_linear_kernel,
        out_shape=jax.ShapeDtypeStruct((NUM_CLASSES, b_pad), jnp.float32),
        grid_spec=pltpu.PrefetchScalarGridSpec(
            num_scalar_prefetch=0,
            grid=grid,
            in_specs=in_specs,
            out_specs=out_specs,
            scratch_shapes=[pltpu.VMEM((T, g4, b_tile), jnp.float32)],
        ),
        compiler_params=pltpu.CompilerParams(
            dimension_semantics=("parallel",),
            vmem_limit_bytes=vmem_limit),
    )(
        x_t,
        w_ih.astype(wdt),                           # (4H, I)
        w_hh.astype(wdt),                           # (4H, H)
        b_comb,                                     # (4H, 1)
        w_out.astype(wdt),                          # (C, H)
        b_out.astype(jnp.float32).reshape(NUM_CLASSES, 1),
    )
    return jnp.transpose(out_t)[:B]                 # (B, 10)


def init_params(key):
    """Deterministic init matching PyTorch default shapes/ranges."""
    k_lstm = 1.0 / np.sqrt(HIDDEN)
    k_lin = 1.0 / np.sqrt(HIDDEN)
    ks = jax.random.split(key, 6)
    w_ih = jax.random.uniform(ks[0], (4 * HIDDEN, INPUT_SIZE), jnp.float32, -k_lstm, k_lstm)
    w_hh = jax.random.uniform(ks[1], (4 * HIDDEN, HIDDEN), jnp.float32, -k_lstm, k_lstm)
    b_ih = jax.random.uniform(ks[2], (4 * HIDDEN,), jnp.float32, -k_lstm, k_lstm)
    b_hh = jax.random.uniform(ks[3], (4 * HIDDEN,), jnp.float32, -k_lstm, k_lstm)
    w_out = jax.random.uniform(ks[4], (NUM_CLASSES, HIDDEN), jnp.float32, -k_lin, k_lin)
    b_out = jax.random.uniform(ks[5], (NUM_CLASSES,), jnp.float32, -k_lin, k_lin)
    return (w_ih, w_hh, b_ih, b_hh, w_out, b_out)


def rnn_forward_ref(x, params):
    """Pure-JAX reference (mirrors torch.nn.LSTM + Linear forward)."""
    w_ih, w_hh, b_ih, b_hh, w_out, b_out = params
    B, T, _ = x.shape
    H = HIDDEN
    h = jnp.zeros((B, H), jnp.float32)
    c = jnp.zeros((B, H), jnp.float32)
    for t in range(T):
        gates = x[:, t, :] @ w_ih.T + b_ih + h @ w_hh.T + b_hh
        i = jax.nn.sigmoid(gates[:, 0 * H:1 * H])
        f = jax.nn.sigmoid(gates[:, 1 * H:2 * H])
        g = jnp.tanh(gates[:, 2 * H:3 * H])
        o = jax.nn.sigmoid(gates[:, 3 * H:4 * H])
        c = f * c + i * g
        h = o * jnp.tanh(c)
    return h @ w_out.T + b_out


if __name__ == "__main__":
    key = jax.random.PRNGKey(0)
    k_x, k_p = jax.random.split(key)

    B, T = 2, 8
    x = jax.random.normal(k_x, (B, T, INPUT_SIZE), dtype=jnp.float32)
    params = init_params(k_p)

    ref = rnn_forward_ref(x, params)

    # Exact-numerics path (f32 weights): matches the f32/PyTorch math to fp tol.
    out = jax.block_until_ready(rnn_forward(x, params))
    np.testing.assert_allclose(np.asarray(out), np.asarray(ref),
                               rtol=1e-5, atol=1e-5)

    # bf16-weight MXU path (bf16-native MXUs on v5e/v6e/v7x); relaxed tolerance.
    out_bf16 = jax.block_until_ready(
        rnn_forward(x, params, weights_dtype=jnp.bfloat16))
    np.testing.assert_allclose(np.asarray(out_bf16), np.asarray(ref),
                               rtol=5e-2, atol=5e-2)

    print("KERNEL_OK")
</pallas_src>

<mosaic_0001>
module attributes {stable_mosaic.version = 11 : i64} {
  func.func @lstm_linear_kernel(%arg0: i32, %arg1: memref<8x28x128xf32, #tpu.memory_space<vmem>>, %arg2: memref<256x28xf32, #tpu.memory_space<vmem>>, %arg3: memref<256x64xf32, #tpu.memory_space<vmem>>, %arg4: memref<256x1xf32, #tpu.memory_space<vmem>>, %arg5: memref<10x64xf32, #tpu.memory_space<vmem>>, %arg6: memref<10x1xf32, #tpu.memory_space<vmem>>, %arg7: memref<10x128xf32, #tpu.memory_space<vmem>>, %arg8: memref<8x256x128xf32, #tpu.memory_space<vmem>>) attributes {dimension_semantics = [#tpu.dimension_semantics<parallel>], iteration_bounds = array<i64: 1>, scalar_prefetch = 0 : i64, scratch_operands = 1 : i64, tpu.core_type = #tpu.core_type<tc>, window_params = [{transform_indices = @transform_0, window_bounds = array<i64: 8, 28, 128>}, {pipeline_mode = #tpu.pipeline_mode<synchronous>, transform_indices = @transform_1, window_bounds = array<i64: 256, 28>}, {pipeline_mode = #tpu.pipeline_mode<synchronous>, transform_indices = @transform_2, window_bounds = array<i64: 256, 64>}, {pipeline_mode = #tpu.pipeline_mode<synchronous>, transform_indices = @transform_3, window_bounds = array<i64: 256, 1>}, {pipeline_mode = #tpu.pipeline_mode<synchronous>, transform_indices = @transform_4, window_bounds = array<i64: 10, 64>}, {pipeline_mode = #tpu.pipeline_mode<synchronous>, transform_indices = @transform_5, window_bounds = array<i64: 10, 1>}, {transform_indices = @transform_6, window_bounds = array<i64: 10, 128>}]} {
    %c0 = arith.constant 0 : index
    %c0_0 = arith.constant 0 : index
    %0 = vector.load %arg2[%c0, %c0_0] : memref<256x28xf32, #tpu.memory_space<vmem>>, vector<256x28xf32>
    %c0_1 = arith.constant 0 : index
    %c0_2 = arith.constant 0 : index
    %1 = vector.load %arg4[%c0_1, %c0_2] : memref<256x1xf32, #tpu.memory_space<vmem>>, vector<256x1xf32>
    %2 = vector.shape_cast %1 : vector<256x1xf32> to vector<256x1xf32>
    %3 = vector.broadcast %2 : vector<256x1xf32> to vector<256x128xf32>
    %c0_3 = arith.constant 0 : index
    %c0_4 = arith.constant 0 : index
    %c0_5 = arith.constant 0 : index
    %4 = vector.load %arg1[%c0_3, %c0_4, %c0_5] : memref<8x28x128xf32, #tpu.memory_space<vmem>>, vector<1x28x128xf32>
    %5 = vector.shape_cast %4 : vector<1x28x128xf32> to vector<28x128xf32>
    %cst = arith.constant dense<0.000000e+00> : vector<256x128xf32>
    %6 = tpu.matmul %0, %5, %cst {dimension_numbers = #tpu.dot_dimension_numbers<[1], [0], [0], [1], [0, 0, 1, 1], [], []>} : vector<256x28xf32>, vector<28x128xf32>, vector<256x128xf32> -> vector<256x128xf32>
    %7 = arith.addf %6, %3 : vector<256x128xf32>
    %c0_6 = arith.constant 0 : index
    %c0_7 = arith.constant 0 : index
    %c0_8 = arith.constant 0 : index
    %8 = vector.load %arg8[%c0_6, %c0_7, %c0_8] : memref<8x256x128xf32, #tpu.memory_space<vmem>>, vector<1x256x128xf32>
    %9 = vector.shape_cast %8 : vector<1x256x128xf32> to vector<256x128xf32>
    %10 = vector.shape_cast %7 : vector<256x128xf32> to vector<1x256x128xf32>
    tpu.vector_store %arg8[%c0_6, %c0_7, %c0_8], %10 {strides = array<i32>} : memref<8x256x128xf32, #tpu.memory_space<vmem>>, vector<1x256x128xf32>,
    %c1 = arith.constant 1 : index
    %c0_9 = arith.constant 0 : index
    %c0_10 = arith.constant 0 : index
    %11 = vector.load %arg1[%c1, %c0_9, %c0_10] : memref<8x28x128xf32, #tpu.memory_space<vmem>>, vector<1x28x128xf32>
    %12 = vector.shape_cast %11 : vector<1x28x128xf32> to vector<28x128xf32>
    %cst_11 = arith.constant dense<0.000000e+00> : vector<256x128xf32>
    %13 = tpu.matmul %0, %12, %cst_11 {dimension_numbers = #tpu.dot_dimension_numbers<[1], [0], [0], [1], [0, 0, 1, 1], [], []>} : vector<256x28xf32>, vector<28x128xf32>, vector<256x128xf32> -> vector<256x128xf32>
    %14 = arith.addf %13, %3 : vector<256x128xf32>
    %c1_12 = arith.constant 1 : index
    %c0_13 = arith.constant 0 : index
    %c0_14 = arith.constant 0 : index
    %15 = vector.load %arg8[%c1_12, %c0_13, %c0_14] : memref<8x256x128xf32, #tpu.memory_space<vmem>>, vector<1x256x128xf32>
    %16 = vector.shape_cast %15 : vector<1x256x128xf32> to vector<256x128xf32>
    %17 = vector.shape_cast %14 : vector<256x128xf32> to vector<1x256x128xf32>
    tpu.vector_store %arg8[%c1_12, %c0_13, %c0_14], %17 {strides = array<i32>} : memref<8x256x128xf32, #tpu.memory_space<vmem>>, vector<1x256x128xf32>,
    %c2 = arith.constant 2 : index
    %c0_15 = arith.constant 0 : index
    %c0_16 = arith.constant 0 : index
    %18 = vector.load %arg1[%c2, %c0_15, %c0_16] : memref<8x28x128xf32, #tpu.memory_space<vmem>>, vector<1x28x128xf32>
    %19 = vector.shape_cast %18 : vector<1x28x128xf32> to vector<28x128xf32>
    %cst_17 = arith.constant dense<0.000000e+00> : vector<256x128xf32>
    %20 = tpu.matmul %0, %19, %cst_17 {dimension_numbers = #tpu.dot_dimension_numbers<[1], [0], [0], [1], [0, 0, 1, 1], [], []>} : vector<256x28xf32>, vector<28x128xf32>, vector<256x128xf32> -> vector<256x128xf32>
    %21 = arith.addf %20, %3 : vector<256x128xf32>
    %c2_18 = arith.constant 2 : index
    %c0_19 = arith.constant 0 : index
    %c0_20 = arith.constant 0 : index
    %22 = vector.load %arg8[%c2_18, %c0_19, %c0_20] : memref<8x256x128xf32, #tpu.memory_space<vmem>>, vector<1x256x128xf32>
    %23 = vector.shape_cast %22 : vector<1x256x128xf32> to vector<256x128xf32>
    %24 = vector.shape_cast %21 : vector<256x128xf32> to vector<1x256x128xf32>
    tpu.vector_store %arg8[%c2_18, %c0_19, %c0_20], %24 {strides = array<i32>} : memref<8x256x128xf32, #tpu.memory_space<vmem>>, vector<1x256x128xf32>,
    %c3 = arith.constant 3 : index
    %c0_21 = arith.constant 0 : index
    %c0_22 = arith.constant 0 : index
    %25 = vector.load %arg1[%c3, %c0_21, %c0_22] : memref<8x28x128xf32, #tpu.memory_space<vmem>>, vector<1x28x128xf32>
    %26 = vector.shape_cast %25 : vector<1x28x128xf32> to vector<28x128xf32>
    %cst_23 = arith.constant dense<0.000000e+00> : vector<256x128xf32>
    %27 = tpu.matmul %0, %26, %cst_23 {dimension_numbers = #tpu.dot_dimension_numbers<[1], [0], [0], [1], [0, 0, 1, 1], [], []>} : vector<256x28xf32>, vector<28x128xf32>, vector<256x128xf32> -> vector<256x128xf32>
    %28 = arith.addf %27, %3 : vector<256x128xf32>
    %c3_24 = arith.constant 3 : index
    %c0_25 = arith.constant 0 : index
    %c0_26 = arith.constant 0 : index
    %29 = vector.load %arg8[%c3_24, %c0_25, %c0_26] : memref<8x256x128xf32, #tpu.memory_space<vmem>>, vector<1x256x128xf32>
    %30 = vector.shape_cast %29 : vector<1x256x128xf32> to vector<256x128xf32>
    %31 = vector.shape_cast %28 : vector<256x128xf32> to vector<1x256x128xf32>
    tpu.vector_store %arg8[%c3_24, %c0_25, %c0_26], %31 {strides = array<i32>} : memref<8x256x128xf32, #tpu.memory_space<vmem>>, vector<1x256x128xf32>,
    %c4 = arith.constant 4 : index
    %c0_27 = arith.constant 0 : index
    %c0_28 = arith.constant 0 : index
    %32 = vector.load %arg1[%c4, %c0_27, %c0_28] : memref<8x28x128xf32, #tpu.memory_space<vmem>>, vector<1x28x128xf32>
    %33 = vector.shape_cast %32 : vector<1x28x128xf32> to vector<28x128xf32>
    %cst_29 = arith.constant dense<0.000000e+00> : vector<256x128xf32>
    %34 = tpu.matmul %0, %33, %cst_29 {dimension_numbers = #tpu.dot_dimension_numbers<[1], [0], [0], [1], [0, 0, 1, 1], [], []>} : vector<256x28xf32>, vector<28x128xf32>, vector<256x128xf32> -> vector<256x128xf32>
    %35 = arith.addf %34, %3 : vector<256x128xf32>
    %c4_30 = arith.constant 4 : index
    %c0_31 = arith.constant 0 : index
    %c0_32 = arith.constant 0 : index
    %36 = vector.load %arg8[%c4_30, %c0_31, %c0_32] : memref<8x256x128xf32, #tpu.memory_space<vmem>>, vector<1x256x128xf32>
    %37 = vector.shape_cast %36 : vector<1x256x128xf32> to vector<256x128xf32>
    %38 = vector.shape_cast %35 : vector<256x128xf32> to vector<1x256x128xf32>
    tpu.vector_store %arg8[%c4_30, %c0_31, %c0_32], %38 {strides = array<i32>} : memref<8x256x128xf32, #tpu.memory_space<vmem>>, vector<1x256x128xf32>,
    %c5 = arith.constant 5 : index
    %c0_33 = arith.constant 0 : index
    %c0_34 = arith.constant 0 : index
    %39 = vector.load %arg1[%c5, %c0_33, %c0_34] : memref<8x28x128xf32, #tpu.memory_space<vmem>>, vector<1x28x128xf32>
    %40 = vector.shape_cast %39 : vector<1x28x128xf32> to vector<28x128xf32>
    %cst_35 = arith.constant dense<0.000000e+00> : vector<256x128xf32>
    %41 = tpu.matmul %0, %40, %cst_35 {dimension_numbers = #tpu.dot_dimension_numbers<[1], [0], [0], [1], [0, 0, 1, 1], [], []>} : vector<256x28xf32>, vector<28x128xf32>, vector<256x128xf32> -> vector<256x128xf32>
    %42 = arith.addf %41, %3 : vector<256x128xf32>
    %c5_36 = arith.constant 5 : index
    %c0_37 = arith.constant 0 : index
    %c0_38 = arith.constant 0 : index
    %43 = vector.load %arg8[%c5_36, %c0_37, %c0_38] : memref<8x256x128xf32, #tpu.memory_space<vmem>>, vector<1x256x128xf32>
    %44 = vector.shape_cast %43 : vector<1x256x128xf32> to vector<256x128xf32>
    %45 = vector.shape_cast %42 : vector<256x128xf32> to vector<1x256x128xf32>
    tpu.vector_store %arg8[%c5_36, %c0_37, %c0_38], %45 {strides = array<i32>} : memref<8x256x128xf32, #tpu.memory_space<vmem>>, vector<1x256x128xf32>,
    %c6 = arith.constant 6 : index
    %c0_39 = arith.constant 0 : index
    %c0_40 = arith.constant 0 : index
    %46 = vector.load %arg1[%c6, %c0_39, %c0_40] : memref<8x28x128xf32, #tpu.memory_space<vmem>>, vector<1x28x128xf32>
    %47 = vector.shape_cast %46 : vector<1x28x128xf32> to vector<28x128xf32>
    %cst_41 = arith.constant dense<0.000000e+00> : vector<256x128xf32>
    %48 = tpu.matmul %0, %47, %cst_41 {dimension_numbers = #tpu.dot_dimension_numbers<[1], [0], [0], [1], [0, 0, 1, 1], [], []>} : vector<256x28xf32>, vector<28x128xf32>, vector<256x128xf32> -> vector<256x128xf32>
    %49 = arith.addf %48, %3 : vector<256x128xf32>
    %c6_42 = arith.constant 6 : index
    %c0_43 = arith.constant 0 : index
    %c0_44 = arith.constant 0 : index
    %50 = vector.load %arg8[%c6_42, %c0_43, %c0_44] : memref<8x256x128xf32, #tpu.memory_space<vmem>>, vector<1x256x128xf32>
    %51 = vector.shape_cast %50 : vector<1x256x128xf32> to vector<256x128xf32>
    %52 = vector.shape_cast %49 : vector<256x128xf32> to vector<1x256x128xf32>
    tpu.vector_store %arg8[%c6_42, %c0_43, %c0_44], %52 {strides = array<i32>} : memref<8x256x128xf32, #tpu.memory_space<vmem>>, vector<1x256x128xf32>,
    %c7 = arith.constant 7 : index
    %c0_45 = arith.constant 0 : index
    %c0_46 = arith.constant 0 : index
    %53 = vector.load %arg1[%c7, %c0_45, %c0_46] : memref<8x28x128xf32, #tpu.memory_space<vmem>>, vector<1x28x128xf32>
    %54 = vector.shape_cast %53 : vector<1x28x128xf32> to vector<28x128xf32>
    %cst_47 = arith.constant dense<0.000000e+00> : vector<256x128xf32>
    %55 = tpu.matmul %0, %54, %cst_47 {dimension_numbers = #tpu.dot_dimension_numbers<[1], [0], [0], [1], [0, 0, 1, 1], [], []>} : vector<256x28xf32>, vector<28x128xf32>, vector<256x128xf32> -> vector<256x128xf32>
    %56 = arith.addf %55, %3 : vector<256x128xf32>
    %c7_48 = arith.constant 7 : index
    %c0_49 = arith.constant 0 : index
    %c0_50 = arith.constant 0 : index
    %57 = vector.load %arg8[%c7_48, %c0_49, %c0_50] : memref<8x256x128xf32, #tpu.memory_space<vmem>>, vector<1x256x128xf32>
    %58 = vector.shape_cast %57 : vector<1x256x128xf32> to vector<256x128xf32>
    %59 = vector.shape_cast %56 : vector<256x128xf32> to vector<1x256x128xf32>
    tpu.vector_store %arg8[%c7_48, %c0_49, %c0_50], %59 {strides = array<i32>} : memref<8x256x128xf32, #tpu.memory_space<vmem>>, vector<1x256x128xf32>,
    %c0_51 = arith.constant 0 : index
    %c0_52 = arith.constant 0 : index
    %60 = vector.load %arg3[%c0_51, %c0_52] : memref<256x64xf32, #tpu.memory_space<vmem>>, vector<256x64xf32>
    %cst_53 = arith.constant 0.000000e+00 : f32
    %61 = vector.broadcast %cst_53 : f32 to vector<64x128xf32>
    %cst_54 = arith.constant 0.000000e+00 : f32
    %62 = vector.broadcast %cst_54 : f32 to vector<64x128xf32>
    %c0_i32 = arith.constant 0 : i32
    %63 = arith.index_cast %c0_i32 : i32 to index
    %c0_55 = arith.constant 0 : index
    %c0_56 = arith.constant 0 : index
    %64 = vector.load %arg8[%63, %c0_55, %c0_56] : memref<8x256x128xf32, #tpu.memory_space<vmem>>, vector<1x256x128xf32>
    %65 = vector.shape_cast %64 : vector<1x256x128xf32> to vector<256x128xf32>
    %cst_57 = arith.constant dense<0.000000e+00> : vector<256x128xf32>
    %66 = tpu.matmul %60, %61, %cst_57 {dimension_numbers = #tpu.dot_dimension_numbers<[1], [0], [0], [1], [0, 0, 1, 1], [], []>} : vector<256x64xf32>, vector<64x128xf32>, vector<256x128xf32> -> vector<256x128xf32>
    %67 = arith.addf %65, %66 : vector<256x128xf32>
    %68 = vector.extract_strided_slice %67 {offsets = [0, 0], sizes = [64, 128], strides = [1, 1]} : vector<256x128xf32> to vector<64x128xf32>
    %69 = arith.negf %68 : vector<64x128xf32>
    %70 = math.exp %69 : vector<64x128xf32>
    %cst_58 = arith.constant 1.000000e+00 : f32
    %71 = vector.broadcast %cst_58 : f32 to vector<64x128xf32>
    %72 = arith.addf %71, %70 : vector<64x128xf32>
    %73 = arith.divf %71, %72 : vector<64x128xf32>
    %74 = vector.extract_strided_slice %67 {offsets = [64, 0], sizes = [64, 128], strides = [1, 1]} : vector<256x128xf32> to vector<64x128xf32>
    %75 = arith.negf %74 : vector<64x128xf32>
    %76 = math.exp %75 : vector<64x128xf32>
    %cst_59 = arith.constant 1.000000e+00 : f32
    %77 = vector.broadcast %cst_59 : f32 to vector<64x128xf32>
    %78 = arith.addf %77, %76 : vector<64x128xf32>
    %79 = arith.divf %77, %78 : vector<64x128xf32>
    %80 = vector.extract_strided_slice %67 {offsets = [128, 0], sizes = [64, 128], strides = [1, 1]} : vector<256x128xf32> to vector<64x128xf32>
    %81 = math.tanh %80 : vector<64x128xf32>
    %82 = vector.extract_strided_slice %67 {offsets = [192, 0], sizes = [64, 128], strides = [1, 1]} : vector<256x128xf32> to vector<64x128xf32>
    %83 = arith.negf %82 : vector<64x128xf32>
    %84 = math.exp %83 : vector<64x128xf32>
    %cst_60 = arith.constant 1.000000e+00 : f32
    %85 = vector.broadcast %cst_60 : f32 to vector<64x128xf32>
    %86 = arith.addf %85, %84 : vector<64x128xf32>
    %87 = arith.divf %85, %86 : vector<64x128xf32>
    %88 = arith.mulf %79, %62 : vector<64x128xf32>
    %89 = arith.mulf %73, %81 : vector<64x128xf32>
    %90 = arith.addf %88, %89 : vector<64x128xf32>
    %91 = math.tanh %90 : vector<64x128xf32>
    %92 = arith.mulf %87, %91 : vector<64x128xf32>
    %c1_i32 = arith.constant 1 : i32
    %93 = arith.index_cast %c1_i32 : i32 to index
    %c0_61 = arith.constant 0 : index
    %c0_62 = arith.constant 0 : index
    %94 = vector.load %arg8[%93, %c0_61, %c0_62] : memref<8x256x128xf32, #tpu.memory_space<vmem>>, vector<1x256x128xf32>
    %95 = vector.shape_cast %94 : vector<1x256x128xf32> to vector<256x128xf32>
    %cst_63 = arith.constant dense<0.000000e+00> : vector<256x128xf32>
    %96 = tpu.matmul %60, %92, %cst_63 {dimension_numbers = #tpu.dot_dimension_numbers<[1], [0], [0], [1], [0, 0, 1, 1], [], []>} : vector<256x64xf32>, vector<64x128xf32>, vector<256x128xf32> -> vector<256x128xf32>
    %97 = arith.addf %95, %96 : vector<256x128xf32>
    %98 = vector.extract_strided_slice %97 {offsets = [0, 0], sizes = [64, 128], strides = [1, 1]} : vector<256x128xf32> to vector<64x128xf32>
    %99 = arith.negf %98 : vector<64x128xf32>
    %100 = math.exp %99 : vector<64x128xf32>
    %cst_64 = arith.constant 1.000000e+00 : f32
    %101 = vector.broadcast %cst_64 : f32 to vector<64x128xf32>
    %102 = arith.addf %101, %100 : vector<64x128xf32>
    %103 = arith.divf %101, %102 : vector<64x128xf32>
    %104 = vector.extract_strided_slice %97 {offsets = [64, 0], sizes = [64, 128], strides = [1, 1]} : vector<256x128xf32> to vector<64x128xf32>
    %105 = arith.negf %104 : vector<64x128xf32>
    %106 = math.exp %105 : vector<64x128xf32>
    %cst_65 = arith.constant 1.000000e+00 : f32
    %107 = vector.broadcast %cst_65 : f32 to vector<64x128xf32>
    %108 = arith.addf %107, %106 : vector<64x128xf32>
    %109 = arith.divf %107, %108 : vector<64x128xf32>
    %110 = vector.extract_strided_slice %97 {offsets = [128, 0], sizes = [64, 128], strides = [1, 1]} : vector<256x128xf32> to vector<64x128xf32>
    %111 = math.tanh %110 : vector<64x128xf32>
    %112 = vector.extract_strided_slice %97 {offsets = [192, 0], sizes = [64, 128], strides = [1, 1]} : vector<256x128xf32> to vector<64x128xf32>
    %113 = arith.negf %112 : vector<64x128xf32>
    %114 = math.exp %113 : vector<64x128xf32>
    %cst_66 = arith.constant 1.000000e+00 : f32
    %115 = vector.broadcast %cst_66 : f32 to vector<64x128xf32>
    %116 = arith.addf %115, %114 : vector<64x128xf32>
    %117 = arith.divf %115, %116 : vector<64x128xf32>
    %118 = arith.mulf %109, %90 : vector<64x128xf32>
    %119 = arith.mulf %103, %111 : vector<64x128xf32>
    %120 = arith.addf %118, %119 : vector<64x128xf32>
    %121 = math.tanh %120 : vector<64x128xf32>
    %122 = arith.mulf %117, %121 : vector<64x128xf32>
    %c2_i32 = arith.constant 2 : i32
    %123 = arith.index_cast %c2_i32 : i32 to index
    %c0_67 = arith.constant 0 : index
    %c0_68 = arith.constant 0 : index
    %124 = vector.load %arg8[%123, %c0_67, %c0_68] : memref<8x256x128xf32, #tpu.memory_space<vmem>>, vector<1x256x128xf32>
    %125 = vector.shape_cast %124 : vector<1x256x128xf32> to vector<256x128xf32>
    %cst_69 = arith.constant dense<0.000000e+00> : vector<256x128xf32>
    %126 = tpu.matmul %60, %122, %cst_69 {dimension_numbers = #tpu.dot_dimension_numbers<[1], [0], [0], [1], [0, 0, 1, 1], [], []>} : vector<256x64xf32>, vector<64x128xf32>, vector<256x128xf32> -> vector<256x128xf32>
    %127 = arith.addf %125, %126 : vector<256x128xf32>
    %128 = vector.extract_strided_slice %127 {offsets = [0, 0], sizes = [64, 128], strides = [1, 1]} : vector<256x128xf32> to vector<64x128xf32>
    %129 = arith.negf %128 : vector<64x128xf32>
    %130 = math.exp %129 : vector<64x128xf32>
    %cst_70 = arith.constant 1.000000e+00 : f32
    %131 = vector.broadcast %cst_70 : f32 to vector<64x128xf32>
    %132 = arith.addf %131, %130 : vector<64x128xf32>
    %133 = arith.divf %131, %132 : vector<64x128xf32>
    %134 = vector.extract_strided_slice %127 {offsets = [64, 0], sizes = [64, 128], strides = [1, 1]} : vector<256x128xf32> to vector<64x128xf32>
    %135 = arith.negf %134 : vector<64x128xf32>
    %136 = math.exp %135 : vector<64x128xf32>
    %cst_71 = arith.constant 1.000000e+00 : f32
    %137 = vector.broadcast %cst_71 : f32 to vector<64x128xf32>
    %138 = arith.addf %137, %136 : vector<64x128xf32>
    %139 = arith.divf %137, %138 : vector<64x128xf32>
    %140 = vector.extract_strided_slice %127 {offsets = [128, 0], sizes = [64, 128], strides = [1, 1]} : vector<256x128xf32> to vector<64x128xf32>
    %141 = math.tanh %140 : vector<64x128xf32>
    %142 = vector.extract_strided_slice %127 {offsets = [192, 0], sizes = [64, 128], strides = [1, 1]} : vector<256x128xf32> to vector<64x128xf32>
    %143 = arith.negf %142 : vector<64x128xf32>
    %144 = math.exp %143 : vector<64x128xf32>
    %cst_72 = arith.constant 1.000000e+00 : f32
    %145 = vector.broadcast %cst_72 : f32 to vector<64x128xf32>
    %146 = arith.addf %145, %144 : vector<64x128xf32>
    %147 = arith.divf %145, %146 : vector<64x128xf32>
    %148 = arith.mulf %139, %120 : vector<64x128xf32>
    %149 = arith.mulf %133, %141 : vector<64x128xf32>
    %150 = arith.addf %148, %149 : vector<64x128xf32>
    %151 = math.tanh %150 : vector<64x128xf32>
    %152 = arith.mulf %147, %151 : vector<64x128xf32>
    %c3_i32 = arith.constant 3 : i32
    %153 = arith.index_cast %c3_i32 : i32 to index
    %c0_73 = arith.constant 0 : index
    %c0_74 = arith.constant 0 : index
    %154 = vector.load %arg8[%153, %c0_73, %c0_74] : memref<8x256x128xf32, #tpu.memory_space<vmem>>, vector<1x256x128xf32>
    %155 = vector.shape_cast %154 : vector<1x256x128xf32> to vector<256x128xf32>
    %cst_75 = arith.constant dense<0.000000e+00> : vector<256x128xf32>
    %156 = tpu.matmul %60, %152, %cst_75 {dimension_numbers = #tpu.dot_dimension_numbers<[1], [0], [0], [1], [0, 0, 1, 1], [], []>} : vector<256x64xf32>, vector<64x128xf32>, vector<256x128xf32> -> vector<256x128xf32>
    %157 = arith.addf %155, %156 : vector<256x128xf32>
    %158 = vector.extract_strided_slice %157 {offsets = [0, 0], sizes = [64, 128], strides = [1, 1]} : vector<256x128xf32> to vector<64x128xf32>
    %159 = arith.negf %158 : vector<64x128xf32>
    %160 = math.exp %159 : vector<64x128xf32>
    %cst_76 = arith.constant 1.000000e+00 : f32
    %161 = vector.broadcast %cst_76 : f32 to vector<64x128xf32>
    %162 = arith.addf %161, %160 : vector<64x128xf32>
    %163 = arith.divf %161, %162 : vector<64x128xf32>
    %164 = vector.extract_strided_slice %157 {offsets = [64, 0], sizes = [64, 128], strides = [1, 1]} : vector<256x128xf32> to vector<64x128xf32>
    %165 = arith.negf %164 : vector<64x128xf32>
    %166 = math.exp %165 : vector<64x128xf32>
    %cst_77 = arith.constant 1.000000e+00 : f32
    %167 = vector.broadcast %cst_77 : f32 to vector<64x128xf32>
    %168 = arith.addf %167, %166 : vector<64x128xf32>
    %169 = arith.divf %167, %168 : vector<64x128xf32>
    %170 = vector.extract_strided_slice %157 {offsets = [128, 0], sizes = [64, 128], strides = [1, 1]} : vector<256x128xf32> to vector<64x128xf32>
    %171 = math.tanh %170 : vector<64x128xf32>
    %172 = vector.extract_strided_slice %157 {offsets = [192, 0], sizes = [64, 128], strides = [1, 1]} : vector<256x128xf32> to vector<64x128xf32>
    %173 = arith.negf %172 : vector<64x128xf32>
    %174 = math.exp %173 : vector<64x128xf32>
    %cst_78 = arith.constant 1.000000e+00 : f32
    %175 = vector.broadcast %cst_78 : f32 to vector<64x128xf32>
    %176 = arith.addf %175, %174 : vector<64x128xf32>
    %177 = arith.divf %175, %176 : vector<64x128xf32>
    %178 = arith.mulf %169, %150 : vector<64x128xf32>
    %179 = arith.mulf %163, %171 : vector<64x128xf32>
    %180 = arith.addf %178, %179 : vector<64x128xf32>
    %181 = math.tanh %180 : vector<64x128xf32>
    %182 = arith.mulf %177, %181 : vector<64x128xf32>
    %c4_i32 = arith.constant 4 : i32
    %183 = arith.index_cast %c4_i32 : i32 to index
    %c0_79 = arith.constant 0 : index
    %c0_80 = arith.constant 0 : index
    %184 = vector.load %arg8[%183, %c0_79, %c0_80] : memref<8x256x128xf32, #tpu.memory_space<vmem>>, vector<1x256x128xf32>
    %185 = vector.shape_cast %184 : vector<1x256x128xf32> to vector<256x128xf32>
    %cst_81 = arith.constant dense<0.000000e+00> : vector<256x128xf32>
    %186 = tpu.matmul %60, %182, %cst_81 {dimension_numbers = #tpu.dot_dimension_numbers<[1], [0], [0], [1], [0, 0, 1, 1], [], []>} : vector<256x64xf32>, vector<64x128xf32>, vector<256x128xf32> -> vector<256x128xf32>
    %187 = arith.addf %185, %186 : vector<256x128xf32>
    %188 = vector.extract_strided_slice %187 {offsets = [0, 0], sizes = [64, 128], strides = [1, 1]} : vector<256x128xf32> to vector<64x128xf32>
    %189 = arith.negf %188 : vector<64x128xf32>
    %190 = math.exp %189 : vector<64x128xf32>
    %cst_82 = arith.constant 1.000000e+00 : f32
    %191 = vector.broadcast %cst_82 : f32 to vector<64x128xf32>
    %192 = arith.addf %191, %190 : vector<64x128xf32>
    %193 = arith.divf %191, %192 : vector<64x128xf32>
    %194 = vector.extract_strided_slice %187 {offsets = [64, 0], sizes = [64, 128], strides = [1, 1]} : vector<256x128xf32> to vector<64x128xf32>
    %195 = arith.negf %194 : vector<64x128xf32>
    %196 = math.exp %195 : vector<64x128xf32>
    %cst_83 = arith.constant 1.000000e+00 : f32
    %197 = vector.broadcast %cst_83 : f32 to vector<64x128xf32>
    %198 = arith.addf %197, %196 : vector<64x128xf32>
    %199 = arith.divf %197, %198 : vector<64x128xf32>
    %200 = vector.extract_strided_slice %187 {offsets = [128, 0], sizes = [64, 128], strides = [1, 1]} : vector<256x128xf32> to vector<64x128xf32>
    %201 = math.tanh %200 : vector<64x128xf32>
    %202 = vector.extract_strided_slice %187 {offsets = [192, 0], sizes = [64, 128], strides = [1, 1]} : vector<256x128xf32> to vector<64x128xf32>
    %203 = arith.negf %202 : vector<64x128xf32>
    %204 = math.exp %203 : vector<64x128xf32>
    %cst_84 = arith.constant 1.000000e+00 : f32
    %205 = vector.broadcast %cst_84 : f32 to vector<64x128xf32>
    %206 = arith.addf %205, %204 : vector<64x128xf32>
    %207 = arith.divf %205, %206 : vector<64x128xf32>
    %208 = arith.mulf %199, %180 : vector<64x128xf32>
    %209 = arith.mulf %193, %201 : vector<64x128xf32>
    %210 = arith.addf %208, %209 : vector<64x128xf32>
    %211 = math.tanh %210 : vector<64x128xf32>
    %212 = arith.mulf %207, %211 : vector<64x128xf32>
    %c5_i32 = arith.constant 5 : i32
    %213 = arith.index_cast %c5_i32 : i32 to index
    %c0_85 = arith.constant 0 : index
    %c0_86 = arith.constant 0 : index
    %214 = vector.load %arg8[%213, %c0_85, %c0_86] : memref<8x256x128xf32, #tpu.memory_space<vmem>>, vector<1x256x128xf32>
    %215 = vector.shape_cast %214 : vector<1x256x128xf32> to vector<256x128xf32>
    %cst_87 = arith.constant dense<0.000000e+00> : vector<256x128xf32>
    %216 = tpu.matmul %60, %212, %cst_87 {dimension_numbers = #tpu.dot_dimension_numbers<[1], [0], [0], [1], [0, 0, 1, 1], [], []>} : vector<256x64xf32>, vector<64x128xf32>, vector<256x128xf32> -> vector<256x128xf32>
    %217 = arith.addf %215, %216 : vector<256x128xf32>
    %218 = vector.extract_strided_slice %217 {offsets = [0, 0], sizes = [64, 128], strides = [1, 1]} : vector<256x128xf32> to vector<64x128xf32>
    %219 = arith.negf %218 : vector<64x128xf32>
    %220 = math.exp %219 : vector<64x128xf32>
    %cst_88 = arith.constant 1.000000e+00 : f32
    %221 = vector.broadcast %cst_88 : f32 to vector<64x128xf32>
    %222 = arith.addf %221, %220 : vector<64x128xf32>
    %223 = arith.divf %221, %222 : vector<64x128xf32>
    %224 = vector.extract_strided_slice %217 {offsets = [64, 0], sizes = [64, 128], strides = [1, 1]} : vector<256x128xf32> to vector<64x128xf32>
    %225 = arith.negf %224 : vector<64x128xf32>
    %226 = math.exp %225 : vector<64x128xf32>
    %cst_89 = arith.constant 1.000000e+00 : f32
    %227 = vector.broadcast %cst_89 : f32 to vector<64x128xf32>
    %228 = arith.addf %227, %226 : vector<64x128xf32>
    %229 = arith.divf %227, %228 : vector<64x128xf32>
    %230 = vector.extract_strided_slice %217 {offsets = [128, 0], sizes = [64, 128], strides = [1, 1]} : vector<256x128xf32> to vector<64x128xf32>
    %231 = math.tanh %230 : vector<64x128xf32>
    %232 = vector.extract_strided_slice %217 {offsets = [192, 0], sizes = [64, 128], strides = [1, 1]} : vector<256x128xf32> to vector<64x128xf32>
    %233 = arith.negf %232 : vector<64x128xf32>
    %234 = math.exp %233 : vector<64x128xf32>
    %cst_90 = arith.constant 1.000000e+00 : f32
    %235 = vector.broadcast %cst_90 : f32 to vector<64x128xf32>
    %236 = arith.addf %235, %234 : vector<64x128xf32>
    %237 = arith.divf %235, %236 : vector<64x128xf32>
    %238 = arith.mulf %229, %210 : vector<64x128xf32>
    %239 = arith.mulf %223, %231 : vector<64x128xf32>
    %240 = arith.addf %238, %239 : vector<64x128xf32>
    %241 = math.tanh %240 : vector<64x128xf32>
    %242 = arith.mulf %237, %241 : vector<64x128xf32>
    %c6_i32 = arith.constant 6 : i32
    %243 = arith.index_cast %c6_i32 : i32 to index
    %c0_91 = arith.constant 0 : index
    %c0_92 = arith.constant 0 : index
    %244 = vector.load %arg8[%243, %c0_91, %c0_92] : memref<8x256x128xf32, #tpu.memory_space<vmem>>, vector<1x256x128xf32>
    %245 = vector.shape_cast %244 : vector<1x256x128xf32> to vector<256x128xf32>
    %cst_93 = arith.constant dense<0.000000e+00> : vector<256x128xf32>
    %246 = tpu.matmul %60, %242, %cst_93 {dimension_numbers = #tpu.dot_dimension_numbers<[1], [0], [0], [1], [0, 0, 1, 1], [], []>} : vector<256x64xf32>, vector<64x128xf32>, vector<256x128xf32> -> vector<256x128xf32>
    %247 = arith.addf %245, %246 : vector<256x128xf32>
    %248 = vector.extract_strided_slice %247 {offsets = [0, 0], sizes = [64, 128], strides = [1, 1]} : vector<256x128xf32> to vector<64x128xf32>
    %249 = arith.negf %248 : vector<64x128xf32>
    %250 = math.exp %249 : vector<64x128xf32>
    %cst_94 = arith.constant 1.000000e+00 : f32
    %251 = vector.broadcast %cst_94 : f32 to vector<64x128xf32>
    %252 = arith.addf %251, %250 : vector<64x128xf32>
    %253 = arith.divf %251, %252 : vector<64x128xf32>
    %254 = vector.extract_strided_slice %247 {offsets = [64, 0], sizes = [64, 128], strides = [1, 1]} : vector<256x128xf32> to vector<64x128xf32>
    %255 = arith.negf %254 : vector<64x128xf32>
    %256 = math.exp %255 : vector<64x128xf32>
    %cst_95 = arith.constant 1.000000e+00 : f32
    %257 = vector.broadcast %cst_95 : f32 to vector<64x128xf32>
    %258 = arith.addf %257, %256 : vector<64x128xf32>
    %259 = arith.divf %257, %258 : vector<64x128xf32>
    %260 = vector.extract_strided_slice %247 {offsets = [128, 0], sizes = [64, 128], strides = [1, 1]} : vector<256x128xf32> to vector<64x128xf32>
    %261 = math.tanh %260 : vector<64x128xf32>
    %262 = vector.extract_strided_slice %247 {offsets = [192, 0], sizes = [64, 128], strides = [1, 1]} : vector<256x128xf32> to vector<64x128xf32>
    %263 = arith.negf %262 : vector<64x128xf32>
    %264 = math.exp %263 : vector<64x128xf32>
    %cst_96 = arith.constant 1.000000e+00 : f32
    %265 = vector.broadcast %cst_96 : f32 to vector<64x128xf32>
    %266 = arith.addf %265, %264 : vector<64x128xf32>
    %267 = arith.divf %265, %266 : vector<64x128xf32>
    %268 = arith.mulf %259, %240 : vector<64x128xf32>
    %269 = arith.mulf %253, %261 : vector<64x128xf32>
    %270 = arith.addf %268, %269 : vector<64x128xf32>
    %271 = math.tanh %270 : vector<64x128xf32>
    %272 = arith.mulf %267, %271 : vector<64x128xf32>
    %c7_i32 = arith.constant 7 : i32
    %273 = arith.index_cast %c7_i32 : i32 to index
    %c0_97 = arith.constant 0 : index
    %c0_98 = arith.constant 0 : index
    %274 = vector.load %arg8[%273, %c0_97, %c0_98] : memref<8x256x128xf32, #tpu.memory_space<vmem>>, vector<1x256x128xf32>
    %275 = vector.shape_cast %274 : vector<1x256x128xf32> to vector<256x128xf32>
    %cst_99 = arith.constant dense<0.000000e+00> : vector<256x128xf32>
    %276 = tpu.matmul %60, %272, %cst_99 {dimension_numbers = #tpu.dot_dimension_numbers<[1], [0], [0], [1], [0, 0, 1, 1], [], []>} : vector<256x64xf32>, vector<64x128xf32>, vector<256x128xf32> -> vector<256x128xf32>
    %277 = arith.addf %275, %276 : vector<256x128xf32>
    %278 = vector.extract_strided_slice %277 {offsets = [0, 0], sizes = [64, 128], strides = [1, 1]} : vector<256x128xf32> to vector<64x128xf32>
    %279 = arith.negf %278 : vector<64x128xf32>
    %280 = math.exp %279 : vector<64x128xf32>
    %cst_100 = arith.constant 1.000000e+00 : f32
    %281 = vector.broadcast %cst_100 : f32 to vector<64x128xf32>
    %282 = arith.addf %281, %280 : vector<64x128xf32>
    %283 = arith.divf %281, %282 : vector<64x128xf32>
    %284 = vector.extract_strided_slice %277 {offsets = [64, 0], sizes = [64, 128], strides = [1, 1]} : vector<256x128xf32> to vector<64x128xf32>
    %285 = arith.negf %284 : vector<64x128xf32>
    %286 = math.exp %285 : vector<64x128xf32>
    %cst_101 = arith.constant 1.000000e+00 : f32
    %287 = vector.broadcast %cst_101 : f32 to vector<64x128xf32>
    %288 = arith.addf %287, %286 : vector<64x128xf32>
    %289 = arith.divf %287, %288 : vector<64x128xf32>
    %290 = vector.extract_strided_slice %277 {offsets = [128, 0], sizes = [64, 128], strides = [1, 1]} : vector<256x128xf32> to vector<64x128xf32>
    %291 = math.tanh %290 : vector<64x128xf32>
    %292 = vector.extract_strided_slice %277 {offsets = [192, 0], sizes = [64, 128], strides = [1, 1]} : vector<256x128xf32> to vector<64x128xf32>
    %293 = arith.negf %292 : vector<64x128xf32>
    %294 = math.exp %293 : vector<64x128xf32>
    %cst_102 = arith.constant 1.000000e+00 : f32
    %295 = vector.broadcast %cst_102 : f32 to vector<64x128xf32>
    %296 = arith.addf %295, %294 : vector<64x128xf32>
    %297 = arith.divf %295, %296 : vector<64x128xf32>
    %298 = arith.mulf %289, %270 : vector<64x128xf32>
    %299 = arith.mulf %283, %291 : vector<64x128xf32>
    %300 = arith.addf %298, %299 : vector<64x128xf32>
    %301 = math.tanh %300 : vector<64x128xf32>
    %302 = arith.mulf %297, %301 : vector<64x128xf32>
    %c8_i32 = arith.constant 8 : i32
    %c0_103 = arith.constant 0 : index
    %c0_104 = arith.constant 0 : index
    %303 = vector.load %arg5[%c0_103, %c0_104] : memref<10x64xf32, #tpu.memory_space<vmem>>, vector<10x64xf32>
    %cst_105 = arith.constant dense<0.000000e+00> : vector<10x128xf32>
    %304 = tpu.matmul %303, %302, %cst_105 {dimension_numbers = #tpu.dot_dimension_numbers<[1], [0], [0], [1], [0, 0, 1, 1], [], []>} : vector<10x64xf32>, vector<64x128xf32>, vector<10x128xf32> -> vector<10x128xf32>
    %c0_106 = arith.constant 0 : index
    %c0_107 = arith.constant 0 : index
    %305 = vector.load %arg6[%c0_106, %c0_107] : memref<10x1xf32, #tpu.memory_space<vmem>>, vector<10x1xf32>
    %306 = vector.broadcast %305 : vector<10x1xf32> to vector<10x128xf32>
    %307 = arith.addf %304, %306 : vector<10x128xf32>
    %c0_108 = arith.constant 0 : index
    %c0_109 = arith.constant 0 : index
    %308 = vector.load %arg7[%c0_108, %c0_109] : memref<10x128xf32, #tpu.memory_space<vmem>>, vector<10x128xf32>
    tpu.vector_store %arg7[%c0_108, %c0_109], %307 {strides = array<i32>} : memref<10x128xf32, #tpu.memory_space<vmem>>, vector<10x128xf32>,
    return
  }
  func.func @transform_0(%arg0: i32) -> (i32, i32, i32) {
    %c0_i32 = arith.constant 0 : i32
    %c0_i32_0 = arith.constant 0 : i32
    %c0_i32_1 = arith.constant 0 : i32
    return %c0_i32, %c0_i32_0, %arg0 : i32, i32, i32
  }
  func.func @transform_1(%arg0: i32) -> (i32, i32) {
    %c0_i32 = arith.constant 0 : i32
    %c0_i32_0 = arith.constant 0 : i32
    %c0_i32_1 = arith.constant 0 : i32
    return %c0_i32, %c0_i32_0 : i32, i32
  }
  func.func @transform_2(%arg0: i32) -> (i32, i32) {
    %c0_i32 = arith.constant 0 : i32
    %c0_i32_0 = arith.constant 0 : i32
    %c0_i32_1 = arith.constant 0 : i32
    return %c0_i32, %c0_i32_0 : i32, i32
  }
  func.func @transform_3(%arg0: i32) -> (i32, i32) {
    %c0_i32 = arith.constant 0 : i32
    %c0_i32_0 = arith.constant 0 : i32
    %c0_i32_1 = arith.constant 0 : i32
    return %c0_i32, %c0_i32_0 : i32, i32
  }
  func.func @transform_4(%arg0: i32) -> (i32, i32) {
    %c0_i32 = arith.constant 0 : i32
    %c0_i32_0 = arith.constant 0 : i32
    %c0_i32_1 = arith.constant 0 : i32
    return %c0_i32, %c0_i32_0 : i32, i32
  }
  func.func @transform_5(%arg0: i32) -> (i32, i32) {
    %c0_i32 = arith.constant 0 : i32
    %c0_i32_0 = arith.constant 0 : i32
    %c0_i32_1 = arith.constant 0 : i32
    return %c0_i32, %c0_i32_0 : i32, i32
  }
  func.func @transform_6(%arg0: i32) -> (i32, i32) {
    %c0_i32 = arith.constant 0 : i32
    %c0_i32_0 = arith.constant 0 : i32
    return %c0_i32, %arg0 : i32, i32
  }
}

</mosaic_0001>

<llo_original>
// kernel: tpu_custom_call.1
$region0: #{tpu_custom_call.1}
  #allocation0 [shape = 'u32[]', space=smem, size = 0x4, offset = 0x4, fixed_abs, tag = 'smem constant byte address 0x4 - core index']
  #allocation1 [shape = 'u32[144,128]{1,0:T(1,128)}', space=vmem, size = 0x12000, scoped, tag = 'internal scratch']
  #allocation2 [shape = 'f32[8,256,128]{2,1,0:T(8,128)}', space=vmem, size = 0x100000, scoped, tag = 'scratch operand']
  %s0 = inlined_call_operand.vmem [shape: f32[8,28,128], index: 0, kind: input, shape index: {}]
  %s1 = inlined_call_operand.vmem [shape: f32[256,28], index: 1, kind: input, shape index: {}]
  %s2 = inlined_call_operand.vmem [shape: f32[256,64], index: 2, kind: input, shape index: {}]
  %s3 = inlined_call_operand.vmem [shape: f32[256,1], index: 3, kind: input, shape index: {}]
  %s4 = inlined_call_operand.vmem [shape: f32[10,64], index: 4, kind: input, shape index: {}]
  %s5 = inlined_call_operand.vmem [shape: f32[10,1], index: 5, kind: input, shape index: {}]
  %s6 = inlined_call_operand.hbm [shape: f32[10,128], index: 6, kind: output, shape index: {}]
  %s7 = sld [smem:[#allocation0]]
  $region34: #{tpu_custom_call.1} parent=0
    _
  %s9 = ssub.s32 1, %s7
  %s10 = scalar_select 0, %s9, %s7
  $region1: #{tpu_custom_call.1} parent=0
    #allocation3 [shape = 'u8[8192]{0}', space=vmem, size = 0x2000, scoped, tag = 'output window, operand 0, single buffered']
    #allocation4 [shape = 's32[1]{0}', space=sflag, size = 0x4, scoped, tag = 'scoped memory for tpu_custom_call.1']
    %11 = vsyncpa [#allocation4], 0
    // Predicated region
    $region2: #{tpu_custom_call.1} parent=1 // pred_check
      _
    $region3: #{tpu_custom_call.1} parent=1 // pred_check_branch
      %13 = sbr.rel (0) target = $region5
    $region4: #{tpu_custom_call.1} parent=1 // pred_region
      _
    $region5: #{tpu_custom_call.1} parent=1 // pred_fallthru
      _
    // Predicated region
    $region6: #{tpu_custom_call.1} parent=1 // pred_check
      _
    $region7: #{tpu_custom_call.1} parent=1 // pred_check_branch
      %15 = sbr.rel (0) target = $region9
    $region8: #{tpu_custom_call.1} parent=1 // pred_region
      _
    $region9: #{tpu_custom_call.1} parent=1 // pred_fallthru
      _
    // Predicated region
    $region10: #{tpu_custom_call.1} parent=1 // pred_check
      _
    $region11: #{tpu_custom_call.1} parent=1 // pred_check_branch
      %17 = sbr.rel (0) target = $region13
    $region12: #{tpu_custom_call.1} parent=1 // pred_region
      _
    $region13: #{tpu_custom_call.1} parent=1 // pred_fallthru
      _
    // Predicated region
    $region14: #{tpu_custom_call.1} parent=1 // pred_check
      _
    $region15: #{tpu_custom_call.1} parent=1 // pred_check_branch
      %19 = sbr.rel (0) target = $region17
    $region16: #{tpu_custom_call.1} parent=1 // pred_region
      _
    $region17: #{tpu_custom_call.1} parent=1 // pred_fallthru
      _
    // Predicated region
    $region18: #{tpu_custom_call.1} parent=1 // pred_check
      _
    $region19: #{tpu_custom_call.1} parent=1 // pred_check_branch
      %21 = sbr.rel (0) target = $region21
    $region20: #{tpu_custom_call.1} parent=1 // pred_region
      _
    $region21: #{tpu_custom_call.1} parent=1 // pred_fallthru
      _
    // Predicated region
    $region22: #{tpu_custom_call.1} parent=1 // pred_check
      _
    $region23: #{tpu_custom_call.1} parent=1 // pred_check_branch
      %23 = sbr.rel (0) target = $region25
    $region24: #{tpu_custom_call.1} parent=1 // pred_region
      _
    $region25: #{tpu_custom_call.1} parent=1 // pred_fallthru
      _
    %v24 = vld [vmem:[%s1] sm:$0xff]
    %v25 = vld [vmem:[%s1 + $0x8] sm:$0xff]
    %v26 = vld [vmem:[%s1 + $0x10] sm:$0xff]
    %v27 = vld [vmem:[%s1 + $0x18] sm:$0xff]
    %v28 = vld [vmem:[%s1 + $0x20] sm:$0xff]
    %v29 = vld [vmem:[%s1 + $0x28] sm:$0xff]
    %v30 = vld [vmem:[%s1 + $0x30] sm:$0xff]
    %v31 = vld [vmem:[%s1 + $0x38] sm:$0xff]
    %v32 = vld [vmem:[%s1 + $0x40] sm:$0xff]
    %v33 = vld [vmem:[%s1 + $0x48] sm:$0xff]
    %v34 = vld [vmem:[%s1 + $0x50] sm:$0xff]
    %v35 = vld [vmem:[%s1 + $0x58] sm:$0xff]
    %v36 = vld [vmem:[%s1 + $0x60] sm:$0xff]
    %v37 = vld [vmem:[%s1 + $0x68] sm:$0xff]
    %v38 = vld [vmem:[%s1 + $0x70] sm:$0xff]
    %v39 = vld [vmem:[%s1 + $0x78] sm:$0xff]
    %v40 = vld [vmem:[%s1 + $0x80] sm:$0xff]
    %v41 = vld [vmem:[%s1 + $0x88] sm:$0xff]
    %v42 = vld [vmem:[%s1 + $0x90] sm:$0xff]
    %v43 = vld [vmem:[%s1 + $0x98] sm:$0xff]
    %v44 = vld [vmem:[%s1 + $0xa0] sm:$0xff]
    %v45 = vld [vmem:[%s1 + $0xa8] sm:$0xff]
    %v46 = vld [vmem:[%s1 + $0xb0] sm:$0xff]
    %v47 = vld [vmem:[%s1 + $0xb8] sm:$0xff]
    %v48 = vld [vmem:[%s1 + $0xc0] sm:$0xff]
    %v49 = vld [vmem:[%s1 + $0xc8] sm:$0xff]
    %v50 = vld [vmem:[%s1 + $0xd0] sm:$0xff]
    %v51 = vld [vmem:[%s1 + $0xd8] sm:$0xff]
    %v52 = vld [vmem:[%s1 + $0xe0] sm:$0xff]
    %v53 = vld [vmem:[%s1 + $0xe8] sm:$0xff]
    %v54 = vld [vmem:[%s1 + $0xf0] sm:$0xff]
    %v55 = vld [vmem:[%s1 + $0xf8] sm:$0xff]
    %v56 = vld [vmem:[%s3] sm:$0xff]
    %v57 = vld [vmem:[%s3 + $0x8] sm:$0xff]
    %v58 = vld [vmem:[%s3 + $0x10] sm:$0xff]
    %v59 = vld [vmem:[%s3 + $0x18] sm:$0xff]
    %v60 = vld [vmem:[%s3 + $0x20] sm:$0xff]
    %v61 = vld [vmem:[%s3 + $0x28] sm:$0xff]
    %v62 = vld [vmem:[%s3 + $0x30] sm:$0xff]
    %v63 = vld [vmem:[%s3 + $0x38] sm:$0xff]
    %v64 = vld [vmem:[%s3 + $0x40] sm:$0xff]
    %v65 = vld [vmem:[%s3 + $0x48] sm:$0xff]
    %v66 = vld [vmem:[%s3 + $0x50] sm:$0xff]
    %v67 = vld [vmem:[%s3 + $0x58] sm:$0xff]
    %v68 = vld [vmem:[%s3 + $0x60] sm:$0xff]
    %v69 = vld [vmem:[%s3 + $0x68] sm:$0xff]
    %v70 = vld [vmem:[%s3 + $0x70] sm:$0xff]
    %v71 = vld [vmem:[%s3 + $0x78] sm:$0xff]
    %v72 = vld [vmem:[%s3 + $0x80] sm:$0xff]
    %v73 = vld [vmem:[%s3 + $0x88] sm:$0xff]
    %v74 = vld [vmem:[%s3 + $0x90] sm:$0xff]
    %v75 = vld [vmem:[%s3 + $0x98] sm:$0xff]
    %v76 = vld [vmem:[%s3 + $0xa0] sm:$0xff]
    %v77 = vld [vmem:[%s3 + $0xa8] sm:$0xff]
    %v78 = vld [vmem:[%s3 + $0xb0] sm:$0xff]
    %v79 = vld [vmem:[%s3 + $0xb8] sm:$0xff]
    %v80 = vld [vmem:[%s3 + $0xc0] sm:$0xff]
    %v81 = vld [vmem:[%s3 + $0xc8] sm:$0xff]
    %v82 = vld [vmem:[%s3 + $0xd0] sm:$0xff]
    %v83 = vld [vmem:[%s3 + $0xd8] sm:$0xff]
    %v84 = vld [vmem:[%s3 + $0xe0] sm:$0xff]
    %v85 = vld [vmem:[%s3 + $0xe8] sm:$0xff]
    %v86 = vld [vmem:[%s3 + $0xf0] sm:$0xff]
    %v87 = vld [vmem:[%s3 + $0xf8] sm:$0xff]
    %89 = vset.pattern.permute.xlu0 0
    %90 = vperm.xlu0 %89, %v56
    %v91 = vpop.permute.xlu0 %90
    %94 = vset.pattern.permute.xlu0 0
    %95 = vperm.xlu0 %94, %v57
    %v96 = vpop.permute.xlu0 %95
    %99 = vset.pattern.permute.xlu0 0
    %100 = vperm.xlu0 %99, %v58
    %v101 = vpop.permute.xlu0 %100
    %104 = vset.pattern.permute.xlu0 0
    %105 = vperm.xlu0 %104, %v59
    %v106 = vpop.permute.xlu0 %105
    %109 = vset.pattern.permute.xlu0 0
    %110 = vperm.xlu0 %109, %v60
    %v111 = vpop.permute.xlu0 %110
    %114 = vset.pattern.permute.xlu0 0
    %115 = vperm.xlu0 %114, %v61
    %v116 = vpop.permute.xlu0 %115
    %119 = vset.pattern.permute.xlu0 0
    %120 = vperm.xlu0 %119, %v62
    %v121 = vpop.permute.xlu0 %120
    %124 = vset.pattern.permute.xlu0 0
    %125 = vperm.xlu0 %124, %v63
    %v126 = vpop.permute.xlu0 %125
    %129 = vset.pattern.permute.xlu0 0
    %130 = vperm.xlu0 %129, %v64
    %v131 = vpop.permute.xlu0 %130
    %134 = vset.pattern.permute.xlu0 0
    %135 = vperm.xlu0 %134, %v65
    %v136 = vpop.permute.xlu0 %135
    %139 = vset.pattern.permute.xlu0 0
    %140 = vperm.xlu0 %139, %v66
    %v141 = vpop.permute.xlu0 %140
    %144 = vset.pattern.permute.xlu0 0
    %145 = vperm.xlu0 %144, %v67
    %v146 = vpop.permute.xlu0 %145
    %149 = vset.pattern.permute.xlu0 0
    %150 = vperm.xlu0 %149, %v68
    %v151 = vpop.permute.xlu0 %150
    %154 = vset.pattern.permute.xlu0 0
    %155 = vperm.xlu0 %154, %v69
    %v156 = vpop.permute.xlu0 %155
    %159 = vset.pattern.permute.xlu0 0
    %160 = vperm.xlu0 %159, %v70
    %v161 = vpop.permute.xlu0 %160
    %164 = vset.pattern.permute.xlu0 0
    %165 = vperm.xlu0 %164, %v71
    %v166 = vpop.permute.xlu0 %165
    %169 = vset.pattern.permute.xlu0 0
    %170 = vperm.xlu0 %169, %v72
    %v171 = vpop.permute.xlu0 %170
    %174 = vset.pattern.permute.xlu0 0
    %175 = vperm.xlu0 %174, %v73
    %v176 = vpop.permute.xlu0 %175
    %179 = vset.pattern.permute.xlu0 0
    %180 = vperm.xlu0 %179, %v74
    %v181 = vpop.permute.xlu0 %180
    %184 = vset.pattern.permute.xlu0 0
    %185 = vperm.xlu0 %184, %v75
    %v186 = vpop.permute.xlu0 %185
    %189 = vset.pattern.permute.xlu0 0
    %190 = vperm.xlu0 %189, %v76
    %v191 = vpop.permute.xlu0 %190
    %194 = vset.pattern.permute.xlu0 0
    %195 = vperm.xlu0 %194, %v77
    %v196 = vpop.permute.xlu0 %195
    %199 = vset.pattern.permute.xlu0 0
    %200 = vperm.xlu0 %199, %v78
    %v201 = vpop.permute.xlu0 %200
    %204 = vset.pattern.permute.xlu0 0
    %205 = vperm.xlu0 %204, %v79
    %v206 = vpop.permute.xlu0 %205
    %209 = vset.pattern.permute.xlu0 0
    %210 = vperm.xlu0 %209, %v80
    %v211 = vpop.permute.xlu0 %210
    %214 = vset.pattern.permute.xlu0 0
    %215 = vperm.xlu0 %214, %v81
    %v216 = vpop.permute.xlu0 %215
    %219 = vset.pattern.permute.xlu0 0
    %220 = vperm.xlu0 %219, %v82
    %v221 = vpop.permute.xlu0 %220
    %224 = vset.pattern.permute.xlu0 0
    %225 = vperm.xlu0 %224, %v83
    %v226 = vpop.permute.xlu0 %225
    %229 = vset.pattern.permute.xlu0 0
    %230 = vperm.xlu0 %229, %v84
    %v231 = vpop.permute.xlu0 %230
    %234 = vset.pattern.permute.xlu0 0
    %235 = vperm.xlu0 %234, %v85
    %v236 = vpop.permute.xlu0 %235
    %239 = vset.pattern.permute.xlu0 0
    %240 = vperm.xlu0 %239, %v86
    %v241 = vpop.permute.xlu0 %240
    %244 = vset.pattern.permute.xlu0 0
    %245 = vperm.xlu0 %244, %v87
    %v246 = vpop.permute.xlu0 %245
    %v248 = vld [vmem:[%s0] sm:$0xff]
    %v249 = vld [vmem:[%s0 + $0x8] sm:$0xff]
    %v250 = vld [vmem:[%s0 + $0x10] sm:$0xff]
    %v251 = vld [vmem:[%s0 + $0x18] sm:$0xf]
    %vm252 = vcmask 228352
    %v254 = vsel %vm252, %v24, 0
    %v257 = vsel %vm252, %v25, 0
    %v260 = vsel %vm252, %v26, 0
    %v263 = vsel %vm252, %v27, 0
    %v266 = vsel %vm252, %v28, 0
    %v269 = vsel %vm252, %v29, 0
    %v272 = vsel %vm252, %v30, 0
    %v275 = vsel %vm252, %v31, 0
    %v278 = vsel %vm252, %v32, 0
    %v281 = vsel %vm252, %v33, 0
    %v284 = vsel %vm252, %v34, 0
    %v287 = vsel %vm252, %v35, 0
    %v290 = vsel %vm252, %v36, 0
    %v293 = vsel %vm252, %v37, 0
    %v296 = vsel %vm252, %v38, 0
    %v299 = vsel %vm252, %v39, 0
    %v302 = vsel %vm252, %v40, 0
    %v305 = vsel %vm252, %v41, 0
    %v308 = vsel %vm252, %v42, 0
    %v311 = vsel %vm252, %v43, 0
    %v314 = vsel %vm252, %v44, 0
    %v317 = vsel %vm252, %v45, 0
    %v320 = vsel %vm252, %v46, 0
    %v323 = vsel %vm252, %v47, 0
    %v326 = vsel %vm252, %v48, 0
    %v329 = vsel %vm252, %v49, 0
    %v332 = vsel %vm252, %v50, 0
    %v335 = vsel %vm252, %v51, 0
    %v338 = vsel %vm252, %v52, 0
    %v341 = vsel %vm252, %v53, 0
    %v344 = vsel %vm252, %v54, 0
    %v347 = vsel %vm252, %v55, 0
    %vm349 = vcmask 1043456
    %v351 = vsel %vm349, %v251, 0
    %353 = vmatprep.subr.mxu0 0.0
    %354 = vmatpush1.msra.mxu0 0.0
    %355 = vmatprep.subr.mxu0 0.0
    %356 = vmatpush1.msra.mxu0 0.0
    %357 = vmatprep.subr.mxu0 0.0
    %358 = vmatpush1.msra.mxu0 0.0
    %359 = vmatprep.subr.mxu0 0.0
    %360 = vmatpush1.msra.mxu0 0.0
    %361 = vmatprep.subr.mxu0 0.0
    %362 = vmatpush1.msra.mxu0 0.0
    %363 = vmatprep.subr.mxu0 0.0
    %364 = vmatpush1.msra.mxu0 0.0
    %365 = vmatprep.subr.mxu0 0.0
    %366 = vmatpush1.msra.mxu0 0.0
    %367 = vmatprep.subr.mxu0 0.0
    %368 = vmatpush1.msra.mxu0 0.0
    %369 = vmatprep.subr.mxu0 0.0
    %370 = vmatpush1.msra.mxu0 0.0
    %371 = vmatprep.subr.mxu0 0.0
    %372 = vmatpush1.msra.mxu0 0.0
    %373 = vmatprep.subr.mxu0 0.0
    %374 = vmatpush1.msra.mxu0 0.0
    %375 = vmatprep.subr.mxu0 0.0
    %376 = vmatpush1.msra.mxu0 0.0
    %377 = vmatprep.subr.mxu0 0.0
    %378 = vmatpush1.msra.mxu0 %v351
    %379 = vmatprep.subr.mxu0 0.0
    %380 = vmatpush1.msra.mxu0 %v250
    %381 = vmatprep.subr.mxu0 0.0
    %382 = vmatpush1.msra.mxu0 %v249
    %383 = vmatprep.subr.mxu0 0.0
    %384 = vmatpush1.msra.mxu0 %v248
    %385 = vmatprep.subr.mxu0 0.0
    %386 = vmatpush2.msra.mxu0 0.0
    %387 = vmatprep.subr.mxu0 0.0
    %388 = vmatpush2.msra.mxu0 0.0
    %389 = vmatprep.subr.mxu0 0.0
    %390 = vmatpush2.msra.mxu0 0.0
    %391 = vmatprep.subr.mxu0 0.0
    %392 = vmatpush2.msra.mxu0 0.0
    %393 = vmatprep.subr.mxu0 0.0
    %394 = vmatpush2.msra.mxu0 0.0
    %395 = vmatprep.subr.mxu0 0.0
    %396 = vmatpush2.msra.mxu0 0.0
    %397 = vmatprep.subr.mxu0 0.0
    %398 = vmatpush2.msra.mxu0 0.0
    %399 = vmatprep.subr.mxu0 0.0
    %400 = vmatpush2.msra.mxu0 0.0
    %401 = vmatprep.subr.mxu0 0.0
    %402 = vmatpush2.msra.mxu0 0.0
    %403 = vmatprep.subr.mxu0 0.0
    %404 = vmatpush2.msra.mxu0 0.0
    %405 = vmatprep.subr.mxu0 0.0
    %406 = vmatpush2.msra.mxu0 0.0
    %407 = vmatprep.subr.mxu0 0.0
    %408 = vmatpush2.msra.mxu0 0.0
    %409 = vmatprep.subr.mxu0 0.0
    %410 = vmatpush2.msra.mxu0 0.0
    %411 = vmatprep.subr.mxu0 0.0
    %412 = vmatpush2.msra.mxu0 0.0
    %413 = vmatprep.subr.mxu0 0.0
    %414 = vmatpush2.msra.mxu0 0.0
    %415 = vmatprep.subr.mxu0 0.0
    %416 = vmatpush2.msra.mxu0 0.0
    %417 = vmatprep.mubr.f32.mxu0 0.0
    %418 = vmatmul.mubr.f32.gmra.mxu0 %v254
    %v419 = vpop.f32.mrf.mxu0
    %v420 = vadd.f32 %v91, %v419
    %v421 = vpop.f32.mrf.mxu0
    %422 = vmatprep.mubr.f32.mxu0 0.0
    %423 = vmatmul.mubr.f32.gmra.mxu0 %v257
    %v424 = vpop.f32.mrf.mxu0
    %v425 = vadd.f32 %v96, %v424
    %v426 = vpop.f32.mrf.mxu0
    %427 = vmatprep.mubr.f32.mxu0 0.0
    %428 = vmatmul.mubr.f32.gmra.mxu0 %v260
    %v429 = vpop.f32.mrf.mxu0
    %v430 = vadd.f32 %v101, %v429
    %v431 = vpop.f32.mrf.mxu0
    %432 = vmatprep.mubr.f32.mxu0 0.0
    %433 = vmatmul.mubr.f32.gmra.mxu0 %v263
    %v434 = vpop.f32.mrf.mxu0
    %v435 = vadd.f32 %v106, %v434
    %v436 = vpop.f32.mrf.mxu0
    %437 = vmatprep.mubr.f32.mxu0 0.0
    %438 = vmatmul.mubr.f32.gmra.mxu0 %v266
    %v439 = vpop.f32.mrf.mxu0
    %v440 = vadd.f32 %v111, %v439
    %v441 = vpop.f32.mrf.mxu0
    %442 = vmatprep.mubr.f32.mxu0 0.0
    %443 = vmatmul.mubr.f32.gmra.mxu0 %v269
    %v444 = vpop.f32.mrf.mxu0
    %v445 = vadd.f32 %v116, %v444
    %v446 = vpop.f32.mrf.mxu0
    %447 = vmatprep.mubr.f32.mxu0 0.0
    %448 = vmatmul.mubr.f32.gmra.mxu0 %v272
    %v449 = vpop.f32.mrf.mxu0
    %v450 = vadd.f32 %v121, %v449
    %v451 = vpop.f32.mrf.mxu0
    %452 = vmatprep.mubr.f32.mxu0 0.0
    %453 = vmatmul.mubr.f32.gmra.mxu0 %v275
    %v454 = vpop.f32.mrf.mxu0
    %v455 = vadd.f32 %v126, %v454
    %v456 = vpop.f32.mrf.mxu0
    %457 = vmatprep.mubr.f32.mxu0 0.0
    %458 = vmatmul.mubr.f32.gmra.mxu0 %v278
    %v459 = vpop.f32.mrf.mxu0
    %v460 = vadd.f32 %v131, %v459
    %v461 = vpop.f32.mrf.mxu0
    %462 = vmatprep.mubr.f32.mxu0 0.0
    %463 = vmatmul.mubr.f32.gmra.mxu0 %v281
    %v464 = vpop.f32.mrf.mxu0
    %v465 = vadd.f32 %v136, %v464
    %v466 = vpop.f32.mrf.mxu0
    %467 = vmatprep.mubr.f32.mxu0 0.0
    %468 = vmatmul.mubr.f32.gmra.mxu0 %v284
    %v469 = vpop.f32.mrf.mxu0
    %v470 = vadd.f32 %v141, %v469
    %v471 = vpop.f32.mrf.mxu0
    %472 = vmatprep.mubr.f32.mxu0 0.0
    %473 = vmatmul.mubr.f32.gmra.mxu0 %v287
    %v474 = vpop.f32.mrf.mxu0
    %v475 = vadd.f32 %v146, %v474
    %v476 = vpop.f32.mrf.mxu0
    %477 = vmatprep.mubr.f32.mxu0 0.0
    %478 = vmatmul.mubr.f32.gmra.mxu0 %v290
    %v479 = vpop.f32.mrf.mxu0
    %v480 = vadd.f32 %v151, %v479
    %v481 = vpop.f32.mrf.mxu0
    %482 = vmatprep.mubr.f32.mxu0 0.0
    %483 = vmatmul.mubr.f32.gmra.mxu0 %v293
    %v484 = vpop.f32.mrf.mxu0
    %v485 = vadd.f32 %v156, %v484
    %v486 = vpop.f32.mrf.mxu0
    %487 = vmatprep.mubr.f32.mxu0 0.0
    %488 = vmatmul.mubr.f32.gmra.mxu0 %v296
    %v489 = vpop.f32.mrf.mxu0
    %v490 = vadd.f32 %v161, %v489
    %v491 = vpop.f32.mrf.mxu0
    %492 = vmatprep.mubr.f32.mxu0 0.0
    %493 = vmatmul.mubr.f32.gmra.mxu0 %v299
    %v494 = vpop.f32.mrf.mxu0
    %v495 = vadd.f32 %v166, %v494
    %v496 = vpop.f32.mrf.mxu0
    %497 = vmatprep.mubr.f32.mxu0 0.0
    %498 = vmatmul.mubr.f32.gmra.mxu0 %v302
    %v499 = vpop.f32.mrf.mxu0
    %v500 = vadd.f32 %v171, %v499
    %v501 = vpop.f32.mrf.mxu0
    %502 = vmatprep.mubr.f32.mxu0 0.0
    %503 = vmatmul.mubr.f32.gmra.mxu0 %v305
    %v504 = vpop.f32.mrf.mxu0
    %v505 = vadd.f32 %v176, %v504
    %v506 = vpop.f32.mrf.mxu0
    %507 = vmatprep.mubr.f32.mxu0 0.0
    %508 = vmatmul.mubr.f32.gmra.mxu0 %v308
    %v509 = vpop.f32.mrf.mxu0
    %v510 = vadd.f32 %v181, %v509
    %v511 = vpop.f32.mrf.mxu0
    %512 = vmatprep.mubr.f32.mxu0 0.0
    %513 = vmatmul.mubr.f32.gmra.mxu0 %v311
    %v514 = vpop.f32.mrf.mxu0
    %v515 = vadd.f32 %v186, %v514
    %v516 = vpop.f32.mrf.mxu0
    %517 = vmatprep.mubr.f32.mxu0 0.0
    %518 = vmatmul.mubr.f32.gmra.mxu0 %v314
    %v519 = vpop.f32.mrf.mxu0
    %v520 = vadd.f32 %v191, %v519
    %v521 = vpop.f32.mrf.mxu0
    %522 = vmatprep.mubr.f32.mxu0 0.0
    %523 = vmatmul.mubr.f32.gmra.mxu0 %v317
    %v524 = vpop.f32.mrf.mxu0
    %v525 = vadd.f32 %v196, %v524
    %v526 = vpop.f32.mrf.mxu0
    %527 = vmatprep.mubr.f32.mxu0 0.0
    %528 = vmatmul.mubr.f32.gmra.mxu0 %v320
    %v529 = vpop.f32.mrf.mxu0
    %v530 = vadd.f32 %v201, %v529
    %v531 = vpop.f32.mrf.mxu0
    %532 = vmatprep.mubr.f32.mxu0 0.0
    %533 = vmatmul.mubr.f32.gmra.mxu0 %v323
    %v534 = vpop.f32.mrf.mxu0
    %v535 = vadd.f32 %v206, %v534
    %v536 = vpop.f32.mrf.mxu0
    %537 = vmatprep.mubr.f32.mxu0 0.0
    %538 = vmatmul.mubr.f32.gmra.mxu0 %v326
    %v539 = vpop.f32.mrf.mxu0
    %v540 = vadd.f32 %v211, %v539
    %v541 = vpop.f32.mrf.mxu0
    %542 = vmatprep.mubr.f32.mxu0 0.0
    %543 = vmatmul.mubr.f32.gmra.mxu0 %v329
    %v544 = vpop.f32.mrf.mxu0
    %v545 = vadd.f32 %v216, %v544
    %v546 = vpop.f32.mrf.mxu0
    %547 = vmatprep.mubr.f32.mxu0 0.0
    %548 = vmatmul.mubr.f32.gmra.mxu0 %v332
    %v549 = vpop.f32.mrf.mxu0
    %v550 = vadd.f32 %v221, %v549
    %v551 = vpop.f32.mrf.mxu0
    %552 = vmatprep.mubr.f32.mxu0 0.0
    %553 = vmatmul.mubr.f32.gmra.mxu0 %v335
    %v554 = vpop.f32.mrf.mxu0
    %v555 = vadd.f32 %v226, %v554
    %v556 = vpop.f32.mrf.mxu0
    %557 = vmatprep.mubr.f32.mxu0 0.0
    %558 = vmatmul.mubr.f32.gmra.mxu0 %v338
    %v559 = vpop.f32.mrf.mxu0
    %v560 = vadd.f32 %v231, %v559
    %v561 = vpop.f32.mrf.mxu0
    %562 = vmatprep.mubr.f32.mxu0 0.0
    %563 = vmatmul.mubr.f32.gmra.mxu0 %v341
    %v564 = vpop.f32.mrf.mxu0
    %v565 = vadd.f32 %v236, %v564
    %v566 = vpop.f32.mrf.mxu0
    %567 = vmatprep.mubr.f32.mxu0 0.0
    %568 = vmatmul.mubr.f32.gmra.mxu0 %v344
    %v569 = vpop.f32.mrf.mxu0
    %v570 = vadd.f32 %v241, %v569
    %v571 = vpop.f32.mrf.mxu0
    %572 = vmatprep.mubr.f32.mxu0 0.0
    %573 = vmatmul.mubr.f32.gmra.mxu0 %v347
    %v574 = vpop.f32.mrf.mxu0
    %v575 = vadd.f32 %v246, %v574
    %v576 = vpop.f32.mrf.mxu0
    %577 = vdwg.mxu0
    %578 = vst [vmem:[#allocation2] sm:$0xff] %v420
    %579 = vst [vmem:[#allocation2 + $0x8] sm:$0xff] %v425
    %580 = vst [vmem:[#allocation2 + $0x10] sm:$0xff] %v430
    %581 = vst [vmem:[#allocation2 + $0x18] sm:$0xff] %v435
    %582 = vst [vmem:[#allocation2 + $0x20] sm:$0xff] %v440
    %583 = vst [vmem:[#allocation2 + $0x28] sm:$0xff] %v445
    %584 = vst [vmem:[#allocation2 + $0x30] sm:$0xff] %v450
    %585 = vst [vmem:[#allocation2 + $0x38] sm:$0xff] %v455
    %586 = vst [vmem:[#allocation2 + $0x40] sm:$0xff] %v460
    %587 = vst [vmem:[#allocation2 + $0x48] sm:$0xff] %v465
    %588 = vst [vmem:[#allocation2 + $0x50] sm:$0xff] %v470
    %589 = vst [vmem:[#allocation2 + $0x58] sm:$0xff] %v475
    %590 = vst [vmem:[#allocation2 + $0x60] sm:$0xff] %v480
    %591 = vst [vmem:[#allocation2 + $0x68] sm:$0xff] %v485
    %592 = vst [vmem:[#allocation2 + $0x70] sm:$0xff] %v490
    %593 = vst [vmem:[#allocation2 + $0x78] sm:$0xff] %v495
    %594 = vst [vmem:[#allocation2 + $0x80] sm:$0xff] %v500
    %595 = vst [vmem:[#allocation2 + $0x88] sm:$0xff] %v505
    %596 = vst [vmem:[#allocation2 + $0x90] sm:$0xff] %v510
    %597 = vst [vmem:[#allocation2 + $0x98] sm:$0xff] %v515
    %598 = vst [vmem:[#allocation2 + $0xa0] sm:$0xff] %v520
    %599 = vst [vmem:[#allocation2 + $0xa8] sm:$0xff] %v525
    %600 = vst [vmem:[#allocation2 + $0xb0] sm:$0xff] %v530
    %601 = vst [vmem:[#allocation2 + $0xb8] sm:$0xff] %v535
    %602 = vst [vmem:[#allocation2 + $0xc0] sm:$0xff] %v540
    %603 = vst [vmem:[#allocation2 + $0xc8] sm:$0xff] %v545
    %604 = vst [vmem:[#allocation2 + $0xd0] sm:$0xff] %v550
    %605 = vst [vmem:[#allocation2 + $0xd8] sm:$0xff] %v555
    %606 = vst [vmem:[#allocation2 + $0xe0] sm:$0xff] %v560
    %607 = vst [vmem:[#allocation2 + $0xe8] sm:$0xff] %v565
    %608 = vst [vmem:[#allocation2 + $0xf0] sm:$0xff] %v570
    %609 = vst [vmem:[#allocation2 + $0xf8] sm:$0xff] %v575
    %s610 = scalar_lea.vmem %s0, 32
    %v611 = vld [vmem:[%s610] sm:$0xff]
    %v612 = vld [vmem:[%s610 + $0x8] sm:$0xff]
    %v613 = vld [vmem:[%s610 + $0x10] sm:$0xff]
    %v614 = vld [vmem:[%s610 + $0x18] sm:$0xf]
    %v616 = vsel %vm349, %v614, 0
    %618 = vmatprep.subr.mxu0 0.0
    %619 = vmatpush1.msra.mxu0 0.0
    %620 = vmatprep.subr.mxu0 0.0
    %621 = vmatpush1.msra.mxu0 0.0
    %622 = vmatprep.subr.mxu0 0.0
    %623 = vmatpush1.msra.mxu0 0.0
    %624 = vmatprep.subr.mxu0 0.0
    %625 = vmatpush1.msra.mxu0 0.0
    %626 = vmatprep.subr.mxu0 0.0
    %627 = vmatpush1.msra.mxu0 0.0
    %628 = vmatprep.subr.mxu0 0.0
    %629 = vmatpush1.msra.mxu0 0.0
    %630 = vmatprep.subr.mxu0 0.0
    %631 = vmatpush1.msra.mxu0 0.0
    %632 = vmatprep.subr.mxu0 0.0
    %633 = vmatpush1.msra.mxu0 0.0
    %634 = vmatprep.subr.mxu0 0.0
    %635 = vmatpush1.msra.mxu0 0.0
    %636 = vmatprep.subr.mxu0 0.0
    %637 = vmatpush1.msra.mxu0 0.0
    %638 = vmatprep.subr.mxu0 0.0
    %639 = vmatpush1.msra.mxu0 0.0
    %640 = vmatprep.subr.mxu0 0.0
    %641 = vmatpush1.msra.mxu0 0.0
    %642 = vmatprep.subr.mxu0 0.0
    %643 = vmatpush1.msra.mxu0 %v616
    %644 = vmatprep.subr.mxu0 0.0
    %645 = vmatpush1.msra.mxu0 %v613
    %646 = vmatprep.subr.mxu0 0.0
    %647 = vmatpush1.msra.mxu0 %v612
    %648 = vmatprep.subr.mxu0 0.0
    %649 = vmatpush1.msra.mxu0 %v611
    %650 = vmatprep.subr.mxu0 0.0
    %651 = vmatpush2.msra.mxu0 0.0
    %652 = vmatprep.subr.mxu0 0.0
    %653 = vmatpush2.msra.mxu0 0.0
    %654 = vmatprep.subr.mxu0 0.0
    %655 = vmatpush2.msra.mxu0 0.0
    %656 = vmatprep.subr.mxu0 0.0
    %657 = vmatpush2.msra.mxu0 0.0
    %658 = vmatprep.subr.mxu0 0.0
    %659 = vmatpush2.msra.mxu0 0.0
    %660 = vmatprep.subr.mxu0 0.0
    %661 = vmatpush2.msra.mxu0 0.0
    %662 = vmatprep.subr.mxu0 0.0
    %663 = vmatpush2.msra.mxu0 0.0
    %664 = vmatprep.subr.mxu0 0.0
    %665 = vmatpush2.msra.mxu0 0.0
    %666 = vmatprep.subr.mxu0 0.0
    %667 = vmatpush2.msra.mxu0 0.0
    %668 = vmatprep.subr.mxu0 0.0
    %669 = vmatpush2.msra.mxu0 0.0
    %670 = vmatprep.subr.mxu0 0.0
    %671 = vmatpush2.msra.mxu0 0.0
    %672 = vmatprep.subr.mxu0 0.0
    %673 = vmatpush2.msra.mxu0 0.0
    %674 = vmatprep.subr.mxu0 0.0
    %675 = vmatpush2.msra.mxu0 0.0
    %676 = vmatprep.subr.mxu0 0.0
    %677 = vmatpush2.msra.mxu0 0.0
    %678 = vmatprep.subr.mxu0 0.0
    %679 = vmatpush2.msra.mxu0 0.0
    %680 = vmatprep.subr.mxu0 0.0
    %681 = vmatpush2.msra.mxu0 0.0
    %682 = vmatprep.mubr.f32.mxu0 0.0
    %683 = vmatmul.mubr.f32.gmra.mxu0 %v254
    %v684 = vpop.f32.mrf.mxu0
    %v685 = vadd.f32 %v91, %v684
    %v686 = vpop.f32.mrf.mxu0
    %687 = vmatprep.mubr.f32.mxu0 0.0
    %688 = vmatmul.mubr.f32.gmra.mxu0 %v257
    %v689 = vpop.f32.mrf.mxu0
    %v690 = vadd.f32 %v96, %v689
    %v691 = vpop.f32.mrf.mxu0
    %692 = vmatprep.mubr.f32.mxu0 0.0
    %693 = vmatmul.mubr.f32.gmra.mxu0 %v260
    %v694 = vpop.f32.mrf.mxu0
    %v695 = vadd.f32 %v101, %v694
    %v696 = vpop.f32.mrf.mxu0
    %697 = vmatprep.mubr.f32.mxu0 0.0
    %698 = vmatmul.mubr.f32.gmra.mxu0 %v263
    %v699 = vpop.f32.mrf.mxu0
    %v700 = vadd.f32 %v106, %v699
    %v701 = vpop.f32.mrf.mxu0
    %702 = vmatprep.mubr.f32.mxu0 0.0
    %703 = vmatmul.mubr.f32.gmra.mxu0 %v266
    %v704 = vpop.f32.mrf.mxu0
    %v705 = vadd.f32 %v111, %v704
    %v706 = vpop.f32.mrf.mxu0
    %707 = vmatprep.mubr.f32.mxu0 0.0
    %708 = vmatmul.mubr.f32.gmra.mxu0 %v269
    %v709 = vpop.f32.mrf.mxu0
    %v710 = vadd.f32 %v116, %v709
    %v711 = vpop.f32.mrf.mxu0
    %712 = vmatprep.mubr.f32.mxu0 0.0
    %713 = vmatmul.mubr.f32.gmra.mxu0 %v272
    %v714 = vpop.f32.mrf.mxu0
    %v715 = vadd.f32 %v121, %v714
    %v716 = vpop.f32.mrf.mxu0
    %717 = vmatprep.mubr.f32.mxu0 0.0
    %718 = vmatmul.mubr.f32.gmra.mxu0 %v275
    %v719 = vpop.f32.mrf.mxu0
    %v720 = vadd.f32 %v126, %v719
    %v721 = vpop.f32.mrf.mxu0
    %722 = vmatprep.mubr.f32.mxu0 0.0
    %723 = vmatmul.mubr.f32.gmra.mxu0 %v278
    %v724 = vpop.f32.mrf.mxu0
    %v725 = vadd.f32 %v131, %v724
    %v726 = vpop.f32.mrf.mxu0
    %727 = vmatprep.mubr.f32.mxu0 0.0
    %728 = vmatmul.mubr.f32.gmra.mxu0 %v281
    %v729 = vpop.f32.mrf.mxu0
    %v730 = vadd.f32 %v136, %v729
    %v731 = vpop.f32.mrf.mxu0
    %732 = vmatprep.mubr.f32.mxu0 0.0
    %733 = vmatmul.mubr.f32.gmra.mxu0 %v284
    %v734 = vpop.f32.mrf.mxu0
    %v735 = vadd.f32 %v141, %v734
    %v736 = vpop.f32.mrf.mxu0
    %737 = vmatprep.mubr.f32.mxu0 0.0
    %738 = vmatmul.mubr.f32.gmra.mxu0 %v287
    %v739 = vpop.f32.mrf.mxu0
    %v740 = vadd.f32 %v146, %v739
    %v741 = vpop.f32.mrf.mxu0
    %742 = vmatprep.mubr.f32.mxu0 0.0
    %743 = vmatmul.mubr.f32.gmra.mxu0 %v290
    %v744 = vpop.f32.mrf.mxu0
    %v745 = vadd.f32 %v151, %v744
    %v746 = vpop.f32.mrf.mxu0
    %747 = vmatprep.mubr.f32.mxu0 0.0
    %748 = vmatmul.mubr.f32.gmra.mxu0 %v293
    %v749 = vpop.f32.mrf.mxu0
    %v750 = vadd.f32 %v156, %v749
    %v751 = vpop.f32.mrf.mxu0
    %752 = vmatprep.mubr.f32.mxu0 0.0
    %753 = vmatmul.mubr.f32.gmra.mxu0 %v296
    %v754 = vpop.f32.mrf.mxu0
    %v755 = vadd.f32 %v161, %v754
    %v756 = vpop.f32.mrf.mxu0
    %757 = vmatprep.mubr.f32.mxu0 0.0
    %758 = vmatmul.mubr.f32.gmra.mxu0 %v299
    %v759 = vpop.f32.mrf.mxu0
    %v760 = vadd.f32 %v166, %v759
    %v761 = vpop.f32.mrf.mxu0
    %762 = vmatprep.mubr.f32.mxu0 0.0
    %763 = vmatmul.mubr.f32.gmra.mxu0 %v302
    %v764 = vpop.f32.mrf.mxu0
    %v765 = vadd.f32 %v171, %v764
    %v766 = vpop.f32.mrf.mxu0
    %767 = vmatprep.mubr.f32.mxu0 0.0
    %768 = vmatmul.mubr.f32.gmra.mxu0 %v305
    %v769 = vpop.f32.mrf.mxu0
    %v770 = vadd.f32 %v176, %v769
    %v771 = vpop.f32.mrf.mxu0
    %772 = vmatprep.mubr.f32.mxu0 0.0
    %773 = vmatmul.mubr.f32.gmra.mxu0 %v308
    %v774 = vpop.f32.mrf.mxu0
    %v775 = vadd.f32 %v181, %v774
    %v776 = vpop.f32.mrf.mxu0
    %777 = vmatprep.mubr.f32.mxu0 0.0
    %778 = vmatmul.mubr.f32.gmra.mxu0 %v311
    %v779 = vpop.f32.mrf.mxu0
    %v780 = vadd.f32 %v186, %v779
    %v781 = vpop.f32.mrf.mxu0
    %782 = vmatprep.mubr.f32.mxu0 0.0
    %783 = vmatmul.mubr.f32.gmra.mxu0 %v314
    %v784 = vpop.f32.mrf.mxu0
    %v785 = vadd.f32 %v191, %v784
    %v786 = vpop.f32.mrf.mxu0
    %787 = vmatprep.mubr.f32.mxu0 0.0
    %788 = vmatmul.mubr.f32.gmra.mxu0 %v317
    %v789 = vpop.f32.mrf.mxu0
    %v790 = vadd.f32 %v196, %v789
    %v791 = vpop.f32.mrf.mxu0
    %792 = vmatprep.mubr.f32.mxu0 0.0
    %793 = vmatmul.mubr.f32.gmra.mxu0 %v320
    %v794 = vpop.f32.mrf.mxu0
    %v795 = vadd.f32 %v201, %v794
    %v796 = vpop.f32.mrf.mxu0
    %797 = vmatprep.mubr.f32.mxu0 0.0
    %798 = vmatmul.mubr.f32.gmra.mxu0 %v323
    %v799 = vpop.f32.mrf.mxu0
    %v800 = vadd.f32 %v206, %v799
    %v801 = vpop.f32.mrf.mxu0
    %802 = vmatprep.mubr.f32.mxu0 0.0
    %803 = vmatmul.mubr.f32.gmra.mxu0 %v326
    %v804 = vpop.f32.mrf.mxu0
    %v805 = vadd.f32 %v211, %v804
    %v806 = vpop.f32.mrf.mxu0
    %807 = vmatprep.mubr.f32.mxu0 0.0
    %808 = vmatmul.mubr.f32.gmra.mxu0 %v329
    %v809 = vpop.f32.mrf.mxu0
    %v810 = vadd.f32 %v216, %v809
    %v811 = vpop.f32.mrf.mxu0
    %812 = vmatprep.mubr.f32.mxu0 0.0
    %813 = vmatmul.mubr.f32.gmra.mxu0 %v332
    %v814 = vpop.f32.mrf.mxu0
    %v815 = vadd.f32 %v221, %v814
    %v816 = vpop.f32.mrf.mxu0
    %817 = vmatprep.mubr.f32.mxu0 0.0
    %818 = vmatmul.mubr.f32.gmra.mxu0 %v335
    %v819 = vpop.f32.mrf.mxu0
    %v820 = vadd.f32 %v226, %v819
    %v821 = vpop.f32.mrf.mxu0
    %822 = vmatprep.mubr.f32.mxu0 0.0
    %823 = vmatmul.mubr.f32.gmra.mxu0 %v338
    %v824 = vpop.f32.mrf.mxu0
    %v825 = vadd.f32 %v231, %v824
    %v826 = vpop.f32.mrf.mxu0
    %827 = vmatprep.mubr.f32.mxu0 0.0
    %828 = vmatmul.mubr.f32.gmra.mxu0 %v341
    %v829 = vpop.f32.mrf.mxu0
    %v830 = vadd.f32 %v236, %v829
    %v831 = vpop.f32.mrf.mxu0
    %832 = vmatprep.mubr.f32.mxu0 0.0
    %833 = vmatmul.mubr.f32.gmra.mxu0 %v344
    %v834 = vpop.f32.mrf.mxu0
    %v835 = vadd.f32 %v241, %v834
    %v836 = vpop.f32.mrf.mxu0
    %837 = vmatprep.mubr.f32.mxu0 0.0
    %838 = vmatmul.mubr.f32.gmra.mxu0 %v347
    %v839 = vpop.f32.mrf.mxu0
    %v840 = vadd.f32 %v246, %v839
    %v841 = vpop.f32.mrf.mxu0
    %842 = vdwg.mxu0
    %s843 = scalar_lea.vmem [#allocation2], 256
    %844 = vst [vmem:[%s843] sm:$0xff] %v685
    %845 = vst [vmem:[%s843 + $0x8] sm:$0xff] %v690
    %846 = vst [vmem:[%s843 + $0x10] sm:$0xff] %v695
    %847 = vst [vmem:[%s843 + $0x18] sm:$0xff] %v700
    %848 = vst [vmem:[%s843 + $0x20] sm:$0xff] %v705
    %849 = vst [vmem:[%s843 + $0x28] sm:$0xff] %v710
    %850 = vst [vmem:[%s843 + $0x30] sm:$0xff] %v715
    %851 = vst [vmem:[%s843 + $0x38] sm:$0xff] %v720
    %852 = vst [vmem:[%s843 + $0x40] sm:$0xff] %v725
    %853 = vst [vmem:[%s843 + $0x48] sm:$0xff] %v730
    %854 = vst [vmem:[%s843 + $0x50] sm:$0xff] %v735
    %855 = vst [vmem:[%s843 + $0x58] sm:$0xff] %v740
    %856 = vst [vmem:[%s843 + $0x60] sm:$0xff] %v745
    %857 = vst [vmem:[%s843 + $0x68] sm:$0xff] %v750
    %858 = vst [vmem:[%s843 + $0x70] sm:$0xff] %v755
    %859 = vst [vmem:[%s843 + $0x78] sm:$0xff] %v760
    %860 = vst [vmem:[%s843 + $0x80] sm:$0xff] %v765
    %861 = vst [vmem:[%s843 + $0x88] sm:$0xff] %v770
    %862 = vst [vmem:[%s843 + $0x90] sm:$0xff] %v775
    %863 = vst [vmem:[%s843 + $0x98] sm:$0xff] %v780
    %864 = vst [vmem:[%s843 + $0xa0] sm:$0xff] %v785
    %865 = vst [vmem:[%s843 + $0xa8] sm:$0xff] %v790
    %866 = vst [vmem:[%s843 + $0xb0] sm:$0xff] %v795
    %867 = vst [vmem:[%s843 + $0xb8] sm:$0xff] %v800
    %868 = vst [vmem:[%s843 + $0xc0] sm:$0xff] %v805
    %869 = vst [vmem:[%s843 + $0xc8] sm:$0xff] %v810
    %870 = vst [vmem:[%s843 + $0xd0] sm:$0xff] %v815
    %871 = vst [vmem:[%s843 + $0xd8] sm:$0xff] %v820
    %872 = vst [vmem:[%s843 + $0xe0] sm:$0xff] %v825
    %873 = vst [vmem:[%s843 + $0xe8] sm:$0xff] %v830
    %874 = vst [vmem:[%s843 + $0xf0] sm:$0xff] %v835
    %875 = vst [vmem:[%s843 + $0xf8] sm:$0xff] %v840
    %s876 = scalar_lea.vmem %s0, 64
    %v877 = vld [vmem:[%s876] sm:$0xff]
    %v878 = vld [vmem:[%s876 + $0x8] sm:$0xff]
    %v879 = vld [vmem:[%s876 + $0x10] sm:$0xff]
    %v880 = vld [vmem:[%s876 + $0x18] sm:$0xf]
    %v882 = vsel %vm349, %v880, 0
    %884 = vmatprep.subr.mxu0 0.0
    %885 = vmatpush1.msra.mxu0 0.0
    %886 = vmatprep.subr.mxu0 0.0
    %887 = vmatpush1.msra.mxu0 0.0
    %888 = vmatprep.subr.mxu0 0.0
    %889 = vmatpush1.msra.mxu0 0.0
    %890 = vmatprep.subr.mxu0 0.0
    %891 = vmatpush1.msra.mxu0 0.0
    %892 = vmatprep.subr.mxu0 0.0
    %893 = vmatpush1.msra.mxu0 0.0
    %894 = vmatprep.subr.mxu0 0.0
    %895 = vmatpush1.msra.mxu0 0.0
    %896 = vmatprep.subr.mxu0 0.0
    %897 = vmatpush1.msra.mxu0 0.0
    %898 = vmatprep.subr.mxu0 0.0
    %899 = vmatpush1.msra.mxu0 0.0
    %900 = vmatprep.subr.mxu0 0.0
    %901 = vmatpush1.msra.mxu0 0.0
    %902 = vmatprep.subr.mxu0 0.0
    %903 = vmatpush1.msra.mxu0 0.0
    %904 = vmatprep.subr.mxu0 0.0
    %905 = vmatpush1.msra.mxu0 0.0
    %906 = vmatprep.subr.mxu0 0.0
    %907 = vmatpush1.msra.mxu0 0.0
    %908 = vmatprep.subr.mxu0 0.0
    %909 = vmatpush1.msra.mxu0 %v882
    %910 = vmatprep.subr.mxu0 0.0
    %911 = vmatpush1.msra.mxu0 %v879
    %912 = vmatprep.subr.mxu0 0.0
    %913 = vmatpush1.msra.mxu0 %v878
    %914 = vmatprep.subr.mxu0 0.0
    %915 = vmatpush1.msra.mxu0 %v877
    %916 = vmatprep.subr.mxu0 0.0
    %917 = vmatpush2.msra.mxu0 0.0
    %918 = vmatprep.subr.mxu0 0.0
    %919 = vmatpush2.msra.mxu0 0.0
    %920 = vmatprep.subr.mxu0 0.0
    %921 = vmatpush2.msra.mxu0 0.0
    %922 = vmatprep.subr.mxu0 0.0
    %923 = vmatpush2.msra.mxu0 0.0
    %924 = vmatprep.subr.mxu0 0.0
    %925 = vmatpush2.msra.mxu0 0.0
    %926 = vmatprep.subr.mxu0 0.0
    %927 = vmatpush2.msra.mxu0 0.0
    %928 = vmatprep.subr.mxu0 0.0
    %929 = vmatpush2.msra.mxu0 0.0
    %930 = vmatprep.subr.mxu0 0.0
    %931 = vmatpush2.msra.mxu0 0.0
    %932 = vmatprep.subr.mxu0 0.0
    %933 = vmatpush2.msra.mxu0 0.0
    %934 = vmatprep.subr.mxu0 0.0
    %935 = vmatpush2.msra.mxu0 0.0
    %936 = vmatprep.subr.mxu0 0.0
    %937 = vmatpush2.msra.mxu0 0.0
    %938 = vmatprep.subr.mxu0 0.0
    %939 = vmatpush2.msra.mxu0 0.0
    %940 = vmatprep.subr.mxu0 0.0
    %941 = vmatpush2.msra.mxu0 0.0
    %942 = vmatprep.subr.mxu0 0.0
    %943 = vmatpush2.msra.mxu0 0.0
    %944 = vmatprep.subr.mxu0 0.0
    %945 = vmatpush2.msra.mxu0 0.0
    %946 = vmatprep.subr.mxu0 0.0
    %947 = vmatpush2.msra.mxu0 0.0
    %948 = vmatprep.mubr.f32.mxu0 0.0
    %949 = vmatmul.mubr.f32.gmra.mxu0 %v254
    %v950 = vpop.f32.mrf.mxu0
    %v951 = vadd.f32 %v91, %v950
    %v952 = vpop.f32.mrf.mxu0
    %953 = vmatprep.mubr.f32.mxu0 0.0
    %954 = vmatmul.mubr.f32.gmra.mxu0 %v257
    %v955 = vpop.f32.mrf.mxu0
    %v956 = vadd.f32 %v96, %v955
    %v957 = vpop.f32.mrf.mxu0
    %958 = vmatprep.mubr.f32.mxu0 0.0
    %959 = vmatmul.mubr.f32.gmra.mxu0 %v260
    %v960 = vpop.f32.mrf.mxu0
    %v961 = vadd.f32 %v101, %v960
    %v962 = vpop.f32.mrf.mxu0
    %963 = vmatprep.mubr.f32.mxu0 0.0
    %964 = vmatmul.mubr.f32.gmra.mxu0 %v263
    %v965 = vpop.f32.mrf.mxu0
    %v966 = vadd.f32 %v106, %v965
    %v967 = vpop.f32.mrf.mxu0
    %968 = vmatprep.mubr.f32.mxu0 0.0
    %969 = vmatmul.mubr.f32.gmra.mxu0 %v266
    %v970 = vpop.f32.mrf.mxu0
    %v971 = vadd.f32 %v111, %v970
    %v972 = vpop.f32.mrf.mxu0
    %973 = vmatprep.mubr.f32.mxu0 0.0
    %974 = vmatmul.mubr.f32.gmra.mxu0 %v269
    %v975 = vpop.f32.mrf.mxu0
    %v976 = vadd.f32 %v116, %v975
    %v977 = vpop.f32.mrf.mxu0
    %978 = vmatprep.mubr.f32.mxu0 0.0
    %979 = vmatmul.mubr.f32.gmra.mxu0 %v272
    %v980 = vpop.f32.mrf.mxu0
    %v981 = vadd.f32 %v121, %v980
    %v982 = vpop.f32.mrf.mxu0
    %983 = vmatprep.mubr.f32.mxu0 0.0
    %984 = vmatmul.mubr.f32.gmra.mxu0 %v275
    %v985 = vpop.f32.mrf.mxu0
    %v986 = vadd.f32 %v126, %v985
    %v987 = vpop.f32.mrf.mxu0
    %988 = vmatprep.mubr.f32.mxu0 0.0
    %989 = vmatmul.mubr.f32.gmra.mxu0 %v278
    %v990 = vpop.f32.mrf.mxu0
    %v991 = vadd.f32 %v131, %v990
    %v992 = vpop.f32.mrf.mxu0
    %993 = vmatprep.mubr.f32.mxu0 0.0
    %994 = vmatmul.mubr.f32.gmra.mxu0 %v281
    %v995 = vpop.f32.mrf.mxu0
    %v996 = vadd.f32 %v136, %v995
    %v997 = vpop.f32.mrf.mxu0
    %998 = vmatprep.mubr.f32.mxu0 0.0
    %999 = vmatmul.mubr.f32.gmra.mxu0 %v284
    %v1000 = vpop.f32.mrf.mxu0
    %v1001 = vadd.f32 %v141, %v1000
    %v1002 = vpop.f32.mrf.mxu0
    %1003 = vmatprep.mubr.f32.mxu0 0.0
    %1004 = vmatmul.mubr.f32.gmra.mxu0 %v287
    %v1005 = vpop.f32.mrf.mxu0
    %v1006 = vadd.f32 %v146, %v1005
    %v1007 = vpop.f32.mrf.mxu0
    %1008 = vmatprep.mubr.f32.mxu0 0.0
    %1009 = vmatmul.mubr.f32.gmra.mxu0 %v290
    %v1010 = vpop.f32.mrf.mxu0
    %v1011 = vadd.f32 %v151, %v1010
    %v1012 = vpop.f32.mrf.mxu0
    %1013 = vmatprep.mubr.f32.mxu0 0.0
    %1014 = vmatmul.mubr.f32.gmra.mxu0 %v293
    %v1015 = vpop.f32.mrf.mxu0
    %v1016 = vadd.f32 %v156, %v1015
    %v1017 = vpop.f32.mrf.mxu0
    %1018 = vmatprep.mubr.f32.mxu0 0.0
    %1019 = vmatmul.mubr.f32.gmra.mxu0 %v296
    %v1020 = vpop.f32.mrf.mxu0
    %v1021 = vadd.f32 %v161, %v1020
    %v1022 = vpop.f32.mrf.mxu0
    %1023 = vmatprep.mubr.f32.mxu0 0.0
    %1024 = vmatmul.mubr.f32.gmra.mxu0 %v299
    %v1025 = vpop.f32.mrf.mxu0
    %v1026 = vadd.f32 %v166, %v1025
    %v1027 = vpop.f32.mrf.mxu0
    %1028 = vmatprep.mubr.f32.mxu0 0.0
    %1029 = vmatmul.mubr.f32.gmra.mxu0 %v302
    %v1030 = vpop.f32.mrf.mxu0
    %v1031 = vadd.f32 %v171, %v1030
    %v1032 = vpop.f32.mrf.mxu0
    %1033 = vmatprep.mubr.f32.mxu0 0.0
    %1034 = vmatmul.mubr.f32.gmra.mxu0 %v305
    %v1035 = vpop.f32.mrf.mxu0
    %v1036 = vadd.f32 %v176, %v1035
    %v1037 = vpop.f32.mrf.mxu0
    %1038 = vmatprep.mubr.f32.mxu0 0.0
    %1039 = vmatmul.mubr.f32.gmra.mxu0 %v308
    %v1040 = vpop.f32.mrf.mxu0
    %v1041 = vadd.f32 %v181, %v1040
    %v1042 = vpop.f32.mrf.mxu0
    %1043 = vmatprep.mubr.f32.mxu0 0.0
    %1044 = vmatmul.mubr.f32.gmra.mxu0 %v311
    %v1045 = vpop.f32.mrf.mxu0
    %v1046 = vadd.f32 %v186, %v1045
    %v1047 = vpop.f32.mrf.mxu0
    %1048 = vmatprep.mubr.f32.mxu0 0.0
    %1049 = vmatmul.mubr.f32.gmra.mxu0 %v314
    %v1050 = vpop.f32.mrf.mxu0
    %v1051 = vadd.f32 %v191, %v1050
    %v1052 = vpop.f32.mrf.mxu0
    %1053 = vmatprep.mubr.f32.mxu0 0.0
    %1054 = vmatmul.mubr.f32.gmra.mxu0 %v317
    %v1055 = vpop.f32.mrf.mxu0
    %v1056 = vadd.f32 %v196, %v1055
    %v1057 = vpop.f32.mrf.mxu0
    %1058 = vmatprep.mubr.f32.mxu0 0.0
    %1059 = vmatmul.mubr.f32.gmra.mxu0 %v320
    %v1060 = vpop.f32.mrf.mxu0
    %v1061 = vadd.f32 %v201, %v1060
    %v1062 = vpop.f32.mrf.mxu0
    %1063 = vmatprep.mubr.f32.mxu0 0.0
    %1064 = vmatmul.mubr.f32.gmra.mxu0 %v323
    %v1065 = vpop.f32.mrf.mxu0
    %v1066 = vadd.f32 %v206, %v1065
    %v1067 = vpop.f32.mrf.mxu0
    %1068 = vmatprep.mubr.f32.mxu0 0.0
    %1069 = vmatmul.mubr.f32.gmra.mxu0 %v326
    %v1070 = vpop.f32.mrf.mxu0
    %v1071 = vadd.f32 %v211, %v1070
    %v1072 = vpop.f32.mrf.mxu0
    %1073 = vmatprep.mubr.f32.mxu0 0.0
    %1074 = vmatmul.mubr.f32.gmra.mxu0 %v329
    %v1075 = vpop.f32.mrf.mxu0
    %v1076 = vadd.f32 %v216, %v1075
    %v1077 = vpop.f32.mrf.mxu0
    %1078 = vmatprep.mubr.f32.mxu0 0.0
    %1079 = vmatmul.mubr.f32.gmra.mxu0 %v332
    %v1080 = vpop.f32.mrf.mxu0
    %v1081 = vadd.f32 %v221, %v1080
    %v1082 = vpop.f32.mrf.mxu0
    %1083 = vmatprep.mubr.f32.mxu0 0.0
    %1084 = vmatmul.mubr.f32.gmra.mxu0 %v335
    %v1085 = vpop.f32.mrf.mxu0
    %v1086 = vadd.f32 %v226, %v1085
    %v1087 = vpop.f32.mrf.mxu0
    %1088 = vmatprep.mubr.f32.mxu0 0.0
    %1089 = vmatmul.mubr.f32.gmra.mxu0 %v338
    %v1090 = vpop.f32.mrf.mxu0
    %v1091 = vadd.f32 %v231, %v1090
    %v1092 = vpop.f32.mrf.mxu0
    %1093 = vmatprep.mubr.f32.mxu0 0.0
    %1094 = vmatmul.mubr.f32.gmra.mxu0 %v341
    %v1095 = vpop.f32.mrf.mxu0
    %v1096 = vadd.f32 %v236, %v1095
    %v1097 = vpop.f32.mrf.mxu0
    %1098 = vmatprep.mubr.f32.mxu0 0.0
    %1099 = vmatmul.mubr.f32.gmra.mxu0 %v344
    %v1100 = vpop.f32.mrf.mxu0
    %v1101 = vadd.f32 %v241, %v1100
    %v1102 = vpop.f32.mrf.mxu0
    %1103 = vmatprep.mubr.f32.mxu0 0.0
    %1104 = vmatmul.mubr.f32.gmra.mxu0 %v347
    %v1105 = vpop.f32.mrf.mxu0
    %v1106 = vadd.f32 %v246, %v1105
    %v1107 = vpop.f32.mrf.mxu0
    %1108 = vdwg.mxu0
    %s1109 = scalar_lea.vmem [#allocation2], 512
    %1110 = vst [vmem:[%s1109] sm:$0xff] %v951
    %1111 = vst [vmem:[%s1109 + $0x8] sm:$0xff] %v956
    %1112 = vst [vmem:[%s1109 + $0x10] sm:$0xff] %v961
    %1113 = vst [vmem:[%s1109 + $0x18] sm:$0xff] %v966
    %1114 = vst [vmem:[%s1109 + $0x20] sm:$0xff] %v971
    %1115 = vst [vmem:[%s1109 + $0x28] sm:$0xff] %v976
    %1116 = vst [vmem:[%s1109 + $0x30] sm:$0xff] %v981
    %1117 = vst [vmem:[%s1109 + $0x38] sm:$0xff] %v986
    %1118 = vst [vmem:[%s1109 + $0x40] sm:$0xff] %v991
    %1119 = vst [vmem:[%s1109 + $0x48] sm:$0xff] %v996
    %1120 = vst [vmem:[%s1109 + $0x50] sm:$0xff] %v1001
    %1121 = vst [vmem:[%s1109 + $0x58] sm:$0xff] %v1006
    %1122 = vst [vmem:[%s1109 + $0x60] sm:$0xff] %v1011
    %1123 = vst [vmem:[%s1109 + $0x68] sm:$0xff] %v1016
    %1124 = vst [vmem:[%s1109 + $0x70] sm:$0xff] %v1021
    %1125 = vst [vmem:[%s1109 + $0x78] sm:$0xff] %v1026
    %1126 = vst [vmem:[%s1109 + $0x80] sm:$0xff] %v1031
    %1127 = vst [vmem:[%s1109 + $0x88] sm:$0xff] %v1036
    %1128 = vst [vmem:[%s1109 + $0x90] sm:$0xff] %v1041
    %1129 = vst [vmem:[%s1109 + $0x98] sm:$0xff] %v1046
    %1130 = vst [vmem:[%s1109 + $0xa0] sm:$0xff] %v1051
    %1131 = vst [vmem:[%s1109 + $0xa8] sm:$0xff] %v1056
    %1132 = vst [vmem:[%s1109 + $0xb0] sm:$0xff] %v1061
    %1133 = vst [vmem:[%s1109 + $0xb8] sm:$0xff] %v1066
    %1134 = vst [vmem:[%s1109 + $0xc0] sm:$0xff] %v1071
    %1135 = vst [vmem:[%s1109 + $0xc8] sm:$0xff] %v1076
    %1136 = vst [vmem:[%s1109 + $0xd0] sm:$0xff] %v1081
    %1137 = vst [vmem:[%s1109 + $0xd8] sm:$0xff] %v1086
    %1138 = vst [vmem:[%s1109 + $0xe0] sm:$0xff] %v1091
    %1139 = vst [vmem:[%s1109 + $0xe8] sm:$0xff] %v1096
    %1140 = vst [vmem:[%s1109 + $0xf0] sm:$0xff] %v1101
    %1141 = vst [vmem:[%s1109 + $0xf8] sm:$0xff] %v1106
    %s1142 = scalar_lea.vmem %s0, 96
    %v1143 = vld [vmem:[%s1142] sm:$0xff]
    %v1144 = vld [vmem:[%s1142 + $0x8] sm:$0xff]
    %v1145 = vld [vmem:[%s1142 + $0x10] sm:$0xff]
    %v1146 = vld [vmem:[%s1142 + $0x18] sm:$0xf]
    %v1148 = vsel %vm349, %v1146, 0
    %1150 = vmatprep.subr.mxu0 0.0
    %1151 = vmatpush1.msra.mxu0 0.0
    %1152 = vmatprep.subr.mxu0 0.0
    %1153 = vmatpush1.msra.mxu0 0.0
    %1154 = vmatprep.subr.mxu0 0.0
    %1155 = vmatpush1.msra.mxu0 0.0
    %1156 = vmatprep.subr.mxu0 0.0
    %1157 = vmatpush1.msra.mxu0 0.0
    %1158 = vmatprep.subr.mxu0 0.0
    %1159 = vmatpush1.msra.mxu0 0.0
    %1160 = vmatprep.subr.mxu0 0.0
    %1161 = vmatpush1.msra.mxu0 0.0
    %1162 = vmatprep.subr.mxu0 0.0
    %1163 = vmatpush1.msra.mxu0 0.0
    %1164 = vmatprep.subr.mxu0 0.0
    %1165 = vmatpush1.msra.mxu0 0.0
    %1166 = vmatprep.subr.mxu0 0.0
    %1167 = vmatpush1.msra.mxu0 0.0
    %1168 = vmatprep.subr.mxu0 0.0
    %1169 = vmatpush1.msra.mxu0 0.0
    %1170 = vmatprep.subr.mxu0 0.0
    %1171 = vmatpush1.msra.mxu0 0.0
    %1172 = vmatprep.subr.mxu0 0.0
    %1173 = vmatpush1.msra.mxu0 0.0
    %1174 = vmatprep.subr.mxu0 0.0
    %1175 = vmatpush1.msra.mxu0 %v1148
    %1176 = vmatprep.subr.mxu0 0.0
    %1177 = vmatpush1.msra.mxu0 %v1145
    %1178 = vmatprep.subr.mxu0 0.0
    %1179 = vmatpush1.msra.mxu0 %v1144
    %1180 = vmatprep.subr.mxu0 0.0
    %1181 = vmatpush1.msra.mxu0 %v1143
    %1182 = vmatprep.subr.mxu0 0.0
    %1183 = vmatpush2.msra.mxu0 0.0
    %1184 = vmatprep.subr.mxu0 0.0
    %1185 = vmatpush2.msra.mxu0 0.0
    %1186 = vmatprep.subr.mxu0 0.0
    %1187 = vmatpush2.msra.mxu0 0.0
    %1188 = vmatprep.subr.mxu0 0.0
    %1189 = vmatpush2.msra.mxu0 0.0
    %1190 = vmatprep.subr.mxu0 0.0
    %1191 = vmatpush2.msra.mxu0 0.0
    %1192 = vmatprep.subr.mxu0 0.0
    %1193 = vmatpush2.msra.mxu0 0.0
    %1194 = vmatprep.subr.mxu0 0.0
    %1195 = vmatpush2.msra.mxu0 0.0
    %1196 = vmatprep.subr.mxu0 0.0
    %1197 = vmatpush2.msra.mxu0 0.0
    %1198 = vmatprep.subr.mxu0 0.0
    %1199 = vmatpush2.msra.mxu0 0.0
    %1200 = vmatprep.subr.mxu0 0.0
    %1201 = vmatpush2.msra.mxu0 0.0
    %1202 = vmatprep.subr.mxu0 0.0
    %1203 = vmatpush2.msra.mxu0 0.0
    %1204 = vmatprep.subr.mxu0 0.0
    %1205 = vmatpush2.msra.mxu0 0.0
    %1206 = vmatprep.subr.mxu0 0.0
    %1207 = vmatpush2.msra.mxu0 0.0
    %1208 = vmatprep.subr.mxu0 0.0
    %1209 = vmatpush2.msra.mxu0 0.0
    %1210 = vmatprep.subr.mxu0 0.0
    %1211 = vmatpush2.msra.mxu0 0.0
    %1212 = vmatprep.subr.mxu0 0.0
    %1213 = vmatpush2.msra.mxu0 0.0
    %1214 = vmatprep.mubr.f32.mxu0 0.0
    %1215 = vmatmul.mubr.f32.gmra.mxu0 %v254
    %v1216 = vpop.f32.mrf.mxu0
    %v1217 = vadd.f32 %v91, %v1216
    %v1218 = vpop.f32.mrf.mxu0
    %1219 = vmatprep.mubr.f32.mxu0 0.0
    %1220 = vmatmul.mubr.f32.gmra.mxu0 %v257
    %v1221 = vpop.f32.mrf.mxu0
    %v1222 = vadd.f32 %v96, %v1221
    %v1223 = vpop.f32.mrf.mxu0
    %1224 = vmatprep.mubr.f32.mxu0 0.0
    %1225 = vmatmul.mubr.f32.gmra.mxu0 %v260
    %v1226 = vpop.f32.mrf.mxu0
    %v1227 = vadd.f32 %v101, %v1226
    %v1228 = vpop.f32.mrf.mxu0
    %1229 = vmatprep.mubr.f32.mxu0 0.0
    %1230 = vmatmul.mubr.f32.gmra.mxu0 %v263
    %v1231 = vpop.f32.mrf.mxu0
    %v1232 = vadd.f32 %v106, %v1231
    %v1233 = vpop.f32.mrf.mxu0
    %1234 = vmatprep.mubr.f32.mxu0 0.0
    %1235 = vmatmul.mubr.f32.gmra.mxu0 %v266
    %v1236 = vpop.f32.mrf.mxu0
    %v1237 = vadd.f32 %v111, %v1236
    %v1238 = vpop.f32.mrf.mxu0
    %1239 = vmatprep.mubr.f32.mxu0 0.0
    %1240 = vmatmul.mubr.f32.gmra.mxu0 %v269
    %v1241 = vpop.f32.mrf.mxu0
    %v1242 = vadd.f32 %v116, %v1241
    %v1243 = vpop.f32.mrf.mxu0
    %1244 = vmatprep.mubr.f32.mxu0 0.0
    %1245 = vmatmul.mubr.f32.gmra.mxu0 %v272
    %v1246 = vpop.f32.mrf.mxu0
    %v1247 = vadd.f32 %v121, %v1246
    %v1248 = vpop.f32.mrf.mxu0
    %1249 = vmatprep.mubr.f32.mxu0 0.0
    %1250 = vmatmul.mubr.f32.gmra.mxu0 %v275
    %v1251 = vpop.f32.mrf.mxu0
    %v1252 = vadd.f32 %v126, %v1251
    %v1253 = vpop.f32.mrf.mxu0
    %1254 = vmatprep.mubr.f32.mxu0 0.0
    %1255 = vmatmul.mubr.f32.gmra.mxu0 %v278
    %v1256 = vpop.f32.mrf.mxu0
    %v1257 = vadd.f32 %v131, %v1256
    %v1258 = vpop.f32.mrf.mxu0
    %1259 = vmatprep.mubr.f32.mxu0 0.0
    %1260 = vmatmul.mubr.f32.gmra.mxu0 %v281
    %v1261 = vpop.f32.mrf.mxu0
    %v1262 = vadd.f32 %v136, %v1261
    %v1263 = vpop.f32.mrf.mxu0
    %1264 = vmatprep.mubr.f32.mxu0 0.0
    %1265 = vmatmul.mubr.f32.gmra.mxu0 %v284
    %v1266 = vpop.f32.mrf.mxu0
    %v1267 = vadd.f32 %v141, %v1266
    %v1268 = vpop.f32.mrf.mxu0
    %1269 = vmatprep.mubr.f32.mxu0 0.0
    %1270 = vmatmul.mubr.f32.gmra.mxu0 %v287
    %v1271 = vpop.f32.mrf.mxu0
    %v1272 = vadd.f32 %v146, %v1271
    %v1273 = vpop.f32.mrf.mxu0
    %1274 = vmatprep.mubr.f32.mxu0 0.0
    %1275 = vmatmul.mubr.f32.gmra.mxu0 %v290
    %v1276 = vpop.f32.mrf.mxu0
    %v1277 = vadd.f32 %v151, %v1276
    %v1278 = vpop.f32.mrf.mxu0
    %1279 = vmatprep.mubr.f32.mxu0 0.0
    %1280 = vmatmul.mubr.f32.gmra.mxu0 %v293
    %v1281 = vpop.f32.mrf.mxu0
    %v1282 = vadd.f32 %v156, %v1281
    %v1283 = vpop.f32.mrf.mxu0
    %1284 = vmatprep.mubr.f32.mxu0 0.0
    %1285 = vmatmul.mubr.f32.gmra.mxu0 %v296
    %v1286 = vpop.f32.mrf.mxu0
    %v1287 = vadd.f32 %v161, %v1286
    %v1288 = vpop.f32.mrf.mxu0
    %1289 = vmatprep.mubr.f32.mxu0 0.0
    %1290 = vmatmul.mubr.f32.gmra.mxu0 %v299
    %v1291 = vpop.f32.mrf.mxu0
    %v1292 = vadd.f32 %v166, %v1291
    %v1293 = vpop.f32.mrf.mxu0
    %1294 = vmatprep.mubr.f32.mxu0 0.0
    %1295 = vmatmul.mubr.f32.gmra.mxu0 %v302
    %v1296 = vpop.f32.mrf.mxu0
    %v1297 = vadd.f32 %v171, %v1296
    %v1298 = vpop.f32.mrf.mxu0
    %1299 = vmatprep.mubr.f32.mxu0 0.0
    %1300 = vmatmul.mubr.f32.gmra.mxu0 %v305
    %v1301 = vpop.f32.mrf.mxu0
    %v1302 = vadd.f32 %v176, %v1301
    %v1303 = vpop.f32.mrf.mxu0
    %1304 = vmatprep.mubr.f32.mxu0 0.0
    %1305 = vmatmul.mubr.f32.gmra.mxu0 %v308
    %v1306 = vpop.f32.mrf.mxu0
    %v1307 = vadd.f32 %v181, %v1306
    %v1308 = vpop.f32.mrf.mxu0
    %1309 = vmatprep.mubr.f32.mxu0 0.0
    %1310 = vmatmul.mubr.f32.gmra.mxu0 %v311
    %v1311 = vpop.f32.mrf.mxu0
    %v1312 = vadd.f32 %v186, %v1311
    %v1313 = vpop.f32.mrf.mxu0
    %1314 = vmatprep.mubr.f32.mxu0 0.0
    %1315 = vmatmul.mubr.f32.gmra.mxu0 %v314
    %v1316 = vpop.f32.mrf.mxu0
    %v1317 = vadd.f32 %v191, %v1316
    %v1318 = vpop.f32.mrf.mxu0
    %1319 = vmatprep.mubr.f32.mxu0 0.0
    %1320 = vmatmul.mubr.f32.gmra.mxu0 %v317
    %v1321 = vpop.f32.mrf.mxu0
    %v1322 = vadd.f32 %v196, %v1321
    %v1323 = vpop.f32.mrf.mxu0
    %1324 = vmatprep.mubr.f32.mxu0 0.0
    %1325 = vmatmul.mubr.f32.gmra.mxu0 %v320
    %v1326 = vpop.f32.mrf.mxu0
    %v1327 = vadd.f32 %v201, %v1326
    %v1328 = vpop.f32.mrf.mxu0
    %1329 = vmatprep.mubr.f32.mxu0 0.0
    %1330 = vmatmul.mubr.f32.gmra.mxu0 %v323
    %v1331 = vpop.f32.mrf.mxu0
    %v1332 = vadd.f32 %v206, %v1331
    %v1333 = vpop.f32.mrf.mxu0
    %1334 = vmatprep.mubr.f32.mxu0 0.0
    %1335 = vmatmul.mubr.f32.gmra.mxu0 %v326
    %v1336 = vpop.f32.mrf.mxu0
    %v1337 = vadd.f32 %v211, %v1336
    %v1338 = vpop.f32.mrf.mxu0
    %1339 = vmatprep.mubr.f32.mxu0 0.0
    %1340 = vmatmul.mubr.f32.gmra.mxu0 %v329
    %v1341 = vpop.f32.mrf.mxu0
    %v1342 = vadd.f32 %v216, %v1341
    %v1343 = vpop.f32.mrf.mxu0
    %1344 = vmatprep.mubr.f32.mxu0 0.0
    %1345 = vmatmul.mubr.f32.gmra.mxu0 %v332
    %v1346 = vpop.f32.mrf.mxu0
    %v1347 = vadd.f32 %v221, %v1346
    %v1348 = vpop.f32.mrf.mxu0
    %1349 = vmatprep.mubr.f32.mxu0 0.0
    %1350 = vmatmul.mubr.f32.gmra.mxu0 %v335
    %v1351 = vpop.f32.mrf.mxu0
    %v1352 = vadd.f32 %v226, %v1351
    %v1353 = vpop.f32.mrf.mxu0
    %1354 = vmatprep.mubr.f32.mxu0 0.0
    %1355 = vmatmul.mubr.f32.gmra.mxu0 %v338
    %v1356 = vpop.f32.mrf.mxu0
    %v1357 = vadd.f32 %v231, %v1356
    %v1358 = vpop.f32.mrf.mxu0
    %1359 = vmatprep.mubr.f32.mxu0 0.0
    %1360 = vmatmul.mubr.f32.gmra.mxu0 %v341
    %v1361 = vpop.f32.mrf.mxu0
    %v1362 = vadd.f32 %v236, %v1361
    %v1363 = vpop.f32.mrf.mxu0
    %1364 = vmatprep.mubr.f32.mxu0 0.0
    %1365 = vmatmul.mubr.f32.gmra.mxu0 %v344
    %v1366 = vpop.f32.mrf.mxu0
    %v1367 = vadd.f32 %v241, %v1366
    %v1368 = vpop.f32.mrf.mxu0
    %1369 = vmatprep.mubr.f32.mxu0 0.0
    %1370 = vmatmul.mubr.f32.gmra.mxu0 %v347
    %v1371 = vpop.f32.mrf.mxu0
    %v1372 = vadd.f32 %v246, %v1371
    %v1373 = vpop.f32.mrf.mxu0
    %1374 = vdwg.mxu0
    %s1375 = scalar_lea.vmem [#allocation2], 768
    %1376 = vst [vmem:[%s1375] sm:$0xff] %v1217
    %1377 = vst [vmem:[%s1375 + $0x8] sm:$0xff] %v1222
    %1378 = vst [vmem:[%s1375 + $0x10] sm:$0xff] %v1227
    %1379 = vst [vmem:[%s1375 + $0x18] sm:$0xff] %v1232
    %1380 = vst [vmem:[%s1375 + $0x20] sm:$0xff] %v1237
    %1381 = vst [vmem:[%s1375 + $0x28] sm:$0xff] %v1242
    %1382 = vst [vmem:[%s1375 + $0x30] sm:$0xff] %v1247
    %1383 = vst [vmem:[%s1375 + $0x38] sm:$0xff] %v1252
    %1384 = vst [vmem:[%s1375 + $0x40] sm:$0xff] %v1257
    %1385 = vst [vmem:[%s1375 + $0x48] sm:$0xff] %v1262
    %1386 = vst [vmem:[%s1375 + $0x50] sm:$0xff] %v1267
    %1387 = vst [vmem:[%s1375 + $0x58] sm:$0xff] %v1272
    %1388 = vst [vmem:[%s1375 + $0x60] sm:$0xff] %v1277
    %1389 = vst [vmem:[%s1375 + $0x68] sm:$0xff] %v1282
    %1390 = vst [vmem:[%s1375 + $0x70] sm:$0xff] %v1287
    %1391 = vst [vmem:[%s1375 + $0x78] sm:$0xff] %v1292
    %1392 = vst [vmem:[%s1375 + $0x80] sm:$0xff] %v1297
    %1393 = vst [vmem:[%s1375 + $0x88] sm:$0xff] %v1302
    %1394 = vst [vmem:[%s1375 + $0x90] sm:$0xff] %v1307
    %1395 = vst [vmem:[%s1375 + $0x98] sm:$0xff] %v1312
    %1396 = vst [vmem:[%s1375 + $0xa0] sm:$0xff] %v1317
    %1397 = vst [vmem:[%s1375 + $0xa8] sm:$0xff] %v1322
    %1398 = vst [vmem:[%s1375 + $0xb0] sm:$0xff] %v1327
    %1399 = vst [vmem:[%s1375 + $0xb8] sm:$0xff] %v1332
    %1400 = vst [vmem:[%s1375 + $0xc0] sm:$0xff] %v1337
    %1401 = vst [vmem:[%s1375 + $0xc8] sm:$0xff] %v1342
    %1402 = vst [vmem:[%s1375 + $0xd0] sm:$0xff] %v1347
    %1403 = vst [vmem:[%s1375 + $0xd8] sm:$0xff] %v1352
    %1404 = vst [vmem:[%s1375 + $0xe0] sm:$0xff] %v1357
    %1405 = vst [vmem:[%s1375 + $0xe8] sm:$0xff] %v1362
    %1406 = vst [vmem:[%s1375 + $0xf0] sm:$0xff] %v1367
    %1407 = vst [vmem:[%s1375 + $0xf8] sm:$0xff] %v1372
    %s1408 = scalar_lea.vmem %s0, 128
    %v1409 = vld [vmem:[%s1408] sm:$0xff]
    %v1410 = vld [vmem:[%s1408 + $0x8] sm:$0xff]
    %v1411 = vld [vmem:[%s1408 + $0x10] sm:$0xff]
    %v1412 = vld [vmem:[%s1408 + $0x18] sm:$0xf]
    %v1414 = vsel %vm349, %v1412, 0
    %1416 = vmatprep.subr.mxu0 0.0
    %1417 = vmatpush1.msra.mxu0 0.0
    %1418 = vmatprep.subr.mxu0 0.0
    %1419 = vmatpush1.msra.mxu0 0.0
    %1420 = vmatprep.subr.mxu0 0.0
    %1421 = vmatpush1.msra.mxu0 0.0
    %1422 = vmatprep.subr.mxu0 0.0
    %1423 = vmatpush1.msra.mxu0 0.0
    %1424 = vmatprep.subr.mxu0 0.0
    %1425 = vmatpush1.msra.mxu0 0.0
    %1426 = vmatprep.subr.mxu0 0.0
    %1427 = vmatpush1.msra.mxu0 0.0
    %1428 = vmatprep.subr.mxu0 0.0
    %1429 = vmatpush1.msra.mxu0 0.0
    %1430 = vmatprep.subr.mxu0 0.0
    %1431 = vmatpush1.msra.mxu0 0.0
    %1432 = vmatprep.subr.mxu0 0.0
    %1433 = vmatpush1.msra.mxu0 0.0
    %1434 = vmatprep.subr.mxu0 0.0
    %1435 = vmatpush1.msra.mxu0 0.0
    %1436 = vmatprep.subr.mxu0 0.0
    %1437 = vmatpush1.msra.mxu0 0.0
    %1438 = vmatprep.subr.mxu0 0.0
    %1439 = vmatpush1.msra.mxu0 0.0
    %1440 = vmatprep.subr.mxu0 0.0
    %1441 = vmatpush1.msra.mxu0 %v1414
    %1442 = vmatprep.subr.mxu0 0.0
    %1443 = vmatpush1.msra.mxu0 %v1411
    %1444 = vmatprep.subr.mxu0 0.0
    %1445 = vmatpush1.msra.mxu0 %v1410
    %1446 = vmatprep.subr.mxu0 0.0
    %1447 = vmatpush1.msra.mxu0 %v1409
    %1448 = vmatprep.subr.mxu0 0.0
    %1449 = vmatpush2.msra.mxu0 0.0
    %1450 = vmatprep.subr.mxu0 0.0
    %1451 = vmatpush2.msra.mxu0 0.0
    %1452 = vmatprep.subr.mxu0 0.0
    %1453 = vmatpush2.msra.mxu0 0.0
    %1454 = vmatprep.subr.mxu0 0.0
    %1455 = vmatpush2.msra.mxu0 0.0
    %1456 = vmatprep.subr.mxu0 0.0
    %1457 = vmatpush2.msra.mxu0 0.0
    %1458 = vmatprep.subr.mxu0 0.0
    %1459 = vmatpush2.msra.mxu0 0.0
    %1460 = vmatprep.subr.mxu0 0.0
    %1461 = vmatpush2.msra.mxu0 0.0
    %1462 = vmatprep.subr.mxu0 0.0
    %1463 = vmatpush2.msra.mxu0 0.0
    %1464 = vmatprep.subr.mxu0 0.0
    %1465 = vmatpush2.msra.mxu0 0.0
    %1466 = vmatprep.subr.mxu0 0.0
    %1467 = vmatpush2.msra.mxu0 0.0
    %1468 = vmatprep.subr.mxu0 0.0
    %1469 = vmatpush2.msra.mxu0 0.0
    %1470 = vmatprep.subr.mxu0 0.0
    %1471 = vmatpush2.msra.mxu0 0.0
    %1472 = vmatprep.subr.mxu0 0.0
    %1473 = vmatpush2.msra.mxu0 0.0
    %1474 = vmatprep.subr.mxu0 0.0
    %1475 = vmatpush2.msra.mxu0 0.0
    %1476 = vmatprep.subr.mxu0 0.0
    %1477 = vmatpush2.msra.mxu0 0.0
    %1478 = vmatprep.subr.mxu0 0.0
    %1479 = vmatpush2.msra.mxu0 0.0
    %1480 = vmatprep.mubr.f32.mxu0 0.0
    %1481 = vmatmul.mubr.f32.gmra.mxu0 %v254
    %v1482 = vpop.f32.mrf.mxu0
    %v1483 = vadd.f32 %v91, %v1482
    %v1484 = vpop.f32.mrf.mxu0
    %1485 = vmatprep.mubr.f32.mxu0 0.0
    %1486 = vmatmul.mubr.f32.gmra.mxu0 %v257
    %v1487 = vpop.f32.mrf.mxu0
    %v1488 = vadd.f32 %v96, %v1487
    %v1489 = vpop.f32.mrf.mxu0
    %1490 = vmatprep.mubr.f32.mxu0 0.0
    %1491 = vmatmul.mubr.f32.gmra.mxu0 %v260
    %v1492 = vpop.f32.mrf.mxu0
    %v1493 = vadd.f32 %v101, %v1492
    %v1494 = vpop.f32.mrf.mxu0
    %1495 = vmatprep.mubr.f32.mxu0 0.0
    %1496 = vmatmul.mubr.f32.gmra.mxu0 %v263
    %v1497 = vpop.f32.mrf.mxu0
    %v1498 = vadd.f32 %v106, %v1497
    %v1499 = vpop.f32.mrf.mxu0
    %1500 = vmatprep.mubr.f32.mxu0 0.0
    %1501 = vmatmul.mubr.f32.gmra.mxu0 %v266
    %v1502 = vpop.f32.mrf.mxu0
    %v1503 = vadd.f32 %v111, %v1502
    %v1504 = vpop.f32.mrf.mxu0
    %1505 = vmatprep.mubr.f32.mxu0 0.0
    %1506 = vmatmul.mubr.f32.gmra.mxu0 %v269
    %v1507 = vpop.f32.mrf.mxu0
    %v1508 = vadd.f32 %v116, %v1507
    %v1509 = vpop.f32.mrf.mxu0
    %1510 = vmatprep.mubr.f32.mxu0 0.0
    %1511 = vmatmul.mubr.f32.gmra.mxu0 %v272
    %v1512 = vpop.f32.mrf.mxu0
    %v1513 = vadd.f32 %v121, %v1512
    %v1514 = vpop.f32.mrf.mxu0
    %1515 = vmatprep.mubr.f32.mxu0 0.0
    %1516 = vmatmul.mubr.f32.gmra.mxu0 %v275
    %v1517 = vpop.f32.mrf.mxu0
    %v1518 = vadd.f32 %v126, %v1517
    %v1519 = vpop.f32.mrf.mxu0
    %1520 = vmatprep.mubr.f32.mxu0 0.0
    %1521 = vmatmul.mubr.f32.gmra.mxu0 %v278
    %v1522 = vpop.f32.mrf.mxu0
    %v1523 = vadd.f32 %v131, %v1522
    %v1524 = vpop.f32.mrf.mxu0
    %1525 = vmatprep.mubr.f32.mxu0 0.0
    %1526 = vmatmul.mubr.f32.gmra.mxu0 %v281
    %v1527 = vpop.f32.mrf.mxu0
    %v1528 = vadd.f32 %v136, %v1527
    %v1529 = vpop.f32.mrf.mxu0
    %1530 = vmatprep.mubr.f32.mxu0 0.0
    %1531 = vmatmul.mubr.f32.gmra.mxu0 %v284
    %v1532 = vpop.f32.mrf.mxu0
    %v1533 = vadd.f32 %v141, %v1532
    %v1534 = vpop.f32.mrf.mxu0
    %1535 = vmatprep.mubr.f32.mxu0 0.0
    %1536 = vmatmul.mubr.f32.gmra.mxu0 %v287
    %v1537 = vpop.f32.mrf.mxu0
    %v1538 = vadd.f32 %v146, %v1537
    %v1539 = vpop.f32.mrf.mxu0
    %1540 = vmatprep.mubr.f32.mxu0 0.0
    %1541 = vmatmul.mubr.f32.gmra.mxu0 %v290
    %v1542 = vpop.f32.mrf.mxu0
    %v1543 = vadd.f32 %v151, %v1542
    %v1544 = vpop.f32.mrf.mxu0
    %1545 = vmatprep.mubr.f32.mxu0 0.0
    %1546 = vmatmul.mubr.f32.gmra.mxu0 %v293
    %v1547 = vpop.f32.mrf.mxu0
    %v1548 = vadd.f32 %v156, %v1547
    %v1549 = vpop.f32.mrf.mxu0
    %1550 = vmatprep.mubr.f32.mxu0 0.0
    %1551 = vmatmul.mubr.f32.gmra.mxu0 %v296
    %v1552 = vpop.f32.mrf.mxu0
    %v1553 = vadd.f32 %v161, %v1552
    %v1554 = vpop.f32.mrf.mxu0
    %1555 = vmatprep.mubr.f32.mxu0 0.0
    %1556 = vmatmul.mubr.f32.gmra.mxu0 %v299
    %v1557 = vpop.f32.mrf.mxu0
    %v1558 = vadd.f32 %v166, %v1557
    %v1559 = vpop.f32.mrf.mxu0
    %1560 = vmatprep.mubr.f32.mxu0 0.0
    %1561 = vmatmul.mubr.f32.gmra.mxu0 %v302
    %v1562 = vpop.f32.mrf.mxu0
    %v1563 = vadd.f32 %v171, %v1562
    %v1564 = vpop.f32.mrf.mxu0
    %1565 = vmatprep.mubr.f32.mxu0 0.0
    %1566 = vmatmul.mubr.f32.gmra.mxu0 %v305
    %v1567 = vpop.f32.mrf.mxu0
    %v1568 = vadd.f32 %v176, %v1567
    %v1569 = vpop.f32.mrf.mxu0
    %1570 = vmatprep.mubr.f32.mxu0 0.0
    %1571 = vmatmul.mubr.f32.gmra.mxu0 %v308
    %v1572 = vpop.f32.mrf.mxu0
    %v1573 = vadd.f32 %v181, %v1572
    %v1574 = vpop.f32.mrf.mxu0
    %1575 = vmatprep.mubr.f32.mxu0 0.0
    %1576 = vmatmul.mubr.f32.gmra.mxu0 %v311
    %v1577 = vpop.f32.mrf.mxu0
    %v1578 = vadd.f32 %v186, %v1577
    %v1579 = vpop.f32.mrf.mxu0
    %1580 = vmatprep.mubr.f32.mxu0 0.0
    %1581 = vmatmul.mubr.f32.gmra.mxu0 %v314
    %v1582 = vpop.f32.mrf.mxu0
    %v1583 = vadd.f32 %v191, %v1582
    %v1584 = vpop.f32.mrf.mxu0
    %1585 = vmatprep.mubr.f32.mxu0 0.0
    %1586 = vmatmul.mubr.f32.gmra.mxu0 %v317
    %v1587 = vpop.f32.mrf.mxu0
    %v1588 = vadd.f32 %v196, %v1587
    %v1589 = vpop.f32.mrf.mxu0
    %1590 = vmatprep.mubr.f32.mxu0 0.0
    %1591 = vmatmul.mubr.f32.gmra.mxu0 %v320
    %v1592 = vpop.f32.mrf.mxu0
    %v1593 = vadd.f32 %v201, %v1592
    %v1594 = vpop.f32.mrf.mxu0
    %1595 = vmatprep.mubr.f32.mxu0 0.0
    %1596 = vmatmul.mubr.f32.gmra.mxu0 %v323
    %v1597 = vpop.f32.mrf.mxu0
    %v1598 = vadd.f32 %v206, %v1597
    %v1599 = vpop.f32.mrf.mxu0
    %1600 = vmatprep.mubr.f32.mxu0 0.0
    %1601 = vmatmul.mubr.f32.gmra.mxu0 %v326
    %v1602 = vpop.f32.mrf.mxu0
    %v1603 = vadd.f32 %v211, %v1602
    %v1604 = vpop.f32.mrf.mxu0
    %1605 = vmatprep.mubr.f32.mxu0 0.0
    %1606 = vmatmul.mubr.f32.gmra.mxu0 %v329
    %v1607 = vpop.f32.mrf.mxu0
    %v1608 = vadd.f32 %v216, %v1607
    %v1609 = vpop.f32.mrf.mxu0
    %1610 = vmatprep.mubr.f32.mxu0 0.0
    %1611 = vmatmul.mubr.f32.gmra.mxu0 %v332
    %v1612 = vpop.f32.mrf.mxu0
    %v1613 = vadd.f32 %v221, %v1612
    %v1614 = vpop.f32.mrf.mxu0
    %1615 = vmatprep.mubr.f32.mxu0 0.0
    %1616 = vmatmul.mubr.f32.gmra.mxu0 %v335
    %v1617 = vpop.f32.mrf.mxu0
    %v1618 = vadd.f32 %v226, %v1617
    %v1619 = vpop.f32.mrf.mxu0
    %1620 = vmatprep.mubr.f32.mxu0 0.0
    %1621 = vmatmul.mubr.f32.gmra.mxu0 %v338
    %v1622 = vpop.f32.mrf.mxu0
    %v1623 = vadd.f32 %v231, %v1622
    %v1624 = vpop.f32.mrf.mxu0
    %1625 = vmatprep.mubr.f32.mxu0 0.0
    %1626 = vmatmul.mubr.f32.gmra.mxu0 %v341
    %v1627 = vpop.f32.mrf.mxu0
    %v1628 = vadd.f32 %v236, %v1627
    %v1629 = vpop.f32.mrf.mxu0
    %1630 = vmatprep.mubr.f32.mxu0 0.0
    %1631 = vmatmul.mubr.f32.gmra.mxu0 %v344
    %v1632 = vpop.f32.mrf.mxu0
    %v1633 = vadd.f32 %v241, %v1632
    %v1634 = vpop.f32.mrf.mxu0
    %1635 = vmatprep.mubr.f32.mxu0 0.0
    %1636 = vmatmul.mubr.f32.gmra.mxu0 %v347
    %v1637 = vpop.f32.mrf.mxu0
    %v1638 = vadd.f32 %v246, %v1637
    %v1639 = vpop.f32.mrf.mxu0
    %1640 = vdwg.mxu0
    %s1641 = scalar_lea.vmem [#allocation2], 1024
    %1642 = vst [vmem:[%s1641] sm:$0xff] %v1483
    %1643 = vst [vmem:[%s1641 + $0x8] sm:$0xff] %v1488
    %1644 = vst [vmem:[%s1641 + $0x10] sm:$0xff] %v1493
    %1645 = vst [vmem:[%s1641 + $0x18] sm:$0xff] %v1498
    %1646 = vst [vmem:[%s1641 + $0x20] sm:$0xff] %v1503
    %1647 = vst [vmem:[%s1641 + $0x28] sm:$0xff] %v1508
    %1648 = vst [vmem:[%s1641 + $0x30] sm:$0xff] %v1513
    %1649 = vst [vmem:[%s1641 + $0x38] sm:$0xff] %v1518
    %1650 = vst [vmem:[%s1641 + $0x40] sm:$0xff] %v1523
    %1651 = vst [vmem:[%s1641 + $0x48] sm:$0xff] %v1528
    %1652 = vst [vmem:[%s1641 + $0x50] sm:$0xff] %v1533
    %1653 = vst [vmem:[%s1641 + $0x58] sm:$0xff] %v1538
    %1654 = vst [vmem:[%s1641 + $0x60] sm:$0xff] %v1543
    %1655 = vst [vmem:[%s1641 + $0x68] sm:$0xff] %v1548
    %1656 = vst [vmem:[%s1641 + $0x70] sm:$0xff] %v1553
    %1657 = vst [vmem:[%s1641 + $0x78] sm:$0xff] %v1558
    %1658 = vst [vmem:[%s1641 + $0x80] sm:$0xff] %v1563
    %1659 = vst [vmem:[%s1641 + $0x88] sm:$0xff] %v1568
    %1660 = vst [vmem:[%s1641 + $0x90] sm:$0xff] %v1573
    %1661 = vst [vmem:[%s1641 + $0x98] sm:$0xff] %v1578
    %1662 = vst [vmem:[%s1641 + $0xa0] sm:$0xff] %v1583
    %1663 = vst [vmem:[%s1641 + $0xa8] sm:$0xff] %v1588
    %1664 = vst [vmem:[%s1641 + $0xb0] sm:$0xff] %v1593
    %1665 = vst [vmem:[%s1641 + $0xb8] sm:$0xff] %v1598
    %1666 = vst [vmem:[%s1641 + $0xc0] sm:$0xff] %v1603
    %1667 = vst [vmem:[%s1641 + $0xc8] sm:$0xff] %v1608
    %1668 = vst [vmem:[%s1641 + $0xd0] sm:$0xff] %v1613
    %1669 = vst [vmem:[%s1641 + $0xd8] sm:$0xff] %v1618
    %1670 = vst [vmem:[%s1641 + $0xe0] sm:$0xff] %v1623
    %1671 = vst [vmem:[%s1641 + $0xe8] sm:$0xff] %v1628
    %1672 = vst [vmem:[%s1641 + $0xf0] sm:$0xff] %v1633
    %1673 = vst [vmem:[%s1641 + $0xf8] sm:$0xff] %v1638
    %s1674 = scalar_lea.vmem %s0, 160
    %v1675 = vld [vmem:[%s1674] sm:$0xff]
    %v1676 = vld [vmem:[%s1674 + $0x8] sm:$0xff]
    %v1677 = vld [vmem:[%s1674 + $0x10] sm:$0xff]
    %v1678 = vld [vmem:[%s1674 + $0x18] sm:$0xf]
    %v1680 = vsel %vm349, %v1678, 0
    %1682 = vmatprep.subr.mxu0 0.0
    %1683 = vmatpush1.msra.mxu0 0.0
    %1684 = vmatprep.subr.mxu0 0.0
    %1685 = vmatpush1.msra.mxu0 0.0
    %1686 = vmatprep.subr.mxu0 0.0
    %1687 = vmatpush1.msra.mxu0 0.0
    %1688 = vmatprep.subr.mxu0 0.0
    %1689 = vmatpush1.msra.mxu0 0.0
    %1690 = vmatprep.subr.mxu0 0.0
    %1691 = vmatpush1.msra.mxu0 0.0
    %1692 = vmatprep.subr.mxu0 0.0
    %1693 = vmatpush1.msra.mxu0 0.0
    %1694 = vmatprep.subr.mxu0 0.0
    %1695 = vmatpush1.msra.mxu0 0.0
    %1696 = vmatprep.subr.mxu0 0.0
    %1697 = vmatpush1.msra.mxu0 0.0
    %1698 = vmatprep.subr.mxu0 0.0
    %1699 = vmatpush1.msra.mxu0 0.0
    %1700 = vmatprep.subr.mxu0 0.0
    %1701 = vmatpush1.msra.mxu0 0.0
    %1702 = vmatprep.subr.mxu0 0.0
    %1703 = vmatpush1.msra.mxu0 0.0
    %1704 = vmatprep.subr.mxu0 0.0
    %1705 = vmatpush1.msra.mxu0 0.0
    %1706 = vmatprep.subr.mxu0 0.0
    %1707 = vmatpush1.msra.mxu0 %v1680
    %1708 = vmatprep.subr.mxu0 0.0
    %1709 = vmatpush1.msra.mxu0 %v1677
    %1710 = vmatprep.subr.mxu0 0.0
    %1711 = vmatpush1.msra.mxu0 %v1676
    %1712 = vmatprep.subr.mxu0 0.0
    %1713 = vmatpush1.msra.mxu0 %v1675
    %1714 = vmatprep.subr.mxu0 0.0
    %1715 = vmatpush2.msra.mxu0 0.0
    %1716 = vmatprep.subr.mxu0 0.0
    %1717 = vmatpush2.msra.mxu0 0.0
    %1718 = vmatprep.subr.mxu0 0.0
    %1719 = vmatpush2.msra.mxu0 0.0
    %1720 = vmatprep.subr.mxu0 0.0
    %1721 = vmatpush2.msra.mxu0 0.0
    %1722 = vmatprep.subr.mxu0 0.0
    %1723 = vmatpush2.msra.mxu0 0.0
    %1724 = vmatprep.subr.mxu0 0.0
    %1725 = vmatpush2.msra.mxu0 0.0
    %1726 = vmatprep.subr.mxu0 0.0
    %1727 = vmatpush2.msra.mxu0 0.0
    %1728 = vmatprep.subr.mxu0 0.0
    %1729 = vmatpush2.msra.mxu0 0.0
    %1730 = vmatprep.subr.mxu0 0.0
    %1731 = vmatpush2.msra.mxu0 0.0
    %1732 = vmatprep.subr.mxu0 0.0
    %1733 = vmatpush2.msra.mxu0 0.0
    %1734 = vmatprep.subr.mxu0 0.0
    %1735 = vmatpush2.msra.mxu0 0.0
    %1736 = vmatprep.subr.mxu0 0.0
    %1737 = vmatpush2.msra.mxu0 0.0
    %1738 = vmatprep.subr.mxu0 0.0
    %1739 = vmatpush2.msra.mxu0 0.0
    %1740 = vmatprep.subr.mxu0 0.0
    %1741 = vmatpush2.msra.mxu0 0.0
    %1742 = vmatprep.subr.mxu0 0.0
    %1743 = vmatpush2.msra.mxu0 0.0
    %1744 = vmatprep.subr.mxu0 0.0
    %1745 = vmatpush2.msra.mxu0 0.0
    %1746 = vmatprep.mubr.f32.mxu0 0.0
    %1747 = vmatmul.mubr.f32.gmra.mxu0 %v254
    %v1748 = vpop.f32.mrf.mxu0
    %v1749 = vadd.f32 %v91, %v1748
    %v1750 = vpop.f32.mrf.mxu0
    %1751 = vmatprep.mubr.f32.mxu0 0.0
    %1752 = vmatmul.mubr.f32.gmra.mxu0 %v257
    %v1753 = vpop.f32.mrf.mxu0
    %v1754 = vadd.f32 %v96, %v1753
    %v1755 = vpop.f32.mrf.mxu0
    %1756 = vmatprep.mubr.f32.mxu0 0.0
    %1757 = vmatmul.mubr.f32.gmra.mxu0 %v260
    %v1758 = vpop.f32.mrf.mxu0
    %v1759 = vadd.f32 %v101, %v1758
    %v1760 = vpop.f32.mrf.mxu0
    %1761 = vmatprep.mubr.f32.mxu0 0.0
    %1762 = vmatmul.mubr.f32.gmra.mxu0 %v263
    %v1763 = vpop.f32.mrf.mxu0
    %v1764 = vadd.f32 %v106, %v1763
    %v1765 = vpop.f32.mrf.mxu0
    %1766 = vmatprep.mubr.f32.mxu0 0.0
    %1767 = vmatmul.mubr.f32.gmra.mxu0 %v266
    %v1768 = vpop.f32.mrf.mxu0
    %v1769 = vadd.f32 %v111, %v1768
    %v1770 = vpop.f32.mrf.mxu0
    %1771 = vmatprep.mubr.f32.mxu0 0.0
    %1772 = vmatmul.mubr.f32.gmra.mxu0 %v269
    %v1773 = vpop.f32.mrf.mxu0
    %v1774 = vadd.f32 %v116, %v1773
    %v1775 = vpop.f32.mrf.mxu0
    %1776 = vmatprep.mubr.f32.mxu0 0.0
    %1777 = vmatmul.mubr.f32.gmra.mxu0 %v272
    %v1778 = vpop.f32.mrf.mxu0
    %v1779 = vadd.f32 %v121, %v1778
    %v1780 = vpop.f32.mrf.mxu0
    %1781 = vmatprep.mubr.f32.mxu0 0.0
    %1782 = vmatmul.mubr.f32.gmra.mxu0 %v275
    %v1783 = vpop.f32.mrf.mxu0
    %v1784 = vadd.f32 %v126, %v1783
    %v1785 = vpop.f32.mrf.mxu0
    %1786 = vmatprep.mubr.f32.mxu0 0.0
    %1787 = vmatmul.mubr.f32.gmra.mxu0 %v278
    %v1788 = vpop.f32.mrf.mxu0
    %v1789 = vadd.f32 %v131, %v1788
    %v1790 = vpop.f32.mrf.mxu0
    %1791 = vmatprep.mubr.f32.mxu0 0.0
    %1792 = vmatmul.mubr.f32.gmra.mxu0 %v281
    %v1793 = vpop.f32.mrf.mxu0
    %v1794 = vadd.f32 %v136, %v1793
    %v1795 = vpop.f32.mrf.mxu0
    %1796 = vmatprep.mubr.f32.mxu0 0.0
    %1797 = vmatmul.mubr.f32.gmra.mxu0 %v284
    %v1798 = vpop.f32.mrf.mxu0
    %v1799 = vadd.f32 %v141, %v1798
    %v1800 = vpop.f32.mrf.mxu0
    %1801 = vmatprep.mubr.f32.mxu0 0.0
    %1802 = vmatmul.mubr.f32.gmra.mxu0 %v287
    %v1803 = vpop.f32.mrf.mxu0
    %v1804 = vadd.f32 %v146, %v1803
    %v1805 = vpop.f32.mrf.mxu0
    %1806 = vmatprep.mubr.f32.mxu0 0.0
    %1807 = vmatmul.mubr.f32.gmra.mxu0 %v290
    %v1808 = vpop.f32.mrf.mxu0
    %v1809 = vadd.f32 %v151, %v1808
    %v1810 = vpop.f32.mrf.mxu0
    %1811 = vmatprep.mubr.f32.mxu0 0.0
    %1812 = vmatmul.mubr.f32.gmra.mxu0 %v293
    %v1813 = vpop.f32.mrf.mxu0
    %v1814 = vadd.f32 %v156, %v1813
    %v1815 = vpop.f32.mrf.mxu0
    %1816 = vmatprep.mubr.f32.mxu0 0.0
    %1817 = vmatmul.mubr.f32.gmra.mxu0 %v296
    %v1818 = vpop.f32.mrf.mxu0
    %v1819 = vadd.f32 %v161, %v1818
    %v1820 = vpop.f32.mrf.mxu0
    %1821 = vmatprep.mubr.f32.mxu0 0.0
    %1822 = vmatmul.mubr.f32.gmra.mxu0 %v299
    %v1823 = vpop.f32.mrf.mxu0
    %v1824 = vadd.f32 %v166, %v1823
    %v1825 = vpop.f32.mrf.mxu0
    %1826 = vmatprep.mubr.f32.mxu0 0.0
    %1827 = vmatmul.mubr.f32.gmra.mxu0 %v302
    %v1828 = vpop.f32.mrf.mxu0
    %v1829 = vadd.f32 %v171, %v1828
    %v1830 = vpop.f32.mrf.mxu0
    %1831 = vmatprep.mubr.f32.mxu0 0.0
    %1832 = vmatmul.mubr.f32.gmra.mxu0 %v305
    %v1833 = vpop.f32.mrf.mxu0
    %v1834 = vadd.f32 %v176, %v1833
    %v1835 = vpop.f32.mrf.mxu0
    %1836 = vmatprep.mubr.f32.mxu0 0.0
    %1837 = vmatmul.mubr.f32.gmra.mxu0 %v308
    %v1838 = vpop.f32.mrf.mxu0
    %v1839 = vadd.f32 %v181, %v1838
    %v1840 = vpop.f32.mrf.mxu0
    %1841 = vmatprep.mubr.f32.mxu0 0.0
    %1842 = vmatmul.mubr.f32.gmra.mxu0 %v311
    %v1843 = vpop.f32.mrf.mxu0
    %v1844 = vadd.f32 %v186, %v1843
    %v1845 = vpop.f32.mrf.mxu0
    %1846 = vmatprep.mubr.f32.mxu0 0.0
    %1847 = vmatmul.mubr.f32.gmra.mxu0 %v314
    %v1848 = vpop.f32.mrf.mxu0
    %v1849 = vadd.f32 %v191, %v1848
    %v1850 = vpop.f32.mrf.mxu0
    %1851 = vmatprep.mubr.f32.mxu0 0.0
    %1852 = vmatmul.mubr.f32.gmra.mxu0 %v317
    %v1853 = vpop.f32.mrf.mxu0
    %v1854 = vadd.f32 %v196, %v1853
    %v1855 = vpop.f32.mrf.mxu0
    %1856 = vmatprep.mubr.f32.mxu0 0.0
    %1857 = vmatmul.mubr.f32.gmra.mxu0 %v320
    %v1858 = vpop.f32.mrf.mxu0
    %v1859 = vadd.f32 %v201, %v1858
    %v1860 = vpop.f32.mrf.mxu0
    %1861 = vmatprep.mubr.f32.mxu0 0.0
    %1862 = vmatmul.mubr.f32.gmra.mxu0 %v323
    %v1863 = vpop.f32.mrf.mxu0
    %v1864 = vadd.f32 %v206, %v1863
    %v1865 = vpop.f32.mrf.mxu0
    %1866 = vmatprep.mubr.f32.mxu0 0.0
    %1867 = vmatmul.mubr.f32.gmra.mxu0 %v326
    %v1868 = vpop.f32.mrf.mxu0
    %v1869 = vadd.f32 %v211, %v1868
    %v1870 = vpop.f32.mrf.mxu0
    %1871 = vmatprep.mubr.f32.mxu0 0.0
    %1872 = vmatmul.mubr.f32.gmra.mxu0 %v329
    %v1873 = vpop.f32.mrf.mxu0
    %v1874 = vadd.f32 %v216, %v1873
    %v1875 = vpop.f32.mrf.mxu0
    %1876 = vmatprep.mubr.f32.mxu0 0.0
    %1877 = vmatmul.mubr.f32.gmra.mxu0 %v332
    %v1878 = vpop.f32.mrf.mxu0
    %v1879 = vadd.f32 %v221, %v1878
    %v1880 = vpop.f32.mrf.mxu0
    %1881 = vmatprep.mubr.f32.mxu0 0.0
    %1882 = vmatmul.mubr.f32.gmra.mxu0 %v335
    %v1883 = vpop.f32.mrf.mxu0
    %v1884 = vadd.f32 %v226, %v1883
    %v1885 = vpop.f32.mrf.mxu0
    %1886 = vmatprep.mubr.f32.mxu0 0.0
    %1887 = vmatmul.mubr.f32.gmra.mxu0 %v338
    %v1888 = vpop.f32.mrf.mxu0
    %v1889 = vadd.f32 %v231, %v1888
    %v1890 = vpop.f32.mrf.mxu0
    %1891 = vmatprep.mubr.f32.mxu0 0.0
    %1892 = vmatmul.mubr.f32.gmra.mxu0 %v341
    %v1893 = vpop.f32.mrf.mxu0
    %v1894 = vadd.f32 %v236, %v1893
    %v1895 = vpop.f32.mrf.mxu0
    %1896 = vmatprep.mubr.f32.mxu0 0.0
    %1897 = vmatmul.mubr.f32.gmra.mxu0 %v344
    %v1898 = vpop.f32.mrf.mxu0
    %v1899 = vadd.f32 %v241, %v1898
    %v1900 = vpop.f32.mrf.mxu0
    %1901 = vmatprep.mubr.f32.mxu0 0.0
    %1902 = vmatmul.mubr.f32.gmra.mxu0 %v347
    %v1903 = vpop.f32.mrf.mxu0
    %v1904 = vadd.f32 %v246, %v1903
    %v1905 = vpop.f32.mrf.mxu0
    %1906 = vdwg.mxu0
    %s1907 = scalar_lea.vmem [#allocation2], 1280
    %1908 = vst [vmem:[%s1907] sm:$0xff] %v1749
    %1909 = vst [vmem:[%s1907 + $0x8] sm:$0xff] %v1754
    %1910 = vst [vmem:[%s1907 + $0x10] sm:$0xff] %v1759
    %1911 = vst [vmem:[%s1907 + $0x18] sm:$0xff] %v1764
    %1912 = vst [vmem:[%s1907 + $0x20] sm:$0xff] %v1769
    %1913 = vst [vmem:[%s1907 + $0x28] sm:$0xff] %v1774
    %1914 = vst [vmem:[%s1907 + $0x30] sm:$0xff] %v1779
    %1915 = vst [vmem:[%s1907 + $0x38] sm:$0xff] %v1784
    %1916 = vst [vmem:[%s1907 + $0x40] sm:$0xff] %v1789
    %1917 = vst [vmem:[%s1907 + $0x48] sm:$0xff] %v1794
    %1918 = vst [vmem:[%s1907 + $0x50] sm:$0xff] %v1799
    %1919 = vst [vmem:[%s1907 + $0x58] sm:$0xff] %v1804
    %1920 = vst [vmem:[%s1907 + $0x60] sm:$0xff] %v1809
    %1921 = vst [vmem:[%s1907 + $0x68] sm:$0xff] %v1814
    %1922 = vst [vmem:[%s1907 + $0x70] sm:$0xff] %v1819
    %1923 = vst [vmem:[%s1907 + $0x78] sm:$0xff] %v1824
    %1924 = vst [vmem:[%s1907 + $0x80] sm:$0xff] %v1829
    %1925 = vst [vmem:[%s1907 + $0x88] sm:$0xff] %v1834
    %1926 = vst [vmem:[%s1907 + $0x90] sm:$0xff] %v1839
    %1927 = vst [vmem:[%s1907 + $0x98] sm:$0xff] %v1844
    %1928 = vst [vmem:[%s1907 + $0xa0] sm:$0xff] %v1849
    %1929 = vst [vmem:[%s1907 + $0xa8] sm:$0xff] %v1854
    %1930 = vst [vmem:[%s1907 + $0xb0] sm:$0xff] %v1859
    %1931 = vst [vmem:[%s1907 + $0xb8] sm:$0xff] %v1864
    %1932 = vst [vmem:[%s1907 + $0xc0] sm:$0xff] %v1869
    %1933 = vst [vmem:[%s1907 + $0xc8] sm:$0xff] %v1874
    %1934 = vst [vmem:[%s1907 + $0xd0] sm:$0xff] %v1879
    %1935 = vst [vmem:[%s1907 + $0xd8] sm:$0xff] %v1884
    %1936 = vst [vmem:[%s1907 + $0xe0] sm:$0xff] %v1889
    %1937 = vst [vmem:[%s1907 + $0xe8] sm:$0xff] %v1894
    %1938 = vst [vmem:[%s1907 + $0xf0] sm:$0xff] %v1899
    %1939 = vst [vmem:[%s1907 + $0xf8] sm:$0xff] %v1904
    %s1940 = scalar_lea.vmem %s0, 192
    %v1941 = vld [vmem:[%s1940] sm:$0xff]
    %v1942 = vld [vmem:[%s1940 + $0x8] sm:$0xff]
    %v1943 = vld [vmem:[%s1940 + $0x10] sm:$0xff]
    %v1944 = vld [vmem:[%s1940 + $0x18] sm:$0xf]
    %v1946 = vsel %vm349, %v1944, 0
    %1948 = vmatprep.subr.mxu0 0.0
    %1949 = vmatpush1.msra.mxu0 0.0
    %1950 = vmatprep.subr.mxu0 0.0
    %1951 = vmatpush1.msra.mxu0 0.0
    %1952 = vmatprep.subr.mxu0 0.0
    %1953 = vmatpush1.msra.mxu0 0.0
    %1954 = vmatprep.subr.mxu0 0.0
    %1955 = vmatpush1.msra.mxu0 0.0
    %1956 = vmatprep.subr.mxu0 0.0
    %1957 = vmatpush1.msra.mxu0 0.0
    %1958 = vmatprep.subr.mxu0 0.0
    %1959 = vmatpush1.msra.mxu0 0.0
    %1960 = vmatprep.subr.mxu0 0.0
    %1961 = vmatpush1.msra.mxu0 0.0
    %1962 = vmatprep.subr.mxu0 0.0
    %1963 = vmatpush1.msra.mxu0 0.0
    %1964 = vmatprep.subr.mxu0 0.0
    %1965 = vmatpush1.msra.mxu0 0.0
    %1966 = vmatprep.subr.mxu0 0.0
    %1967 = vmatpush1.msra.mxu0 0.0
    %1968 = vmatprep.subr.mxu0 0.0
    %1969 = vmatpush1.msra.mxu0 0.0
    %1970 = vmatprep.subr.mxu0 0.0
    %1971 = vmatpush1.msra.mxu0 0.0
    %1972 = vmatprep.subr.mxu0 0.0
    %1973 = vmatpush1.msra.mxu0 %v1946
    %1974 = vmatprep.subr.mxu0 0.0
    %1975 = vmatpush1.msra.mxu0 %v1943
    %1976 = vmatprep.subr.mxu0 0.0
    %1977 = vmatpush1.msra.mxu0 %v1942
    %1978 = vmatprep.subr.mxu0 0.0
    %1979 = vmatpush1.msra.mxu0 %v1941
    %1980 = vmatprep.subr.mxu0 0.0
    %1981 = vmatpush2.msra.mxu0 0.0
    %1982 = vmatprep.subr.mxu0 0.0
    %1983 = vmatpush2.msra.mxu0 0.0
    %1984 = vmatprep.subr.mxu0 0.0
    %1985 = vmatpush2.msra.mxu0 0.0
    %1986 = vmatprep.subr.mxu0 0.0
    %1987 = vmatpush2.msra.mxu0 0.0
    %1988 = vmatprep.subr.mxu0 0.0
    %1989 = vmatpush2.msra.mxu0 0.0
    %1990 = vmatprep.subr.mxu0 0.0
    %1991 = vmatpush2.msra.mxu0 0.0
    %1992 = vmatprep.subr.mxu0 0.0
    %1993 = vmatpush2.msra.mxu0 0.0
    %1994 = vmatprep.subr.mxu0 0.0
    %1995 = vmatpush2.msra.mxu0 0.0
    %1996 = vmatprep.subr.mxu0 0.0
    %1997 = vmatpush2.msra.mxu0 0.0
    %1998 = vmatprep.subr.mxu0 0.0
    %1999 = vmatpush2.msra.mxu0 0.0
    %2000 = vmatprep.subr.mxu0 0.0
    %2001 = vmatpush2.msra.mxu0 0.0
    %2002 = vmatprep.subr.mxu0 0.0
    %2003 = vmatpush2.msra.mxu0 0.0
    %2004 = vmatprep.subr.mxu0 0.0
    %2005 = vmatpush2.msra.mxu0 0.0
    %2006 = vmatprep.subr.mxu0 0.0
    %2007 = vmatpush2.msra.mxu0 0.0
    %2008 = vmatprep.subr.mxu0 0.0
    %2009 = vmatpush2.msra.mxu0 0.0
    %2010 = vmatprep.subr.mxu0 0.0
    %2011 = vmatpush2.msra.mxu0 0.0
    %2012 = vmatprep.mubr.f32.mxu0 0.0
    %2013 = vmatmul.mubr.f32.gmra.mxu0 %v254
    %v2014 = vpop.f32.mrf.mxu0
    %v2015 = vadd.f32 %v91, %v2014
    %v2016 = vpop.f32.mrf.mxu0
    %2017 = vmatprep.mubr.f32.mxu0 0.0
    %2018 = vmatmul.mubr.f32.gmra.mxu0 %v257
    %v2019 = vpop.f32.mrf.mxu0
    %v2020 = vadd.f32 %v96, %v2019
    %v2021 = vpop.f32.mrf.mxu0
    %2022 = vmatprep.mubr.f32.mxu0 0.0
    %2023 = vmatmul.mubr.f32.gmra.mxu0 %v260
    %v2024 = vpop.f32.mrf.mxu0
    %v2025 = vadd.f32 %v101, %v2024
    %v2026 = vpop.f32.mrf.mxu0
    %2027 = vmatprep.mubr.f32.mxu0 0.0
    %2028 = vmatmul.mubr.f32.gmra.mxu0 %v263
    %v2029 = vpop.f32.mrf.mxu0
    %v2030 = vadd.f32 %v106, %v2029
    %v2031 = vpop.f32.mrf.mxu0
    %2032 = vmatprep.mubr.f32.mxu0 0.0
    %2033 = vmatmul.mubr.f32.gmra.mxu0 %v266
    %v2034 = vpop.f32.mrf.mxu0
    %v2035 = vadd.f32 %v111, %v2034
    %v2036 = vpop.f32.mrf.mxu0
    %2037 = vmatprep.mubr.f32.mxu0 0.0
    %2038 = vmatmul.mubr.f32.gmra.mxu0 %v269
    %v2039 = vpop.f32.mrf.mxu0
    %v2040 = vadd.f32 %v116, %v2039
    %v2041 = vpop.f32.mrf.mxu0
    %2042 = vmatprep.mubr.f32.mxu0 0.0
    %2043 = vmatmul.mubr.f32.gmra.mxu0 %v272
    %v2044 = vpop.f32.mrf.mxu0
    %v2045 = vadd.f32 %v121, %v2044
    %v2046 = vpop.f32.mrf.mxu0
    %2047 = vmatprep.mubr.f32.mxu0 0.0
    %2048 = vmatmul.mubr.f32.gmra.mxu0 %v275
    %v2049 = vpop.f32.mrf.mxu0
    %v2050 = vadd.f32 %v126, %v2049
    %v2051 = vpop.f32.mrf.mxu0
    %2052 = vmatprep.mubr.f32.mxu0 0.0
    %2053 = vmatmul.mubr.f32.gmra.mxu0 %v278
    %v2054 = vpop.f32.mrf.mxu0
    %v2055 = vadd.f32 %v131, %v2054
    %v2056 = vpop.f32.mrf.mxu0
    %2057 = vmatprep.mubr.f32.mxu0 0.0
    %2058 = vmatmul.mubr.f32.gmra.mxu0 %v281
    %v2059 = vpop.f32.mrf.mxu0
    %v2060 = vadd.f32 %v136, %v2059
    %v2061 = vpop.f32.mrf.mxu0
    %2062 = vmatprep.mubr.f32.mxu0 0.0
    %2063 = vmatmul.mubr.f32.gmra.mxu0 %v284
    %v2064 = vpop.f32.mrf.mxu0
    %v2065 = vadd.f32 %v141, %v2064
    %v2066 = vpop.f32.mrf.mxu0
    %2067 = vmatprep.mubr.f32.mxu0 0.0
    %2068 = vmatmul.mubr.f32.gmra.mxu0 %v287
    %v2069 = vpop.f32.mrf.mxu0
    %v2070 = vadd.f32 %v146, %v2069
    %v2071 = vpop.f32.mrf.mxu0
    %2072 = vmatprep.mubr.f32.mxu0 0.0
    %2073 = vmatmul.mubr.f32.gmra.mxu0 %v290
    %v2074 = vpop.f32.mrf.mxu0
    %v2075 = vadd.f32 %v151, %v2074
    %v2076 = vpop.f32.mrf.mxu0
    %2077 = vmatprep.mubr.f32.mxu0 0.0
    %2078 = vmatmul.mubr.f32.gmra.mxu0 %v293
    %v2079 = vpop.f32.mrf.mxu0
    %v2080 = vadd.f32 %v156, %v2079
    %v2081 = vpop.f32.mrf.mxu0
    %2082 = vmatprep.mubr.f32.mxu0 0.0
    %2083 = vmatmul.mubr.f32.gmra.mxu0 %v296
    %v2084 = vpop.f32.mrf.mxu0
    %v2085 = vadd.f32 %v161, %v2084
    %v2086 = vpop.f32.mrf.mxu0
    %2087 = vmatprep.mubr.f32.mxu0 0.0
    %2088 = vmatmul.mubr.f32.gmra.mxu0 %v299
    %v2089 = vpop.f32.mrf.mxu0
    %v2090 = vadd.f32 %v166, %v2089
    %v2091 = vpop.f32.mrf.mxu0
    %2092 = vmatprep.mubr.f32.mxu0 0.0
    %2093 = vmatmul.mubr.f32.gmra.mxu0 %v302
    %v2094 = vpop.f32.mrf.mxu0
    %v2095 = vadd.f32 %v171, %v2094
    %v2096 = vpop.f32.mrf.mxu0
    %2097 = vmatprep.mubr.f32.mxu0 0.0
    %2098 = vmatmul.mubr.f32.gmra.mxu0 %v305
    %v2099 = vpop.f32.mrf.mxu0
    %v2100 = vadd.f32 %v176, %v2099
    %v2101 = vpop.f32.mrf.mxu0
    %2102 = vmatprep.mubr.f32.mxu0 0.0
    %2103 = vmatmul.mubr.f32.gmra.mxu0 %v308
    %v2104 = vpop.f32.mrf.mxu0
    %v2105 = vadd.f32 %v181, %v2104
    %v2106 = vpop.f32.mrf.mxu0
    %2107 = vmatprep.mubr.f32.mxu0 0.0
    %2108 = vmatmul.mubr.f32.gmra.mxu0 %v311
    %v2109 = vpop.f32.mrf.mxu0
    %v2110 = vadd.f32 %v186, %v2109
    %v2111 = vpop.f32.mrf.mxu0
    %2112 = vmatprep.mubr.f32.mxu0 0.0
    %2113 = vmatmul.mubr.f32.gmra.mxu0 %v314
    %v2114 = vpop.f32.mrf.mxu0
    %v2115 = vadd.f32 %v191, %v2114
    %v2116 = vpop.f32.mrf.mxu0
    %2117 = vmatprep.mubr.f32.mxu0 0.0
    %2118 = vmatmul.mubr.f32.gmra.mxu0 %v317
    %v2119 = vpop.f32.mrf.mxu0
    %v2120 = vadd.f32 %v196, %v2119
    %v2121 = vpop.f32.mrf.mxu0
    %2122 = vmatprep.mubr.f32.mxu0 0.0
    %2123 = vmatmul.mubr.f32.gmra.mxu0 %v320
    %v2124 = vpop.f32.mrf.mxu0
    %v2125 = vadd.f32 %v201, %v2124
    %v2126 = vpop.f32.mrf.mxu0
    %2127 = vmatprep.mubr.f32.mxu0 0.0
    %2128 = vmatmul.mubr.f32.gmra.mxu0 %v323
    %v2129 = vpop.f32.mrf.mxu0
    %v2130 = vadd.f32 %v206, %v2129
    %v2131 = vpop.f32.mrf.mxu0
    %2132 = vmatprep.mubr.f32.mxu0 0.0
    %2133 = vmatmul.mubr.f32.gmra.mxu0 %v326
    %v2134 = vpop.f32.mrf.mxu0
    %v2135 = vadd.f32 %v211, %v2134
    %v2136 = vpop.f32.mrf.mxu0
    %2137 = vmatprep.mubr.f32.mxu0 0.0
    %2138 = vmatmul.mubr.f32.gmra.mxu0 %v329
    %v2139 = vpop.f32.mrf.mxu0
    %v2140 = vadd.f32 %v216, %v2139
    %v2141 = vpop.f32.mrf.mxu0
    %2142 = vmatprep.mubr.f32.mxu0 0.0
    %2143 = vmatmul.mubr.f32.gmra.mxu0 %v332
    %v2144 = vpop.f32.mrf.mxu0
    %v2145 = vadd.f32 %v221, %v2144
    %v2146 = vpop.f32.mrf.mxu0
    %2147 = vmatprep.mubr.f32.mxu0 0.0
    %2148 = vmatmul.mubr.f32.gmra.mxu0 %v335
    %v2149 = vpop.f32.mrf.mxu0
    %v2150 = vadd.f32 %v226, %v2149
    %v2151 = vpop.f32.mrf.mxu0
    %2152 = vmatprep.mubr.f32.mxu0 0.0
    %2153 = vmatmul.mubr.f32.gmra.mxu0 %v338
    %v2154 = vpop.f32.mrf.mxu0
    %v2155 = vadd.f32 %v231, %v2154
    %v2156 = vpop.f32.mrf.mxu0
    %2157 = vmatprep.mubr.f32.mxu0 0.0
    %2158 = vmatmul.mubr.f32.gmra.mxu0 %v341
    %v2159 = vpop.f32.mrf.mxu0
    %v2160 = vadd.f32 %v236, %v2159
    %v2161 = vpop.f32.mrf.mxu0
    %2162 = vmatprep.mubr.f32.mxu0 0.0
    %2163 = vmatmul.mubr.f32.gmra.mxu0 %v344
    %v2164 = vpop.f32.mrf.mxu0
    %v2165 = vadd.f32 %v241, %v2164
    %v2166 = vpop.f32.mrf.mxu0
    %2167 = vmatprep.mubr.f32.mxu0 0.0
    %2168 = vmatmul.mubr.f32.gmra.mxu0 %v347
    %v2169 = vpop.f32.mrf.mxu0
    %v2170 = vadd.f32 %v246, %v2169
    %v2171 = vpop.f32.mrf.mxu0
    %2172 = vdwg.mxu0
    %s2173 = scalar_lea.vmem [#allocation2], 1536
    %2174 = vst [vmem:[%s2173] sm:$0xff] %v2015
    %2175 = vst [vmem:[%s2173 + $0x8] sm:$0xff] %v2020
    %2176 = vst [vmem:[%s2173 + $0x10] sm:$0xff] %v2025
    %2177 = vst [vmem:[%s2173 + $0x18] sm:$0xff] %v2030
    %2178 = vst [vmem:[%s2173 + $0x20] sm:$0xff] %v2035
    %2179 = vst [vmem:[%s2173 + $0x28] sm:$0xff] %v2040
    %2180 = vst [vmem:[%s2173 + $0x30] sm:$0xff] %v2045
    %2181 = vst [vmem:[%s2173 + $0x38] sm:$0xff] %v2050
    %2182 = vst [vmem:[%s2173 + $0x40] sm:$0xff] %v2055
    %2183 = vst [vmem:[%s2173 + $0x48] sm:$0xff] %v2060
    %2184 = vst [vmem:[%s2173 + $0x50] sm:$0xff] %v2065
    %2185 = vst [vmem:[%s2173 + $0x58] sm:$0xff] %v2070
    %2186 = vst [vmem:[%s2173 + $0x60] sm:$0xff] %v2075
    %2187 = vst [vmem:[%s2173 + $0x68] sm:$0xff] %v2080
    %2188 = vst [vmem:[%s2173 + $0x70] sm:$0xff] %v2085
    %2189 = vst [vmem:[%s2173 + $0x78] sm:$0xff] %v2090
    %2190 = vst [vmem:[%s2173 + $0x80] sm:$0xff] %v2095
    %2191 = vst [vmem:[%s2173 + $0x88] sm:$0xff] %v2100
    %2192 = vst [vmem:[%s2173 + $0x90] sm:$0xff] %v2105
    %2193 = vst [vmem:[%s2173 + $0x98] sm:$0xff] %v2110
    %2194 = vst [vmem:[%s2173 + $0xa0] sm:$0xff] %v2115
    %2195 = vst [vmem:[%s2173 + $0xa8] sm:$0xff] %v2120
    %2196 = vst [vmem:[%s2173 + $0xb0] sm:$0xff] %v2125
    %2197 = vst [vmem:[%s2173 + $0xb8] sm:$0xff] %v2130
    %2198 = vst [vmem:[%s2173 + $0xc0] sm:$0xff] %v2135
    %2199 = vst [vmem:[%s2173 + $0xc8] sm:$0xff] %v2140
    %2200 = vst [vmem:[%s2173 + $0xd0] sm:$0xff] %v2145
    %2201 = vst [vmem:[%s2173 + $0xd8] sm:$0xff] %v2150
    %2202 = vst [vmem:[%s2173 + $0xe0] sm:$0xff] %v2155
    %2203 = vst [vmem:[%s2173 + $0xe8] sm:$0xff] %v2160
    %2204 = vst [vmem:[%s2173 + $0xf0] sm:$0xff] %v2165
    %2205 = vst [vmem:[%s2173 + $0xf8] sm:$0xff] %v2170
    %s2206 = scalar_lea.vmem %s0, 224
    %v2207 = vld [vmem:[%s2206] sm:$0xff]
    %v2208 = vld [vmem:[%s2206 + $0x8] sm:$0xff]
    %v2209 = vld [vmem:[%s2206 + $0x10] sm:$0xff]
    %v2210 = vld [vmem:[%s2206 + $0x18] sm:$0xf]
    %v2212 = vsel %vm349, %v2210, 0
    %2214 = vmatprep.subr.mxu0 0.0
    %2215 = vmatpush1.msra.mxu0 0.0
    %2216 = vmatprep.subr.mxu0 0.0
    %2217 = vmatpush1.msra.mxu0 0.0
    %2218 = vmatprep.subr.mxu0 0.0
    %2219 = vmatpush1.msra.mxu0 0.0
    %2220 = vmatprep.subr.mxu0 0.0
    %2221 = vmatpush1.msra.mxu0 0.0
    %2222 = vmatprep.subr.mxu0 0.0
    %2223 = vmatpush1.msra.mxu0 0.0
    %2224 = vmatprep.subr.mxu0 0.0
    %2225 = vmatpush1.msra.mxu0 0.0
    %2226 = vmatprep.subr.mxu0 0.0
    %2227 = vmatpush1.msra.mxu0 0.0
    %2228 = vmatprep.subr.mxu0 0.0
    %2229 = vmatpush1.msra.mxu0 0.0
    %2230 = vmatprep.subr.mxu0 0.0
    %2231 = vmatpush1.msra.mxu0 0.0
    %2232 = vmatprep.subr.mxu0 0.0
    %2233 = vmatpush1.msra.mxu0 0.0
    %2234 = vmatprep.subr.mxu0 0.0
    %2235 = vmatpush1.msra.mxu0 0.0
    %2236 = vmatprep.subr.mxu0 0.0
    %2237 = vmatpush1.msra.mxu0 0.0
    %2238 = vmatprep.subr.mxu0 0.0
    %2239 = vmatpush1.msra.mxu0 %v2212
    %2240 = vmatprep.subr.mxu0 0.0
    %2241 = vmatpush1.msra.mxu0 %v2209
    %2242 = vmatprep.subr.mxu0 0.0
    %2243 = vmatpush1.msra.mxu0 %v2208
    %2244 = vmatprep.subr.mxu0 0.0
    %2245 = vmatpush1.msra.mxu0 %v2207
    %2246 = vmatprep.subr.mxu0 0.0
    %2247 = vmatpush2.msra.mxu0 0.0
    %2248 = vmatprep.subr.mxu0 0.0
    %2249 = vmatpush2.msra.mxu0 0.0
    %2250 = vmatprep.subr.mxu0 0.0
    %2251 = vmatpush2.msra.mxu0 0.0
    %2252 = vmatprep.subr.mxu0 0.0
    %2253 = vmatpush2.msra.mxu0 0.0
    %2254 = vmatprep.subr.mxu0 0.0
    %2255 = vmatpush2.msra.mxu0 0.0
    %2256 = vmatprep.subr.mxu0 0.0
    %2257 = vmatpush2.msra.mxu0 0.0
    %2258 = vmatprep.subr.mxu0 0.0
    %2259 = vmatpush2.msra.mxu0 0.0
    %2260 = vmatprep.subr.mxu0 0.0
    %2261 = vmatpush2.msra.mxu0 0.0
    %2262 = vmatprep.subr.mxu0 0.0
    %2263 = vmatpush2.msra.mxu0 0.0
    %2264 = vmatprep.subr.mxu0 0.0
    %2265 = vmatpush2.msra.mxu0 0.0
    %2266 = vmatprep.subr.mxu0 0.0
    %2267 = vmatpush2.msra.mxu0 0.0
    %2268 = vmatprep.subr.mxu0 0.0
    %2269 = vmatpush2.msra.mxu0 0.0
    %2270 = vmatprep.subr.mxu0 0.0
    %2271 = vmatpush2.msra.mxu0 0.0
    %2272 = vmatprep.subr.mxu0 0.0
    %2273 = vmatpush2.msra.mxu0 0.0
    %2274 = vmatprep.subr.mxu0 0.0
    %2275 = vmatpush2.msra.mxu0 0.0
    %2276 = vmatprep.subr.mxu0 0.0
    %2277 = vmatpush2.msra.mxu0 0.0
    %2278 = vmatprep.mubr.f32.mxu0 0.0
    %2279 = vmatmul.mubr.f32.gmra.mxu0 %v254
    %v2280 = vpop.f32.mrf.mxu0
    %v2281 = vadd.f32 %v91, %v2280
    %v2282 = vpop.f32.mrf.mxu0
    %2283 = vmatprep.mubr.f32.mxu0 0.0
    %2284 = vmatmul.mubr.f32.gmra.mxu0 %v257
    %v2285 = vpop.f32.mrf.mxu0
    %v2286 = vadd.f32 %v96, %v2285
    %v2287 = vpop.f32.mrf.mxu0
    %2288 = vmatprep.mubr.f32.mxu0 0.0
    %2289 = vmatmul.mubr.f32.gmra.mxu0 %v260
    %v2290 = vpop.f32.mrf.mxu0
    %v2291 = vadd.f32 %v101, %v2290
    %v2292 = vpop.f32.mrf.mxu0
    %2293 = vmatprep.mubr.f32.mxu0 0.0
    %2294 = vmatmul.mubr.f32.gmra.mxu0 %v263
    %v2295 = vpop.f32.mrf.mxu0
    %v2296 = vadd.f32 %v106, %v2295
    %v2297 = vpop.f32.mrf.mxu0
    %2298 = vmatprep.mubr.f32.mxu0 0.0
    %2299 = vmatmul.mubr.f32.gmra.mxu0 %v266
    %v2300 = vpop.f32.mrf.mxu0
    %v2301 = vadd.f32 %v111, %v2300
    %v2302 = vpop.f32.mrf.mxu0
    %2303 = vmatprep.mubr.f32.mxu0 0.0
    %2304 = vmatmul.mubr.f32.gmra.mxu0 %v269
    %v2305 = vpop.f32.mrf.mxu0
    %v2306 = vadd.f32 %v116, %v2305
    %v2307 = vpop.f32.mrf.mxu0
    %2308 = vmatprep.mubr.f32.mxu0 0.0
    %2309 = vmatmul.mubr.f32.gmra.mxu0 %v272
    %v2310 = vpop.f32.mrf.mxu0
    %v2311 = vadd.f32 %v121, %v2310
    %v2312 = vpop.f32.mrf.mxu0
    %2313 = vmatprep.mubr.f32.mxu0 0.0
    %2314 = vmatmul.mubr.f32.gmra.mxu0 %v275
    %v2315 = vpop.f32.mrf.mxu0
    %v2316 = vadd.f32 %v126, %v2315
    %v2317 = vpop.f32.mrf.mxu0
    %2318 = vmatprep.mubr.f32.mxu0 0.0
    %2319 = vmatmul.mubr.f32.gmra.mxu0 %v278
    %v2320 = vpop.f32.mrf.mxu0
    %v2321 = vadd.f32 %v131, %v2320
    %v2322 = vpop.f32.mrf.mxu0
    %2323 = vmatprep.mubr.f32.mxu0 0.0
    %2324 = vmatmul.mubr.f32.gmra.mxu0 %v281
    %v2325 = vpop.f32.mrf.mxu0
    %v2326 = vadd.f32 %v136, %v2325
    %v2327 = vpop.f32.mrf.mxu0
    %2328 = vmatprep.mubr.f32.mxu0 0.0
    %2329 = vmatmul.mubr.f32.gmra.mxu0 %v284
    %v2330 = vpop.f32.mrf.mxu0
    %v2331 = vadd.f32 %v141, %v2330
    %v2332 = vpop.f32.mrf.mxu0
    %2333 = vmatprep.mubr.f32.mxu0 0.0
    %2334 = vmatmul.mubr.f32.gmra.mxu0 %v287
    %v2335 = vpop.f32.mrf.mxu0
    %v2336 = vadd.f32 %v146, %v2335
    %v2337 = vpop.f32.mrf.mxu0
    %2338 = vmatprep.mubr.f32.mxu0 0.0
    %2339 = vmatmul.mubr.f32.gmra.mxu0 %v290
    %v2340 = vpop.f32.mrf.mxu0
    %v2341 = vadd.f32 %v151, %v2340
    %v2342 = vpop.f32.mrf.mxu0
    %2343 = vmatprep.mubr.f32.mxu0 0.0
    %2344 = vmatmul.mubr.f32.gmra.mxu0 %v293
    %v2345 = vpop.f32.mrf.mxu0
    %v2346 = vadd.f32 %v156, %v2345
    %v2347 = vpop.f32.mrf.mxu0
    %2348 = vmatprep.mubr.f32.mxu0 0.0
    %2349 = vmatmul.mubr.f32.gmra.mxu0 %v296
    %v2350 = vpop.f32.mrf.mxu0
    %v2351 = vadd.f32 %v161, %v2350
    %v2352 = vpop.f32.mrf.mxu0
    %2353 = vmatprep.mubr.f32.mxu0 0.0
    %2354 = vmatmul.mubr.f32.gmra.mxu0 %v299
    %v2355 = vpop.f32.mrf.mxu0
    %v2356 = vadd.f32 %v166, %v2355
    %v2357 = vpop.f32.mrf.mxu0
    %2358 = vmatprep.mubr.f32.mxu0 0.0
    %2359 = vmatmul.mubr.f32.gmra.mxu0 %v302
    %v2360 = vpop.f32.mrf.mxu0
    %v2361 = vadd.f32 %v171, %v2360
    %v2362 = vpop.f32.mrf.mxu0
    %2363 = vmatprep.mubr.f32.mxu0 0.0
    %2364 = vmatmul.mubr.f32.gmra.mxu0 %v305
    %v2365 = vpop.f32.mrf.mxu0
    %v2366 = vadd.f32 %v176, %v2365
    %v2367 = vpop.f32.mrf.mxu0
    %2368 = vmatprep.mubr.f32.mxu0 0.0
    %2369 = vmatmul.mubr.f32.gmra.mxu0 %v308
    %v2370 = vpop.f32.mrf.mxu0
    %v2371 = vadd.f32 %v181, %v2370
    %v2372 = vpop.f32.mrf.mxu0
    %2373 = vmatprep.mubr.f32.mxu0 0.0
    %2374 = vmatmul.mubr.f32.gmra.mxu0 %v311
    %v2375 = vpop.f32.mrf.mxu0
    %v2376 = vadd.f32 %v186, %v2375
    %v2377 = vpop.f32.mrf.mxu0
    %2378 = vmatprep.mubr.f32.mxu0 0.0
    %2379 = vmatmul.mubr.f32.gmra.mxu0 %v314
    %v2380 = vpop.f32.mrf.mxu0
    %v2381 = vadd.f32 %v191, %v2380
    %v2382 = vpop.f32.mrf.mxu0
    %2383 = vmatprep.mubr.f32.mxu0 0.0
    %2384 = vmatmul.mubr.f32.gmra.mxu0 %v317
    %v2385 = vpop.f32.mrf.mxu0
    %v2386 = vadd.f32 %v196, %v2385
    %v2387 = vpop.f32.mrf.mxu0
    %2388 = vmatprep.mubr.f32.mxu0 0.0
    %2389 = vmatmul.mubr.f32.gmra.mxu0 %v320
    %v2390 = vpop.f32.mrf.mxu0
    %v2391 = vadd.f32 %v201, %v2390
    %v2392 = vpop.f32.mrf.mxu0
    %2393 = vmatprep.mubr.f32.mxu0 0.0
    %2394 = vmatmul.mubr.f32.gmra.mxu0 %v323
    %v2395 = vpop.f32.mrf.mxu0
    %v2396 = vadd.f32 %v206, %v2395
    %v2397 = vpop.f32.mrf.mxu0
    %2398 = vmatprep.mubr.f32.mxu0 0.0
    %2399 = vmatmul.mubr.f32.gmra.mxu0 %v326
    %v2400 = vpop.f32.mrf.mxu0
    %v2401 = vadd.f32 %v211, %v2400
    %v2402 = vpop.f32.mrf.mxu0
    %2403 = vmatprep.mubr.f32.mxu0 0.0
    %2404 = vmatmul.mubr.f32.gmra.mxu0 %v329
    %v2405 = vpop.f32.mrf.mxu0
    %v2406 = vadd.f32 %v216, %v2405
    %v2407 = vpop.f32.mrf.mxu0
    %2408 = vmatprep.mubr.f32.mxu0 0.0
    %2409 = vmatmul.mubr.f32.gmra.mxu0 %v332
    %v2410 = vpop.f32.mrf.mxu0
    %v2411 = vadd.f32 %v221, %v2410
    %v2412 = vpop.f32.mrf.mxu0
    %2413 = vmatprep.mubr.f32.mxu0 0.0
    %2414 = vmatmul.mubr.f32.gmra.mxu0 %v335
    %v2415 = vpop.f32.mrf.mxu0
    %v2416 = vadd.f32 %v226, %v2415
    %v2417 = vpop.f32.mrf.mxu0
    %2418 = vmatprep.mubr.f32.mxu0 0.0
    %2419 = vmatmul.mubr.f32.gmra.mxu0 %v338
    %v2420 = vpop.f32.mrf.mxu0
    %v2421 = vadd.f32 %v231, %v2420
    %v2422 = vpop.f32.mrf.mxu0
    %2423 = vmatprep.mubr.f32.mxu0 0.0
    %2424 = vmatmul.mubr.f32.gmra.mxu0 %v341
    %v2425 = vpop.f32.mrf.mxu0
    %v2426 = vadd.f32 %v236, %v2425
    %v2427 = vpop.f32.mrf.mxu0
    %2428 = vmatprep.mubr.f32.mxu0 0.0
    %2429 = vmatmul.mubr.f32.gmra.mxu0 %v344
    %v2430 = vpop.f32.mrf.mxu0
    %v2431 = vadd.f32 %v241, %v2430
    %v2432 = vpop.f32.mrf.mxu0
    %2433 = vmatprep.mubr.f32.mxu0 0.0
    %2434 = vmatmul.mubr.f32.gmra.mxu0 %v347
    %v2435 = vpop.f32.mrf.mxu0
    %v2436 = vadd.f32 %v246, %v2435
    %v2437 = vpop.f32.mrf.mxu0
    %2438 = vdwg.mxu0
    %s2439 = scalar_lea.vmem [#allocation2], 1792
    %2440 = vst [vmem:[%s2439] sm:$0xff] %v2281
    %2441 = vst [vmem:[%s2439 + $0x8] sm:$0xff] %v2286
    %2442 = vst [vmem:[%s2439 + $0x10] sm:$0xff] %v2291
    %2443 = vst [vmem:[%s2439 + $0x18] sm:$0xff] %v2296
    %2444 = vst [vmem:[%s2439 + $0x20] sm:$0xff] %v2301
    %2445 = vst [vmem:[%s2439 + $0x28] sm:$0xff] %v2306
    %2446 = vst [vmem:[%s2439 + $0x30] sm:$0xff] %v2311
    %2447 = vst [vmem:[%s2439 + $0x38] sm:$0xff] %v2316
    %2448 = vst [vmem:[%s2439 + $0x40] sm:$0xff] %v2321
    %2449 = vst [vmem:[%s2439 + $0x48] sm:$0xff] %v2326
    %2450 = vst [vmem:[%s2439 + $0x50] sm:$0xff] %v2331
    %2451 = vst [vmem:[%s2439 + $0x58] sm:$0xff] %v2336
    %2452 = vst [vmem:[%s2439 + $0x60] sm:$0xff] %v2341
    %2453 = vst [vmem:[%s2439 + $0x68] sm:$0xff] %v2346
    %2454 = vst [vmem:[%s2439 + $0x70] sm:$0xff] %v2351
    %2455 = vst [vmem:[%s2439 + $0x78] sm:$0xff] %v2356
    %2456 = vst [vmem:[%s2439 + $0x80] sm:$0xff] %v2361
    %2457 = vst [vmem:[%s2439 + $0x88] sm:$0xff] %v2366
    %2458 = vst [vmem:[%s2439 + $0x90] sm:$0xff] %v2371
    %2459 = vst [vmem:[%s2439 + $0x98] sm:$0xff] %v2376
    %2460 = vst [vmem:[%s2439 + $0xa0] sm:$0xff] %v2381
    %2461 = vst [vmem:[%s2439 + $0xa8] sm:$0xff] %v2386
    %2462 = vst [vmem:[%s2439 + $0xb0] sm:$0xff] %v2391
    %2463 = vst [vmem:[%s2439 + $0xb8] sm:$0xff] %v2396
    %2464 = vst [vmem:[%s2439 + $0xc0] sm:$0xff] %v2401
    %2465 = vst [vmem:[%s2439 + $0xc8] sm:$0xff] %v2406
    %2466 = vst [vmem:[%s2439 + $0xd0] sm:$0xff] %v2411
    %2467 = vst [vmem:[%s2439 + $0xd8] sm:$0xff] %v2416
    %2468 = vst [vmem:[%s2439 + $0xe0] sm:$0xff] %v2421
    %2469 = vst [vmem:[%s2439 + $0xe8] sm:$0xff] %v2426
    %2470 = vst [vmem:[%s2439 + $0xf0] sm:$0xff] %v2431
    %2471 = vst [vmem:[%s2439 + $0xf8] sm:$0xff] %v2436
    %v2472 = vld [vmem:[%s2] sm:$0xff]
    %v2473 = vld [vmem:[%s2 + $0x8] sm:$0xff]
    %v2474 = vld [vmem:[%s2 + $0x10] sm:$0xff]
    %v2475 = vld [vmem:[%s2 + $0x18] sm:$0xff]
    %v2476 = vld [vmem:[%s2 + $0x20] sm:$0xff]
    %v2477 = vld [vmem:[%s2 + $0x28] sm:$0xff]
    %v2478 = vld [vmem:[%s2 + $0x30] sm:$0xff]
    %v2479 = vld [vmem:[%s2 + $0x38] sm:$0xff]
    %v2480 = vld [vmem:[%s2 + $0x40] sm:$0xff]
    %v2481 = vld [vmem:[%s2 + $0x48] sm:$0xff]
    %v2482 = vld [vmem:[%s2 + $0x50] sm:$0xff]
    %v2483 = vld [vmem:[%s2 + $0x58] sm:$0xff]
    %v2484 = vld [vmem:[%s2 + $0x60] sm:$0xff]
    %v2485 = vld [vmem:[%s2 + $0x68] sm:$0xff]
    %v2486 = vld [vmem:[%s2 + $0x70] sm:$0xff]
    %v2487 = vld [vmem:[%s2 + $0x78] sm:$0xff]
    %v2488 = vld [vmem:[%s2 + $0x80] sm:$0xff]
    %v2489 = vld [vmem:[%s2 + $0x88] sm:$0xff]
    %v2490 = vld [vmem:[%s2 + $0x90] sm:$0xff]
    %v2491 = vld [vmem:[%s2 + $0x98] sm:$0xff]
    %v2492 = vld [vmem:[%s2 + $0xa0] sm:$0xff]
    %v2493 = vld [vmem:[%s2 + $0xa8] sm:$0xff]
    %v2494 = vld [vmem:[%s2 + $0xb0] sm:$0xff]
    %v2495 = vld [vmem:[%s2 + $0xb8] sm:$0xff]
    %v2496 = vld [vmem:[%s2 + $0xc0] sm:$0xff]
    %v2497 = vld [vmem:[%s2 + $0xc8] sm:$0xff]
    %v2498 = vld [vmem:[%s2 + $0xd0] sm:$0xff]
    %v2499 = vld [vmem:[%s2 + $0xd8] sm:$0xff]
    %v2500 = vld [vmem:[%s2 + $0xe0] sm:$0xff]
    %v2501 = vld [vmem:[%s2 + $0xe8] sm:$0xff]
    %v2502 = vld [vmem:[%s2 + $0xf0] sm:$0xff]
    %v2503 = vld [vmem:[%s2 + $0xf8] sm:$0xff]
    %v2504 = vld [vmem:[#allocation2] sm:$0xff]
    %v2505 = vld [vmem:[#allocation2 + $0x8] sm:$0xff]
    %v2506 = vld [vmem:[#allocation2 + $0x10] sm:$0xff]
    %v2507 = vld [vmem:[#allocation2 + $0x18] sm:$0xff]
    %v2508 = vld [vmem:[#allocation2 + $0x20] sm:$0xff]
    %v2509 = vld [vmem:[#allocation2 + $0x28] sm:$0xff]
    %v2510 = vld [vmem:[#allocation2 + $0x30] sm:$0xff]
    %v2511 = vld [vmem:[#allocation2 + $0x38] sm:$0xff]
    %v2512 = vld [vmem:[#allocation2 + $0x40] sm:$0xff]
    %v2513 = vld [vmem:[#allocation2 + $0x48] sm:$0xff]
    %v2514 = vld [vmem:[#allocation2 + $0x50] sm:$0xff]
    %v2515 = vld [vmem:[#allocation2 + $0x58] sm:$0xff]
    %v2516 = vld [vmem:[#allocation2 + $0x60] sm:$0xff]
    %v2517 = vld [vmem:[#allocation2 + $0x68] sm:$0xff]
    %v2518 = vld [vmem:[#allocation2 + $0x70] sm:$0xff]
    %v2519 = vld [vmem:[#allocation2 + $0x78] sm:$0xff]
    %v2520 = vld [vmem:[#allocation2 + $0x80] sm:$0xff]
    %v2521 = vld [vmem:[#allocation2 + $0x88] sm:$0xff]
    %v2522 = vld [vmem:[#allocation2 + $0x90] sm:$0xff]
    %v2523 = vld [vmem:[#allocation2 + $0x98] sm:$0xff]
    %v2524 = vld [vmem:[#allocation2 + $0xa0] sm:$0xff]
    %v2525 = vld [vmem:[#allocation2 + $0xa8] sm:$0xff]
    %v2526 = vld [vmem:[#allocation2 + $0xb0] sm:$0xff]
    %v2527 = vld [vmem:[#allocation2 + $0xb8] sm:$0xff]
    %v2528 = vld [vmem:[#allocation2 + $0xc0] sm:$0xff]
    %v2529 = vld [vmem:[#allocation2 + $0xc8] sm:$0xff]
    %v2530 = vld [vmem:[#allocation2 + $0xd0] sm:$0xff]
    %v2531 = vld [vmem:[#allocation2 + $0xd8] sm:$0xff]
    %v2532 = vld [vmem:[#allocation2 + $0xe0] sm:$0xff]
    %v2533 = vld [vmem:[#allocation2 + $0xe8] sm:$0xff]
    %v2534 = vld [vmem:[#allocation2 + $0xf0] sm:$0xff]
    %v2535 = vld [vmem:[#allocation2 + $0xf8] sm:$0xff]
    %vm2536 = vcmask 523264
    %v2538 = vsel %vm2536, %v2472, 0
    %v2541 = vsel %vm2536, %v2473, 0
    %v2544 = vsel %vm2536, %v2474, 0
    %v2547 = vsel %vm2536, %v2475, 0
    %v2550 = vsel %vm2536, %v2476, 0
    %v2553 = vsel %vm2536, %v2477, 0
    %v2556 = vsel %vm2536, %v2478, 0
    %v2559 = vsel %vm2536, %v2479, 0
    %v2562 = vsel %vm2536, %v2480, 0
    %v2565 = vsel %vm2536, %v2481, 0
    %v2568 = vsel %vm2536, %v2482, 0
    %v2571 = vsel %vm2536, %v2483, 0
    %v2574 = vsel %vm2536, %v2484, 0
    %v2577 = vsel %vm2536, %v2485, 0
    %v2580 = vsel %vm2536, %v2486, 0
    %v2583 = vsel %vm2536, %v2487, 0
    %v2586 = vsel %vm2536, %v2488, 0
    %v2589 = vsel %vm2536, %v2489, 0
    %v2592 = vsel %vm2536, %v2490, 0
    %v2595 = vsel %vm2536, %v2491, 0
    %v2598 = vsel %vm2536, %v2492, 0
    %v2601 = vsel %vm2536, %v2493, 0
    %v2604 = vsel %vm2536, %v2494, 0
    %v2607 = vsel %vm2536, %v2495, 0
    %v2610 = vsel %vm2536, %v2496, 0
    %v2613 = vsel %vm2536, %v2497, 0
    %v2616 = vsel %vm2536, %v2498, 0
    %v2619 = vsel %vm2536, %v2499, 0
    %v2622 = vsel %vm2536, %v2500, 0
    %v2625 = vsel %vm2536, %v2501, 0
    %v2628 = vsel %vm2536, %v2502, 0
    %v2631 = vsel %vm2536, %v2503, 0
    %2633 = vmatprep.subr.mxu0 0.0
    %2634 = vmatpush1.msra.mxu0 0.0
    %2635 = vmatprep.subr.mxu0 0.0
    %2636 = vmatpush1.msra.mxu0 0.0
    %2637 = vmatprep.subr.mxu0 0.0
    %2638 = vmatpush1.msra.mxu0 0.0
    %2639 = vmatprep.subr.mxu0 0.0
    %2640 = vmatpush1.msra.mxu0 0.0
    %2641 = vmatprep.subr.mxu0 0.0
    %2642 = vmatpush1.msra.mxu0 0.0
    %2643 = vmatprep.subr.mxu0 0.0
    %2644 = vmatpush1.msra.mxu0 0.0
    %2645 = vmatprep.subr.mxu0 0.0
    %2646 = vmatpush1.msra.mxu0 0.0
    %2647 = vmatprep.subr.mxu0 0.0
    %2648 = vmatpush1.msra.mxu0 0.0
    %2649 = vmatprep.subr.mxu0 0.0
    %2650 = vmatpush1.msra.mxu0 0.0
    %2651 = vmatprep.subr.mxu0 0.0
    %2652 = vmatpush1.msra.mxu0 0.0
    %2653 = vmatprep.subr.mxu0 0.0
    %2654 = vmatpush1.msra.mxu0 0.0
    %2655 = vmatprep.subr.mxu0 0.0
    %2656 = vmatpush1.msra.mxu0 0.0
    %2657 = vmatprep.subr.mxu0 0.0
    %2658 = vmatpush1.msra.mxu0 0.0
    %2659 = vmatprep.subr.mxu0 0.0
    %2660 = vmatpush1.msra.mxu0 0.0
    %2661 = vmatprep.subr.mxu0 0.0
    %2662 = vmatpush1.msra.mxu0 0.0
    %2663 = vmatprep.subr.mxu0 0.0
    %2664 = vmatpush1.msra.mxu0 0.0
    %2665 = vmatprep.subr.mxu0 0.0
    %2666 = vmatpush2.msra.mxu0 0.0
    %2667 = vmatprep.subr.mxu0 0.0
    %2668 = vmatpush2.msra.mxu0 0.0
    %2669 = vmatprep.subr.mxu0 0.0
    %2670 = vmatpush2.msra.mxu0 0.0
    %2671 = vmatprep.subr.mxu0 0.0
    %2672 = vmatpush2.msra.mxu0 0.0
    %2673 = vmatprep.subr.mxu0 0.0
    %2674 = vmatpush2.msra.mxu0 0.0
    %2675 = vmatprep.subr.mxu0 0.0
    %2676 = vmatpush2.msra.mxu0 0.0
    %2677 = vmatprep.subr.mxu0 0.0
    %2678 = vmatpush2.msra.mxu0 0.0
    %2679 = vmatprep.subr.mxu0 0.0
    %2680 = vmatpush2.msra.mxu0 0.0
    %2681 = vmatprep.subr.mxu0 0.0
    %2682 = vmatpush2.msra.mxu0 0.0
    %2683 = vmatprep.subr.mxu0 0.0
    %2684 = vmatpush2.msra.mxu0 0.0
    %2685 = vmatprep.subr.mxu0 0.0
    %2686 = vmatpush2.msra.mxu0 0.0
    %2687 = vmatprep.subr.mxu0 0.0
    %2688 = vmatpush2.msra.mxu0 0.0
    %2689 = vmatprep.subr.mxu0 0.0
    %2690 = vmatpush2.msra.mxu0 0.0
    %2691 = vmatprep.subr.mxu0 0.0
    %2692 = vmatpush2.msra.mxu0 0.0
    %2693 = vmatprep.subr.mxu0 0.0
    %2694 = vmatpush2.msra.mxu0 0.0
    %2695 = vmatprep.subr.mxu0 0.0
    %2696 = vmatpush2.msra.mxu0 0.0
    %2697 = vmatprep.mubr.f32.mxu0 0.0
    %2698 = vmatmul.mubr.f32.gmra.mxu0 %v2538
    %v2699 = vpop.f32.mrf.mxu0
    %v2700 = vadd.f32 0.0, %v2699
    %v2701 = vpop.f32.mrf.mxu0
    %2702 = vmatprep.mubr.f32.mxu0 0.0
    %2703 = vmatmul.mubr.f32.gmra.mxu0 %v2541
    %v2704 = vpop.f32.mrf.mxu0
    %v2705 = vadd.f32 0.0, %v2704
    %v2706 = vpop.f32.mrf.mxu0
    %2707 = vmatprep.mubr.f32.mxu0 0.0
    %2708 = vmatmul.mubr.f32.gmra.mxu0 %v2544
    %v2709 = vpop.f32.mrf.mxu0
    %v2710 = vadd.f32 0.0, %v2709
    %v2711 = vpop.f32.mrf.mxu0
    %2712 = vmatprep.mubr.f32.mxu0 0.0
    %2713 = vmatmul.mubr.f32.gmra.mxu0 %v2547
    %v2714 = vpop.f32.mrf.mxu0
    %v2715 = vadd.f32 0.0, %v2714
    %v2716 = vpop.f32.mrf.mxu0
    %2717 = vmatprep.mubr.f32.mxu0 0.0
    %2718 = vmatmul.mubr.f32.gmra.mxu0 %v2550
    %v2719 = vpop.f32.mrf.mxu0
    %v2720 = vadd.f32 0.0, %v2719
    %v2721 = vpop.f32.mrf.mxu0
    %2722 = vmatprep.mubr.f32.mxu0 0.0
    %2723 = vmatmul.mubr.f32.gmra.mxu0 %v2553
    %v2724 = vpop.f32.mrf.mxu0
    %v2725 = vadd.f32 0.0, %v2724
    %v2726 = vpop.f32.mrf.mxu0
    %2727 = vmatprep.mubr.f32.mxu0 0.0
    %2728 = vmatmul.mubr.f32.gmra.mxu0 %v2556
    %v2729 = vpop.f32.mrf.mxu0
    %v2730 = vadd.f32 0.0, %v2729
    %v2731 = vpop.f32.mrf.mxu0
    %2732 = vmatprep.mubr.f32.mxu0 0.0
    %2733 = vmatmul.mubr.f32.gmra.mxu0 %v2559
    %v2734 = vpop.f32.mrf.mxu0
    %v2735 = vadd.f32 0.0, %v2734
    %v2736 = vpop.f32.mrf.mxu0
    %2737 = vmatprep.mubr.f32.mxu0 0.0
    %2738 = vmatmul.mubr.f32.gmra.mxu0 %v2562
    %v2739 = vpop.f32.mrf.mxu0
    %v2740 = vadd.f32 0.0, %v2739
    %v2741 = vpop.f32.mrf.mxu0
    %2742 = vmatprep.mubr.f32.mxu0 0.0
    %2743 = vmatmul.mubr.f32.gmra.mxu0 %v2565
    %v2744 = vpop.f32.mrf.mxu0
    %v2745 = vadd.f32 0.0, %v2744
    %v2746 = vpop.f32.mrf.mxu0
    %2747 = vmatprep.mubr.f32.mxu0 0.0
    %2748 = vmatmul.mubr.f32.gmra.mxu0 %v2568
    %v2749 = vpop.f32.mrf.mxu0
    %v2750 = vadd.f32 0.0, %v2749
    %v2751 = vpop.f32.mrf.mxu0
    %2752 = vmatprep.mubr.f32.mxu0 0.0
    %2753 = vmatmul.mubr.f32.gmra.mxu0 %v2571
    %v2754 = vpop.f32.mrf.mxu0
    %v2755 = vadd.f32 0.0, %v2754
    %v2756 = vpop.f32.mrf.mxu0
    %2757 = vmatprep.mubr.f32.mxu0 0.0
    %2758 = vmatmul.mubr.f32.gmra.mxu0 %v2574
    %v2759 = vpop.f32.mrf.mxu0
    %v2760 = vadd.f32 0.0, %v2759
    %v2761 = vpop.f32.mrf.mxu0
    %2762 = vmatprep.mubr.f32.mxu0 0.0
    %2763 = vmatmul.mubr.f32.gmra.mxu0 %v2577
    %v2764 = vpop.f32.mrf.mxu0
    %v2765 = vadd.f32 0.0, %v2764
    %v2766 = vpop.f32.mrf.mxu0
    %2767 = vmatprep.mubr.f32.mxu0 0.0
    %2768 = vmatmul.mubr.f32.gmra.mxu0 %v2580
    %v2769 = vpop.f32.mrf.mxu0
    %v2770 = vadd.f32 0.0, %v2769
    %v2771 = vpop.f32.mrf.mxu0
    %2772 = vmatprep.mubr.f32.mxu0 0.0
    %2773 = vmatmul.mubr.f32.gmra.mxu0 %v2583
    %v2774 = vpop.f32.mrf.mxu0
    %v2775 = vadd.f32 0.0, %v2774
    %v2776 = vpop.f32.mrf.mxu0
    %2777 = vmatprep.mubr.f32.mxu0 0.0
    %2778 = vmatmul.mubr.f32.gmra.mxu0 %v2586
    %v2779 = vpop.f32.mrf.mxu0
    %v2780 = vadd.f32 0.0, %v2779
    %v2781 = vpop.f32.mrf.mxu0
    %2782 = vmatprep.mubr.f32.mxu0 0.0
    %2783 = vmatmul.mubr.f32.gmra.mxu0 %v2589
    %v2784 = vpop.f32.mrf.mxu0
    %v2785 = vadd.f32 0.0, %v2784
    %v2786 = vpop.f32.mrf.mxu0
    %2787 = vmatprep.mubr.f32.mxu0 0.0
    %2788 = vmatmul.mubr.f32.gmra.mxu0 %v2592
    %v2789 = vpop.f32.mrf.mxu0
    %v2790 = vadd.f32 0.0, %v2789
    %v2791 = vpop.f32.mrf.mxu0
    %2792 = vmatprep.mubr.f32.mxu0 0.0
    %2793 = vmatmul.mubr.f32.gmra.mxu0 %v2595
    %v2794 = vpop.f32.mrf.mxu0
    %v2795 = vadd.f32 0.0, %v2794
    %v2796 = vpop.f32.mrf.mxu0
    %2797 = vmatprep.mubr.f32.mxu0 0.0
    %2798 = vmatmul.mubr.f32.gmra.mxu0 %v2598
    %v2799 = vpop.f32.mrf.mxu0
    %v2800 = vadd.f32 0.0, %v2799
    %v2801 = vpop.f32.mrf.mxu0
    %2802 = vmatprep.mubr.f32.mxu0 0.0
    %2803 = vmatmul.mubr.f32.gmra.mxu0 %v2601
    %v2804 = vpop.f32.mrf.mxu0
    %v2805 = vadd.f32 0.0, %v2804
    %v2806 = vpop.f32.mrf.mxu0
    %2807 = vmatprep.mubr.f32.mxu0 0.0
    %2808 = vmatmul.mubr.f32.gmra.mxu0 %v2604
    %v2809 = vpop.f32.mrf.mxu0
    %v2810 = vadd.f32 0.0, %v2809
    %v2811 = vpop.f32.mrf.mxu0
    %2812 = vmatprep.mubr.f32.mxu0 0.0
    %2813 = vmatmul.mubr.f32.gmra.mxu0 %v2607
    %v2814 = vpop.f32.mrf.mxu0
    %v2815 = vadd.f32 0.0, %v2814
    %v2816 = vpop.f32.mrf.mxu0
    %2817 = vmatprep.mubr.f32.mxu0 0.0
    %2818 = vmatmul.mubr.f32.gmra.mxu0 %v2610
    %v2819 = vpop.f32.mrf.mxu0
    %v2820 = vadd.f32 0.0, %v2819
    %v2821 = vpop.f32.mrf.mxu0
    %2822 = vmatprep.mubr.f32.mxu0 0.0
    %2823 = vmatmul.mubr.f32.gmra.mxu0 %v2613
    %v2824 = vpop.f32.mrf.mxu0
    %v2825 = vadd.f32 0.0, %v2824
    %v2826 = vpop.f32.mrf.mxu0
    %2827 = vmatprep.mubr.f32.mxu0 0.0
    %2828 = vmatmul.mubr.f32.gmra.mxu0 %v2616
    %v2829 = vpop.f32.mrf.mxu0
    %v2830 = vadd.f32 0.0, %v2829
    %v2831 = vpop.f32.mrf.mxu0
    %2832 = vmatprep.mubr.f32.mxu0 0.0
    %2833 = vmatmul.mubr.f32.gmra.mxu0 %v2619
    %v2834 = vpop.f32.mrf.mxu0
    %v2835 = vadd.f32 0.0, %v2834
    %v2836 = vpop.f32.mrf.mxu0
    %2837 = vmatprep.mubr.f32.mxu0 0.0
    %2838 = vmatmul.mubr.f32.gmra.mxu0 %v2622
    %v2839 = vpop.f32.mrf.mxu0
    %v2840 = vadd.f32 0.0, %v2839
    %v2841 = vpop.f32.mrf.mxu0
    %2842 = vmatprep.mubr.f32.mxu0 0.0
    %2843 = vmatmul.mubr.f32.gmra.mxu0 %v2625
    %v2844 = vpop.f32.mrf.mxu0
    %v2845 = vadd.f32 0.0, %v2844
    %v2846 = vpop.f32.mrf.mxu0
    %2847 = vmatprep.mubr.f32.mxu0 0.0
    %2848 = vmatmul.mubr.f32.gmra.mxu0 %v2628
    %v2849 = vpop.f32.mrf.mxu0
    %v2850 = vadd.f32 0.0, %v2849
    %v2851 = vpop.f32.mrf.mxu0
    %2852 = vmatprep.mubr.f32.mxu0 0.0
    %2853 = vmatmul.mubr.f32.gmra.mxu0 %v2631
    %v2854 = vpop.f32.mrf.mxu0
    %v2855 = vadd.f32 0.0, %v2854
    %v2856 = vpop.f32.mrf.mxu0
    %2857 = vdwg.mxu0
    %v2858 = vadd.f32 %v2504, %v2700
    %v2859 = vadd.f32 %v2505, %v2705
    %v2860 = vadd.f32 %v2506, %v2710
    %v2861 = vadd.f32 %v2507, %v2715
    %v2862 = vadd.f32 %v2508, %v2720
    %v2863 = vadd.f32 %v2509, %v2725
    %v2864 = vadd.f32 %v2510, %v2730
    %v2865 = vadd.f32 %v2511, %v2735
    %v2866 = vadd.f32 %v2512, %v2740
    %v2867 = vadd.f32 %v2513, %v2745
    %v2868 = vadd.f32 %v2514, %v2750
    %v2869 = vadd.f32 %v2515, %v2755
    %v2870 = vadd.f32 %v2516, %v2760
    %v2871 = vadd.f32 %v2517, %v2765
    %v2872 = vadd.f32 %v2518, %v2770
    %v2873 = vadd.f32 %v2519, %v2775
    %v2874 = vadd.f32 %v2520, %v2780
    %v2875 = vadd.f32 %v2521, %v2785
    %v2876 = vadd.f32 %v2522, %v2790
    %v2877 = vadd.f32 %v2523, %v2795
    %v2878 = vadd.f32 %v2524, %v2800
    %v2879 = vadd.f32 %v2525, %v2805
    %v2880 = vadd.f32 %v2526, %v2810
    %v2881 = vadd.f32 %v2527, %v2815
    %v2882 = vadd.f32 %v2528, %v2820
    %v2883 = vadd.f32 %v2529, %v2825
    %v2884 = vadd.f32 %v2530, %v2830
    %v2885 = vadd.f32 %v2531, %v2835
    %v2886 = vadd.f32 %v2532, %v2840
    %v2887 = vadd.f32 %v2533, %v2845
    %v2888 = vadd.f32 %v2534, %v2850
    %v2889 = vadd.f32 %v2535, %v2855
    %v2890 = vxor.u32 %v2858, 2147483648
    %v2891 = vxor.u32 %v2859, 2147483648
    %v2892 = vxor.u32 %v2860, 2147483648
    %v2893 = vxor.u32 %v2861, 2147483648
    %v2894 = vxor.u32 %v2862, 2147483648
    %v2895 = vxor.u32 %v2863, 2147483648
    %v2896 = vxor.u32 %v2864, 2147483648
    %v2897 = vxor.u32 %v2865, 2147483648
    %v2898 = vmul.f32 %v2890, 1.442695
    %v2899 = vpow.pop %v2898
    %v2900 = vmul.f32 %v2891, 1.442695
    %v2901 = vpow.pop %v2900
    %v2902 = vmul.f32 %v2892, 1.442695
    %v2903 = vpow.pop %v2902
    %v2904 = vmul.f32 %v2893, 1.442695
    %v2905 = vpow.pop %v2904
    %v2906 = vmul.f32 %v2894, 1.442695
    %v2907 = vpow.pop %v2906
    %v2908 = vmul.f32 %v2895, 1.442695
    %v2909 = vpow.pop %v2908
    %v2910 = vmul.f32 %v2896, 1.442695
    %v2911 = vpow.pop %v2910
    %v2912 = vmul.f32 %v2897, 1.442695
    %v2913 = vpow.pop %v2912
    %v2914 = vadd.f32 %v2899, 1.0
    %v2915 = vadd.f32 %v2901, 1.0
    %v2916 = vadd.f32 %v2903, 1.0
    %v2917 = vadd.f32 %v2905, 1.0
    %v2918 = vadd.f32 %v2907, 1.0
    %v2919 = vadd.f32 %v2909, 1.0
    %v2920 = vadd.f32 %v2911, 1.0
    %v2921 = vadd.f32 %v2913, 1.0
    %v2922 = vrcp.pop %v2914
    %v2923 = vmul.f32 1.0, %v2922
    %v2924 = vrcp.pop %v2915
    %v2925 = vmul.f32 1.0, %v2924
    %v2926 = vrcp.pop %v2916
    %v2927 = vmul.f32 1.0, %v2926
    %v2928 = vrcp.pop %v2917
    %v2929 = vmul.f32 1.0, %v2928
    %v2930 = vrcp.pop %v2918
    %v2931 = vmul.f32 1.0, %v2930
    %v2932 = vrcp.pop %v2919
    %v2933 = vmul.f32 1.0, %v2932
    %v2934 = vrcp.pop %v2920
    %v2935 = vmul.f32 1.0, %v2934
    %v2936 = vrcp.pop %v2921
    %v2937 = vmul.f32 1.0, %v2936
    %v2938 = vxor.u32 %v2866, 2147483648
    %v2939 = vxor.u32 %v2867, 2147483648
    %v2940 = vxor.u32 %v2868, 2147483648
    %v2941 = vxor.u32 %v2869, 2147483648
    %v2942 = vxor.u32 %v2870, 2147483648
    %v2943 = vxor.u32 %v2871, 2147483648
    %v2944 = vxor.u32 %v2872, 2147483648
    %v2945 = vxor.u32 %v2873, 2147483648
    %v2946 = vmul.f32 %v2938, 1.442695
    %v2947 = vpow.pop %v2946
    %v2948 = vmul.f32 %v2939, 1.442695
    %v2949 = vpow.pop %v2948
    %v2950 = vmul.f32 %v2940, 1.442695
    %v2951 = vpow.pop %v2950
    %v2952 = vmul.f32 %v2941, 1.442695
    %v2953 = vpow.pop %v2952
    %v2954 = vmul.f32 %v2942, 1.442695
    %v2955 = vpow.pop %v2954
    %v2956 = vmul.f32 %v2943, 1.442695
    %v2957 = vpow.pop %v2956
    %v2958 = vmul.f32 %v2944, 1.442695
    %v2959 = vpow.pop %v2958
    %v2960 = vmul.f32 %v2945, 1.442695
    %v2961 = vpow.pop %v2960
    %v2962 = vadd.f32 %v2947, 1.0
    %v2963 = vadd.f32 %v2949, 1.0
    %v2964 = vadd.f32 %v2951, 1.0
    %v2965 = vadd.f32 %v2953, 1.0
    %v2966 = vadd.f32 %v2955, 1.0
    %v2967 = vadd.f32 %v2957, 1.0
    %v2968 = vadd.f32 %v2959, 1.0
    %v2969 = vadd.f32 %v2961, 1.0
    %v2970 = vrcp.pop %v2962
    %v2971 = vmul.f32 1.0, %v2970
    %v2972 = vrcp.pop %v2963
    %v2973 = vmul.f32 1.0, %v2972
    %v2974 = vrcp.pop %v2964
    %v2975 = vmul.f32 1.0, %v2974
    %v2976 = vrcp.pop %v2965
    %v2977 = vmul.f32 1.0, %v2976
    %v2978 = vrcp.pop %v2966
    %v2979 = vmul.f32 1.0, %v2978
    %v2980 = vrcp.pop %v2967
    %v2981 = vmul.f32 1.0, %v2980
    %v2982 = vrcp.pop %v2968
    %v2983 = vmul.f32 1.0, %v2982
    %v2984 = vrcp.pop %v2969
    %v2985 = vmul.f32 1.0, %v2984
    %v2986 = vtanh.pop %v2874
    %v2987 = vtanh.pop %v2875
    %v2988 = vtanh.pop %v2876
    %v2989 = vtanh.pop %v2877
    %v2990 = vtanh.pop %v2878
    %v2991 = vtanh.pop %v2879
    %v2992 = vtanh.pop %v2880
    %v2993 = vtanh.pop %v2881
    %v2994 = vxor.u32 %v2882, 2147483648
    %v2995 = vxor.u32 %v2883, 2147483648
    %v2996 = vxor.u32 %v2884, 2147483648
    %v2997 = vxor.u32 %v2885, 2147483648
    %v2998 = vxor.u32 %v2886, 2147483648
    %v2999 = vxor.u32 %v2887, 2147483648
    %v3000 = vxor.u32 %v2888, 2147483648
    %v3001 = vxor.u32 %v2889, 2147483648
    %v3002 = vmul.f32 %v2994, 1.442695
    %v3003 = vpow.pop %v3002
    %v3004 = vmul.f32 %v2995, 1.442695
    %v3005 = vpow.pop %v3004
    %v3006 = vmul.f32 %v2996, 1.442695
    %v3007 = vpow.pop %v3006
    %v3008 = vmul.f32 %v2997, 1.442695
    %v3009 = vpow.pop %v3008
    %v3010 = vmul.f32 %v2998, 1.442695
    %v3011 = vpow.pop %v3010
    %v3012 = vmul.f32 %v2999, 1.442695
    %v3013 = vpow.pop %v3012
    %v3014 = vmul.f32 %v3000, 1.442695
    %v3015 = vpow.pop %v3014
    %v3016 = vmul.f32 %v3001, 1.442695
    %v3017 = vpow.pop %v3016
    %v3018 = vadd.f32 %v3003, 1.0
    %v3019 = vadd.f32 %v3005, 1.0
    %v3020 = vadd.f32 %v3007, 1.0
    %v3021 = vadd.f32 %v3009, 1.0
    %v3022 = vadd.f32 %v3011, 1.0
    %v3023 = vadd.f32 %v3013, 1.0
    %v3024 = vadd.f32 %v3015, 1.0
    %v3025 = vadd.f32 %v3017, 1.0
    %v3026 = vrcp.pop %v3018
    %v3027 = vmul.f32 1.0, %v3026
    %v3028 = vrcp.pop %v3019
    %v3029 = vmul.f32 1.0, %v3028
    %v3030 = vrcp.pop %v3020
    %v3031 = vmul.f32 1.0, %v3030
    %v3032 = vrcp.pop %v3021
    %v3033 = vmul.f32 1.0, %v3032
    %v3034 = vrcp.pop %v3022
    %v3035 = vmul.f32 1.0, %v3034
    %v3036 = vrcp.pop %v3023
    %v3037 = vmul.f32 1.0, %v3036
    %v3038 = vrcp.pop %v3024
    %v3039 = vmul.f32 1.0, %v3038
    %v3040 = vrcp.pop %v3025
    %v3041 = vmul.f32 1.0, %v3040
    %v3042 = vmul.f32 %v2971, 0.0
    %v3043 = vmul.f32 %v2973, 0.0
    %v3044 = vmul.f32 %v2975, 0.0
    %v3045 = vmul.f32 %v2977, 0.0
    %v3046 = vmul.f32 %v2979, 0.0
    %v3047 = vmul.f32 %v2981, 0.0
    %v3048 = vmul.f32 %v2983, 0.0
    %v3049 = vmul.f32 %v2985, 0.0
    %v3050 = vmul.f32 %v2923, %v2986
    %v3051 = vmul.f32 %v2925, %v2987
    %v3052 = vmul.f32 %v2927, %v2988
    %v3053 = vmul.f32 %v2929, %v2989
    %v3054 = vmul.f32 %v2931, %v2990
    %v3055 = vmul.f32 %v2933, %v2991
    %v3056 = vmul.f32 %v2935, %v2992
    %v3057 = vmul.f32 %v2937, %v2993
    %v3058 = vadd.f32 %v3042, %v3050
    %v3059 = vadd.f32 %v3043, %v3051
    %v3060 = vadd.f32 %v3044, %v3052
    %v3061 = vadd.f32 %v3045, %v3053
    %v3062 = vadd.f32 %v3046, %v3054
    %v3063 = vadd.f32 %v3047, %v3055
    %v3064 = vadd.f32 %v3048, %v3056
    %v3065 = vadd.f32 %v3049, %v3057
    %v3066 = vtanh.pop %v3058
    %v3067 = vtanh.pop %v3059
    %v3068 = vtanh.pop %v3060
    %v3069 = vtanh.pop %v3061
    %v3070 = vtanh.pop %v3062
    %v3071 = vtanh.pop %v3063
    %v3072 = vtanh.pop %v3064
    %v3073 = vtanh.pop %v3065
    %v3074 = vmul.f32 %v3027, %v3066
    %v3075 = vmul.f32 %v3029, %v3067
    %v3076 = vmul.f32 %v3031, %v3068
    %v3077 = vmul.f32 %v3033, %v3069
    %v3078 = vmul.f32 %v3035, %v3070
    %v3079 = vmul.f32 %v3037, %v3071
    %v3080 = vmul.f32 %v3039, %v3072
    %v3081 = vmul.f32 %v3041, %v3073
    %v3082 = vld [vmem:[%s843] sm:$0xff]
    %v3083 = vld [vmem:[%s843 + $0x8] sm:$0xff]
    %v3084 = vld [vmem:[%s843 + $0x10] sm:$0xff]
    %v3085 = vld [vmem:[%s843 + $0x18] sm:$0xff]
    %v3086 = vld [vmem:[%s843 + $0x20] sm:$0xff]
    %v3087 = vld [vmem:[%s843 + $0x28] sm:$0xff]
    %v3088 = vld [vmem:[%s843 + $0x30] sm:$0xff]
    %v3089 = vld [vmem:[%s843 + $0x38] sm:$0xff]
    %v3090 = vld [vmem:[%s843 + $0x40] sm:$0xff]
    %v3091 = vld [vmem:[%s843 + $0x48] sm:$0xff]
    %v3092 = vld [vmem:[%s843 + $0x50] sm:$0xff]
    %v3093 = vld [vmem:[%s843 + $0x58] sm:$0xff]
    %v3094 = vld [vmem:[%s843 + $0x60] sm:$0xff]
    %v3095 = vld [vmem:[%s843 + $0x68] sm:$0xff]
    %v3096 = vld [vmem:[%s843 + $0x70] sm:$0xff]
    %v3097 = vld [vmem:[%s843 + $0x78] sm:$0xff]
    %v3098 = vld [vmem:[%s843 + $0x80] sm:$0xff]
    %v3099 = vld [vmem:[%s843 + $0x88] sm:$0xff]
    %v3100 = vld [vmem:[%s843 + $0x90] sm:$0xff]
    %v3101 = vld [vmem:[%s843 + $0x98] sm:$0xff]
    %v3102 = vld [vmem:[%s843 + $0xa0] sm:$0xff]
    %v3103 = vld [vmem:[%s843 + $0xa8] sm:$0xff]
    %v3104 = vld [vmem:[%s843 + $0xb0] sm:$0xff]
    %v3105 = vld [vmem:[%s843 + $0xb8] sm:$0xff]
    %v3106 = vld [vmem:[%s843 + $0xc0] sm:$0xff]
    %v3107 = vld [vmem:[%s843 + $0xc8] sm:$0xff]
    %v3108 = vld [vmem:[%s843 + $0xd0] sm:$0xff]
    %v3109 = vld [vmem:[%s843 + $0xd8] sm:$0xff]
    %v3110 = vld [vmem:[%s843 + $0xe0] sm:$0xff]
    %v3111 = vld [vmem:[%s843 + $0xe8] sm:$0xff]
    %v3112 = vld [vmem:[%s843 + $0xf0] sm:$0xff]
    %v3113 = vld [vmem:[%s843 + $0xf8] sm:$0xff]
    %3114 = vmatprep.subr.mxu0 0.0
    %3115 = vmatpush1.msra.mxu0 0.0
    %3116 = vmatprep.subr.mxu0 0.0
    %3117 = vmatpush1.msra.mxu0 0.0
    %3118 = vmatprep.subr.mxu0 0.0
    %3119 = vmatpush1.msra.mxu0 0.0
    %3120 = vmatprep.subr.mxu0 0.0
    %3121 = vmatpush1.msra.mxu0 0.0
    %3122 = vmatprep.subr.mxu0 0.0
    %3123 = vmatpush1.msra.mxu0 0.0
    %3124 = vmatprep.subr.mxu0 0.0
    %3125 = vmatpush1.msra.mxu0 0.0
    %3126 = vmatprep.subr.mxu0 0.0
    %3127 = vmatpush1.msra.mxu0 0.0
    %3128 = vmatprep.subr.mxu0 0.0
    %3129 = vmatpush1.msra.mxu0 0.0
    %3130 = vmatprep.subr.mxu0 0.0
    %3131 = vmatpush1.msra.mxu0 %v3081
    %3132 = vmatprep.subr.mxu0 0.0
    %3133 = vmatpush1.msra.mxu0 %v3080
    %3134 = vmatprep.subr.mxu0 0.0
    %3135 = vmatpush1.msra.mxu0 %v3079
    %3136 = vmatprep.subr.mxu0 0.0
    %3137 = vmatpush1.msra.mxu0 %v3078
    %3138 = vmatprep.subr.mxu0 0.0
    %3139 = vmatpush1.msra.mxu0 %v3077
    %3140 = vmatprep.subr.mxu0 0.0
    %3141 = vmatpush1.msra.mxu0 %v3076
    %3142 = vmatprep.subr.mxu0 0.0
    %3143 = vmatpush1.msra.mxu0 %v3075
    %3144 = vmatprep.subr.mxu0 0.0
    %3145 = vmatpush1.msra.mxu0 %v3074
    %3146 = vmatprep.subr.mxu0 0.0
    %3147 = vmatpush2.msra.mxu0 0.0
    %3148 = vmatprep.subr.mxu0 0.0
    %3149 = vmatpush2.msra.mxu0 0.0
    %3150 = vmatprep.subr.mxu0 0.0
    %3151 = vmatpush2.msra.mxu0 0.0
    %3152 = vmatprep.subr.mxu0 0.0
    %3153 = vmatpush2.msra.mxu0 0.0
    %3154 = vmatprep.subr.mxu0 0.0
    %3155 = vmatpush2.msra.mxu0 0.0
    %3156 = vmatprep.subr.mxu0 0.0
    %3157 = vmatpush2.msra.mxu0 0.0
    %3158 = vmatprep.subr.mxu0 0.0
    %3159 = vmatpush2.msra.mxu0 0.0
    %3160 = vmatprep.subr.mxu0 0.0
    %3161 = vmatpush2.msra.mxu0 0.0
    %3162 = vmatprep.subr.mxu0 0.0
    %3163 = vmatpush2.msra.mxu0 0.0
    %3164 = vmatprep.subr.mxu0 0.0
    %3165 = vmatpush2.msra.mxu0 0.0
    %3166 = vmatprep.subr.mxu0 0.0
    %3167 = vmatpush2.msra.mxu0 0.0
    %3168 = vmatprep.subr.mxu0 0.0
    %3169 = vmatpush2.msra.mxu0 0.0
    %3170 = vmatprep.subr.mxu0 0.0
    %3171 = vmatpush2.msra.mxu0 0.0
    %3172 = vmatprep.subr.mxu0 0.0
    %3173 = vmatpush2.msra.mxu0 0.0
    %3174 = vmatprep.subr.mxu0 0.0
    %3175 = vmatpush2.msra.mxu0 0.0
    %3176 = vmatprep.subr.mxu0 0.0
    %3177 = vmatpush2.msra.mxu0 0.0
    %3178 = vmatprep.mubr.f32.mxu0 0.0
    %3179 = vmatmul.mubr.f32.gmra.mxu0 %v2538
    %v3180 = vpop.f32.mrf.mxu0
    %v3181 = vadd.f32 0.0, %v3180
    %v3182 = vpop.f32.mrf.mxu0
    %3183 = vmatprep.mubr.f32.mxu0 0.0
    %3184 = vmatmul.mubr.f32.gmra.mxu0 %v2541
    %v3185 = vpop.f32.mrf.mxu0
    %v3186 = vadd.f32 0.0, %v3185
    %v3187 = vpop.f32.mrf.mxu0
    %3188 = vmatprep.mubr.f32.mxu0 0.0
    %3189 = vmatmul.mubr.f32.gmra.mxu0 %v2544
    %v3190 = vpop.f32.mrf.mxu0
    %v3191 = vadd.f32 0.0, %v3190
    %v3192 = vpop.f32.mrf.mxu0
    %3193 = vmatprep.mubr.f32.mxu0 0.0
    %3194 = vmatmul.mubr.f32.gmra.mxu0 %v2547
    %v3195 = vpop.f32.mrf.mxu0
    %v3196 = vadd.f32 0.0, %v3195
    %v3197 = vpop.f32.mrf.mxu0
    %3198 = vmatprep.mubr.f32.mxu0 0.0
    %3199 = vmatmul.mubr.f32.gmra.mxu0 %v2550
    %v3200 = vpop.f32.mrf.mxu0
    %v3201 = vadd.f32 0.0, %v3200
    %v3202 = vpop.f32.mrf.mxu0
    %3203 = vmatprep.mubr.f32.mxu0 0.0
    %3204 = vmatmul.mubr.f32.gmra.mxu0 %v2553
    %v3205 = vpop.f32.mrf.mxu0
    %v3206 = vadd.f32 0.0, %v3205
    %v3207 = vpop.f32.mrf.mxu0
    %3208 = vmatprep.mubr.f32.mxu0 0.0
    %3209 = vmatmul.mubr.f32.gmra.mxu0 %v2556
    %v3210 = vpop.f32.mrf.mxu0
    %v3211 = vadd.f32 0.0, %v3210
    %v3212 = vpop.f32.mrf.mxu0
    %3213 = vmatprep.mubr.f32.mxu0 0.0
    %3214 = vmatmul.mubr.f32.gmra.mxu0 %v2559
    %v3215 = vpop.f32.mrf.mxu0
    %v3216 = vadd.f32 0.0, %v3215
    %v3217 = vpop.f32.mrf.mxu0
    %3218 = vmatprep.mubr.f32.mxu0 0.0
    %3219 = vmatmul.mubr.f32.gmra.mxu0 %v2562
    %v3220 = vpop.f32.mrf.mxu0
    %v3221 = vadd.f32 0.0, %v3220
    %v3222 = vpop.f32.mrf.mxu0
    %3223 = vmatprep.mubr.f32.mxu0 0.0
    %3224 = vmatmul.mubr.f32.gmra.mxu0 %v2565
    %v3225 = vpop.f32.mrf.mxu0
    %v3226 = vadd.f32 0.0, %v3225
    %v3227 = vpop.f32.mrf.mxu0
    %3228 = vmatprep.mubr.f32.mxu0 0.0
    %3229 = vmatmul.mubr.f32.gmra.mxu0 %v2568
    %v3230 = vpop.f32.mrf.mxu0
    %v3231 = vadd.f32 0.0, %v3230
    %v3232 = vpop.f32.mrf.mxu0
    %3233 = vmatprep.mubr.f32.mxu0 0.0
    %3234 = vmatmul.mubr.f32.gmra.mxu0 %v2571
    %v3235 = vpop.f32.mrf.mxu0
    %v3236 = vadd.f32 0.0, %v3235
    %v3237 = vpop.f32.mrf.mxu0
    %3238 = vmatprep.mubr.f32.mxu0 0.0
    %3239 = vmatmul.mubr.f32.gmra.mxu0 %v2574
    %v3240 = vpop.f32.mrf.mxu0
    %v3241 = vadd.f32 0.0, %v3240
    %v3242 = vpop.f32.mrf.mxu0
    %3243 = vmatprep.mubr.f32.mxu0 0.0
    %3244 = vmatmul.mubr.f32.gmra.mxu0 %v2577
    %v3245 = vpop.f32.mrf.mxu0
    %v3246 = vadd.f32 0.0, %v3245
    %v3247 = vpop.f32.mrf.mxu0
    %3248 = vmatprep.mubr.f32.mxu0 0.0
    %3249 = vmatmul.mubr.f32.gmra.mxu0 %v2580
    %v3250 = vpop.f32.mrf.mxu0
    %v3251 = vadd.f32 0.0, %v3250
    %v3252 = vpop.f32.mrf.mxu0
    %3253 = vmatprep.mubr.f32.mxu0 0.0
    %3254 = vmatmul.mubr.f32.gmra.mxu0 %v2583
    %v3255 = vpop.f32.mrf.mxu0
    %v3256 = vadd.f32 0.0, %v3255
    %v3257 = vpop.f32.mrf.mxu0
    %3258 = vmatprep.mubr.f32.mxu0 0.0
    %3259 = vmatmul.mubr.f32.gmra.mxu0 %v2586
    %v3260 = vpop.f32.mrf.mxu0
    %v3261 = vadd.f32 0.0, %v3260
    %v3262 = vpop.f32.mrf.mxu0
    %3263 = vmatprep.mubr.f32.mxu0 0.0
    %3264 = vmatmul.mubr.f32.gmra.mxu0 %v2589
    %v3265 = vpop.f32.mrf.mxu0
    %v3266 = vadd.f32 0.0, %v3265
    %v3267 = vpop.f32.mrf.mxu0
    %3268 = vmatprep.mubr.f32.mxu0 0.0
    %3269 = vmatmul.mubr.f32.gmra.mxu0 %v2592
    %v3270 = vpop.f32.mrf.mxu0
    %v3271 = vadd.f32 0.0, %v3270
    %v3272 = vpop.f32.mrf.mxu0
    %3273 = vmatprep.mubr.f32.mxu0 0.0
    %3274 = vmatmul.mubr.f32.gmra.mxu0 %v2595
    %v3275 = vpop.f32.mrf.mxu0
    %v3276 = vadd.f32 0.0, %v3275
    %v3277 = vpop.f32.mrf.mxu0
    %3278 = vmatprep.mubr.f32.mxu0 0.0
    %3279 = vmatmul.mubr.f32.gmra.mxu0 %v2598
    %v3280 = vpop.f32.mrf.mxu0
    %v3281 = vadd.f32 0.0, %v3280
    %v3282 = vpop.f32.mrf.mxu0
    %3283 = vmatprep.mubr.f32.mxu0 0.0
    %3284 = vmatmul.mubr.f32.gmra.mxu0 %v2601
    %v3285 = vpop.f32.mrf.mxu0
    %v3286 = vadd.f32 0.0, %v3285
    %v3287 = vpop.f32.mrf.mxu0
    %3288 = vmatprep.mubr.f32.mxu0 0.0
    %3289 = vmatmul.mubr.f32.gmra.mxu0 %v2604
    %v3290 = vpop.f32.mrf.mxu0
    %v3291 = vadd.f32 0.0, %v3290
    %v3292 = vpop.f32.mrf.mxu0
    %3293 = vmatprep.mubr.f32.mxu0 0.0
    %3294 = vmatmul.mubr.f32.gmra.mxu0 %v2607
    %v3295 = vpop.f32.mrf.mxu0
    %v3296 = vadd.f32 0.0, %v3295
    %v3297 = vpop.f32.mrf.mxu0
    %3298 = vmatprep.mubr.f32.mxu0 0.0
    %3299 = vmatmul.mubr.f32.gmra.mxu0 %v2610
    %v3300 = vpop.f32.mrf.mxu0
    %v3301 = vadd.f32 0.0, %v3300
    %v3302 = vpop.f32.mrf.mxu0
    %3303 = vmatprep.mubr.f32.mxu0 0.0
    %3304 = vmatmul.mubr.f32.gmra.mxu0 %v2613
    %v3305 = vpop.f32.mrf.mxu0
    %v3306 = vadd.f32 0.0, %v3305
    %v3307 = vpop.f32.mrf.mxu0
    %3308 = vmatprep.mubr.f32.mxu0 0.0
    %3309 = vmatmul.mubr.f32.gmra.mxu0 %v2616
    %v3310 = vpop.f32.mrf.mxu0
    %v3311 = vadd.f32 0.0, %v3310
    %v3312 = vpop.f32.mrf.mxu0
    %3313 = vmatprep.mubr.f32.mxu0 0.0
    %3314 = vmatmul.mubr.f32.gmra.mxu0 %v2619
    %v3315 = vpop.f32.mrf.mxu0
    %v3316 = vadd.f32 0.0, %v3315
    %v3317 = vpop.f32.mrf.mxu0
    %3318 = vmatprep.mubr.f32.mxu0 0.0
    %3319 = vmatmul.mubr.f32.gmra.mxu0 %v2622
    %v3320 = vpop.f32.mrf.mxu0
    %v3321 = vadd.f32 0.0, %v3320
    %v3322 = vpop.f32.mrf.mxu0
    %3323 = vmatprep.mubr.f32.mxu0 0.0
    %3324 = vmatmul.mubr.f32.gmra.mxu0 %v2625
    %v3325 = vpop.f32.mrf.mxu0
    %v3326 = vadd.f32 0.0, %v3325
    %v3327 = vpop.f32.mrf.mxu0
    %3328 = vmatprep.mubr.f32.mxu0 0.0
    %3329 = vmatmul.mubr.f32.gmra.mxu0 %v2628
    %v3330 = vpop.f32.mrf.mxu0
    %v3331 = vadd.f32 0.0, %v3330
    %v3332 = vpop.f32.mrf.mxu0
    %3333 = vmatprep.mubr.f32.mxu0 0.0
    %3334 = vmatmul.mubr.f32.gmra.mxu0 %v2631
    %v3335 = vpop.f32.mrf.mxu0
    %v3336 = vadd.f32 0.0, %v3335
    %v3337 = vpop.f32.mrf.mxu0
    %3338 = vdwg.mxu0
    %v3339 = vadd.f32 %v3082, %v3181
    %v3340 = vadd.f32 %v3083, %v3186
    %v3341 = vadd.f32 %v3084, %v3191
    %v3342 = vadd.f32 %v3085, %v3196
    %v3343 = vadd.f32 %v3086, %v3201
    %v3344 = vadd.f32 %v3087, %v3206
    %v3345 = vadd.f32 %v3088, %v3211
    %v3346 = vadd.f32 %v3089, %v3216
    %v3347 = vadd.f32 %v3090, %v3221
    %v3348 = vadd.f32 %v3091, %v3226
    %v3349 = vadd.f32 %v3092, %v3231
    %v3350 = vadd.f32 %v3093, %v3236
    %v3351 = vadd.f32 %v3094, %v3241
    %v3352 = vadd.f32 %v3095, %v3246
    %v3353 = vadd.f32 %v3096, %v3251
    %v3354 = vadd.f32 %v3097, %v3256
    %v3355 = vadd.f32 %v3098, %v3261
    %v3356 = vadd.f32 %v3099, %v3266
    %v3357 = vadd.f32 %v3100, %v3271
    %v3358 = vadd.f32 %v3101, %v3276
    %v3359 = vadd.f32 %v3102, %v3281
    %v3360 = vadd.f32 %v3103, %v3286
    %v3361 = vadd.f32 %v3104, %v3291
    %v3362 = vadd.f32 %v3105, %v3296
    %v3363 = vadd.f32 %v3106, %v3301
    %v3364 = vadd.f32 %v3107, %v3306
    %v3365 = vadd.f32 %v3108, %v3311
    %v3366 = vadd.f32 %v3109, %v3316
    %v3367 = vadd.f32 %v3110, %v3321
    %v3368 = vadd.f32 %v3111, %v3326
    %v3369 = vadd.f32 %v3112, %v3331
    %v3370 = vadd.f32 %v3113, %v3336
    %v3371 = vxor.u32 %v3339, 2147483648
    %v3372 = vxor.u32 %v3340, 2147483648
    %v3373 = vxor.u32 %v3341, 2147483648
    %v3374 = vxor.u32 %v3342, 2147483648
    %v3375 = vxor.u32 %v3343, 2147483648
    %v3376 = vxor.u32 %v3344, 2147483648
    %v3377 = vxor.u32 %v3345, 2147483648
    %v3378 = vxor.u32 %v3346, 2147483648
    %v3379 = vmul.f32 %v3371, 1.442695
    %v3380 = vpow.pop %v3379
    %v3381 = vmul.f32 %v3372, 1.442695
    %v3382 = vpow.pop %v3381
    %v3383 = vmul.f32 %v3373, 1.442695
    %v3384 = vpow.pop %v3383
    %v3385 = vmul.f32 %v3374, 1.442695
    %v3386 = vpow.pop %v3385
    %v3387 = vmul.f32 %v3375, 1.442695
    %v3388 = vpow.pop %v3387
    %v3389 = vmul.f32 %v3376, 1.442695
    %v3390 = vpow.pop %v3389
    %v3391 = vmul.f32 %v3377, 1.442695
    %v3392 = vpow.pop %v3391
    %v3393 = vmul.f32 %v3378, 1.442695
    %v3394 = vpow.pop %v3393
    %v3395 = vadd.f32 %v3380, 1.0
    %v3396 = vadd.f32 %v3382, 1.0
    %v3397 = vadd.f32 %v3384, 1.0
    %v3398 = vadd.f32 %v3386, 1.0
    %v3399 = vadd.f32 %v3388, 1.0
    %v3400 = vadd.f32 %v3390, 1.0
    %v3401 = vadd.f32 %v3392, 1.0
    %v3402 = vadd.f32 %v3394, 1.0
    %v3403 = vrcp.pop %v3395
    %v3404 = vmul.f32 1.0, %v3403
    %v3405 = vrcp.pop %v3396
    %v3406 = vmul.f32 1.0, %v3405
    %v3407 = vrcp.pop %v3397
    %v3408 = vmul.f32 1.0, %v3407
    %v3409 = vrcp.pop %v3398
    %v3410 = vmul.f32 1.0, %v3409
    %v3411 = vrcp.pop %v3399
    %v3412 = vmul.f32 1.0, %v3411
    %v3413 = vrcp.pop %v3400
    %v3414 = vmul.f32 1.0, %v3413
    %v3415 = vrcp.pop %v3401
    %v3416 = vmul.f32 1.0, %v3415
    %v3417 = vrcp.pop %v3402
    %v3418 = vmul.f32 1.0, %v3417
    %v3419 = vxor.u32 %v3347, 2147483648
    %v3420 = vxor.u32 %v3348, 2147483648
    %v3421 = vxor.u32 %v3349, 2147483648
    %v3422 = vxor.u32 %v3350, 2147483648
    %v3423 = vxor.u32 %v3351, 2147483648
    %v3424 = vxor.u32 %v3352, 2147483648
    %v3425 = vxor.u32 %v3353, 2147483648
    %v3426 = vxor.u32 %v3354, 2147483648
    %v3427 = vmul.f32 %v3419, 1.442695
    %v3428 = vpow.pop %v3427
    %v3429 = vmul.f32 %v3420, 1.442695
    %v3430 = vpow.pop %v3429
    %v3431 = vmul.f32 %v3421, 1.442695
    %v3432 = vpow.pop %v3431
    %v3433 = vmul.f32 %v3422, 1.442695
    %v3434 = vpow.pop %v3433
    %v3435 = vmul.f32 %v3423, 1.442695
    %v3436 = vpow.pop %v3435
    %v3437 = vmul.f32 %v3424, 1.442695
    %v3438 = vpow.pop %v3437
    %v3439 = vmul.f32 %v3425, 1.442695
    %v3440 = vpow.pop %v3439
    %v3441 = vmul.f32 %v3426, 1.442695
    %v3442 = vpow.pop %v3441
    %v3443 = vadd.f32 %v3428, 1.0
    %v3444 = vadd.f32 %v3430, 1.0
    %v3445 = vadd.f32 %v3432, 1.0
    %v3446 = vadd.f32 %v3434, 1.0
    %v3447 = vadd.f32 %v3436, 1.0
    %v3448 = vadd.f32 %v3438, 1.0
    %v3449 = vadd.f32 %v3440, 1.0
    %v3450 = vadd.f32 %v3442, 1.0
    %v3451 = vrcp.pop %v3443
    %v3452 = vmul.f32 1.0, %v3451
    %v3453 = vrcp.pop %v3444
    %v3454 = vmul.f32 1.0, %v3453
    %v3455 = vrcp.pop %v3445
    %v3456 = vmul.f32 1.0, %v3455
    %v3457 = vrcp.pop %v3446
    %v3458 = vmul.f32 1.0, %v3457
    %v3459 = vrcp.pop %v3447
    %v3460 = vmul.f32 1.0, %v3459
    %v3461 = vrcp.pop %v3448
    %v3462 = vmul.f32 1.0, %v3461
    %v3463 = vrcp.pop %v3449
    %v3464 = vmul.f32 1.0, %v3463
    %v3465 = vrcp.pop %v3450
    %v3466 = vmul.f32 1.0, %v3465
    %v3467 = vtanh.pop %v3355
    %v3468 = vtanh.pop %v3356
    %v3469 = vtanh.pop %v3357
    %v3470 = vtanh.pop %v3358
    %v3471 = vtanh.pop %v3359
    %v3472 = vtanh.pop %v3360
    %v3473 = vtanh.pop %v3361
    %v3474 = vtanh.pop %v3362
    %v3475 = vxor.u32 %v3363, 2147483648
    %v3476 = vxor.u32 %v3364, 2147483648
    %v3477 = vxor.u32 %v3365, 2147483648
    %v3478 = vxor.u32 %v3366, 2147483648
    %v3479 = vxor.u32 %v3367, 2147483648
    %v3480 = vxor.u32 %v3368, 2147483648
    %v3481 = vxor.u32 %v3369, 2147483648
    %v3482 = vxor.u32 %v3370, 2147483648
    %v3483 = vmul.f32 %v3475, 1.442695
    %v3484 = vpow.pop %v3483
    %v3485 = vmul.f32 %v3476, 1.442695
    %v3486 = vpow.pop %v3485
    %v3487 = vmul.f32 %v3477, 1.442695
    %v3488 = vpow.pop %v3487
    %v3489 = vmul.f32 %v3478, 1.442695
    %v3490 = vpow.pop %v3489
    %v3491 = vmul.f32 %v3479, 1.442695
    %v3492 = vpow.pop %v3491
    %v3493 = vmul.f32 %v3480, 1.442695
    %v3494 = vpow.pop %v3493
    %v3495 = vmul.f32 %v3481, 1.442695
    %v3496 = vpow.pop %v3495
    %v3497 = vmul.f32 %v3482, 1.442695
    %v3498 = vpow.pop %v3497
    %v3499 = vadd.f32 %v3484, 1.0
    %v3500 = vadd.f32 %v3486, 1.0
    %v3501 = vadd.f32 %v3488, 1.0
    %v3502 = vadd.f32 %v3490, 1.0
    %v3503 = vadd.f32 %v3492, 1.0
    %v3504 = vadd.f32 %v3494, 1.0
    %v3505 = vadd.f32 %v3496, 1.0
    %v3506 = vadd.f32 %v3498, 1.0
    %v3507 = vrcp.pop %v3499
    %v3508 = vmul.f32 1.0, %v3507
    %v3509 = vrcp.pop %v3500
    %v3510 = vmul.f32 1.0, %v3509
    %v3511 = vrcp.pop %v3501
    %v3512 = vmul.f32 1.0, %v3511
    %v3513 = vrcp.pop %v3502
    %v3514 = vmul.f32 1.0, %v3513
    %v3515 = vrcp.pop %v3503
    %v3516 = vmul.f32 1.0, %v3515
    %v3517 = vrcp.pop %v3504
    %v3518 = vmul.f32 1.0, %v3517
    %v3519 = vrcp.pop %v3505
    %v3520 = vmul.f32 1.0, %v3519
    %v3521 = vrcp.pop %v3506
    %v3522 = vmul.f32 1.0, %v3521
    %v3523 = vmul.f32 %v3452, %v3058
    %v3524 = vmul.f32 %v3454, %v3059
    %v3525 = vmul.f32 %v3456, %v3060
    %v3526 = vmul.f32 %v3458, %v3061
    %v3527 = vmul.f32 %v3460, %v3062
    %v3528 = vmul.f32 %v3462, %v3063
    %v3529 = vmul.f32 %v3464, %v3064
    %v3530 = vmul.f32 %v3466, %v3065
    %v3531 = vmul.f32 %v3404, %v3467
    %v3532 = vmul.f32 %v3406, %v3468
    %v3533 = vmul.f32 %v3408, %v3469
    %v3534 = vmul.f32 %v3410, %v3470
    %v3535 = vmul.f32 %v3412, %v3471
    %v3536 = vmul.f32 %v3414, %v3472
    %v3537 = vmul.f32 %v3416, %v3473
    %v3538 = vmul.f32 %v3418, %v3474
    %v3539 = vadd.f32 %v3523, %v3531
    %v3540 = vadd.f32 %v3524, %v3532
    %v3541 = vadd.f32 %v3525, %v3533
    %v3542 = vadd.f32 %v3526, %v3534
    %v3543 = vadd.f32 %v3527, %v3535
    %v3544 = vadd.f32 %v3528, %v3536
    %v3545 = vadd.f32 %v3529, %v3537
    %v3546 = vadd.f32 %v3530, %v3538
    %v3547 = vtanh.pop %v3539
    %v3548 = vtanh.pop %v3540
    %v3549 = vtanh.pop %v3541
    %v3550 = vtanh.pop %v3542
    %v3551 = vtanh.pop %v3543
    %v3552 = vtanh.pop %v3544
    %v3553 = vtanh.pop %v3545
    %v3554 = vtanh.pop %v3546
    %v3555 = vmul.f32 %v3508, %v3547
    %v3556 = vmul.f32 %v3510, %v3548
    %v3557 = vmul.f32 %v3512, %v3549
    %v3558 = vmul.f32 %v3514, %v3550
    %v3559 = vmul.f32 %v3516, %v3551
    %v3560 = vmul.f32 %v3518, %v3552
    %v3561 = vmul.f32 %v3520, %v3553
    %v3562 = vmul.f32 %v3522, %v3554
    %v3563 = vld [vmem:[%s1109] sm:$0xff]
    %v3564 = vld [vmem:[%s1109 + $0x8] sm:$0xff]
    %v3565 = vld [vmem:[%s1109 + $0x10] sm:$0xff]
    %v3566 = vld [vmem:[%s1109 + $0x18] sm:$0xff]
    %v3567 = vld [vmem:[%s1109 + $0x20] sm:$0xff]
    %v3568 = vld [vmem:[%s1109 + $0x28] sm:$0xff]
    %v3569 = vld [vmem:[%s1109 + $0x30] sm:$0xff]
    %v3570 = vld [vmem:[%s1109 + $0x38] sm:$0xff]
    %v3571 = vld [vmem:[%s1109 + $0x40] sm:$0xff]
    %v3572 = vld [vmem:[%s1109 + $0x48] sm:$0xff]
    %v3573 = vld [vmem:[%s1109 + $0x50] sm:$0xff]
    %v3574 = vld [vmem:[%s1109 + $0x58] sm:$0xff]
    %v3575 = vld [vmem:[%s1109 + $0x60] sm:$0xff]
    %v3576 = vld [vmem:[%s1109 + $0x68] sm:$0xff]
    %v3577 = vld [vmem:[%s1109 + $0x70] sm:$0xff]
    %v3578 = vld [vmem:[%s1109 + $0x78] sm:$0xff]
    %v3579 = vld [vmem:[%s1109 + $0x80] sm:$0xff]
    %v3580 = vld [vmem:[%s1109 + $0x88] sm:$0xff]
    %v3581 = vld [vmem:[%s1109 + $0x90] sm:$0xff]
    %v3582 = vld [vmem:[%s1109 + $0x98] sm:$0xff]
    %v3583 = vld [vmem:[%s1109 + $0xa0] sm:$0xff]
    %v3584 = vld [vmem:[%s1109 + $0xa8] sm:$0xff]
    %v3585 = vld [vmem:[%s1109 + $0xb0] sm:$0xff]
    %v3586 = vld [vmem:[%s1109 + $0xb8] sm:$0xff]
    %v3587 = vld [vmem:[%s1109 + $0xc0] sm:$0xff]
    %v3588 = vld [vmem:[%s1109 + $0xc8] sm:$0xff]
    %v3589 = vld [vmem:[%s1109 + $0xd0] sm:$0xff]
    %v3590 = vld [vmem:[%s1109 + $0xd8] sm:$0xff]
    %v3591 = vld [vmem:[%s1109 + $0xe0] sm:$0xff]
    %v3592 = vld [vmem:[%s1109 + $0xe8] sm:$0xff]
    %v3593 = vld [vmem:[%s1109 + $0xf0] sm:$0xff]
    %v3594 = vld [vmem:[%s1109 + $0xf8] sm:$0xff]
    %3595 = vmatprep.subr.mxu0 0.0
    %3596 = vmatpush1.msra.mxu0 0.0
    %3597 = vmatprep.subr.mxu0 0.0
    %3598 = vmatpush1.msra.mxu0 0.0
    %3599 = vmatprep.subr.mxu0 0.0
    %3600 = vmatpush1.msra.mxu0 0.0
    %3601 = vmatprep.subr.mxu0 0.0
    %3602 = vmatpush1.msra.mxu0 0.0
    %3603 = vmatprep.subr.mxu0 0.0
    %3604 = vmatpush1.msra.mxu0 0.0
    %3605 = vmatprep.subr.mxu0 0.0
    %3606 = vmatpush1.msra.mxu0 0.0
    %3607 = vmatprep.subr.mxu0 0.0
    %3608 = vmatpush1.msra.mxu0 0.0
    %3609 = vmatprep.subr.mxu0 0.0
    %3610 = vmatpush1.msra.mxu0 0.0
    %3611 = vmatprep.subr.mxu0 0.0
    %3612 = vmatpush1.msra.mxu0 %v3562
    %3613 = vmatprep.subr.mxu0 0.0
    %3614 = vmatpush1.msra.mxu0 %v3561
    %3615 = vmatprep.subr.mxu0 0.0
    %3616 = vmatpush1.msra.mxu0 %v3560
    %3617 = vmatprep.subr.mxu0 0.0
    %3618 = vmatpush1.msra.mxu0 %v3559
    %3619 = vmatprep.subr.mxu0 0.0
    %3620 = vmatpush1.msra.mxu0 %v3558
    %3621 = vmatprep.subr.mxu0 0.0
    %3622 = vmatpush1.msra.mxu0 %v3557
    %3623 = vmatprep.subr.mxu0 0.0
    %3624 = vmatpush1.msra.mxu0 %v3556
    %3625 = vmatprep.subr.mxu0 0.0
    %3626 = vmatpush1.msra.mxu0 %v3555
    %3627 = vmatprep.subr.mxu0 0.0
    %3628 = vmatpush2.msra.mxu0 0.0
    %3629 = vmatprep.subr.mxu0 0.0
    %3630 = vmatpush2.msra.mxu0 0.0
    %3631 = vmatprep.subr.mxu0 0.0
    %3632 = vmatpush2.msra.mxu0 0.0
    %3633 = vmatprep.subr.mxu0 0.0
    %3634 = vmatpush2.msra.mxu0 0.0
    %3635 = vmatprep.subr.mxu0 0.0
    %3636 = vmatpush2.msra.mxu0 0.0
    %3637 = vmatprep.subr.mxu0 0.0
    %3638 = vmatpush2.msra.mxu0 0.0
    %3639 = vmatprep.subr.mxu0 0.0
    %3640 = vmatpush2.msra.mxu0 0.0
    %3641 = vmatprep.subr.mxu0 0.0
    %3642 = vmatpush2.msra.mxu0 0.0
    %3643 = vmatprep.subr.mxu0 0.0
    %3644 = vmatpush2.msra.mxu0 0.0
    %3645 = vmatprep.subr.mxu0 0.0
    %3646 = vmatpush2.msra.mxu0 0.0
    %3647 = vmatprep.subr.mxu0 0.0
    %3648 = vmatpush2.msra.mxu0 0.0
    %3649 = vmatprep.subr.mxu0 0.0
    %3650 = vmatpush2.msra.mxu0 0.0
    %3651 = vmatprep.subr.mxu0 0.0
    %3652 = vmatpush2.msra.mxu0 0.0
    %3653 = vmatprep.subr.mxu0 0.0
    %3654 = vmatpush2.msra.mxu0 0.0
    %3655 = vmatprep.subr.mxu0 0.0
    %3656 = vmatpush2.msra.mxu0 0.0
    %3657 = vmatprep.subr.mxu0 0.0
    %3658 = vmatpush2.msra.mxu0 0.0
    %3659 = vmatprep.mubr.f32.mxu0 0.0
    %3660 = vmatmul.mubr.f32.gmra.mxu0 %v2538
    %v3661 = vpop.f32.mrf.mxu0
    %v3662 = vadd.f32 0.0, %v3661
    %v3663 = vpop.f32.mrf.mxu0
    %3664 = vmatprep.mubr.f32.mxu0 0.0
    %3665 = vmatmul.mubr.f32.gmra.mxu0 %v2541
    %v3666 = vpop.f32.mrf.mxu0
    %v3667 = vadd.f32 0.0, %v3666
    %v3668 = vpop.f32.mrf.mxu0
    %3669 = vmatprep.mubr.f32.mxu0 0.0
    %3670 = vmatmul.mubr.f32.gmra.mxu0 %v2544
    %v3671 = vpop.f32.mrf.mxu0
    %v3672 = vadd.f32 0.0, %v3671
    %v3673 = vpop.f32.mrf.mxu0
    %3674 = vmatprep.mubr.f32.mxu0 0.0
    %3675 = vmatmul.mubr.f32.gmra.mxu0 %v2547
    %v3676 = vpop.f32.mrf.mxu0
    %v3677 = vadd.f32 0.0, %v3676
    %v3678 = vpop.f32.mrf.mxu0
    %3679 = vmatprep.mubr.f32.mxu0 0.0
    %3680 = vmatmul.mubr.f32.gmra.mxu0 %v2550
    %v3681 = vpop.f32.mrf.mxu0
    %v3682 = vadd.f32 0.0, %v3681
    %v3683 = vpop.f32.mrf.mxu0
    %3684 = vmatprep.mubr.f32.mxu0 0.0
    %3685 = vmatmul.mubr.f32.gmra.mxu0 %v2553
    %v3686 = vpop.f32.mrf.mxu0
    %v3687 = vadd.f32 0.0, %v3686
    %v3688 = vpop.f32.mrf.mxu0
    %3689 = vmatprep.mubr.f32.mxu0 0.0
    %3690 = vmatmul.mubr.f32.gmra.mxu0 %v2556
    %v3691 = vpop.f32.mrf.mxu0
    %v3692 = vadd.f32 0.0, %v3691
    %v3693 = vpop.f32.mrf.mxu0
    %3694 = vmatprep.mubr.f32.mxu0 0.0
    %3695 = vmatmul.mubr.f32.gmra.mxu0 %v2559
    %v3696 = vpop.f32.mrf.mxu0
    %v3697 = vadd.f32 0.0, %v3696
    %v3698 = vpop.f32.mrf.mxu0
    %3699 = vmatprep.mubr.f32.mxu0 0.0
    %3700 = vmatmul.mubr.f32.gmra.mxu0 %v2562
    %v3701 = vpop.f32.mrf.mxu0
    %v3702 = vadd.f32 0.0, %v3701
    %v3703 = vpop.f32.mrf.mxu0
    %3704 = vmatprep.mubr.f32.mxu0 0.0
    %3705 = vmatmul.mubr.f32.gmra.mxu0 %v2565
    %v3706 = vpop.f32.mrf.mxu0
    %v3707 = vadd.f32 0.0, %v3706
    %v3708 = vpop.f32.mrf.mxu0
    %3709 = vmatprep.mubr.f32.mxu0 0.0
    %3710 = vmatmul.mubr.f32.gmra.mxu0 %v2568
    %v3711 = vpop.f32.mrf.mxu0
    %v3712 = vadd.f32 0.0, %v3711
    %v3713 = vpop.f32.mrf.mxu0
    %3714 = vmatprep.mubr.f32.mxu0 0.0
    %3715 = vmatmul.mubr.f32.gmra.mxu0 %v2571
    %v3716 = vpop.f32.mrf.mxu0
    %v3717 = vadd.f32 0.0, %v3716
    %v3718 = vpop.f32.mrf.mxu0
    %3719 = vmatprep.mubr.f32.mxu0 0.0
    %3720 = vmatmul.mubr.f32.gmra.mxu0 %v2574
    %v3721 = vpop.f32.mrf.mxu0
    %v3722 = vadd.f32 0.0, %v3721
    %v3723 = vpop.f32.mrf.mxu0
    %3724 = vmatprep.mubr.f32.mxu0 0.0
    %3725 = vmatmul.mubr.f32.gmra.mxu0 %v2577
    %v3726 = vpop.f32.mrf.mxu0
    %v3727 = vadd.f32 0.0, %v3726
    %v3728 = vpop.f32.mrf.mxu0
    %3729 = vmatprep.mubr.f32.mxu0 0.0
    %3730 = vmatmul.mubr.f32.gmra.mxu0 %v2580
    %v3731 = vpop.f32.mrf.mxu0
    %v3732 = vadd.f32 0.0, %v3731
    %v3733 = vpop.f32.mrf.mxu0
    %3734 = vmatprep.mubr.f32.mxu0 0.0
    %3735 = vmatmul.mubr.f32.gmra.mxu0 %v2583
    %v3736 = vpop.f32.mrf.mxu0
    %v3737 = vadd.f32 0.0, %v3736
    %v3738 = vpop.f32.mrf.mxu0
    %3739 = vmatprep.mubr.f32.mxu0 0.0
    %3740 = vmatmul.mubr.f32.gmra.mxu0 %v2586
    %v3741 = vpop.f32.mrf.mxu0
    %v3742 = vadd.f32 0.0, %v3741
    %v3743 = vpop.f32.mrf.mxu0
    %3744 = vmatprep.mubr.f32.mxu0 0.0
    %3745 = vmatmul.mubr.f32.gmra.mxu0 %v2589
    %v3746 = vpop.f32.mrf.mxu0
    %v3747 = vadd.f32 0.0, %v3746
    %v3748 = vpop.f32.mrf.mxu0
    %3749 = vmatprep.mubr.f32.mxu0 0.0
    %3750 = vmatmul.mubr.f32.gmra.mxu0 %v2592
    %v3751 = vpop.f32.mrf.mxu0
    %v3752 = vadd.f32 0.0, %v3751
    %v3753 = vpop.f32.mrf.mxu0
    %3754 = vmatprep.mubr.f32.mxu0 0.0
    %3755 = vmatmul.mubr.f32.gmra.mxu0 %v2595
    %v3756 = vpop.f32.mrf.mxu0
    %v3757 = vadd.f32 0.0, %v3756
    %v3758 = vpop.f32.mrf.mxu0
    %3759 = vmatprep.mubr.f32.mxu0 0.0
    %3760 = vmatmul.mubr.f32.gmra.mxu0 %v2598
    %v3761 = vpop.f32.mrf.mxu0
    %v3762 = vadd.f32 0.0, %v3761
    %v3763 = vpop.f32.mrf.mxu0
    %3764 = vmatprep.mubr.f32.mxu0 0.0
    %3765 = vmatmul.mubr.f32.gmra.mxu0 %v2601
    %v3766 = vpop.f32.mrf.mxu0
    %v3767 = vadd.f32 0.0, %v3766
    %v3768 = vpop.f32.mrf.mxu0
    %3769 = vmatprep.mubr.f32.mxu0 0.0
    %3770 = vmatmul.mubr.f32.gmra.mxu0 %v2604
    %v3771 = vpop.f32.mrf.mxu0
    %v3772 = vadd.f32 0.0, %v3771
    %v3773 = vpop.f32.mrf.mxu0
    %3774 = vmatprep.mubr.f32.mxu0 0.0
    %3775 = vmatmul.mubr.f32.gmra.mxu0 %v2607
    %v3776 = vpop.f32.mrf.mxu0
    %v3777 = vadd.f32 0.0, %v3776
    %v3778 = vpop.f32.mrf.mxu0
    %3779 = vmatprep.mubr.f32.mxu0 0.0
    %3780 = vmatmul.mubr.f32.gmra.mxu0 %v2610
    %v3781 = vpop.f32.mrf.mxu0
    %v3782 = vadd.f32 0.0, %v3781
    %v3783 = vpop.f32.mrf.mxu0
    %3784 = vmatprep.mubr.f32.mxu0 0.0
    %3785 = vmatmul.mubr.f32.gmra.mxu0 %v2613
    %v3786 = vpop.f32.mrf.mxu0
    %v3787 = vadd.f32 0.0, %v3786
    %v3788 = vpop.f32.mrf.mxu0
    %3789 = vmatprep.mubr.f32.mxu0 0.0
    %3790 = vmatmul.mubr.f32.gmra.mxu0 %v2616
    %v3791 = vpop.f32.mrf.mxu0
    %v3792 = vadd.f32 0.0, %v3791
    %v3793 = vpop.f32.mrf.mxu0
    %3794 = vmatprep.mubr.f32.mxu0 0.0
    %3795 = vmatmul.mubr.f32.gmra.mxu0 %v2619
    %v3796 = vpop.f32.mrf.mxu0
    %v3797 = vadd.f32 0.0, %v3796
    %v3798 = vpop.f32.mrf.mxu0
    %3799 = vmatprep.mubr.f32.mxu0 0.0
    %3800 = vmatmul.mubr.f32.gmra.mxu0 %v2622
    %v3801 = vpop.f32.mrf.mxu0
    %v3802 = vadd.f32 0.0, %v3801
    %v3803 = vpop.f32.mrf.mxu0
    %3804 = vmatprep.mubr.f32.mxu0 0.0
    %3805 = vmatmul.mubr.f32.gmra.mxu0 %v2625
    %v3806 = vpop.f32.mrf.mxu0
    %v3807 = vadd.f32 0.0, %v3806
    %v3808 = vpop.f32.mrf.mxu0
    %3809 = vmatprep.mubr.f32.mxu0 0.0
    %3810 = vmatmul.mubr.f32.gmra.mxu0 %v2628
    %v3811 = vpop.f32.mrf.mxu0
    %v3812 = vadd.f32 0.0, %v3811
    %v3813 = vpop.f32.mrf.mxu0
    %3814 = vmatprep.mubr.f32.mxu0 0.0
    %3815 = vmatmul.mubr.f32.gmra.mxu0 %v2631
    %v3816 = vpop.f32.mrf.mxu0
    %v3817 = vadd.f32 0.0, %v3816
    %v3818 = vpop.f32.mrf.mxu0
    %3819 = vdwg.mxu0
    %v3820 = vadd.f32 %v3563, %v3662
    %v3821 = vadd.f32 %v3564, %v3667
    %v3822 = vadd.f32 %v3565, %v3672
    %v3823 = vadd.f32 %v3566, %v3677
    %v3824 = vadd.f32 %v3567, %v3682
    %v3825 = vadd.f32 %v3568, %v3687
    %v3826 = vadd.f32 %v3569, %v3692
    %v3827 = vadd.f32 %v3570, %v3697
    %v3828 = vadd.f32 %v3571, %v3702
    %v3829 = vadd.f32 %v3572, %v3707
    %v3830 = vadd.f32 %v3573, %v3712
    %v3831 = vadd.f32 %v3574, %v3717
    %v3832 = vadd.f32 %v3575, %v3722
    %v3833 = vadd.f32 %v3576, %v3727
    %v3834 = vadd.f32 %v3577, %v3732
    %v3835 = vadd.f32 %v3578, %v3737
    %v3836 = vadd.f32 %v3579, %v3742
    %v3837 = vadd.f32 %v3580, %v3747
    %v3838 = vadd.f32 %v3581, %v3752
    %v3839 = vadd.f32 %v3582, %v3757
    %v3840 = vadd.f32 %v3583, %v3762
    %v3841 = vadd.f32 %v3584, %v3767
    %v3842 = vadd.f32 %v3585, %v3772
    %v3843 = vadd.f32 %v3586, %v3777
    %v3844 = vadd.f32 %v3587, %v3782
    %v3845 = vadd.f32 %v3588, %v3787
    %v3846 = vadd.f32 %v3589, %v3792
    %v3847 = vadd.f32 %v3590, %v3797
    %v3848 = vadd.f32 %v3591, %v3802
    %v3849 = vadd.f32 %v3592, %v3807
    %v3850 = vadd.f32 %v3593, %v3812
    %v3851 = vadd.f32 %v3594, %v3817
    %v3852 = vxor.u32 %v3820, 2147483648
    %v3853 = vxor.u32 %v3821, 2147483648
    %v3854 = vxor.u32 %v3822, 2147483648
    %v3855 = vxor.u32 %v3823, 2147483648
    %v3856 = vxor.u32 %v3824, 2147483648
    %v3857 = vxor.u32 %v3825, 2147483648
    %v3858 = vxor.u32 %v3826, 2147483648
    %v3859 = vxor.u32 %v3827, 2147483648
    %v3860 = vmul.f32 %v3852, 1.442695
    %v3861 = vpow.pop %v3860
    %v3862 = vmul.f32 %v3853, 1.442695
    %v3863 = vpow.pop %v3862
    %v3864 = vmul.f32 %v3854, 1.442695
    %v3865 = vpow.pop %v3864
    %v3866 = vmul.f32 %v3855, 1.442695
    %v3867 = vpow.pop %v3866
    %v3868 = vmul.f32 %v3856, 1.442695
    %v3869 = vpow.pop %v3868
    %v3870 = vmul.f32 %v3857, 1.442695
    %v3871 = vpow.pop %v3870
    %v3872 = vmul.f32 %v3858, 1.442695
    %v3873 = vpow.pop %v3872
    %v3874 = vmul.f32 %v3859, 1.442695
    %v3875 = vpow.pop %v3874
    %v3876 = vadd.f32 %v3861, 1.0
    %v3877 = vadd.f32 %v3863, 1.0
    %v3878 = vadd.f32 %v3865, 1.0
    %v3879 = vadd.f32 %v3867, 1.0
    %v3880 = vadd.f32 %v3869, 1.0
    %v3881 = vadd.f32 %v3871, 1.0
    %v3882 = vadd.f32 %v3873, 1.0
    %v3883 = vadd.f32 %v3875, 1.0
    %v3884 = vrcp.pop %v3876
    %v3885 = vmul.f32 1.0, %v3884
    %v3886 = vrcp.pop %v3877
    %v3887 = vmul.f32 1.0, %v3886
    %v3888 = vrcp.pop %v3878
    %v3889 = vmul.f32 1.0, %v3888
    %v3890 = vrcp.pop %v3879
    %v3891 = vmul.f32 1.0, %v3890
    %v3892 = vrcp.pop %v3880
    %v3893 = vmul.f32 1.0, %v3892
    %v3894 = vrcp.pop %v3881
    %v3895 = vmul.f32 1.0, %v3894
    %v3896 = vrcp.pop %v3882
    %v3897 = vmul.f32 1.0, %v3896
    %v3898 = vrcp.pop %v3883
    %v3899 = vmul.f32 1.0, %v3898
    %v3900 = vxor.u32 %v3828, 2147483648
    %v3901 = vxor.u32 %v3829, 2147483648
    %v3902 = vxor.u32 %v3830, 2147483648
    %v3903 = vxor.u32 %v3831, 2147483648
    %v3904 = vxor.u32 %v3832, 2147483648
    %v3905 = vxor.u32 %v3833, 2147483648
    %v3906 = vxor.u32 %v3834, 2147483648
    %v3907 = vxor.u32 %v3835, 2147483648
    %v3908 = vmul.f32 %v3900, 1.442695
    %v3909 = vpow.pop %v3908
    %v3910 = vmul.f32 %v3901, 1.442695
    %v3911 = vpow.pop %v3910
    %v3912 = vmul.f32 %v3902, 1.442695
    %v3913 = vpow.pop %v3912
    %v3914 = vmul.f32 %v3903, 1.442695
    %v3915 = vpow.pop %v3914
    %v3916 = vmul.f32 %v3904, 1.442695
    %v3917 = vpow.pop %v3916
    %v3918 = vmul.f32 %v3905, 1.442695
    %v3919 = vpow.pop %v3918
    %v3920 = vmul.f32 %v3906, 1.442695
    %v3921 = vpow.pop %v3920
    %v3922 = vmul.f32 %v3907, 1.442695
    %v3923 = vpow.pop %v3922
    %v3924 = vadd.f32 %v3909, 1.0
    %v3925 = vadd.f32 %v3911, 1.0
    %v3926 = vadd.f32 %v3913, 1.0
    %v3927 = vadd.f32 %v3915, 1.0
    %v3928 = vadd.f32 %v3917, 1.0
    %v3929 = vadd.f32 %v3919, 1.0
    %v3930 = vadd.f32 %v3921, 1.0
    %v3931 = vadd.f32 %v3923, 1.0
    %v3932 = vrcp.pop %v3924
    %v3933 = vmul.f32 1.0, %v3932
    %v3934 = vrcp.pop %v3925
    %v3935 = vmul.f32 1.0, %v3934
    %v3936 = vrcp.pop %v3926
    %v3937 = vmul.f32 1.0, %v3936
    %v3938 = vrcp.pop %v3927
    %v3939 = vmul.f32 1.0, %v3938
    %v3940 = vrcp.pop %v3928
    %v3941 = vmul.f32 1.0, %v3940
    %v3942 = vrcp.pop %v3929
    %v3943 = vmul.f32 1.0, %v3942
    %v3944 = vrcp.pop %v3930
    %v3945 = vmul.f32 1.0, %v3944
    %v3946 = vrcp.pop %v3931
    %v3947 = vmul.f32 1.0, %v3946
    %v3948 = vtanh.pop %v3836
    %v3949 = vtanh.pop %v3837
    %v3950 = vtanh.pop %v3838
    %v3951 = vtanh.pop %v3839
    %v3952 = vtanh.pop %v3840
    %v3953 = vtanh.pop %v3841
    %v3954 = vtanh.pop %v3842
    %v3955 = vtanh.pop %v3843
    %v3956 = vxor.u32 %v3844, 2147483648
    %v3957 = vxor.u32 %v3845, 2147483648
    %v3958 = vxor.u32 %v3846, 2147483648
    %v3959 = vxor.u32 %v3847, 2147483648
    %v3960 = vxor.u32 %v3848, 2147483648
    %v3961 = vxor.u32 %v3849, 2147483648
    %v3962 = vxor.u32 %v3850, 2147483648
    %v3963 = vxor.u32 %v3851, 2147483648
    %v3964 = vmul.f32 %v3956, 1.442695
    %v3965 = vpow.pop %v3964
    %v3966 = vmul.f32 %v3957, 1.442695
    %v3967 = vpow.pop %v3966
    %v3968 = vmul.f32 %v3958, 1.442695
    %v3969 = vpow.pop %v3968
    %v3970 = vmul.f32 %v3959, 1.442695
    %v3971 = vpow.pop %v3970
    %v3972 = vmul.f32 %v3960, 1.442695
    %v3973 = vpow.pop %v3972
    %v3974 = vmul.f32 %v3961, 1.442695
    %v3975 = vpow.pop %v3974
    %v3976 = vmul.f32 %v3962, 1.442695
    %v3977 = vpow.pop %v3976
    %v3978 = vmul.f32 %v3963, 1.442695
    %v3979 = vpow.pop %v3978
    %v3980 = vadd.f32 %v3965, 1.0
    %v3981 = vadd.f32 %v3967, 1.0
    %v3982 = vadd.f32 %v3969, 1.0
    %v3983 = vadd.f32 %v3971, 1.0
    %v3984 = vadd.f32 %v3973, 1.0
    %v3985 = vadd.f32 %v3975, 1.0
    %v3986 = vadd.f32 %v3977, 1.0
    %v3987 = vadd.f32 %v3979, 1.0
    %v3988 = vrcp.pop %v3980
    %v3989 = vmul.f32 1.0, %v3988
    %v3990 = vrcp.pop %v3981
    %v3991 = vmul.f32 1.0, %v3990
    %v3992 = vrcp.pop %v3982
    %v3993 = vmul.f32 1.0, %v3992
    %v3994 = vrcp.pop %v3983
    %v3995 = vmul.f32 1.0, %v3994
    %v3996 = vrcp.pop %v3984
    %v3997 = vmul.f32 1.0, %v3996
    %v3998 = vrcp.pop %v3985
    %v3999 = vmul.f32 1.0, %v3998
    %v4000 = vrcp.pop %v3986
    %v4001 = vmul.f32 1.0, %v4000
    %v4002 = vrcp.pop %v3987
    %v4003 = vmul.f32 1.0, %v4002
    %v4004 = vmul.f32 %v3933, %v3539
    %v4005 = vmul.f32 %v3935, %v3540
    %v4006 = vmul.f32 %v3937, %v3541
    %v4007 = vmul.f32 %v3939, %v3542
    %v4008 = vmul.f32 %v3941, %v3543
    %v4009 = vmul.f32 %v3943, %v3544
    %v4010 = vmul.f32 %v3945, %v3545
    %v4011 = vmul.f32 %v3947, %v3546
    %v4012 = vmul.f32 %v3885, %v3948
    %v4013 = vmul.f32 %v3887, %v3949
    %v4014 = vmul.f32 %v3889, %v3950
    %v4015 = vmul.f32 %v3891, %v3951
    %v4016 = vmul.f32 %v3893, %v3952
    %v4017 = vmul.f32 %v3895, %v3953
    %v4018 = vmul.f32 %v3897, %v3954
    %v4019 = vmul.f32 %v3899, %v3955
    %v4020 = vadd.f32 %v4004, %v4012
    %v4021 = vadd.f32 %v4005, %v4013
    %v4022 = vadd.f32 %v4006, %v4014
    %v4023 = vadd.f32 %v4007, %v4015
    %v4024 = vadd.f32 %v4008, %v4016
    %v4025 = vadd.f32 %v4009, %v4017
    %v4026 = vadd.f32 %v4010, %v4018
    %v4027 = vadd.f32 %v4011, %v4019
    %v4028 = vtanh.pop %v4020
    %v4029 = vtanh.pop %v4021
    %v4030 = vtanh.pop %v4022
    %v4031 = vtanh.pop %v4023
    %v4032 = vtanh.pop %v4024
    %v4033 = vtanh.pop %v4025
    %v4034 = vtanh.pop %v4026
    %v4035 = vtanh.pop %v4027
    %v4036 = vmul.f32 %v3989, %v4028
    %v4037 = vmul.f32 %v3991, %v4029
    %v4038 = vmul.f32 %v3993, %v4030
    %v4039 = vmul.f32 %v3995, %v4031
    %v4040 = vmul.f32 %v3997, %v4032
    %v4041 = vmul.f32 %v3999, %v4033
    %v4042 = vmul.f32 %v4001, %v4034
    %v4043 = vmul.f32 %v4003, %v4035
    %v4044 = vld [vmem:[%s1375] sm:$0xff]
    %v4045 = vld [vmem:[%s1375 + $0x8] sm:$0xff]
    %v4046 = vld [vmem:[%s1375 + $0x10] sm:$0xff]
    %v4047 = vld [vmem:[%s1375 + $0x18] sm:$0xff]
    %v4048 = vld [vmem:[%s1375 + $0x20] sm:$0xff]
    %v4049 = vld [vmem:[%s1375 + $0x28] sm:$0xff]
    %v4050 = vld [vmem:[%s1375 + $0x30] sm:$0xff]
    %v4051 = vld [vmem:[%s1375 + $0x38] sm:$0xff]
    %v4052 = vld [vmem:[%s1375 + $0x40] sm:$0xff]
    %v4053 = vld [vmem:[%s1375 + $0x48] sm:$0xff]
    %v4054 = vld [vmem:[%s1375 + $0x50] sm:$0xff]
    %v4055 = vld [vmem:[%s1375 + $0x58] sm:$0xff]
    %v4056 = vld [vmem:[%s1375 + $0x60] sm:$0xff]
    %v4057 = vld [vmem:[%s1375 + $0x68] sm:$0xff]
    %v4058 = vld [vmem:[%s1375 + $0x70] sm:$0xff]
    %v4059 = vld [vmem:[%s1375 + $0x78] sm:$0xff]
    %v4060 = vld [vmem:[%s1375 + $0x80] sm:$0xff]
    %v4061 = vld [vmem:[%s1375 + $0x88] sm:$0xff]
    %v4062 = vld [vmem:[%s1375 + $0x90] sm:$0xff]
    %v4063 = vld [vmem:[%s1375 + $0x98] sm:$0xff]
    %v4064 = vld [vmem:[%s1375 + $0xa0] sm:$0xff]
    %v4065 = vld [vmem:[%s1375 + $0xa8] sm:$0xff]
    %v4066 = vld [vmem:[%s1375 + $0xb0] sm:$0xff]
    %v4067 = vld [vmem:[%s1375 + $0xb8] sm:$0xff]
    %v4068 = vld [vmem:[%s1375 + $0xc0] sm:$0xff]
    %v4069 = vld [vmem:[%s1375 + $0xc8] sm:$0xff]
    %v4070 = vld [vmem:[%s1375 + $0xd0] sm:$0xff]
    %v4071 = vld [vmem:[%s1375 + $0xd8] sm:$0xff]
    %v4072 = vld [vmem:[%s1375 + $0xe0] sm:$0xff]
    %v4073 = vld [vmem:[%s1375 + $0xe8] sm:$0xff]
    %v4074 = vld [vmem:[%s1375 + $0xf0] sm:$0xff]
    %v4075 = vld [vmem:[%s1375 + $0xf8] sm:$0xff]
    %4076 = vmatprep.subr.mxu0 0.0
    %4077 = vmatpush1.msra.mxu0 0.0
    %4078 = vmatprep.subr.mxu0 0.0
    %4079 = vmatpush1.msra.mxu0 0.0
    %4080 = vmatprep.subr.mxu0 0.0
    %4081 = vmatpush1.msra.mxu0 0.0
    %4082 = vmatprep.subr.mxu0 0.0
    %4083 = vmatpush1.msra.mxu0 0.0
    %4084 = vmatprep.subr.mxu0 0.0
    %4085 = vmatpush1.msra.mxu0 0.0
    %4086 = vmatprep.subr.mxu0 0.0
    %4087 = vmatpush1.msra.mxu0 0.0
    %4088 = vmatprep.subr.mxu0 0.0
    %4089 = vmatpush1.msra.mxu0 0.0
    %4090 = vmatprep.subr.mxu0 0.0
    %4091 = vmatpush1.msra.mxu0 0.0
    %4092 = vmatprep.subr.mxu0 0.0
    %4093 = vmatpush1.msra.mxu0 %v4043
    %4094 = vmatprep.subr.mxu0 0.0
    %4095 = vmatpush1.msra.mxu0 %v4042
    %4096 = vmatprep.subr.mxu0 0.0
    %4097 = vmatpush1.msra.mxu0 %v4041
    %4098 = vmatprep.subr.mxu0 0.0
    %4099 = vmatpush1.msra.mxu0 %v4040
    %4100 = vmatprep.subr.mxu0 0.0
    %4101 = vmatpush1.msra.mxu0 %v4039
    %4102 = vmatprep.subr.mxu0 0.0
    %4103 = vmatpush1.msra.mxu0 %v4038
    %4104 = vmatprep.subr.mxu0 0.0
    %4105 = vmatpush1.msra.mxu0 %v4037
    %4106 = vmatprep.subr.mxu0 0.0
    %4107 = vmatpush1.msra.mxu0 %v4036
    %4108 = vmatprep.subr.mxu0 0.0
    %4109 = vmatpush2.msra.mxu0 0.0
    %4110 = vmatprep.subr.mxu0 0.0
    %4111 = vmatpush2.msra.mxu0 0.0
    %4112 = vmatprep.subr.mxu0 0.0
    %4113 = vmatpush2.msra.mxu0 0.0
    %4114 = vmatprep.subr.mxu0 0.0
    %4115 = vmatpush2.msra.mxu0 0.0
    %4116 = vmatprep.subr.mxu0 0.0
    %4117 = vmatpush2.msra.mxu0 0.0
    %4118 = vmatprep.subr.mxu0 0.0
    %4119 = vmatpush2.msra.mxu0 0.0
    %4120 = vmatprep.subr.mxu0 0.0
    %4121 = vmatpush2.msra.mxu0 0.0
    %4122 = vmatprep.subr.mxu0 0.0
    %4123 = vmatpush2.msra.mxu0 0.0
    %4124 = vmatprep.subr.mxu0 0.0
    %4125 = vmatpush2.msra.mxu0 0.0
    %4126 = vmatprep.subr.mxu0 0.0
    %4127 = vmatpush2.msra.mxu0 0.0
    %4128 = vmatprep.subr.mxu0 0.0
    %4129 = vmatpush2.msra.mxu0 0.0
    %4130 = vmatprep.subr.mxu0 0.0
    %4131 = vmatpush2.msra.mxu0 0.0
    %4132 = vmatprep.subr.mxu0 0.0
    %4133 = vmatpush2.msra.mxu0 0.0
    %4134 = vmatprep.subr.mxu0 0.0
    %4135 = vmatpush2.msra.mxu0 0.0
    %4136 = vmatprep.subr.mxu0 0.0
    %4137 = vmatpush2.msra.mxu0 0.0
    %4138 = vmatprep.subr.mxu0 0.0
    %4139 = vmatpush2.msra.mxu0 0.0
    %4140 = vmatprep.mubr.f32.mxu0 0.0
    %4141 = vmatmul.mubr.f32.gmra.mxu0 %v2538
    %v4142 = vpop.f32.mrf.mxu0
    %v4143 = vadd.f32 0.0, %v4142
    %v4144 = vpop.f32.mrf.mxu0
    %4145 = vmatprep.mubr.f32.mxu0 0.0
    %4146 = vmatmul.mubr.f32.gmra.mxu0 %v2541
    %v4147 = vpop.f32.mrf.mxu0
    %v4148 = vadd.f32 0.0, %v4147
    %v4149 = vpop.f32.mrf.mxu0
    %4150 = vmatprep.mubr.f32.mxu0 0.0
    %4151 = vmatmul.mubr.f32.gmra.mxu0 %v2544
    %v4152 = vpop.f32.mrf.mxu0
    %v4153 = vadd.f32 0.0, %v4152
    %v4154 = vpop.f32.mrf.mxu0
    %4155 = vmatprep.mubr.f32.mxu0 0.0
    %4156 = vmatmul.mubr.f32.gmra.mxu0 %v2547
    %v4157 = vpop.f32.mrf.mxu0
    %v4158 = vadd.f32 0.0, %v4157
    %v4159 = vpop.f32.mrf.mxu0
    %4160 = vmatprep.mubr.f32.mxu0 0.0
    %4161 = vmatmul.mubr.f32.gmra.mxu0 %v2550
    %v4162 = vpop.f32.mrf.mxu0
    %v4163 = vadd.f32 0.0, %v4162
    %v4164 = vpop.f32.mrf.mxu0
    %4165 = vmatprep.mubr.f32.mxu0 0.0
    %4166 = vmatmul.mubr.f32.gmra.mxu0 %v2553
    %v4167 = vpop.f32.mrf.mxu0
    %v4168 = vadd.f32 0.0, %v4167
    %v4169 = vpop.f32.mrf.mxu0
    %4170 = vmatprep.mubr.f32.mxu0 0.0
    %4171 = vmatmul.mubr.f32.gmra.mxu0 %v2556
    %v4172 = vpop.f32.mrf.mxu0
    %v4173 = vadd.f32 0.0, %v4172
    %v4174 = vpop.f32.mrf.mxu0
    %4175 = vmatprep.mubr.f32.mxu0 0.0
    %4176 = vmatmul.mubr.f32.gmra.mxu0 %v2559
    %v4177 = vpop.f32.mrf.mxu0
    %v4178 = vadd.f32 0.0, %v4177
    %v4179 = vpop.f32.mrf.mxu0
    %4180 = vmatprep.mubr.f32.mxu0 0.0
    %4181 = vmatmul.mubr.f32.gmra.mxu0 %v2562
    %v4182 = vpop.f32.mrf.mxu0
    %v4183 = vadd.f32 0.0, %v4182
    %v4184 = vpop.f32.mrf.mxu0
    %4185 = vmatprep.mubr.f32.mxu0 0.0
    %4186 = vmatmul.mubr.f32.gmra.mxu0 %v2565
    %v4187 = vpop.f32.mrf.mxu0
    %v4188 = vadd.f32 0.0, %v4187
    %v4189 = vpop.f32.mrf.mxu0
    %4190 = vmatprep.mubr.f32.mxu0 0.0
    %4191 = vmatmul.mubr.f32.gmra.mxu0 %v2568
    %v4192 = vpop.f32.mrf.mxu0
    %v4193 = vadd.f32 0.0, %v4192
    %v4194 = vpop.f32.mrf.mxu0
    %4195 = vmatprep.mubr.f32.mxu0 0.0
    %4196 = vmatmul.mubr.f32.gmra.mxu0 %v2571
    %v4197 = vpop.f32.mrf.mxu0
    %v4198 = vadd.f32 0.0, %v4197
    %v4199 = vpop.f32.mrf.mxu0
    %4200 = vmatprep.mubr.f32.mxu0 0.0
    %4201 = vmatmul.mubr.f32.gmra.mxu0 %v2574
    %v4202 = vpop.f32.mrf.mxu0
    %v4203 = vadd.f32 0.0, %v4202
    %v4204 = vpop.f32.mrf.mxu0
    %4205 = vmatprep.mubr.f32.mxu0 0.0
    %4206 = vmatmul.mubr.f32.gmra.mxu0 %v2577
    %v4207 = vpop.f32.mrf.mxu0
    %v4208 = vadd.f32 0.0, %v4207
    %v4209 = vpop.f32.mrf.mxu0
    %4210 = vmatprep.mubr.f32.mxu0 0.0
    %4211 = vmatmul.mubr.f32.gmra.mxu0 %v2580
    %v4212 = vpop.f32.mrf.mxu0
    %v4213 = vadd.f32 0.0, %v4212
    %v4214 = vpop.f32.mrf.mxu0
    %4215 = vmatprep.mubr.f32.mxu0 0.0
    %4216 = vmatmul.mubr.f32.gmra.mxu0 %v2583
    %v4217 = vpop.f32.mrf.mxu0
    %v4218 = vadd.f32 0.0, %v4217
    %v4219 = vpop.f32.mrf.mxu0
    %4220 = vmatprep.mubr.f32.mxu0 0.0
    %4221 = vmatmul.mubr.f32.gmra.mxu0 %v2586
    %v4222 = vpop.f32.mrf.mxu0
    %v4223 = vadd.f32 0.0, %v4222
    %v4224 = vpop.f32.mrf.mxu0
    %4225 = vmatprep.mubr.f32.mxu0 0.0
    %4226 = vmatmul.mubr.f32.gmra.mxu0 %v2589
    %v4227 = vpop.f32.mrf.mxu0
    %v4228 = vadd.f32 0.0, %v4227
    %v4229 = vpop.f32.mrf.mxu0
    %4230 = vmatprep.mubr.f32.mxu0 0.0
    %4231 = vmatmul.mubr.f32.gmra.mxu0 %v2592
    %v4232 = vpop.f32.mrf.mxu0
    %v4233 = vadd.f32 0.0, %v4232
    %v4234 = vpop.f32.mrf.mxu0
    %4235 = vmatprep.mubr.f32.mxu0 0.0
    %4236 = vmatmul.mubr.f32.gmra.mxu0 %v2595
    %v4237 = vpop.f32.mrf.mxu0
    %v4238 = vadd.f32 0.0, %v4237
    %v4239 = vpop.f32.mrf.mxu0
    %4240 = vmatprep.mubr.f32.mxu0 0.0
    %4241 = vmatmul.mubr.f32.gmra.mxu0 %v2598
    %v4242 = vpop.f32.mrf.mxu0
    %v4243 = vadd.f32 0.0, %v4242
    %v4244 = vpop.f32.mrf.mxu0
    %4245 = vmatprep.mubr.f32.mxu0 0.0
    %4246 = vmatmul.mubr.f32.gmra.mxu0 %v2601
    %v4247 = vpop.f32.mrf.mxu0
    %v4248 = vadd.f32 0.0, %v4247
    %v4249 = vpop.f32.mrf.mxu0
    %4250 = vmatprep.mubr.f32.mxu0 0.0
    %4251 = vmatmul.mubr.f32.gmra.mxu0 %v2604
    %v4252 = vpop.f32.mrf.mxu0
    %v4253 = vadd.f32 0.0, %v4252
    %v4254 = vpop.f32.mrf.mxu0
    %4255 = vmatprep.mubr.f32.mxu0 0.0
    %4256 = vmatmul.mubr.f32.gmra.mxu0 %v2607
    %v4257 = vpop.f32.mrf.mxu0
    %v4258 = vadd.f32 0.0, %v4257
    %v4259 = vpop.f32.mrf.mxu0
    %4260 = vmatprep.mubr.f32.mxu0 0.0
    %4261 = vmatmul.mubr.f32.gmra.mxu0 %v2610
    %v4262 = vpop.f32.mrf.mxu0
    %v4263 = vadd.f32 0.0, %v4262
    %v4264 = vpop.f32.mrf.mxu0
    %4265 = vmatprep.mubr.f32.mxu0 0.0
    %4266 = vmatmul.mubr.f32.gmra.mxu0 %v2613
    %v4267 = vpop.f32.mrf.mxu0
    %v4268 = vadd.f32 0.0, %v4267
    %v4269 = vpop.f32.mrf.mxu0
    %4270 = vmatprep.mubr.f32.mxu0 0.0
    %4271 = vmatmul.mubr.f32.gmra.mxu0 %v2616
    %v4272 = vpop.f32.mrf.mxu0
    %v4273 = vadd.f32 0.0, %v4272
    %v4274 = vpop.f32.mrf.mxu0
    %4275 = vmatprep.mubr.f32.mxu0 0.0
    %4276 = vmatmul.mubr.f32.gmra.mxu0 %v2619
    %v4277 = vpop.f32.mrf.mxu0
    %v4278 = vadd.f32 0.0, %v4277
    %v4279 = vpop.f32.mrf.mxu0
    %4280 = vmatprep.mubr.f32.mxu0 0.0
    %4281 = vmatmul.mubr.f32.gmra.mxu0 %v2622
    %v4282 = vpop.f32.mrf.mxu0
    %v4283 = vadd.f32 0.0, %v4282
    %v4284 = vpop.f32.mrf.mxu0
    %4285 = vmatprep.mubr.f32.mxu0 0.0
    %4286 = vmatmul.mubr.f32.gmra.mxu0 %v2625
    %v4287 = vpop.f32.mrf.mxu0
    %v4288 = vadd.f32 0.0, %v4287
    %v4289 = vpop.f32.mrf.mxu0
    %4290 = vmatprep.mubr.f32.mxu0 0.0
    %4291 = vmatmul.mubr.f32.gmra.mxu0 %v2628
    %v4292 = vpop.f32.mrf.mxu0
    %v4293 = vadd.f32 0.0, %v4292
    %v4294 = vpop.f32.mrf.mxu0
    %4295 = vmatprep.mubr.f32.mxu0 0.0
    %4296 = vmatmul.mubr.f32.gmra.mxu0 %v2631
    %v4297 = vpop.f32.mrf.mxu0
    %v4298 = vadd.f32 0.0, %v4297
    %v4299 = vpop.f32.mrf.mxu0
    %4300 = vdwg.mxu0
    %v4301 = vadd.f32 %v4044, %v4143
    %v4302 = vadd.f32 %v4045, %v4148
    %v4303 = vadd.f32 %v4046, %v4153
    %v4304 = vadd.f32 %v4047, %v4158
    %v4305 = vadd.f32 %v4048, %v4163
    %v4306 = vadd.f32 %v4049, %v4168
    %v4307 = vadd.f32 %v4050, %v4173
    %v4308 = vadd.f32 %v4051, %v4178
    %v4309 = vadd.f32 %v4052, %v4183
    %v4310 = vadd.f32 %v4053, %v4188
    %v4311 = vadd.f32 %v4054, %v4193
    %v4312 = vadd.f32 %v4055, %v4198
    %v4313 = vadd.f32 %v4056, %v4203
    %v4314 = vadd.f32 %v4057, %v4208
    %v4315 = vadd.f32 %v4058, %v4213
    %v4316 = vadd.f32 %v4059, %v4218
    %v4317 = vadd.f32 %v4060, %v4223
    %v4318 = vadd.f32 %v4061, %v4228
    %v4319 = vadd.f32 %v4062, %v4233
    %v4320 = vadd.f32 %v4063, %v4238
    %v4321 = vadd.f32 %v4064, %v4243
    %v4322 = vadd.f32 %v4065, %v4248
    %v4323 = vadd.f32 %v4066, %v4253
    %v4324 = vadd.f32 %v4067, %v4258
    %v4325 = vadd.f32 %v4068, %v4263
    %v4326 = vadd.f32 %v4069, %v4268
    %v4327 = vadd.f32 %v4070, %v4273
    %v4328 = vadd.f32 %v4071, %v4278
    %v4329 = vadd.f32 %v4072, %v4283
    %v4330 = vadd.f32 %v4073, %v4288
    %v4331 = vadd.f32 %v4074, %v4293
    %v4332 = vadd.f32 %v4075, %v4298
    %v4333 = vxor.u32 %v4301, 2147483648
    %v4334 = vxor.u32 %v4302, 2147483648
    %v4335 = vxor.u32 %v4303, 2147483648
    %v4336 = vxor.u32 %v4304, 2147483648
    %v4337 = vxor.u32 %v4305, 2147483648
    %v4338 = vxor.u32 %v4306, 2147483648
    %v4339 = vxor.u32 %v4307, 2147483648
    %v4340 = vxor.u32 %v4308, 2147483648
    %v4341 = vmul.f32 %v4333, 1.442695
    %v4342 = vpow.pop %v4341
    %v4343 = vmul.f32 %v4334, 1.442695
    %v4344 = vpow.pop %v4343
    %v4345 = vmul.f32 %v4335, 1.442695
    %v4346 = vpow.pop %v4345
    %v4347 = vmul.f32 %v4336, 1.442695
    %v4348 = vpow.pop %v4347
    %v4349 = vmul.f32 %v4337, 1.442695
    %v4350 = vpow.pop %v4349
    %v4351 = vmul.f32 %v4338, 1.442695
    %v4352 = vpow.pop %v4351
    %v4353 = vmul.f32 %v4339, 1.442695
    %v4354 = vpow.pop %v4353
    %v4355 = vmul.f32 %v4340, 1.442695
    %v4356 = vpow.pop %v4355
    %v4357 = vadd.f32 %v4342, 1.0
    %v4358 = vadd.f32 %v4344, 1.0
    %v4359 = vadd.f32 %v4346, 1.0
    %v4360 = vadd.f32 %v4348, 1.0
    %v4361 = vadd.f32 %v4350, 1.0
    %v4362 = vadd.f32 %v4352, 1.0
    %v4363 = vadd.f32 %v4354, 1.0
    %v4364 = vadd.f32 %v4356, 1.0
    %v4365 = vrcp.pop %v4357
    %v4366 = vmul.f32 1.0, %v4365
    %v4367 = vrcp.pop %v4358
    %v4368 = vmul.f32 1.0, %v4367
    %v4369 = vrcp.pop %v4359
    %v4370 = vmul.f32 1.0, %v4369
    %v4371 = vrcp.pop %v4360
    %v4372 = vmul.f32 1.0, %v4371
    %v4373 = vrcp.pop %v4361
    %v4374 = vmul.f32 1.0, %v4373
    %v4375 = vrcp.pop %v4362
    %v4376 = vmul.f32 1.0, %v4375
    %v4377 = vrcp.pop %v4363
    %v4378 = vmul.f32 1.0, %v4377
    %v4379 = vrcp.pop %v4364
    %v4380 = vmul.f32 1.0, %v4379
    %v4381 = vxor.u32 %v4309, 2147483648
    %v4382 = vxor.u32 %v4310, 2147483648
    %v4383 = vxor.u32 %v4311, 2147483648
    %v4384 = vxor.u32 %v4312, 2147483648
    %v4385 = vxor.u32 %v4313, 2147483648
    %v4386 = vxor.u32 %v4314, 2147483648
    %v4387 = vxor.u32 %v4315, 2147483648
    %v4388 = vxor.u32 %v4316, 2147483648
    %v4389 = vmul.f32 %v4381, 1.442695
    %v4390 = vpow.pop %v4389
    %v4391 = vmul.f32 %v4382, 1.442695
    %v4392 = vpow.pop %v4391
    %v4393 = vmul.f32 %v4383, 1.442695
    %v4394 = vpow.pop %v4393
    %v4395 = vmul.f32 %v4384, 1.442695
    %v4396 = vpow.pop %v4395
    %v4397 = vmul.f32 %v4385, 1.442695
    %v4398 = vpow.pop %v4397
    %v4399 = vmul.f32 %v4386, 1.442695
    %v4400 = vpow.pop %v4399
    %v4401 = vmul.f32 %v4387, 1.442695
    %v4402 = vpow.pop %v4401
    %v4403 = vmul.f32 %v4388, 1.442695
    %v4404 = vpow.pop %v4403
    %v4405 = vadd.f32 %v4390, 1.0
    %v4406 = vadd.f32 %v4392, 1.0
    %v4407 = vadd.f32 %v4394, 1.0
    %v4408 = vadd.f32 %v4396, 1.0
    %v4409 = vadd.f32 %v4398, 1.0
    %v4410 = vadd.f32 %v4400, 1.0
    %v4411 = vadd.f32 %v4402, 1.0
    %v4412 = vadd.f32 %v4404, 1.0
    %v4413 = vrcp.pop %v4405
    %v4414 = vmul.f32 1.0, %v4413
    %v4415 = vrcp.pop %v4406
    %v4416 = vmul.f32 1.0, %v4415
    %v4417 = vrcp.pop %v4407
    %v4418 = vmul.f32 1.0, %v4417
    %v4419 = vrcp.pop %v4408
    %v4420 = vmul.f32 1.0, %v4419
    %v4421 = vrcp.pop %v4409
    %v4422 = vmul.f32 1.0, %v4421
    %v4423 = vrcp.pop %v4410
    %v4424 = vmul.f32 1.0, %v4423
    %v4425 = vrcp.pop %v4411
    %v4426 = vmul.f32 1.0, %v4425
    %v4427 = vrcp.pop %v4412
    %v4428 = vmul.f32 1.0, %v4427
    %v4429 = vtanh.pop %v4317
    %v4430 = vtanh.pop %v4318
    %v4431 = vtanh.pop %v4319
    %v4432 = vtanh.pop %v4320
    %v4433 = vtanh.pop %v4321
    %v4434 = vtanh.pop %v4322
    %v4435 = vtanh.pop %v4323
    %v4436 = vtanh.pop %v4324
    %v4437 = vxor.u32 %v4325, 2147483648
    %v4438 = vxor.u32 %v4326, 2147483648
    %v4439 = vxor.u32 %v4327, 2147483648
    %v4440 = vxor.u32 %v4328, 2147483648
    %v4441 = vxor.u32 %v4329, 2147483648
    %v4442 = vxor.u32 %v4330, 2147483648
    %v4443 = vxor.u32 %v4331, 2147483648
    %v4444 = vxor.u32 %v4332, 2147483648
    %v4445 = vmul.f32 %v4437, 1.442695
    %v4446 = vpow.pop %v4445
    %v4447 = vmul.f32 %v4438, 1.442695
    %v4448 = vpow.pop %v4447
    %v4449 = vmul.f32 %v4439, 1.442695
    %v4450 = vpow.pop %v4449
    %v4451 = vmul.f32 %v4440, 1.442695
    %v4452 = vpow.pop %v4451
    %v4453 = vmul.f32 %v4441, 1.442695
    %v4454 = vpow.pop %v4453
    %v4455 = vmul.f32 %v4442, 1.442695
    %v4456 = vpow.pop %v4455
    %v4457 = vmul.f32 %v4443, 1.442695
    %v4458 = vpow.pop %v4457
    %v4459 = vmul.f32 %v4444, 1.442695
    %v4460 = vpow.pop %v4459
    %v4461 = vadd.f32 %v4446, 1.0
    %v4462 = vadd.f32 %v4448, 1.0
    %v4463 = vadd.f32 %v4450, 1.0
    %v4464 = vadd.f32 %v4452, 1.0
    %v4465 = vadd.f32 %v4454, 1.0
    %v4466 = vadd.f32 %v4456, 1.0
    %v4467 = vadd.f32 %v4458, 1.0
    %v4468 = vadd.f32 %v4460, 1.0
    %v4469 = vrcp.pop %v4461
    %v4470 = vmul.f32 1.0, %v4469
    %v4471 = vrcp.pop %v4462
    %v4472 = vmul.f32 1.0, %v4471
    %v4473 = vrcp.pop %v4463
    %v4474 = vmul.f32 1.0, %v4473
    %v4475 = vrcp.pop %v4464
    %v4476 = vmul.f32 1.0, %v4475
    %v4477 = vrcp.pop %v4465
    %v4478 = vmul.f32 1.0, %v4477
    %v4479 = vrcp.pop %v4466
    %v4480 = vmul.f32 1.0, %v4479
    %v4481 = vrcp.pop %v4467
    %v4482 = vmul.f32 1.0, %v4481
    %v4483 = vrcp.pop %v4468
    %v4484 = vmul.f32 1.0, %v4483
    %v4485 = vmul.f32 %v4414, %v4020
    %v4486 = vmul.f32 %v4416, %v4021
    %v4487 = vmul.f32 %v4418, %v4022
    %v4488 = vmul.f32 %v4420, %v4023
    %v4489 = vmul.f32 %v4422, %v4024
    %v4490 = vmul.f32 %v4424, %v4025
    %v4491 = vmul.f32 %v4426, %v4026
    %v4492 = vmul.f32 %v4428, %v4027
    %v4493 = vmul.f32 %v4366, %v4429
    %v4494 = vmul.f32 %v4368, %v4430
    %v4495 = vmul.f32 %v4370, %v4431
    %v4496 = vmul.f32 %v4372, %v4432
    %v4497 = vmul.f32 %v4374, %v4433
    %v4498 = vmul.f32 %v4376, %v4434
    %v4499 = vmul.f32 %v4378, %v4435
    %v4500 = vmul.f32 %v4380, %v4436
    %v4501 = vadd.f32 %v4485, %v4493
    %v4502 = vadd.f32 %v4486, %v4494
    %v4503 = vadd.f32 %v4487, %v4495
    %v4504 = vadd.f32 %v4488, %v4496
    %v4505 = vadd.f32 %v4489, %v4497
    %v4506 = vadd.f32 %v4490, %v4498
    %v4507 = vadd.f32 %v4491, %v4499
    %v4508 = vadd.f32 %v4492, %v4500
    %v4509 = vtanh.pop %v4501
    %v4510 = vtanh.pop %v4502
    %v4511 = vtanh.pop %v4503
    %v4512 = vtanh.pop %v4504
    %v4513 = vtanh.pop %v4505
    %v4514 = vtanh.pop %v4506
    %v4515 = vtanh.pop %v4507
    %v4516 = vtanh.pop %v4508
    %v4517 = vmul.f32 %v4470, %v4509
    %v4518 = vmul.f32 %v4472, %v4510
    %v4519 = vmul.f32 %v4474, %v4511
    %v4520 = vmul.f32 %v4476, %v4512
    %v4521 = vmul.f32 %v4478, %v4513
    %v4522 = vmul.f32 %v4480, %v4514
    %v4523 = vmul.f32 %v4482, %v4515
    %v4524 = vmul.f32 %v4484, %v4516
    %v4525 = vld [vmem:[%s1641] sm:$0xff]
    %v4526 = vld [vmem:[%s1641 + $0x8] sm:$0xff]
    %v4527 = vld [vmem:[%s1641 + $0x10] sm:$0xff]
    %v4528 = vld [vmem:[%s1641 + $0x18] sm:$0xff]
    %v4529 = vld [vmem:[%s1641 + $0x20] sm:$0xff]
    %v4530 = vld [vmem:[%s1641 + $0x28] sm:$0xff]
    %v4531 = vld [vmem:[%s1641 + $0x30] sm:$0xff]
    %v4532 = vld [vmem:[%s1641 + $0x38] sm:$0xff]
    %v4533 = vld [vmem:[%s1641 + $0x40] sm:$0xff]
    %v4534 = vld [vmem:[%s1641 + $0x48] sm:$0xff]
    %v4535 = vld [vmem:[%s1641 + $0x50] sm:$0xff]
    %v4536 = vld [vmem:[%s1641 + $0x58] sm:$0xff]
    %v4537 = vld [vmem:[%s1641 + $0x60] sm:$0xff]
    %v4538 = vld [vmem:[%s1641 + $0x68] sm:$0xff]
    %v4539 = vld [vmem:[%s1641 + $0x70] sm:$0xff]
    %v4540 = vld [vmem:[%s1641 + $0x78] sm:$0xff]
    %v4541 = vld [vmem:[%s1641 + $0x80] sm:$0xff]
    %v4542 = vld [vmem:[%s1641 + $0x88] sm:$0xff]
    %v4543 = vld [vmem:[%s1641 + $0x90] sm:$0xff]
    %v4544 = vld [vmem:[%s1641 + $0x98] sm:$0xff]
    %v4545 = vld [vmem:[%s1641 + $0xa0] sm:$0xff]
    %v4546 = vld [vmem:[%s1641 + $0xa8] sm:$0xff]
    %v4547 = vld [vmem:[%s1641 + $0xb0] sm:$0xff]
    %v4548 = vld [vmem:[%s1641 + $0xb8] sm:$0xff]
    %v4549 = vld [vmem:[%s1641 + $0xc0] sm:$0xff]
    %v4550 = vld [vmem:[%s1641 + $0xc8] sm:$0xff]
    %v4551 = vld [vmem:[%s1641 + $0xd0] sm:$0xff]
    %v4552 = vld [vmem:[%s1641 + $0xd8] sm:$0xff]
    %v4553 = vld [vmem:[%s1641 + $0xe0] sm:$0xff]
    %v4554 = vld [vmem:[%s1641 + $0xe8] sm:$0xff]
    %v4555 = vld [vmem:[%s1641 + $0xf0] sm:$0xff]
    %v4556 = vld [vmem:[%s1641 + $0xf8] sm:$0xff]
    %4557 = vmatprep.subr.mxu0 0.0
    %4558 = vmatpush1.msra.mxu0 0.0
    %4559 = vmatprep.subr.mxu0 0.0
    %4560 = vmatpush1.msra.mxu0 0.0
    %4561 = vmatprep.subr.mxu0 0.0
    %4562 = vmatpush1.msra.mxu0 0.0
    %4563 = vmatprep.subr.mxu0 0.0
    %4564 = vmatpush1.msra.mxu0 0.0
    %4565 = vmatprep.subr.mxu0 0.0
    %4566 = vmatpush1.msra.mxu0 0.0
    %4567 = vmatprep.subr.mxu0 0.0
    %4568 = vmatpush1.msra.mxu0 0.0
    %4569 = vmatprep.subr.mxu0 0.0
    %4570 = vmatpush1.msra.mxu0 0.0
    %4571 = vmatprep.subr.mxu0 0.0
    %4572 = vmatpush1.msra.mxu0 0.0
    %4573 = vmatprep.subr.mxu0 0.0
    %4574 = vmatpush1.msra.mxu0 %v4524
    %4575 = vmatprep.subr.mxu0 0.0
    %4576 = vmatpush1.msra.mxu0 %v4523
    %4577 = vmatprep.subr.mxu0 0.0
    %4578 = vmatpush1.msra.mxu0 %v4522
    %4579 = vmatprep.subr.mxu0 0.0
    %4580 = vmatpush1.msra.mxu0 %v4521
    %4581 = vmatprep.subr.mxu0 0.0
    %4582 = vmatpush1.msra.mxu0 %v4520
    %4583 = vmatprep.subr.mxu0 0.0
    %4584 = vmatpush1.msra.mxu0 %v4519
    %4585 = vmatprep.subr.mxu0 0.0
    %4586 = vmatpush1.msra.mxu0 %v4518
    %4587 = vmatprep.subr.mxu0 0.0
    %4588 = vmatpush1.msra.mxu0 %v4517
    %4589 = vmatprep.subr.mxu0 0.0
    %4590 = vmatpush2.msra.mxu0 0.0
    %4591 = vmatprep.subr.mxu0 0.0
    %4592 = vmatpush2.msra.mxu0 0.0
    %4593 = vmatprep.subr.mxu0 0.0
    %4594 = vmatpush2.msra.mxu0 0.0
    %4595 = vmatprep.subr.mxu0 0.0
    %4596 = vmatpush2.msra.mxu0 0.0
    %4597 = vmatprep.subr.mxu0 0.0
    %4598 = vmatpush2.msra.mxu0 0.0
    %4599 = vmatprep.subr.mxu0 0.0
    %4600 = vmatpush2.msra.mxu0 0.0
    %4601 = vmatprep.subr.mxu0 0.0
    %4602 = vmatpush2.msra.mxu0 0.0
    %4603 = vmatprep.subr.mxu0 0.0
    %4604 = vmatpush2.msra.mxu0 0.0
    %4605 = vmatprep.subr.mxu0 0.0
    %4606 = vmatpush2.msra.mxu0 0.0
    %4607 = vmatprep.subr.mxu0 0.0
    %4608 = vmatpush2.msra.mxu0 0.0
    %4609 = vmatprep.subr.mxu0 0.0
    %4610 = vmatpush2.msra.mxu0 0.0
    %4611 = vmatprep.subr.mxu0 0.0
    %4612 = vmatpush2.msra.mxu0 0.0
    %4613 = vmatprep.subr.mxu0 0.0
    %4614 = vmatpush2.msra.mxu0 0.0
    %4615 = vmatprep.subr.mxu0 0.0
    %4616 = vmatpush2.msra.mxu0 0.0
    %4617 = vmatprep.subr.mxu0 0.0
    %4618 = vmatpush2.msra.mxu0 0.0
    %4619 = vmatprep.subr.mxu0 0.0
    %4620 = vmatpush2.msra.mxu0 0.0
    %4621 = vmatprep.mubr.f32.mxu0 0.0
    %4622 = vmatmul.mubr.f32.gmra.mxu0 %v2538
    %v4623 = vpop.f32.mrf.mxu0
    %v4624 = vadd.f32 0.0, %v4623
    %v4625 = vpop.f32.mrf.mxu0
    %4626 = vmatprep.mubr.f32.mxu0 0.0
    %4627 = vmatmul.mubr.f32.gmra.mxu0 %v2541
    %v4628 = vpop.f32.mrf.mxu0
    %v4629 = vadd.f32 0.0, %v4628
    %v4630 = vpop.f32.mrf.mxu0
    %4631 = vmatprep.mubr.f32.mxu0 0.0
    %4632 = vmatmul.mubr.f32.gmra.mxu0 %v2544
    %v4633 = vpop.f32.mrf.mxu0
    %v4634 = vadd.f32 0.0, %v4633
    %v4635 = vpop.f32.mrf.mxu0
    %4636 = vmatprep.mubr.f32.mxu0 0.0
    %4637 = vmatmul.mubr.f32.gmra.mxu0 %v2547
    %v4638 = vpop.f32.mrf.mxu0
    %v4639 = vadd.f32 0.0, %v4638
    %v4640 = vpop.f32.mrf.mxu0
    %4641 = vmatprep.mubr.f32.mxu0 0.0
    %4642 = vmatmul.mubr.f32.gmra.mxu0 %v2550
    %v4643 = vpop.f32.mrf.mxu0
    %v4644 = vadd.f32 0.0, %v4643
    %v4645 = vpop.f32.mrf.mxu0
    %4646 = vmatprep.mubr.f32.mxu0 0.0
    %4647 = vmatmul.mubr.f32.gmra.mxu0 %v2553
    %v4648 = vpop.f32.mrf.mxu0
    %v4649 = vadd.f32 0.0, %v4648
    %v4650 = vpop.f32.mrf.mxu0
    %4651 = vmatprep.mubr.f32.mxu0 0.0
    %4652 = vmatmul.mubr.f32.gmra.mxu0 %v2556
    %v4653 = vpop.f32.mrf.mxu0
    %v4654 = vadd.f32 0.0, %v4653
    %v4655 = vpop.f32.mrf.mxu0
    %4656 = vmatprep.mubr.f32.mxu0 0.0
    %4657 = vmatmul.mubr.f32.gmra.mxu0 %v2559
    %v4658 = vpop.f32.mrf.mxu0
    %v4659 = vadd.f32 0.0, %v4658
    %v4660 = vpop.f32.mrf.mxu0
    %4661 = vmatprep.mubr.f32.mxu0 0.0
    %4662 = vmatmul.mubr.f32.gmra.mxu0 %v2562
    %v4663 = vpop.f32.mrf.mxu0
    %v4664 = vadd.f32 0.0, %v4663
    %v4665 = vpop.f32.mrf.mxu0
    %4666 = vmatprep.mubr.f32.mxu0 0.0
    %4667 = vmatmul.mubr.f32.gmra.mxu0 %v2565
    %v4668 = vpop.f32.mrf.mxu0
    %v4669 = vadd.f32 0.0, %v4668
    %v4670 = vpop.f32.mrf.mxu0
    %4671 = vmatprep.mubr.f32.mxu0 0.0
    %4672 = vmatmul.mubr.f32.gmra.mxu0 %v2568
    %v4673 = vpop.f32.mrf.mxu0
    %v4674 = vadd.f32 0.0, %v4673
    %v4675 = vpop.f32.mrf.mxu0
    %4676 = vmatprep.mubr.f32.mxu0 0.0
    %4677 = vmatmul.mubr.f32.gmra.mxu0 %v2571
    %v4678 = vpop.f32.mrf.mxu0
    %v4679 = vadd.f32 0.0, %v4678
    %v4680 = vpop.f32.mrf.mxu0
    %4681 = vmatprep.mubr.f32.mxu0 0.0
    %4682 = vmatmul.mubr.f32.gmra.mxu0 %v2574
    %v4683 = vpop.f32.mrf.mxu0
    %v4684 = vadd.f32 0.0, %v4683
    %v4685 = vpop.f32.mrf.mxu0
    %4686 = vmatprep.mubr.f32.mxu0 0.0
    %4687 = vmatmul.mubr.f32.gmra.mxu0 %v2577
    %v4688 = vpop.f32.mrf.mxu0
    %v4689 = vadd.f32 0.0, %v4688
    %v4690 = vpop.f32.mrf.mxu0
    %4691 = vmatprep.mubr.f32.mxu0 0.0
    %4692 = vmatmul.mubr.f32.gmra.mxu0 %v2580
    %v4693 = vpop.f32.mrf.mxu0
    %v4694 = vadd.f32 0.0, %v4693
    %v4695 = vpop.f32.mrf.mxu0
    %4696 = vmatprep.mubr.f32.mxu0 0.0
    %4697 = vmatmul.mubr.f32.gmra.mxu0 %v2583
    %v4698 = vpop.f32.mrf.mxu0
    %v4699 = vadd.f32 0.0, %v4698
    %v4700 = vpop.f32.mrf.mxu0
    %4701 = vmatprep.mubr.f32.mxu0 0.0
    %4702 = vmatmul.mubr.f32.gmra.mxu0 %v2586
    %v4703 = vpop.f32.mrf.mxu0
    %v4704 = vadd.f32 0.0, %v4703
    %v4705 = vpop.f32.mrf.mxu0
    %4706 = vmatprep.mubr.f32.mxu0 0.0
    %4707 = vmatmul.mubr.f32.gmra.mxu0 %v2589
    %v4708 = vpop.f32.mrf.mxu0
    %v4709 = vadd.f32 0.0, %v4708
    %v4710 = vpop.f32.mrf.mxu0
    %4711 = vmatprep.mubr.f32.mxu0 0.0
    %4712 = vmatmul.mubr.f32.gmra.mxu0 %v2592
    %v4713 = vpop.f32.mrf.mxu0
    %v4714 = vadd.f32 0.0, %v4713
    %v4715 = vpop.f32.mrf.mxu0
    %4716 = vmatprep.mubr.f32.mxu0 0.0
    %4717 = vmatmul.mubr.f32.gmra.mxu0 %v2595
    %v4718 = vpop.f32.mrf.mxu0
    %v4719 = vadd.f32 0.0, %v4718
    %v4720 = vpop.f32.mrf.mxu0
    %4721 = vmatprep.mubr.f32.mxu0 0.0
    %4722 = vmatmul.mubr.f32.gmra.mxu0 %v2598
    %v4723 = vpop.f32.mrf.mxu0
    %v4724 = vadd.f32 0.0, %v4723
    %v4725 = vpop.f32.mrf.mxu0
    %4726 = vmatprep.mubr.f32.mxu0 0.0
    %4727 = vmatmul.mubr.f32.gmra.mxu0 %v2601
    %v4728 = vpop.f32.mrf.mxu0
    %v4729 = vadd.f32 0.0, %v4728
    %v4730 = vpop.f32.mrf.mxu0
    %4731 = vmatprep.mubr.f32.mxu0 0.0
    %4732 = vmatmul.mubr.f32.gmra.mxu0 %v2604
    %v4733 = vpop.f32.mrf.mxu0
    %v4734 = vadd.f32 0.0, %v4733
    %v4735 = vpop.f32.mrf.mxu0
    %4736 = vmatprep.mubr.f32.mxu0 0.0
    %4737 = vmatmul.mubr.f32.gmra.mxu0 %v2607
    %v4738 = vpop.f32.mrf.mxu0
    %v4739 = vadd.f32 0.0, %v4738
    %v4740 = vpop.f32.mrf.mxu0
    %4741 = vmatprep.mubr.f32.mxu0 0.0
    %4742 = vmatmul.mubr.f32.gmra.mxu0 %v2610
    %v4743 = vpop.f32.mrf.mxu0
    %v4744 = vadd.f32 0.0, %v4743
    %v4745 = vpop.f32.mrf.mxu0
    %4746 = vmatprep.mubr.f32.mxu0 0.0
    %4747 = vmatmul.mubr.f32.gmra.mxu0 %v2613
    %v4748 = vpop.f32.mrf.mxu0
    %v4749 = vadd.f32 0.0, %v4748
    %v4750 = vpop.f32.mrf.mxu0
    %4751 = vmatprep.mubr.f32.mxu0 0.0
    %4752 = vmatmul.mubr.f32.gmra.mxu0 %v2616
    %v4753 = vpop.f32.mrf.mxu0
    %v4754 = vadd.f32 0.0, %v4753
    %v4755 = vpop.f32.mrf.mxu0
    %4756 = vmatprep.mubr.f32.mxu0 0.0
    %4757 = vmatmul.mubr.f32.gmra.mxu0 %v2619
    %v4758 = vpop.f32.mrf.mxu0
    %v4759 = vadd.f32 0.0, %v4758
    %v4760 = vpop.f32.mrf.mxu0
    %4761 = vmatprep.mubr.f32.mxu0 0.0
    %4762 = vmatmul.mubr.f32.gmra.mxu0 %v2622
    %v4763 = vpop.f32.mrf.mxu0
    %v4764 = vadd.f32 0.0, %v4763
    %v4765 = vpop.f32.mrf.mxu0
    %4766 = vmatprep.mubr.f32.mxu0 0.0
    %4767 = vmatmul.mubr.f32.gmra.mxu0 %v2625
    %v4768 = vpop.f32.mrf.mxu0
    %v4769 = vadd.f32 0.0, %v4768
    %v4770 = vpop.f32.mrf.mxu0
    %4771 = vmatprep.mubr.f32.mxu0 0.0
    %4772 = vmatmul.mubr.f32.gmra.mxu0 %v2628
    %v4773 = vpop.f32.mrf.mxu0
    %v4774 = vadd.f32 0.0, %v4773
    %v4775 = vpop.f32.mrf.mxu0
    %4776 = vmatprep.mubr.f32.mxu0 0.0
    %4777 = vmatmul.mubr.f32.gmra.mxu0 %v2631
    %v4778 = vpop.f32.mrf.mxu0
    %v4779 = vadd.f32 0.0, %v4778
    %v4780 = vpop.f32.mrf.mxu0
    %4781 = vdwg.mxu0
    %v4782 = vadd.f32 %v4525, %v4624
    %v4783 = vadd.f32 %v4526, %v4629
    %v4784 = vadd.f32 %v4527, %v4634
    %v4785 = vadd.f32 %v4528, %v4639
    %v4786 = vadd.f32 %v4529, %v4644
    %v4787 = vadd.f32 %v4530, %v4649
    %v4788 = vadd.f32 %v4531, %v4654
    %v4789 = vadd.f32 %v4532, %v4659
    %v4790 = vadd.f32 %v4533, %v4664
    %v4791 = vadd.f32 %v4534, %v4669
    %v4792 = vadd.f32 %v4535, %v4674
    %v4793 = vadd.f32 %v4536, %v4679
    %v4794 = vadd.f32 %v4537, %v4684
    %v4795 = vadd.f32 %v4538, %v4689
    %v4796 = vadd.f32 %v4539, %v4694
    %v4797 = vadd.f32 %v4540, %v4699
    %v4798 = vadd.f32 %v4541, %v4704
    %v4799 = vadd.f32 %v4542, %v4709
    %v4800 = vadd.f32 %v4543, %v4714
    %v4801 = vadd.f32 %v4544, %v4719
    %v4802 = vadd.f32 %v4545, %v4724
    %v4803 = vadd.f32 %v4546, %v4729
    %v4804 = vadd.f32 %v4547, %v4734
    %v4805 = vadd.f32 %v4548, %v4739
    %v4806 = vadd.f32 %v4549, %v4744
    %v4807 = vadd.f32 %v4550, %v4749
    %v4808 = vadd.f32 %v4551, %v4754
    %v4809 = vadd.f32 %v4552, %v4759
    %v4810 = vadd.f32 %v4553, %v4764
    %v4811 = vadd.f32 %v4554, %v4769
    %v4812 = vadd.f32 %v4555, %v4774
    %v4813 = vadd.f32 %v4556, %v4779
    %v4814 = vxor.u32 %v4782, 2147483648
    %v4815 = vxor.u32 %v4783, 2147483648
    %v4816 = vxor.u32 %v4784, 2147483648
    %v4817 = vxor.u32 %v4785, 2147483648
    %v4818 = vxor.u32 %v4786, 2147483648
    %v4819 = vxor.u32 %v4787, 2147483648
    %v4820 = vxor.u32 %v4788, 2147483648
    %v4821 = vxor.u32 %v4789, 2147483648
    %v4822 = vmul.f32 %v4814, 1.442695
    %v4823 = vpow.pop %v4822
    %v4824 = vmul.f32 %v4815, 1.442695
    %v4825 = vpow.pop %v4824
    %v4826 = vmul.f32 %v4816, 1.442695
    %v4827 = vpow.pop %v4826
    %v4828 = vmul.f32 %v4817, 1.442695
    %v4829 = vpow.pop %v4828
    %v4830 = vmul.f32 %v4818, 1.442695
    %v4831 = vpow.pop %v4830
    %v4832 = vmul.f32 %v4819, 1.442695
    %v4833 = vpow.pop %v4832
    %v4834 = vmul.f32 %v4820, 1.442695
    %v4835 = vpow.pop %v4834
    %v4836 = vmul.f32 %v4821, 1.442695
    %v4837 = vpow.pop %v4836
    %v4838 = vadd.f32 %v4823, 1.0
    %v4839 = vadd.f32 %v4825, 1.0
    %v4840 = vadd.f32 %v4827, 1.0
    %v4841 = vadd.f32 %v4829, 1.0
    %v4842 = vadd.f32 %v4831, 1.0
    %v4843 = vadd.f32 %v4833, 1.0
    %v4844 = vadd.f32 %v4835, 1.0
    %v4845 = vadd.f32 %v4837, 1.0
    %v4846 = vrcp.pop %v4838
    %v4847 = vmul.f32 1.0, %v4846
    %v4848 = vrcp.pop %v4839
    %v4849 = vmul.f32 1.0, %v4848
    %v4850 = vrcp.pop %v4840
    %v4851 = vmul.f32 1.0, %v4850
    %v4852 = vrcp.pop %v4841
    %v4853 = vmul.f32 1.0, %v4852
    %v4854 = vrcp.pop %v4842
    %v4855 = vmul.f32 1.0, %v4854
    %v4856 = vrcp.pop %v4843
    %v4857 = vmul.f32 1.0, %v4856
    %v4858 = vrcp.pop %v4844
    %v4859 = vmul.f32 1.0, %v4858
    %v4860 = vrcp.pop %v4845
    %v4861 = vmul.f32 1.0, %v4860
    %v4862 = vxor.u32 %v4790, 2147483648
    %v4863 = vxor.u32 %v4791, 2147483648
    %v4864 = vxor.u32 %v4792, 2147483648
    %v4865 = vxor.u32 %v4793, 2147483648
    %v4866 = vxor.u32 %v4794, 2147483648
    %v4867 = vxor.u32 %v4795, 2147483648
    %v4868 = vxor.u32 %v4796, 2147483648
    %v4869 = vxor.u32 %v4797, 2147483648
    %v4870 = vmul.f32 %v4862, 1.442695
    %v4871 = vpow.pop %v4870
    %v4872 = vmul.f32 %v4863, 1.442695
    %v4873 = vpow.pop %v4872
    %v4874 = vmul.f32 %v4864, 1.442695
    %v4875 = vpow.pop %v4874
    %v4876 = vmul.f32 %v4865, 1.442695
    %v4877 = vpow.pop %v4876
    %v4878 = vmul.f32 %v4866, 1.442695
    %v4879 = vpow.pop %v4878
    %v4880 = vmul.f32 %v4867, 1.442695
    %v4881 = vpow.pop %v4880
    %v4882 = vmul.f32 %v4868, 1.442695
    %v4883 = vpow.pop %v4882
    %v4884 = vmul.f32 %v4869, 1.442695
    %v4885 = vpow.pop %v4884
    %v4886 = vadd.f32 %v4871, 1.0
    %v4887 = vadd.f32 %v4873, 1.0
    %v4888 = vadd.f32 %v4875, 1.0
    %v4889 = vadd.f32 %v4877, 1.0
    %v4890 = vadd.f32 %v4879, 1.0
    %v4891 = vadd.f32 %v4881, 1.0
    %v4892 = vadd.f32 %v4883, 1.0
    %v4893 = vadd.f32 %v4885, 1.0
    %v4894 = vrcp.pop %v4886
    %v4895 = vmul.f32 1.0, %v4894
    %v4896 = vrcp.pop %v4887
    %v4897 = vmul.f32 1.0, %v4896
    %v4898 = vrcp.pop %v4888
    %v4899 = vmul.f32 1.0, %v4898
    %v4900 = vrcp.pop %v4889
    %v4901 = vmul.f32 1.0, %v4900
    %v4902 = vrcp.pop %v4890
    %v4903 = vmul.f32 1.0, %v4902
    %v4904 = vrcp.pop %v4891
    %v4905 = vmul.f32 1.0, %v4904
    %v4906 = vrcp.pop %v4892
    %v4907 = vmul.f32 1.0, %v4906
    %v4908 = vrcp.pop %v4893
    %v4909 = vmul.f32 1.0, %v4908
    %v4910 = vtanh.pop %v4798
    %v4911 = vtanh.pop %v4799
    %v4912 = vtanh.pop %v4800
    %v4913 = vtanh.pop %v4801
    %v4914 = vtanh.pop %v4802
    %v4915 = vtanh.pop %v4803
    %v4916 = vtanh.pop %v4804
    %v4917 = vtanh.pop %v4805
    %v4918 = vxor.u32 %v4806, 2147483648
    %v4919 = vxor.u32 %v4807, 2147483648
    %v4920 = vxor.u32 %v4808, 2147483648
    %v4921 = vxor.u32 %v4809, 2147483648
    %v4922 = vxor.u32 %v4810, 2147483648
    %v4923 = vxor.u32 %v4811, 2147483648
    %v4924 = vxor.u32 %v4812, 2147483648
    %v4925 = vxor.u32 %v4813, 2147483648
    %v4926 = vmul.f32 %v4918, 1.442695
    %v4927 = vpow.pop %v4926
    %v4928 = vmul.f32 %v4919, 1.442695
    %v4929 = vpow.pop %v4928
    %v4930 = vmul.f32 %v4920, 1.442695
    %v4931 = vpow.pop %v4930
    %v4932 = vmul.f32 %v4921, 1.442695
    %v4933 = vpow.pop %v4932
    %v4934 = vmul.f32 %v4922, 1.442695
    %v4935 = vpow.pop %v4934
    %v4936 = vmul.f32 %v4923, 1.442695
    %v4937 = vpow.pop %v4936
    %v4938 = vmul.f32 %v4924, 1.442695
    %v4939 = vpow.pop %v4938
    %v4940 = vmul.f32 %v4925, 1.442695
    %v4941 = vpow.pop %v4940
    %v4942 = vadd.f32 %v4927, 1.0
    %v4943 = vadd.f32 %v4929, 1.0
    %v4944 = vadd.f32 %v4931, 1.0
    %v4945 = vadd.f32 %v4933, 1.0
    %v4946 = vadd.f32 %v4935, 1.0
    %v4947 = vadd.f32 %v4937, 1.0
    %v4948 = vadd.f32 %v4939, 1.0
    %v4949 = vadd.f32 %v4941, 1.0
    %v4950 = vrcp.pop %v4942
    %v4951 = vmul.f32 1.0, %v4950
    %v4952 = vrcp.pop %v4943
    %v4953 = vmul.f32 1.0, %v4952
    %v4954 = vrcp.pop %v4944
    %v4955 = vmul.f32 1.0, %v4954
    %v4956 = vrcp.pop %v4945
    %v4957 = vmul.f32 1.0, %v4956
    %v4958 = vrcp.pop %v4946
    %v4959 = vmul.f32 1.0, %v4958
    %v4960 = vrcp.pop %v4947
    %v4961 = vmul.f32 1.0, %v4960
    %v4962 = vrcp.pop %v4948
    %v4963 = vmul.f32 1.0, %v4962
    %v4964 = vrcp.pop %v4949
    %v4965 = vmul.f32 1.0, %v4964
    %v4966 = vmul.f32 %v4895, %v4501
    %v4967 = vmul.f32 %v4897, %v4502
    %v4968 = vmul.f32 %v4899, %v4503
    %v4969 = vmul.f32 %v4901, %v4504
    %v4970 = vmul.f32 %v4903, %v4505
    %v4971 = vmul.f32 %v4905, %v4506
    %v4972 = vmul.f32 %v4907, %v4507
    %v4973 = vmul.f32 %v4909, %v4508
    %v4974 = vmul.f32 %v4847, %v4910
    %v4975 = vmul.f32 %v4849, %v4911
    %v4976 = vmul.f32 %v4851, %v4912
    %v4977 = vmul.f32 %v4853, %v4913
    %v4978 = vmul.f32 %v4855, %v4914
    %v4979 = vmul.f32 %v4857, %v4915
    %v4980 = vmul.f32 %v4859, %v4916
    %v4981 = vmul.f32 %v4861, %v4917
    %v4982 = vadd.f32 %v4966, %v4974
    %v4983 = vadd.f32 %v4967, %v4975
    %v4984 = vadd.f32 %v4968, %v4976
    %v4985 = vadd.f32 %v4969, %v4977
    %v4986 = vadd.f32 %v4970, %v4978
    %v4987 = vadd.f32 %v4971, %v4979
    %v4988 = vadd.f32 %v4972, %v4980
    %v4989 = vadd.f32 %v4973, %v4981
    %v4990 = vtanh.pop %v4982
    %v4991 = vtanh.pop %v4983
    %v4992 = vtanh.pop %v4984
    %v4993 = vtanh.pop %v4985
    %v4994 = vtanh.pop %v4986
    %v4995 = vtanh.pop %v4987
    %v4996 = vtanh.pop %v4988
    %v4997 = vtanh.pop %v4989
    %v4998 = vmul.f32 %v4951, %v4990
    %v4999 = vmul.f32 %v4953, %v4991
    %v5000 = vmul.f32 %v4955, %v4992
    %v5001 = vmul.f32 %v4957, %v4993
    %v5002 = vmul.f32 %v4959, %v4994
    %v5003 = vmul.f32 %v4961, %v4995
    %v5004 = vmul.f32 %v4963, %v4996
    %v5005 = vmul.f32 %v4965, %v4997
    %v5006 = vld [vmem:[%s1907] sm:$0xff]
    %v5007 = vld [vmem:[%s1907 + $0x8] sm:$0xff]
    %v5008 = vld [vmem:[%s1907 + $0x10] sm:$0xff]
    %v5009 = vld [vmem:[%s1907 + $0x18] sm:$0xff]
    %v5010 = vld [vmem:[%s1907 + $0x20] sm:$0xff]
    %v5011 = vld [vmem:[%s1907 + $0x28] sm:$0xff]
    %v5012 = vld [vmem:[%s1907 + $0x30] sm:$0xff]
    %v5013 = vld [vmem:[%s1907 + $0x38] sm:$0xff]
    %v5014 = vld [vmem:[%s1907 + $0x40] sm:$0xff]
    %v5015 = vld [vmem:[%s1907 + $0x48] sm:$0xff]
    %v5016 = vld [vmem:[%s1907 + $0x50] sm:$0xff]
    %v5017 = vld [vmem:[%s1907 + $0x58] sm:$0xff]
    %v5018 = vld [vmem:[%s1907 + $0x60] sm:$0xff]
    %v5019 = vld [vmem:[%s1907 + $0x68] sm:$0xff]
    %v5020 = vld [vmem:[%s1907 + $0x70] sm:$0xff]
    %v5021 = vld [vmem:[%s1907 + $0x78] sm:$0xff]
    %v5022 = vld [vmem:[%s1907 + $0x80] sm:$0xff]
    %v5023 = vld [vmem:[%s1907 + $0x88] sm:$0xff]
    %v5024 = vld [vmem:[%s1907 + $0x90] sm:$0xff]
    %v5025 = vld [vmem:[%s1907 + $0x98] sm:$0xff]
    %v5026 = vld [vmem:[%s1907 + $0xa0] sm:$0xff]
    %v5027 = vld [vmem:[%s1907 + $0xa8] sm:$0xff]
    %v5028 = vld [vmem:[%s1907 + $0xb0] sm:$0xff]
    %v5029 = vld [vmem:[%s1907 + $0xb8] sm:$0xff]
    %v5030 = vld [vmem:[%s1907 + $0xc0] sm:$0xff]
    %v5031 = vld [vmem:[%s1907 + $0xc8] sm:$0xff]
    %v5032 = vld [vmem:[%s1907 + $0xd0] sm:$0xff]
    %v5033 = vld [vmem:[%s1907 + $0xd8] sm:$0xff]
    %v5034 = vld [vmem:[%s1907 + $0xe0] sm:$0xff]
    %v5035 = vld [vmem:[%s1907 + $0xe8] sm:$0xff]
    %v5036 = vld [vmem:[%s1907 + $0xf0] sm:$0xff]
    %v5037 = vld [vmem:[%s1907 + $0xf8] sm:$0xff]
    %5038 = vmatprep.subr.mxu0 0.0
    %5039 = vmatpush1.msra.mxu0 0.0
    %5040 = vmatprep.subr.mxu0 0.0
    %5041 = vmatpush1.msra.mxu0 0.0
    %5042 = vmatprep.subr.mxu0 0.0
    %5043 = vmatpush1.msra.mxu0 0.0
    %5044 = vmatprep.subr.mxu0 0.0
    %5045 = vmatpush1.msra.mxu0 0.0
    %5046 = vmatprep.subr.mxu0 0.0
    %5047 = vmatpush1.msra.mxu0 0.0
    %5048 = vmatprep.subr.mxu0 0.0
    %5049 = vmatpush1.msra.mxu0 0.0
    %5050 = vmatprep.subr.mxu0 0.0
    %5051 = vmatpush1.msra.mxu0 0.0
    %5052 = vmatprep.subr.mxu0 0.0
    %5053 = vmatpush1.msra.mxu0 0.0
    %5054 = vmatprep.subr.mxu0 0.0
    %5055 = vmatpush1.msra.mxu0 %v5005
    %5056 = vmatprep.subr.mxu0 0.0
    %5057 = vmatpush1.msra.mxu0 %v5004
    %5058 = vmatprep.subr.mxu0 0.0
    %5059 = vmatpush1.msra.mxu0 %v5003
    %5060 = vmatprep.subr.mxu0 0.0
    %5061 = vmatpush1.msra.mxu0 %v5002
    %5062 = vmatprep.subr.mxu0 0.0
    %5063 = vmatpush1.msra.mxu0 %v5001
    %5064 = vmatprep.subr.mxu0 0.0
    %5065 = vmatpush1.msra.mxu0 %v5000
    %5066 = vmatprep.subr.mxu0 0.0
    %5067 = vmatpush1.msra.mxu0 %v4999
    %5068 = vmatprep.subr.mxu0 0.0
    %5069 = vmatpush1.msra.mxu0 %v4998
    %5070 = vmatprep.subr.mxu0 0.0
    %5071 = vmatpush2.msra.mxu0 0.0
    %5072 = vmatprep.subr.mxu0 0.0
    %5073 = vmatpush2.msra.mxu0 0.0
    %5074 = vmatprep.subr.mxu0 0.0
    %5075 = vmatpush2.msra.mxu0 0.0
    %5076 = vmatprep.subr.mxu0 0.0
    %5077 = vmatpush2.msra.mxu0 0.0
    %5078 = vmatprep.subr.mxu0 0.0
    %5079 = vmatpush2.msra.mxu0 0.0
    %5080 = vmatprep.subr.mxu0 0.0
    %5081 = vmatpush2.msra.mxu0 0.0
    %5082 = vmatprep.subr.mxu0 0.0
    %5083 = vmatpush2.msra.mxu0 0.0
    %5084 = vmatprep.subr.mxu0 0.0
    %5085 = vmatpush2.msra.mxu0 0.0
    %5086 = vmatprep.subr.mxu0 0.0
    %5087 = vmatpush2.msra.mxu0 0.0
    %5088 = vmatprep.subr.mxu0 0.0
    %5089 = vmatpush2.msra.mxu0 0.0
    %5090 = vmatprep.subr.mxu0 0.0
    %5091 = vmatpush2.msra.mxu0 0.0
    %5092 = vmatprep.subr.mxu0 0.0
    %5093 = vmatpush2.msra.mxu0 0.0
    %5094 = vmatprep.subr.mxu0 0.0
    %5095 = vmatpush2.msra.mxu0 0.0
    %5096 = vmatprep.subr.mxu0 0.0
    %5097 = vmatpush2.msra.mxu0 0.0
    %5098 = vmatprep.subr.mxu0 0.0
    %5099 = vmatpush2.msra.mxu0 0.0
    %5100 = vmatprep.subr.mxu0 0.0
    %5101 = vmatpush2.msra.mxu0 0.0
    %5102 = vmatprep.mubr.f32.mxu0 0.0
    %5103 = vmatmul.mubr.f32.gmra.mxu0 %v2538
    %v5104 = vpop.f32.mrf.mxu0
    %v5105 = vadd.f32 0.0, %v5104
    %v5106 = vpop.f32.mrf.mxu0
    %5107 = vmatprep.mubr.f32.mxu0 0.0
    %5108 = vmatmul.mubr.f32.gmra.mxu0 %v2541
    %v5109 = vpop.f32.mrf.mxu0
    %v5110 = vadd.f32 0.0, %v5109
    %v5111 = vpop.f32.mrf.mxu0
    %5112 = vmatprep.mubr.f32.mxu0 0.0
    %5113 = vmatmul.mubr.f32.gmra.mxu0 %v2544
    %v5114 = vpop.f32.mrf.mxu0
    %v5115 = vadd.f32 0.0, %v5114
    %v5116 = vpop.f32.mrf.mxu0
    %5117 = vmatprep.mubr.f32.mxu0 0.0
    %5118 = vmatmul.mubr.f32.gmra.mxu0 %v2547
    %v5119 = vpop.f32.mrf.mxu0
    %v5120 = vadd.f32 0.0, %v5119
    %v5121 = vpop.f32.mrf.mxu0
    %5122 = vmatprep.mubr.f32.mxu0 0.0
    %5123 = vmatmul.mubr.f32.gmra.mxu0 %v2550
    %v5124 = vpop.f32.mrf.mxu0
    %v5125 = vadd.f32 0.0, %v5124
    %v5126 = vpop.f32.mrf.mxu0
    %5127 = vmatprep.mubr.f32.mxu0 0.0
    %5128 = vmatmul.mubr.f32.gmra.mxu0 %v2553
    %v5129 = vpop.f32.mrf.mxu0
    %v5130 = vadd.f32 0.0, %v5129
    %v5131 = vpop.f32.mrf.mxu0
    %5132 = vmatprep.mubr.f32.mxu0 0.0
    %5133 = vmatmul.mubr.f32.gmra.mxu0 %v2556
    %v5134 = vpop.f32.mrf.mxu0
    %v5135 = vadd.f32 0.0, %v5134
    %v5136 = vpop.f32.mrf.mxu0
    %5137 = vmatprep.mubr.f32.mxu0 0.0
    %5138 = vmatmul.mubr.f32.gmra.mxu0 %v2559
    %v5139 = vpop.f32.mrf.mxu0
    %v5140 = vadd.f32 0.0, %v5139
    %v5141 = vpop.f32.mrf.mxu0
    %5142 = vmatprep.mubr.f32.mxu0 0.0
    %5143 = vmatmul.mubr.f32.gmra.mxu0 %v2562
    %v5144 = vpop.f32.mrf.mxu0
    %v5145 = vadd.f32 0.0, %v5144
    %v5146 = vpop.f32.mrf.mxu0
    %5147 = vmatprep.mubr.f32.mxu0 0.0
    %5148 = vmatmul.mubr.f32.gmra.mxu0 %v2565
    %v5149 = vpop.f32.mrf.mxu0
    %v5150 = vadd.f32 0.0, %v5149
    %v5151 = vpop.f32.mrf.mxu0
    %5152 = vmatprep.mubr.f32.mxu0 0.0
    %5153 = vmatmul.mubr.f32.gmra.mxu0 %v2568
    %v5154 = vpop.f32.mrf.mxu0
    %v5155 = vadd.f32 0.0, %v5154
    %v5156 = vpop.f32.mrf.mxu0
    %5157 = vmatprep.mubr.f32.mxu0 0.0
    %5158 = vmatmul.mubr.f32.gmra.mxu0 %v2571
    %v5159 = vpop.f32.mrf.mxu0
    %v5160 = vadd.f32 0.0, %v5159
    %v5161 = vpop.f32.mrf.mxu0
    %5162 = vmatprep.mubr.f32.mxu0 0.0
    %5163 = vmatmul.mubr.f32.gmra.mxu0 %v2574
    %v5164 = vpop.f32.mrf.mxu0
    %v5165 = vadd.f32 0.0, %v5164
    %v5166 = vpop.f32.mrf.mxu0
    %5167 = vmatprep.mubr.f32.mxu0 0.0
    %5168 = vmatmul.mubr.f32.gmra.mxu0 %v2577
    %v5169 = vpop.f32.mrf.mxu0
    %v5170 = vadd.f32 0.0, %v5169
    %v5171 = vpop.f32.mrf.mxu0
    %5172 = vmatprep.mubr.f32.mxu0 0.0
    %5173 = vmatmul.mubr.f32.gmra.mxu0 %v2580
    %v5174 = vpop.f32.mrf.mxu0
    %v5175 = vadd.f32 0.0, %v5174
    %v5176 = vpop.f32.mrf.mxu0
    %5177 = vmatprep.mubr.f32.mxu0 0.0
    %5178 = vmatmul.mubr.f32.gmra.mxu0 %v2583
    %v5179 = vpop.f32.mrf.mxu0
    %v5180 = vadd.f32 0.0, %v5179
    %v5181 = vpop.f32.mrf.mxu0
    %5182 = vmatprep.mubr.f32.mxu0 0.0
    %5183 = vmatmul.mubr.f32.gmra.mxu0 %v2586
    %v5184 = vpop.f32.mrf.mxu0
    %v5185 = vadd.f32 0.0, %v5184
    %v5186 = vpop.f32.mrf.mxu0
    %5187 = vmatprep.mubr.f32.mxu0 0.0
    %5188 = vmatmul.mubr.f32.gmra.mxu0 %v2589
    %v5189 = vpop.f32.mrf.mxu0
    %v5190 = vadd.f32 0.0, %v5189
    %v5191 = vpop.f32.mrf.mxu0
    %5192 = vmatprep.mubr.f32.mxu0 0.0
    %5193 = vmatmul.mubr.f32.gmra.mxu0 %v2592
    %v5194 = vpop.f32.mrf.mxu0
    %v5195 = vadd.f32 0.0, %v5194
    %v5196 = vpop.f32.mrf.mxu0
    %5197 = vmatprep.mubr.f32.mxu0 0.0
    %5198 = vmatmul.mubr.f32.gmra.mxu0 %v2595
    %v5199 = vpop.f32.mrf.mxu0
    %v5200 = vadd.f32 0.0, %v5199
    %v5201 = vpop.f32.mrf.mxu0
    %5202 = vmatprep.mubr.f32.mxu0 0.0
    %5203 = vmatmul.mubr.f32.gmra.mxu0 %v2598
    %v5204 = vpop.f32.mrf.mxu0
    %v5205 = vadd.f32 0.0, %v5204
    %v5206 = vpop.f32.mrf.mxu0
    %5207 = vmatprep.mubr.f32.mxu0 0.0
    %5208 = vmatmul.mubr.f32.gmra.mxu0 %v2601
    %v5209 = vpop.f32.mrf.mxu0
    %v5210 = vadd.f32 0.0, %v5209
    %v5211 = vpop.f32.mrf.mxu0
    %5212 = vmatprep.mubr.f32.mxu0 0.0
    %5213 = vmatmul.mubr.f32.gmra.mxu0 %v2604
    %v5214 = vpop.f32.mrf.mxu0
    %v5215 = vadd.f32 0.0, %v5214
    %v5216 = vpop.f32.mrf.mxu0
    %5217 = vmatprep.mubr.f32.mxu0 0.0
    %5218 = vmatmul.mubr.f32.gmra.mxu0 %v2607
    %v5219 = vpop.f32.mrf.mxu0
    %v5220 = vadd.f32 0.0, %v5219
    %v5221 = vpop.f32.mrf.mxu0
    %5222 = vmatprep.mubr.f32.mxu0 0.0
    %5223 = vmatmul.mubr.f32.gmra.mxu0 %v2610
    %v5224 = vpop.f32.mrf.mxu0
    %v5225 = vadd.f32 0.0, %v5224
    %v5226 = vpop.f32.mrf.mxu0
    %5227 = vmatprep.mubr.f32.mxu0 0.0
    %5228 = vmatmul.mubr.f32.gmra.mxu0 %v2613
    %v5229 = vpop.f32.mrf.mxu0
    %v5230 = vadd.f32 0.0, %v5229
    %v5231 = vpop.f32.mrf.mxu0
    %5232 = vmatprep.mubr.f32.mxu0 0.0
    %5233 = vmatmul.mubr.f32.gmra.mxu0 %v2616
    %v5234 = vpop.f32.mrf.mxu0
    %v5235 = vadd.f32 0.0, %v5234
    %v5236 = vpop.f32.mrf.mxu0
    %5237 = vmatprep.mubr.f32.mxu0 0.0
    %5238 = vmatmul.mubr.f32.gmra.mxu0 %v2619
    %v5239 = vpop.f32.mrf.mxu0
    %v5240 = vadd.f32 0.0, %v5239
    %v5241 = vpop.f32.mrf.mxu0
    %5242 = vmatprep.mubr.f32.mxu0 0.0
    %5243 = vmatmul.mubr.f32.gmra.mxu0 %v2622
    %v5244 = vpop.f32.mrf.mxu0
    %v5245 = vadd.f32 0.0, %v5244
    %v5246 = vpop.f32.mrf.mxu0
    %5247 = vmatprep.mubr.f32.mxu0 0.0
    %5248 = vmatmul.mubr.f32.gmra.mxu0 %v2625
    %v5249 = vpop.f32.mrf.mxu0
    %v5250 = vadd.f32 0.0, %v5249
    %v5251 = vpop.f32.mrf.mxu0
    %5252 = vmatprep.mubr.f32.mxu0 0.0
    %5253 = vmatmul.mubr.f32.gmra.mxu0 %v2628
    %v5254 = vpop.f32.mrf.mxu0
    %v5255 = vadd.f32 0.0, %v5254
    %v5256 = vpop.f32.mrf.mxu0
    %5257 = vmatprep.mubr.f32.mxu0 0.0
    %5258 = vmatmul.mubr.f32.gmra.mxu0 %v2631
    %v5259 = vpop.f32.mrf.mxu0
    %v5260 = vadd.f32 0.0, %v5259
    %v5261 = vpop.f32.mrf.mxu0
    %5262 = vdwg.mxu0
    %v5263 = vadd.f32 %v5006, %v5105
    %v5264 = vadd.f32 %v5007, %v5110
    %v5265 = vadd.f32 %v5008, %v5115
    %v5266 = vadd.f32 %v5009, %v5120
    %v5267 = vadd.f32 %v5010, %v5125
    %v5268 = vadd.f32 %v5011, %v5130
    %v5269 = vadd.f32 %v5012, %v5135
    %v5270 = vadd.f32 %v5013, %v5140
    %v5271 = vadd.f32 %v5014, %v5145
    %v5272 = vadd.f32 %v5015, %v5150
    %v5273 = vadd.f32 %v5016, %v5155
    %v5274 = vadd.f32 %v5017, %v5160
    %v5275 = vadd.f32 %v5018, %v5165
    %v5276 = vadd.f32 %v5019, %v5170
    %v5277 = vadd.f32 %v5020, %v5175
    %v5278 = vadd.f32 %v5021, %v5180
    %v5279 = vadd.f32 %v5022, %v5185
    %v5280 = vadd.f32 %v5023, %v5190
    %v5281 = vadd.f32 %v5024, %v5195
    %v5282 = vadd.f32 %v5025, %v5200
    %v5283 = vadd.f32 %v5026, %v5205
    %v5284 = vadd.f32 %v5027, %v5210
    %v5285 = vadd.f32 %v5028, %v5215
    %v5286 = vadd.f32 %v5029, %v5220
    %v5287 = vadd.f32 %v5030, %v5225
    %v5288 = vadd.f32 %v5031, %v5230
    %v5289 = vadd.f32 %v5032, %v5235
    %v5290 = vadd.f32 %v5033, %v5240
    %v5291 = vadd.f32 %v5034, %v5245
    %v5292 = vadd.f32 %v5035, %v5250
    %v5293 = vadd.f32 %v5036, %v5255
    %v5294 = vadd.f32 %v5037, %v5260
    %v5295 = vxor.u32 %v5263, 2147483648
    %v5296 = vxor.u32 %v5264, 2147483648
    %v5297 = vxor.u32 %v5265, 2147483648
    %v5298 = vxor.u32 %v5266, 2147483648
    %v5299 = vxor.u32 %v5267, 2147483648
    %v5300 = vxor.u32 %v5268, 2147483648
    %v5301 = vxor.u32 %v5269, 2147483648
    %v5302 = vxor.u32 %v5270, 2147483648
    %v5303 = vmul.f32 %v5295, 1.442695
    %v5304 = vpow.pop %v5303
    %v5305 = vmul.f32 %v5296, 1.442695
    %v5306 = vpow.pop %v5305
    %v5307 = vmul.f32 %v5297, 1.442695
    %v5308 = vpow.pop %v5307
    %v5309 = vmul.f32 %v5298, 1.442695
    %v5310 = vpow.pop %v5309
    %v5311 = vmul.f32 %v5299, 1.442695
    %v5312 = vpow.pop %v5311
    %v5313 = vmul.f32 %v5300, 1.442695
    %v5314 = vpow.pop %v5313
    %v5315 = vmul.f32 %v5301, 1.442695
    %v5316 = vpow.pop %v5315
    %v5317 = vmul.f32 %v5302, 1.442695
    %v5318 = vpow.pop %v5317
    %v5319 = vadd.f32 %v5304, 1.0
    %v5320 = vadd.f32 %v5306, 1.0
    %v5321 = vadd.f32 %v5308, 1.0
    %v5322 = vadd.f32 %v5310, 1.0
    %v5323 = vadd.f32 %v5312, 1.0
    %v5324 = vadd.f32 %v5314, 1.0
    %v5325 = vadd.f32 %v5316, 1.0
    %v5326 = vadd.f32 %v5318, 1.0
    %v5327 = vrcp.pop %v5319
    %v5328 = vmul.f32 1.0, %v5327
    %v5329 = vrcp.pop %v5320
    %v5330 = vmul.f32 1.0, %v5329
    %v5331 = vrcp.pop %v5321
    %v5332 = vmul.f32 1.0, %v5331
    %v5333 = vrcp.pop %v5322
    %v5334 = vmul.f32 1.0, %v5333
    %v5335 = vrcp.pop %v5323
    %v5336 = vmul.f32 1.0, %v5335
    %v5337 = vrcp.pop %v5324
    %v5338 = vmul.f32 1.0, %v5337
    %v5339 = vrcp.pop %v5325
    %v5340 = vmul.f32 1.0, %v5339
    %v5341 = vrcp.pop %v5326
    %v5342 = vmul.f32 1.0, %v5341
    %v5343 = vxor.u32 %v5271, 2147483648
    %v5344 = vxor.u32 %v5272, 2147483648
    %v5345 = vxor.u32 %v5273, 2147483648
    %v5346 = vxor.u32 %v5274, 2147483648
    %v5347 = vxor.u32 %v5275, 2147483648
    %v5348 = vxor.u32 %v5276, 2147483648
    %v5349 = vxor.u32 %v5277, 2147483648
    %v5350 = vxor.u32 %v5278, 2147483648
    %v5351 = vmul.f32 %v5343, 1.442695
    %v5352 = vpow.pop %v5351
    %v5353 = vmul.f32 %v5344, 1.442695
    %v5354 = vpow.pop %v5353
    %v5355 = vmul.f32 %v5345, 1.442695
    %v5356 = vpow.pop %v5355
    %v5357 = vmul.f32 %v5346, 1.442695
    %v5358 = vpow.pop %v5357
    %v5359 = vmul.f32 %v5347, 1.442695
    %v5360 = vpow.pop %v5359
    %v5361 = vmul.f32 %v5348, 1.442695
    %v5362 = vpow.pop %v5361
    %v5363 = vmul.f32 %v5349, 1.442695
    %v5364 = vpow.pop %v5363
    %v5365 = vmul.f32 %v5350, 1.442695
    %v5366 = vpow.pop %v5365
    %v5367 = vadd.f32 %v5352, 1.0
    %v5368 = vadd.f32 %v5354, 1.0
    %v5369 = vadd.f32 %v5356, 1.0
    %v5370 = vadd.f32 %v5358, 1.0
    %v5371 = vadd.f32 %v5360, 1.0
    %v5372 = vadd.f32 %v5362, 1.0
    %v5373 = vadd.f32 %v5364, 1.0
    %v5374 = vadd.f32 %v5366, 1.0
    %v5375 = vrcp.pop %v5367
    %v5376 = vmul.f32 1.0, %v5375
    %v5377 = vrcp.pop %v5368
    %v5378 = vmul.f32 1.0, %v5377
    %v5379 = vrcp.pop %v5369
    %v5380 = vmul.f32 1.0, %v5379
    %v5381 = vrcp.pop %v5370
    %v5382 = vmul.f32 1.0, %v5381
    %v5383 = vrcp.pop %v5371
    %v5384 = vmul.f32 1.0, %v5383
    %v5385 = vrcp.pop %v5372
    %v5386 = vmul.f32 1.0, %v5385
    %v5387 = vrcp.pop %v5373
    %v5388 = vmul.f32 1.0, %v5387
    %v5389 = vrcp.pop %v5374
    %v5390 = vmul.f32 1.0, %v5389
    %v5391 = vtanh.pop %v5279
    %v5392 = vtanh.pop %v5280
    %v5393 = vtanh.pop %v5281
    %v5394 = vtanh.pop %v5282
    %v5395 = vtanh.pop %v5283
    %v5396 = vtanh.pop %v5284
    %v5397 = vtanh.pop %v5285
    %v5398 = vtanh.pop %v5286
    %v5399 = vxor.u32 %v5287, 2147483648
    %v5400 = vxor.u32 %v5288, 2147483648
    %v5401 = vxor.u32 %v5289, 2147483648
    %v5402 = vxor.u32 %v5290, 2147483648
    %v5403 = vxor.u32 %v5291, 2147483648
    %v5404 = vxor.u32 %v5292, 2147483648
    %v5405 = vxor.u32 %v5293, 2147483648
    %v5406 = vxor.u32 %v5294, 2147483648
    %v5407 = vmul.f32 %v5399, 1.442695
    %v5408 = vpow.pop %v5407
    %v5409 = vmul.f32 %v5400, 1.442695
    %v5410 = vpow.pop %v5409
    %v5411 = vmul.f32 %v5401, 1.442695
    %v5412 = vpow.pop %v5411
    %v5413 = vmul.f32 %v5402, 1.442695
    %v5414 = vpow.pop %v5413
    %v5415 = vmul.f32 %v5403, 1.442695
    %v5416 = vpow.pop %v5415
    %v5417 = vmul.f32 %v5404, 1.442695
    %v5418 = vpow.pop %v5417
    %v5419 = vmul.f32 %v5405, 1.442695
    %v5420 = vpow.pop %v5419
    %v5421 = vmul.f32 %v5406, 1.442695
    %v5422 = vpow.pop %v5421
    %v5423 = vadd.f32 %v5408, 1.0
    %v5424 = vadd.f32 %v5410, 1.0
    %v5425 = vadd.f32 %v5412, 1.0
    %v5426 = vadd.f32 %v5414, 1.0
    %v5427 = vadd.f32 %v5416, 1.0
    %v5428 = vadd.f32 %v5418, 1.0
    %v5429 = vadd.f32 %v5420, 1.0
    %v5430 = vadd.f32 %v5422, 1.0
    %v5431 = vrcp.pop %v5423
    %v5432 = vmul.f32 1.0, %v5431
    %v5433 = vrcp.pop %v5424
    %v5434 = vmul.f32 1.0, %v5433
    %v5435 = vrcp.pop %v5425
    %v5436 = vmul.f32 1.0, %v5435
    %v5437 = vrcp.pop %v5426
    %v5438 = vmul.f32 1.0, %v5437
    %v5439 = vrcp.pop %v5427
    %v5440 = vmul.f32 1.0, %v5439
    %v5441 = vrcp.pop %v5428
    %v5442 = vmul.f32 1.0, %v5441
    %v5443 = vrcp.pop %v5429
    %v5444 = vmul.f32 1.0, %v5443
    %v5445 = vrcp.pop %v5430
    %v5446 = vmul.f32 1.0, %v5445
    %v5447 = vmul.f32 %v5376, %v4982
    %v5448 = vmul.f32 %v5378, %v4983
    %v5449 = vmul.f32 %v5380, %v4984
    %v5450 = vmul.f32 %v5382, %v4985
    %v5451 = vmul.f32 %v5384, %v4986
    %v5452 = vmul.f32 %v5386, %v4987
    %v5453 = vmul.f32 %v5388, %v4988
    %v5454 = vmul.f32 %v5390, %v4989
    %v5455 = vmul.f32 %v5328, %v5391
    %v5456 = vmul.f32 %v5330, %v5392
    %v5457 = vmul.f32 %v5332, %v5393
    %v5458 = vmul.f32 %v5334, %v5394
    %v5459 = vmul.f32 %v5336, %v5395
    %v5460 = vmul.f32 %v5338, %v5396
    %v5461 = vmul.f32 %v5340, %v5397
    %v5462 = vmul.f32 %v5342, %v5398
    %v5463 = vadd.f32 %v5447, %v5455
    %v5464 = vadd.f32 %v5448, %v5456
    %v5465 = vadd.f32 %v5449, %v5457
    %v5466 = vadd.f32 %v5450, %v5458
    %v5467 = vadd.f32 %v5451, %v5459
    %v5468 = vadd.f32 %v5452, %v5460
    %v5469 = vadd.f32 %v5453, %v5461
    %v5470 = vadd.f32 %v5454, %v5462
    %v5471 = vtanh.pop %v5463
    %v5472 = vtanh.pop %v5464
    %v5473 = vtanh.pop %v5465
    %v5474 = vtanh.pop %v5466
    %v5475 = vtanh.pop %v5467
    %v5476 = vtanh.pop %v5468
    %v5477 = vtanh.pop %v5469
    %v5478 = vtanh.pop %v5470
    %v5479 = vmul.f32 %v5432, %v5471
    %v5480 = vmul.f32 %v5434, %v5472
    %v5481 = vmul.f32 %v5436, %v5473
    %v5482 = vmul.f32 %v5438, %v5474
    %v5483 = vmul.f32 %v5440, %v5475
    %v5484 = vmul.f32 %v5442, %v5476
    %v5485 = vmul.f32 %v5444, %v5477
    %v5486 = vmul.f32 %v5446, %v5478
    %v5487 = vld [vmem:[%s2173] sm:$0xff]
    %v5488 = vld [vmem:[%s2173 + $0x8] sm:$0xff]
    %v5489 = vld [vmem:[%s2173 + $0x10] sm:$0xff]
    %v5490 = vld [vmem:[%s2173 + $0x18] sm:$0xff]
    %v5491 = vld [vmem:[%s2173 + $0x20] sm:$0xff]
    %v5492 = vld [vmem:[%s2173 + $0x28] sm:$0xff]
    %v5493 = vld [vmem:[%s2173 + $0x30] sm:$0xff]
    %v5494 = vld [vmem:[%s2173 + $0x38] sm:$0xff]
    %v5495 = vld [vmem:[%s2173 + $0x40] sm:$0xff]
    %v5496 = vld [vmem:[%s2173 + $0x48] sm:$0xff]
    %v5497 = vld [vmem:[%s2173 + $0x50] sm:$0xff]
    %v5498 = vld [vmem:[%s2173 + $0x58] sm:$0xff]
    %v5499 = vld [vmem:[%s2173 + $0x60] sm:$0xff]
    %v5500 = vld [vmem:[%s2173 + $0x68] sm:$0xff]
    %v5501 = vld [vmem:[%s2173 + $0x70] sm:$0xff]
    %v5502 = vld [vmem:[%s2173 + $0x78] sm:$0xff]
    %v5503 = vld [vmem:[%s2173 + $0x80] sm:$0xff]
    %v5504 = vld [vmem:[%s2173 + $0x88] sm:$0xff]
    %v5505 = vld [vmem:[%s2173 + $0x90] sm:$0xff]
    %v5506 = vld [vmem:[%s2173 + $0x98] sm:$0xff]
    %v5507 = vld [vmem:[%s2173 + $0xa0] sm:$0xff]
    %v5508 = vld [vmem:[%s2173 + $0xa8] sm:$0xff]
    %v5509 = vld [vmem:[%s2173 + $0xb0] sm:$0xff]
    %v5510 = vld [vmem:[%s2173 + $0xb8] sm:$0xff]
    %v5511 = vld [vmem:[%s2173 + $0xc0] sm:$0xff]
    %v5512 = vld [vmem:[%s2173 + $0xc8] sm:$0xff]
    %v5513 = vld [vmem:[%s2173 + $0xd0] sm:$0xff]
    %v5514 = vld [vmem:[%s2173 + $0xd8] sm:$0xff]
    %v5515 = vld [vmem:[%s2173 + $0xe0] sm:$0xff]
    %v5516 = vld [vmem:[%s2173 + $0xe8] sm:$0xff]
    %v5517 = vld [vmem:[%s2173 + $0xf0] sm:$0xff]
    %v5518 = vld [vmem:[%s2173 + $0xf8] sm:$0xff]
    %5519 = vmatprep.subr.mxu0 0.0
    %5520 = vmatpush1.msra.mxu0 0.0
    %5521 = vmatprep.subr.mxu0 0.0
    %5522 = vmatpush1.msra.mxu0 0.0
    %5523 = vmatprep.subr.mxu0 0.0
    %5524 = vmatpush1.msra.mxu0 0.0
    %5525 = vmatprep.subr.mxu0 0.0
    %5526 = vmatpush1.msra.mxu0 0.0
    %5527 = vmatprep.subr.mxu0 0.0
    %5528 = vmatpush1.msra.mxu0 0.0
    %5529 = vmatprep.subr.mxu0 0.0
    %5530 = vmatpush1.msra.mxu0 0.0
    %5531 = vmatprep.subr.mxu0 0.0
    %5532 = vmatpush1.msra.mxu0 0.0
    %5533 = vmatprep.subr.mxu0 0.0
    %5534 = vmatpush1.msra.mxu0 0.0
    %5535 = vmatprep.subr.mxu0 0.0
    %5536 = vmatpush1.msra.mxu0 %v5486
    %5537 = vmatprep.subr.mxu0 0.0
    %5538 = vmatpush1.msra.mxu0 %v5485
    %5539 = vmatprep.subr.mxu0 0.0
    %5540 = vmatpush1.msra.mxu0 %v5484
    %5541 = vmatprep.subr.mxu0 0.0
    %5542 = vmatpush1.msra.mxu0 %v5483
    %5543 = vmatprep.subr.mxu0 0.0
    %5544 = vmatpush1.msra.mxu0 %v5482
    %5545 = vmatprep.subr.mxu0 0.0
    %5546 = vmatpush1.msra.mxu0 %v5481
    %5547 = vmatprep.subr.mxu0 0.0
    %5548 = vmatpush1.msra.mxu0 %v5480
    %5549 = vmatprep.subr.mxu0 0.0
    %5550 = vmatpush1.msra.mxu0 %v5479
    %5551 = vmatprep.subr.mxu0 0.0
    %5552 = vmatpush2.msra.mxu0 0.0
    %5553 = vmatprep.subr.mxu0 0.0
    %5554 = vmatpush2.msra.mxu0 0.0
    %5555 = vmatprep.subr.mxu0 0.0
    %5556 = vmatpush2.msra.mxu0 0.0
    %5557 = vmatprep.subr.mxu0 0.0
    %5558 = vmatpush2.msra.mxu0 0.0
    %5559 = vmatprep.subr.mxu0 0.0
    %5560 = vmatpush2.msra.mxu0 0.0
    %5561 = vmatprep.subr.mxu0 0.0
    %5562 = vmatpush2.msra.mxu0 0.0
    %5563 = vmatprep.subr.mxu0 0.0
    %5564 = vmatpush2.msra.mxu0 0.0
    %5565 = vmatprep.subr.mxu0 0.0
    %5566 = vmatpush2.msra.mxu0 0.0
    %5567 = vmatprep.subr.mxu0 0.0
    %5568 = vmatpush2.msra.mxu0 0.0
    %5569 = vmatprep.subr.mxu0 0.0
    %5570 = vmatpush2.msra.mxu0 0.0
    %5571 = vmatprep.subr.mxu0 0.0
    %5572 = vmatpush2.msra.mxu0 0.0
    %5573 = vmatprep.subr.mxu0 0.0
    %5574 = vmatpush2.msra.mxu0 0.0
    %5575 = vmatprep.subr.mxu0 0.0
    %5576 = vmatpush2.msra.mxu0 0.0
    %5577 = vmatprep.subr.mxu0 0.0
    %5578 = vmatpush2.msra.mxu0 0.0
    %5579 = vmatprep.subr.mxu0 0.0
    %5580 = vmatpush2.msra.mxu0 0.0
    %5581 = vmatprep.subr.mxu0 0.0
    %5582 = vmatpush2.msra.mxu0 0.0
    %5583 = vmatprep.mubr.f32.mxu0 0.0
    %5584 = vmatmul.mubr.f32.gmra.mxu0 %v2538
    %v5585 = vpop.f32.mrf.mxu0
    %v5586 = vadd.f32 0.0, %v5585
    %v5587 = vpop.f32.mrf.mxu0
    %5588 = vmatprep.mubr.f32.mxu0 0.0
    %5589 = vmatmul.mubr.f32.gmra.mxu0 %v2541
    %v5590 = vpop.f32.mrf.mxu0
    %v5591 = vadd.f32 0.0, %v5590
    %v5592 = vpop.f32.mrf.mxu0
    %5593 = vmatprep.mubr.f32.mxu0 0.0
    %5594 = vmatmul.mubr.f32.gmra.mxu0 %v2544
    %v5595 = vpop.f32.mrf.mxu0
    %v5596 = vadd.f32 0.0, %v5595
    %v5597 = vpop.f32.mrf.mxu0
    %5598 = vmatprep.mubr.f32.mxu0 0.0
    %5599 = vmatmul.mubr.f32.gmra.mxu0 %v2547
    %v5600 = vpop.f32.mrf.mxu0
    %v5601 = vadd.f32 0.0, %v5600
    %v5602 = vpop.f32.mrf.mxu0
    %5603 = vmatprep.mubr.f32.mxu0 0.0
    %5604 = vmatmul.mubr.f32.gmra.mxu0 %v2550
    %v5605 = vpop.f32.mrf.mxu0
    %v5606 = vadd.f32 0.0, %v5605
    %v5607 = vpop.f32.mrf.mxu0
    %5608 = vmatprep.mubr.f32.mxu0 0.0
    %5609 = vmatmul.mubr.f32.gmra.mxu0 %v2553
    %v5610 = vpop.f32.mrf.mxu0
    %v5611 = vadd.f32 0.0, %v5610
    %v5612 = vpop.f32.mrf.mxu0
    %5613 = vmatprep.mubr.f32.mxu0 0.0
    %5614 = vmatmul.mubr.f32.gmra.mxu0 %v2556
    %v5615 = vpop.f32.mrf.mxu0
    %v5616 = vadd.f32 0.0, %v5615
    %v5617 = vpop.f32.mrf.mxu0
    %5618 = vmatprep.mubr.f32.mxu0 0.0
    %5619 = vmatmul.mubr.f32.gmra.mxu0 %v2559
    %v5620 = vpop.f32.mrf.mxu0
    %v5621 = vadd.f32 0.0, %v5620
    %v5622 = vpop.f32.mrf.mxu0
    %5623 = vmatprep.mubr.f32.mxu0 0.0
    %5624 = vmatmul.mubr.f32.gmra.mxu0 %v2562
    %v5625 = vpop.f32.mrf.mxu0
    %v5626 = vadd.f32 0.0, %v5625
    %v5627 = vpop.f32.mrf.mxu0
    %5628 = vmatprep.mubr.f32.mxu0 0.0
    %5629 = vmatmul.mubr.f32.gmra.mxu0 %v2565
    %v5630 = vpop.f32.mrf.mxu0
    %v5631 = vadd.f32 0.0, %v5630
    %v5632 = vpop.f32.mrf.mxu0
    %5633 = vmatprep.mubr.f32.mxu0 0.0
    %5634 = vmatmul.mubr.f32.gmra.mxu0 %v2568
    %v5635 = vpop.f32.mrf.mxu0
    %v5636 = vadd.f32 0.0, %v5635
    %v5637 = vpop.f32.mrf.mxu0
    %5638 = vmatprep.mubr.f32.mxu0 0.0
    %5639 = vmatmul.mubr.f32.gmra.mxu0 %v2571
    %v5640 = vpop.f32.mrf.mxu0
    %v5641 = vadd.f32 0.0, %v5640
    %v5642 = vpop.f32.mrf.mxu0
    %5643 = vmatprep.mubr.f32.mxu0 0.0
    %5644 = vmatmul.mubr.f32.gmra.mxu0 %v2574
    %v5645 = vpop.f32.mrf.mxu0
    %v5646 = vadd.f32 0.0, %v5645
    %v5647 = vpop.f32.mrf.mxu0
    %5648 = vmatprep.mubr.f32.mxu0 0.0
    %5649 = vmatmul.mubr.f32.gmra.mxu0 %v2577
    %v5650 = vpop.f32.mrf.mxu0
    %v5651 = vadd.f32 0.0, %v5650
    %v5652 = vpop.f32.mrf.mxu0
    %5653 = vmatprep.mubr.f32.mxu0 0.0
    %5654 = vmatmul.mubr.f32.gmra.mxu0 %v2580
    %v5655 = vpop.f32.mrf.mxu0
    %v5656 = vadd.f32 0.0, %v5655
    %v5657 = vpop.f32.mrf.mxu0
    %5658 = vmatprep.mubr.f32.mxu0 0.0
    %5659 = vmatmul.mubr.f32.gmra.mxu0 %v2583
    %v5660 = vpop.f32.mrf.mxu0
    %v5661 = vadd.f32 0.0, %v5660
    %v5662 = vpop.f32.mrf.mxu0
    %5663 = vmatprep.mubr.f32.mxu0 0.0
    %5664 = vmatmul.mubr.f32.gmra.mxu0 %v2586
    %v5665 = vpop.f32.mrf.mxu0
    %v5666 = vadd.f32 0.0, %v5665
    %v5667 = vpop.f32.mrf.mxu0
    %5668 = vmatprep.mubr.f32.mxu0 0.0
    %5669 = vmatmul.mubr.f32.gmra.mxu0 %v2589
    %v5670 = vpop.f32.mrf.mxu0
    %v5671 = vadd.f32 0.0, %v5670
    %v5672 = vpop.f32.mrf.mxu0
    %5673 = vmatprep.mubr.f32.mxu0 0.0
    %5674 = vmatmul.mubr.f32.gmra.mxu0 %v2592
    %v5675 = vpop.f32.mrf.mxu0
    %v5676 = vadd.f32 0.0, %v5675
    %v5677 = vpop.f32.mrf.mxu0
    %5678 = vmatprep.mubr.f32.mxu0 0.0
    %5679 = vmatmul.mubr.f32.gmra.mxu0 %v2595
    %v5680 = vpop.f32.mrf.mxu0
    %v5681 = vadd.f32 0.0, %v5680
    %v5682 = vpop.f32.mrf.mxu0
    %5683 = vmatprep.mubr.f32.mxu0 0.0
    %5684 = vmatmul.mubr.f32.gmra.mxu0 %v2598
    %v5685 = vpop.f32.mrf.mxu0
    %v5686 = vadd.f32 0.0, %v5685
    %v5687 = vpop.f32.mrf.mxu0
    %5688 = vmatprep.mubr.f32.mxu0 0.0
    %5689 = vmatmul.mubr.f32.gmra.mxu0 %v2601
    %v5690 = vpop.f32.mrf.mxu0
    %v5691 = vadd.f32 0.0, %v5690
    %v5692 = vpop.f32.mrf.mxu0
    %5693 = vmatprep.mubr.f32.mxu0 0.0
    %5694 = vmatmul.mubr.f32.gmra.mxu0 %v2604
    %v5695 = vpop.f32.mrf.mxu0
    %v5696 = vadd.f32 0.0, %v5695
    %v5697 = vpop.f32.mrf.mxu0
    %5698 = vmatprep.mubr.f32.mxu0 0.0
    %5699 = vmatmul.mubr.f32.gmra.mxu0 %v2607
    %v5700 = vpop.f32.mrf.mxu0
    %v5701 = vadd.f32 0.0, %v5700
    %v5702 = vpop.f32.mrf.mxu0
    %5703 = vmatprep.mubr.f32.mxu0 0.0
    %5704 = vmatmul.mubr.f32.gmra.mxu0 %v2610
    %v5705 = vpop.f32.mrf.mxu0
    %v5706 = vadd.f32 0.0, %v5705
    %v5707 = vpop.f32.mrf.mxu0
    %5708 = vmatprep.mubr.f32.mxu0 0.0
    %5709 = vmatmul.mubr.f32.gmra.mxu0 %v2613
    %v5710 = vpop.f32.mrf.mxu0
    %v5711 = vadd.f32 0.0, %v5710
    %v5712 = vpop.f32.mrf.mxu0
    %5713 = vmatprep.mubr.f32.mxu0 0.0
    %5714 = vmatmul.mubr.f32.gmra.mxu0 %v2616
    %v5715 = vpop.f32.mrf.mxu0
    %v5716 = vadd.f32 0.0, %v5715
    %v5717 = vpop.f32.mrf.mxu0
    %5718 = vmatprep.mubr.f32.mxu0 0.0
    %5719 = vmatmul.mubr.f32.gmra.mxu0 %v2619
    %v5720 = vpop.f32.mrf.mxu0
    %v5721 = vadd.f32 0.0, %v5720
    %v5722 = vpop.f32.mrf.mxu0
    %5723 = vmatprep.mubr.f32.mxu0 0.0
    %5724 = vmatmul.mubr.f32.gmra.mxu0 %v2622
    %v5725 = vpop.f32.mrf.mxu0
    %v5726 = vadd.f32 0.0, %v5725
    %v5727 = vpop.f32.mrf.mxu0
    %5728 = vmatprep.mubr.f32.mxu0 0.0
    %5729 = vmatmul.mubr.f32.gmra.mxu0 %v2625
    %v5730 = vpop.f32.mrf.mxu0
    %v5731 = vadd.f32 0.0, %v5730
    %v5732 = vpop.f32.mrf.mxu0
    %5733 = vmatprep.mubr.f32.mxu0 0.0
    %5734 = vmatmul.mubr.f32.gmra.mxu0 %v2628
    %v5735 = vpop.f32.mrf.mxu0
    %v5736 = vadd.f32 0.0, %v5735
    %v5737 = vpop.f32.mrf.mxu0
    %5738 = vmatprep.mubr.f32.mxu0 0.0
    %5739 = vmatmul.mubr.f32.gmra.mxu0 %v2631
    %v5740 = vpop.f32.mrf.mxu0
    %v5741 = vadd.f32 0.0, %v5740
    %v5742 = vpop.f32.mrf.mxu0
    %5743 = vdwg.mxu0
    %v5744 = vadd.f32 %v5487, %v5586
    %v5745 = vadd.f32 %v5488, %v5591
    %v5746 = vadd.f32 %v5489, %v5596
    %v5747 = vadd.f32 %v5490, %v5601
    %v5748 = vadd.f32 %v5491, %v5606
    %v5749 = vadd.f32 %v5492, %v5611
    %v5750 = vadd.f32 %v5493, %v5616
    %v5751 = vadd.f32 %v5494, %v5621
    %v5752 = vadd.f32 %v5495, %v5626
    %v5753 = vadd.f32 %v5496, %v5631
    %v5754 = vadd.f32 %v5497, %v5636
    %v5755 = vadd.f32 %v5498, %v5641
    %v5756 = vadd.f32 %v5499, %v5646
    %v5757 = vadd.f32 %v5500, %v5651
    %v5758 = vadd.f32 %v5501, %v5656
    %v5759 = vadd.f32 %v5502, %v5661
    %v5760 = vadd.f32 %v5503, %v5666
    %v5761 = vadd.f32 %v5504, %v5671
    %v5762 = vadd.f32 %v5505, %v5676
    %v5763 = vadd.f32 %v5506, %v5681
    %v5764 = vadd.f32 %v5507, %v5686
    %v5765 = vadd.f32 %v5508, %v5691
    %v5766 = vadd.f32 %v5509, %v5696
    %v5767 = vadd.f32 %v5510, %v5701
    %v5768 = vadd.f32 %v5511, %v5706
    %v5769 = vadd.f32 %v5512, %v5711
    %v5770 = vadd.f32 %v5513, %v5716
    %v5771 = vadd.f32 %v5514, %v5721
    %v5772 = vadd.f32 %v5515, %v5726
    %v5773 = vadd.f32 %v5516, %v5731
    %v5774 = vadd.f32 %v5517, %v5736
    %v5775 = vadd.f32 %v5518, %v5741
    %v5776 = vxor.u32 %v5744, 2147483648
    %v5777 = vxor.u32 %v5745, 2147483648
    %v5778 = vxor.u32 %v5746, 2147483648
    %v5779 = vxor.u32 %v5747, 2147483648
    %v5780 = vxor.u32 %v5748, 2147483648
    %v5781 = vxor.u32 %v5749, 2147483648
    %v5782 = vxor.u32 %v5750, 2147483648
    %v5783 = vxor.u32 %v5751, 2147483648
    %v5784 = vmul.f32 %v5776, 1.442695
    %v5785 = vpow.pop %v5784
    %v5786 = vmul.f32 %v5777, 1.442695
    %v5787 = vpow.pop %v5786
    %v5788 = vmul.f32 %v5778, 1.442695
    %v5789 = vpow.pop %v5788
    %v5790 = vmul.f32 %v5779, 1.442695
    %v5791 = vpow.pop %v5790
    %v5792 = vmul.f32 %v5780, 1.442695
    %v5793 = vpow.pop %v5792
    %v5794 = vmul.f32 %v5781, 1.442695
    %v5795 = vpow.pop %v5794
    %v5796 = vmul.f32 %v5782, 1.442695
    %v5797 = vpow.pop %v5796
    %v5798 = vmul.f32 %v5783, 1.442695
    %v5799 = vpow.pop %v5798
    %v5800 = vadd.f32 %v5785, 1.0
    %v5801 = vadd.f32 %v5787, 1.0
    %v5802 = vadd.f32 %v5789, 1.0
    %v5803 = vadd.f32 %v5791, 1.0
    %v5804 = vadd.f32 %v5793, 1.0
    %v5805 = vadd.f32 %v5795, 1.0
    %v5806 = vadd.f32 %v5797, 1.0
    %v5807 = vadd.f32 %v5799, 1.0
    %v5808 = vrcp.pop %v5800
    %v5809 = vmul.f32 1.0, %v5808
    %v5810 = vrcp.pop %v5801
    %v5811 = vmul.f32 1.0, %v5810
    %v5812 = vrcp.pop %v5802
    %v5813 = vmul.f32 1.0, %v5812
    %v5814 = vrcp.pop %v5803
    %v5815 = vmul.f32 1.0, %v5814
    %v5816 = vrcp.pop %v5804
    %v5817 = vmul.f32 1.0, %v5816
    %v5818 = vrcp.pop %v5805
    %v5819 = vmul.f32 1.0, %v5818
    %v5820 = vrcp.pop %v5806
    %v5821 = vmul.f32 1.0, %v5820
    %v5822 = vrcp.pop %v5807
    %v5823 = vmul.f32 1.0, %v5822
    %v5824 = vxor.u32 %v5752, 2147483648
    %v5825 = vxor.u32 %v5753, 2147483648
    %v5826 = vxor.u32 %v5754, 2147483648
    %v5827 = vxor.u32 %v5755, 2147483648
    %v5828 = vxor.u32 %v5756, 2147483648
    %v5829 = vxor.u32 %v5757, 2147483648
    %v5830 = vxor.u32 %v5758, 2147483648
    %v5831 = vxor.u32 %v5759, 2147483648
    %v5832 = vmul.f32 %v5824, 1.442695
    %v5833 = vpow.pop %v5832
    %v5834 = vmul.f32 %v5825, 1.442695
    %v5835 = vpow.pop %v5834
    %v5836 = vmul.f32 %v5826, 1.442695
    %v5837 = vpow.pop %v5836
    %v5838 = vmul.f32 %v5827, 1.442695
    %v5839 = vpow.pop %v5838
    %v5840 = vmul.f32 %v5828, 1.442695
    %v5841 = vpow.pop %v5840
    %v5842 = vmul.f32 %v5829, 1.442695
    %v5843 = vpow.pop %v5842
    %v5844 = vmul.f32 %v5830, 1.442695
    %v5845 = vpow.pop %v5844
    %v5846 = vmul.f32 %v5831, 1.442695
    %v5847 = vpow.pop %v5846
    %v5848 = vadd.f32 %v5833, 1.0
    %v5849 = vadd.f32 %v5835, 1.0
    %v5850 = vadd.f32 %v5837, 1.0
    %v5851 = vadd.f32 %v5839, 1.0
    %v5852 = vadd.f32 %v5841, 1.0
    %v5853 = vadd.f32 %v5843, 1.0
    %v5854 = vadd.f32 %v5845, 1.0
    %v5855 = vadd.f32 %v5847, 1.0
    %v5856 = vrcp.pop %v5848
    %v5857 = vmul.f32 1.0, %v5856
    %v5858 = vrcp.pop %v5849
    %v5859 = vmul.f32 1.0, %v5858
    %v5860 = vrcp.pop %v5850
    %v5861 = vmul.f32 1.0, %v5860
    %v5862 = vrcp.pop %v5851
    %v5863 = vmul.f32 1.0, %v5862
    %v5864 = vrcp.pop %v5852
    %v5865 = vmul.f32 1.0, %v5864
    %v5866 = vrcp.pop %v5853
    %v5867 = vmul.f32 1.0, %v5866
    %v5868 = vrcp.pop %v5854
    %v5869 = vmul.f32 1.0, %v5868
    %v5870 = vrcp.pop %v5855
    %v5871 = vmul.f32 1.0, %v5870
    %v5872 = vtanh.pop %v5760
    %v5873 = vtanh.pop %v5761
    %v5874 = vtanh.pop %v5762
    %v5875 = vtanh.pop %v5763
    %v5876 = vtanh.pop %v5764
    %v5877 = vtanh.pop %v5765
    %v5878 = vtanh.pop %v5766
    %v5879 = vtanh.pop %v5767
    %v5880 = vxor.u32 %v5768, 2147483648
    %v5881 = vxor.u32 %v5769, 2147483648
    %v5882 = vxor.u32 %v5770, 2147483648
    %v5883 = vxor.u32 %v5771, 2147483648
    %v5884 = vxor.u32 %v5772, 2147483648
    %v5885 = vxor.u32 %v5773, 2147483648
    %v5886 = vxor.u32 %v5774, 2147483648
    %v5887 = vxor.u32 %v5775, 2147483648
    %v5888 = vmul.f32 %v5880, 1.442695
    %v5889 = vpow.pop %v5888
    %v5890 = vmul.f32 %v5881, 1.442695
    %v5891 = vpow.pop %v5890
    %v5892 = vmul.f32 %v5882, 1.442695
    %v5893 = vpow.pop %v5892
    %v5894 = vmul.f32 %v5883, 1.442695
    %v5895 = vpow.pop %v5894
    %v5896 = vmul.f32 %v5884, 1.442695
    %v5897 = vpow.pop %v5896
    %v5898 = vmul.f32 %v5885, 1.442695
    %v5899 = vpow.pop %v5898
    %v5900 = vmul.f32 %v5886, 1.442695
    %v5901 = vpow.pop %v5900
    %v5902 = vmul.f32 %v5887, 1.442695
    %v5903 = vpow.pop %v5902
    %v5904 = vadd.f32 %v5889, 1.0
    %v5905 = vadd.f32 %v5891, 1.0
    %v5906 = vadd.f32 %v5893, 1.0
    %v5907 = vadd.f32 %v5895, 1.0
    %v5908 = vadd.f32 %v5897, 1.0
    %v5909 = vadd.f32 %v5899, 1.0
    %v5910 = vadd.f32 %v5901, 1.0
    %v5911 = vadd.f32 %v5903, 1.0
    %v5912 = vrcp.pop %v5904
    %v5913 = vmul.f32 1.0, %v5912
    %v5914 = vrcp.pop %v5905
    %v5915 = vmul.f32 1.0, %v5914
    %v5916 = vrcp.pop %v5906
    %v5917 = vmul.f32 1.0, %v5916
    %v5918 = vrcp.pop %v5907
    %v5919 = vmul.f32 1.0, %v5918
    %v5920 = vrcp.pop %v5908
    %v5921 = vmul.f32 1.0, %v5920
    %v5922 = vrcp.pop %v5909
    %v5923 = vmul.f32 1.0, %v5922
    %v5924 = vrcp.pop %v5910
    %v5925 = vmul.f32 1.0, %v5924
    %v5926 = vrcp.pop %v5911
    %v5927 = vmul.f32 1.0, %v5926
    %v5928 = vmul.f32 %v5857, %v5463
    %v5929 = vmul.f32 %v5859, %v5464
    %v5930 = vmul.f32 %v5861, %v5465
    %v5931 = vmul.f32 %v5863, %v5466
    %v5932 = vmul.f32 %v5865, %v5467
    %v5933 = vmul.f32 %v5867, %v5468
    %v5934 = vmul.f32 %v5869, %v5469
    %v5935 = vmul.f32 %v5871, %v5470
    %v5936 = vmul.f32 %v5809, %v5872
    %v5937 = vmul.f32 %v5811, %v5873
    %v5938 = vmul.f32 %v5813, %v5874
    %v5939 = vmul.f32 %v5815, %v5875
    %v5940 = vmul.f32 %v5817, %v5876
    %v5941 = vmul.f32 %v5819, %v5877
    %v5942 = vmul.f32 %v5821, %v5878
    %v5943 = vmul.f32 %v5823, %v5879
    %v5944 = vadd.f32 %v5928, %v5936
    %v5945 = vadd.f32 %v5929, %v5937
    %v5946 = vadd.f32 %v5930, %v5938
    %v5947 = vadd.f32 %v5931, %v5939
    %v5948 = vadd.f32 %v5932, %v5940
    %v5949 = vadd.f32 %v5933, %v5941
    %v5950 = vadd.f32 %v5934, %v5942
    %v5951 = vadd.f32 %v5935, %v5943
    %v5952 = vtanh.pop %v5944
    %v5953 = vtanh.pop %v5945
    %v5954 = vtanh.pop %v5946
    %v5955 = vtanh.pop %v5947
    %v5956 = vtanh.pop %v5948
    %v5957 = vtanh.pop %v5949
    %v5958 = vtanh.pop %v5950
    %v5959 = vtanh.pop %v5951
    %v5960 = vmul.f32 %v5913, %v5952
    %v5961 = vmul.f32 %v5915, %v5953
    %v5962 = vmul.f32 %v5917, %v5954
    %v5963 = vmul.f32 %v5919, %v5955
    %v5964 = vmul.f32 %v5921, %v5956
    %v5965 = vmul.f32 %v5923, %v5957
    %v5966 = vmul.f32 %v5925, %v5958
    %v5967 = vmul.f32 %v5927, %v5959
    %v5968 = vld [vmem:[%s2439] sm:$0xff]
    %v5969 = vld [vmem:[%s2439 + $0x8] sm:$0xff]
    %v5970 = vld [vmem:[%s2439 + $0x10] sm:$0xff]
    %v5971 = vld [vmem:[%s2439 + $0x18] sm:$0xff]
    %v5972 = vld [vmem:[%s2439 + $0x20] sm:$0xff]
    %v5973 = vld [vmem:[%s2439 + $0x28] sm:$0xff]
    %v5974 = vld [vmem:[%s2439 + $0x30] sm:$0xff]
    %v5975 = vld [vmem:[%s2439 + $0x38] sm:$0xff]
    %v5976 = vld [vmem:[%s2439 + $0x40] sm:$0xff]
    %v5977 = vld [vmem:[%s2439 + $0x48] sm:$0xff]
    %v5978 = vld [vmem:[%s2439 + $0x50] sm:$0xff]
    %v5979 = vld [vmem:[%s2439 + $0x58] sm:$0xff]
    %v5980 = vld [vmem:[%s2439 + $0x60] sm:$0xff]
    %v5981 = vld [vmem:[%s2439 + $0x68] sm:$0xff]
    %v5982 = vld [vmem:[%s2439 + $0x70] sm:$0xff]
    %v5983 = vld [vmem:[%s2439 + $0x78] sm:$0xff]
    %v5984 = vld [vmem:[%s2439 + $0x80] sm:$0xff]
    %v5985 = vld [vmem:[%s2439 + $0x88] sm:$0xff]
    %v5986 = vld [vmem:[%s2439 + $0x90] sm:$0xff]
    %v5987 = vld [vmem:[%s2439 + $0x98] sm:$0xff]
    %v5988 = vld [vmem:[%s2439 + $0xa0] sm:$0xff]
    %v5989 = vld [vmem:[%s2439 + $0xa8] sm:$0xff]
    %v5990 = vld [vmem:[%s2439 + $0xb0] sm:$0xff]
    %v5991 = vld [vmem:[%s2439 + $0xb8] sm:$0xff]
    %v5992 = vld [vmem:[%s2439 + $0xc0] sm:$0xff]
    %v5993 = vld [vmem:[%s2439 + $0xc8] sm:$0xff]
    %v5994 = vld [vmem:[%s2439 + $0xd0] sm:$0xff]
    %v5995 = vld [vmem:[%s2439 + $0xd8] sm:$0xff]
    %v5996 = vld [vmem:[%s2439 + $0xe0] sm:$0xff]
    %v5997 = vld [vmem:[%s2439 + $0xe8] sm:$0xff]
    %v5998 = vld [vmem:[%s2439 + $0xf0] sm:$0xff]
    %v5999 = vld [vmem:[%s2439 + $0xf8] sm:$0xff]
    %6000 = vmatprep.subr.mxu0 0.0
    %6001 = vmatpush1.msra.mxu0 0.0
    %6002 = vmatprep.subr.mxu0 0.0
    %6003 = vmatpush1.msra.mxu0 0.0
    %6004 = vmatprep.subr.mxu0 0.0
    %6005 = vmatpush1.msra.mxu0 0.0
    %6006 = vmatprep.subr.mxu0 0.0
    %6007 = vmatpush1.msra.mxu0 0.0
    %6008 = vmatprep.subr.mxu0 0.0
    %6009 = vmatpush1.msra.mxu0 0.0
    %6010 = vmatprep.subr.mxu0 0.0
    %6011 = vmatpush1.msra.mxu0 0.0
    %6012 = vmatprep.subr.mxu0 0.0
    %6013 = vmatpush1.msra.mxu0 0.0
    %6014 = vmatprep.subr.mxu0 0.0
    %6015 = vmatpush1.msra.mxu0 0.0
    %6016 = vmatprep.subr.mxu0 0.0
    %6017 = vmatpush1.msra.mxu0 %v5967
    %6018 = vmatprep.subr.mxu0 0.0
    %6019 = vmatpush1.msra.mxu0 %v5966
    %6020 = vmatprep.subr.mxu0 0.0
    %6021 = vmatpush1.msra.mxu0 %v5965
    %6022 = vmatprep.subr.mxu0 0.0
    %6023 = vmatpush1.msra.mxu0 %v5964
    %6024 = vmatprep.subr.mxu0 0.0
    %6025 = vmatpush1.msra.mxu0 %v5963
    %6026 = vmatprep.subr.mxu0 0.0
    %6027 = vmatpush1.msra.mxu0 %v5962
    %6028 = vmatprep.subr.mxu0 0.0
    %6029 = vmatpush1.msra.mxu0 %v5961
    %6030 = vmatprep.subr.mxu0 0.0
    %6031 = vmatpush1.msra.mxu0 %v5960
    %6032 = vmatprep.subr.mxu0 0.0
    %6033 = vmatpush2.msra.mxu0 0.0
    %6034 = vmatprep.subr.mxu0 0.0
    %6035 = vmatpush2.msra.mxu0 0.0
    %6036 = vmatprep.subr.mxu0 0.0
    %6037 = vmatpush2.msra.mxu0 0.0
    %6038 = vmatprep.subr.mxu0 0.0
    %6039 = vmatpush2.msra.mxu0 0.0
    %6040 = vmatprep.subr.mxu0 0.0
    %6041 = vmatpush2.msra.mxu0 0.0
    %6042 = vmatprep.subr.mxu0 0.0
    %6043 = vmatpush2.msra.mxu0 0.0
    %6044 = vmatprep.subr.mxu0 0.0
    %6045 = vmatpush2.msra.mxu0 0.0
    %6046 = vmatprep.subr.mxu0 0.0
    %6047 = vmatpush2.msra.mxu0 0.0
    %6048 = vmatprep.subr.mxu0 0.0
    %6049 = vmatpush2.msra.mxu0 0.0
    %6050 = vmatprep.subr.mxu0 0.0
    %6051 = vmatpush2.msra.mxu0 0.0
    %6052 = vmatprep.subr.mxu0 0.0
    %6053 = vmatpush2.msra.mxu0 0.0
    %6054 = vmatprep.subr.mxu0 0.0
    %6055 = vmatpush2.msra.mxu0 0.0
    %6056 = vmatprep.subr.mxu0 0.0
    %6057 = vmatpush2.msra.mxu0 0.0
    %6058 = vmatprep.subr.mxu0 0.0
    %6059 = vmatpush2.msra.mxu0 0.0
    %6060 = vmatprep.subr.mxu0 0.0
    %6061 = vmatpush2.msra.mxu0 0.0
    %6062 = vmatprep.subr.mxu0 0.0
    %6063 = vmatpush2.msra.mxu0 0.0
    %6064 = vmatprep.mubr.f32.mxu0 0.0
    %6065 = vmatmul.mubr.f32.gmra.mxu0 %v2538
    %v6066 = vpop.f32.mrf.mxu0
    %v6067 = vadd.f32 0.0, %v6066
    %v6068 = vpop.f32.mrf.mxu0
    %6069 = vmatprep.mubr.f32.mxu0 0.0
    %6070 = vmatmul.mubr.f32.gmra.mxu0 %v2541
    %v6071 = vpop.f32.mrf.mxu0
    %v6072 = vadd.f32 0.0, %v6071
    %v6073 = vpop.f32.mrf.mxu0
    %6074 = vmatprep.mubr.f32.mxu0 0.0
    %6075 = vmatmul.mubr.f32.gmra.mxu0 %v2544
    %v6076 = vpop.f32.mrf.mxu0
    %v6077 = vadd.f32 0.0, %v6076
    %v6078 = vpop.f32.mrf.mxu0
    %6079 = vmatprep.mubr.f32.mxu0 0.0
    %6080 = vmatmul.mubr.f32.gmra.mxu0 %v2547
    %v6081 = vpop.f32.mrf.mxu0
    %v6082 = vadd.f32 0.0, %v6081
    %v6083 = vpop.f32.mrf.mxu0
    %6084 = vmatprep.mubr.f32.mxu0 0.0
    %6085 = vmatmul.mubr.f32.gmra.mxu0 %v2550
    %v6086 = vpop.f32.mrf.mxu0
    %v6087 = vadd.f32 0.0, %v6086
    %v6088 = vpop.f32.mrf.mxu0
    %6089 = vmatprep.mubr.f32.mxu0 0.0
    %6090 = vmatmul.mubr.f32.gmra.mxu0 %v2553
    %v6091 = vpop.f32.mrf.mxu0
    %v6092 = vadd.f32 0.0, %v6091
    %v6093 = vpop.f32.mrf.mxu0
    %6094 = vmatprep.mubr.f32.mxu0 0.0
    %6095 = vmatmul.mubr.f32.gmra.mxu0 %v2556
    %v6096 = vpop.f32.mrf.mxu0
    %v6097 = vadd.f32 0.0, %v6096
    %v6098 = vpop.f32.mrf.mxu0
    %6099 = vmatprep.mubr.f32.mxu0 0.0
    %6100 = vmatmul.mubr.f32.gmra.mxu0 %v2559
    %v6101 = vpop.f32.mrf.mxu0
    %v6102 = vadd.f32 0.0, %v6101
    %v6103 = vpop.f32.mrf.mxu0
    %6104 = vmatprep.mubr.f32.mxu0 0.0
    %6105 = vmatmul.mubr.f32.gmra.mxu0 %v2562
    %v6106 = vpop.f32.mrf.mxu0
    %v6107 = vadd.f32 0.0, %v6106
    %v6108 = vpop.f32.mrf.mxu0
    %6109 = vmatprep.mubr.f32.mxu0 0.0
    %6110 = vmatmul.mubr.f32.gmra.mxu0 %v2565
    %v6111 = vpop.f32.mrf.mxu0
    %v6112 = vadd.f32 0.0, %v6111
    %v6113 = vpop.f32.mrf.mxu0
    %6114 = vmatprep.mubr.f32.mxu0 0.0
    %6115 = vmatmul.mubr.f32.gmra.mxu0 %v2568
    %v6116 = vpop.f32.mrf.mxu0
    %v6117 = vadd.f32 0.0, %v6116
    %v6118 = vpop.f32.mrf.mxu0
    %6119 = vmatprep.mubr.f32.mxu0 0.0
    %6120 = vmatmul.mubr.f32.gmra.mxu0 %v2571
    %v6121 = vpop.f32.mrf.mxu0
    %v6122 = vadd.f32 0.0, %v6121
    %v6123 = vpop.f32.mrf.mxu0
    %6124 = vmatprep.mubr.f32.mxu0 0.0
    %6125 = vmatmul.mubr.f32.gmra.mxu0 %v2574
    %v6126 = vpop.f32.mrf.mxu0
    %v6127 = vadd.f32 0.0, %v6126
    %v6128 = vpop.f32.mrf.mxu0
    %6129 = vmatprep.mubr.f32.mxu0 0.0
    %6130 = vmatmul.mubr.f32.gmra.mxu0 %v2577
    %v6131 = vpop.f32.mrf.mxu0
    %v6132 = vadd.f32 0.0, %v6131
    %v6133 = vpop.f32.mrf.mxu0
    %6134 = vmatprep.mubr.f32.mxu0 0.0
    %6135 = vmatmul.mubr.f32.gmra.mxu0 %v2580
    %v6136 = vpop.f32.mrf.mxu0
    %v6137 = vadd.f32 0.0, %v6136
    %v6138 = vpop.f32.mrf.mxu0
    %6139 = vmatprep.mubr.f32.mxu0 0.0
    %6140 = vmatmul.mubr.f32.gmra.mxu0 %v2583
    %v6141 = vpop.f32.mrf.mxu0
    %v6142 = vadd.f32 0.0, %v6141
    %v6143 = vpop.f32.mrf.mxu0
    %6144 = vmatprep.mubr.f32.mxu0 0.0
    %6145 = vmatmul.mubr.f32.gmra.mxu0 %v2586
    %v6146 = vpop.f32.mrf.mxu0
    %v6147 = vadd.f32 0.0, %v6146
    %v6148 = vpop.f32.mrf.mxu0
    %6149 = vmatprep.mubr.f32.mxu0 0.0
    %6150 = vmatmul.mubr.f32.gmra.mxu0 %v2589
    %v6151 = vpop.f32.mrf.mxu0
    %v6152 = vadd.f32 0.0, %v6151
    %v6153 = vpop.f32.mrf.mxu0
    %6154 = vmatprep.mubr.f32.mxu0 0.0
    %6155 = vmatmul.mubr.f32.gmra.mxu0 %v2592
    %v6156 = vpop.f32.mrf.mxu0
    %v6157 = vadd.f32 0.0, %v6156
    %v6158 = vpop.f32.mrf.mxu0
    %6159 = vmatprep.mubr.f32.mxu0 0.0
    %6160 = vmatmul.mubr.f32.gmra.mxu0 %v2595
    %v6161 = vpop.f32.mrf.mxu0
    %v6162 = vadd.f32 0.0, %v6161
    %v6163 = vpop.f32.mrf.mxu0
    %6164 = vmatprep.mubr.f32.mxu0 0.0
    %6165 = vmatmul.mubr.f32.gmra.mxu0 %v2598
    %v6166 = vpop.f32.mrf.mxu0
    %v6167 = vadd.f32 0.0, %v6166
    %v6168 = vpop.f32.mrf.mxu0
    %6169 = vmatprep.mubr.f32.mxu0 0.0
    %6170 = vmatmul.mubr.f32.gmra.mxu0 %v2601
    %v6171 = vpop.f32.mrf.mxu0
    %v6172 = vadd.f32 0.0, %v6171
    %v6173 = vpop.f32.mrf.mxu0
    %6174 = vmatprep.mubr.f32.mxu0 0.0
    %6175 = vmatmul.mubr.f32.gmra.mxu0 %v2604
    %v6176 = vpop.f32.mrf.mxu0
    %v6177 = vadd.f32 0.0, %v6176
    %v6178 = vpop.f32.mrf.mxu0
    %6179 = vmatprep.mubr.f32.mxu0 0.0
    %6180 = vmatmul.mubr.f32.gmra.mxu0 %v2607
    %v6181 = vpop.f32.mrf.mxu0
    %v6182 = vadd.f32 0.0, %v6181
    %v6183 = vpop.f32.mrf.mxu0
    %6184 = vmatprep.mubr.f32.mxu0 0.0
    %6185 = vmatmul.mubr.f32.gmra.mxu0 %v2610
    %v6186 = vpop.f32.mrf.mxu0
    %v6187 = vadd.f32 0.0, %v6186
    %v6188 = vpop.f32.mrf.mxu0
    %6189 = vmatprep.mubr.f32.mxu0 0.0
    %6190 = vmatmul.mubr.f32.gmra.mxu0 %v2613
    %v6191 = vpop.f32.mrf.mxu0
    %v6192 = vadd.f32 0.0, %v6191
    %v6193 = vpop.f32.mrf.mxu0
    %6194 = vmatprep.mubr.f32.mxu0 0.0
    %6195 = vmatmul.mubr.f32.gmra.mxu0 %v2616
    %v6196 = vpop.f32.mrf.mxu0
    %v6197 = vadd.f32 0.0, %v6196
    %v6198 = vpop.f32.mrf.mxu0
    %6199 = vmatprep.mubr.f32.mxu0 0.0
    %6200 = vmatmul.mubr.f32.gmra.mxu0 %v2619
    %v6201 = vpop.f32.mrf.mxu0
    %v6202 = vadd.f32 0.0, %v6201
    %v6203 = vpop.f32.mrf.mxu0
    %6204 = vmatprep.mubr.f32.mxu0 0.0
    %6205 = vmatmul.mubr.f32.gmra.mxu0 %v2622
    %v6206 = vpop.f32.mrf.mxu0
    %v6207 = vadd.f32 0.0, %v6206
    %v6208 = vpop.f32.mrf.mxu0
    %6209 = vmatprep.mubr.f32.mxu0 0.0
    %6210 = vmatmul.mubr.f32.gmra.mxu0 %v2625
    %v6211 = vpop.f32.mrf.mxu0
    %v6212 = vadd.f32 0.0, %v6211
    %v6213 = vpop.f32.mrf.mxu0
    %6214 = vmatprep.mubr.f32.mxu0 0.0
    %6215 = vmatmul.mubr.f32.gmra.mxu0 %v2628
    %v6216 = vpop.f32.mrf.mxu0
    %v6217 = vadd.f32 0.0, %v6216
    %v6218 = vpop.f32.mrf.mxu0
    %6219 = vmatprep.mubr.f32.mxu0 0.0
    %6220 = vmatmul.mubr.f32.gmra.mxu0 %v2631
    %v6221 = vpop.f32.mrf.mxu0
    %v6222 = vadd.f32 0.0, %v6221
    %v6223 = vpop.f32.mrf.mxu0
    %6224 = vdwg.mxu0
    %v6225 = vadd.f32 %v5968, %v6067
    %v6226 = vadd.f32 %v5969, %v6072
    %v6227 = vadd.f32 %v5970, %v6077
    %v6228 = vadd.f32 %v5971, %v6082
    %v6229 = vadd.f32 %v5972, %v6087
    %v6230 = vadd.f32 %v5973, %v6092
    %v6231 = vadd.f32 %v5974, %v6097
    %v6232 = vadd.f32 %v5975, %v6102
    %v6233 = vadd.f32 %v5976, %v6107
    %v6234 = vadd.f32 %v5977, %v6112
    %v6235 = vadd.f32 %v5978, %v6117
    %v6236 = vadd.f32 %v5979, %v6122
    %v6237 = vadd.f32 %v5980, %v6127
    %v6238 = vadd.f32 %v5981, %v6132
    %v6239 = vadd.f32 %v5982, %v6137
    %v6240 = vadd.f32 %v5983, %v6142
    %v6241 = vadd.f32 %v5984, %v6147
    %v6242 = vadd.f32 %v5985, %v6152
    %v6243 = vadd.f32 %v5986, %v6157
    %v6244 = vadd.f32 %v5987, %v6162
    %v6245 = vadd.f32 %v5988, %v6167
    %v6246 = vadd.f32 %v5989, %v6172
    %v6247 = vadd.f32 %v5990, %v6177
    %v6248 = vadd.f32 %v5991, %v6182
    %v6249 = vadd.f32 %v5992, %v6187
    %v6250 = vadd.f32 %v5993, %v6192
    %v6251 = vadd.f32 %v5994, %v6197
    %v6252 = vadd.f32 %v5995, %v6202
    %v6253 = vadd.f32 %v5996, %v6207
    %v6254 = vadd.f32 %v5997, %v6212
    %v6255 = vadd.f32 %v5998, %v6217
    %v6256 = vadd.f32 %v5999, %v6222
    %v6257 = vxor.u32 %v6225, 2147483648
    %v6258 = vxor.u32 %v6226, 2147483648
    %v6259 = vxor.u32 %v6227, 2147483648
    %v6260 = vxor.u32 %v6228, 2147483648
    %v6261 = vxor.u32 %v6229, 2147483648
    %v6262 = vxor.u32 %v6230, 2147483648
    %v6263 = vxor.u32 %v6231, 2147483648
    %v6264 = vxor.u32 %v6232, 2147483648
    %v6265 = vmul.f32 %v6257, 1.442695
    %v6266 = vpow.pop %v6265
    %v6267 = vmul.f32 %v6258, 1.442695
    %v6268 = vpow.pop %v6267
    %v6269 = vmul.f32 %v6259, 1.442695
    %v6270 = vpow.pop %v6269
    %v6271 = vmul.f32 %v6260, 1.442695
    %v6272 = vpow.pop %v6271
    %v6273 = vmul.f32 %v6261, 1.442695
    %v6274 = vpow.pop %v6273
    %v6275 = vmul.f32 %v6262, 1.442695
    %v6276 = vpow.pop %v6275
    %v6277 = vmul.f32 %v6263, 1.442695
    %v6278 = vpow.pop %v6277
    %v6279 = vmul.f32 %v6264, 1.442695
    %v6280 = vpow.pop %v6279
    %v6281 = vadd.f32 %v6266, 1.0
    %v6282 = vadd.f32 %v6268, 1.0
    %v6283 = vadd.f32 %v6270, 1.0
    %v6284 = vadd.f32 %v6272, 1.0
    %v6285 = vadd.f32 %v6274, 1.0
    %v6286 = vadd.f32 %v6276, 1.0
    %v6287 = vadd.f32 %v6278, 1.0
    %v6288 = vadd.f32 %v6280, 1.0
    %v6289 = vrcp.pop %v6281
    %v6290 = vmul.f32 1.0, %v6289
    %v6291 = vrcp.pop %v6282
    %v6292 = vmul.f32 1.0, %v6291
    %v6293 = vrcp.pop %v6283
    %v6294 = vmul.f32 1.0, %v6293
    %v6295 = vrcp.pop %v6284
    %v6296 = vmul.f32 1.0, %v6295
    %v6297 = vrcp.pop %v6285
    %v6298 = vmul.f32 1.0, %v6297
    %v6299 = vrcp.pop %v6286
    %v6300 = vmul.f32 1.0, %v6299
    %v6301 = vrcp.pop %v6287
    %v6302 = vmul.f32 1.0, %v6301
    %v6303 = vrcp.pop %v6288
    %v6304 = vmul.f32 1.0, %v6303
    %v6305 = vxor.u32 %v6233, 2147483648
    %v6306 = vxor.u32 %v6234, 2147483648
    %v6307 = vxor.u32 %v6235, 2147483648
    %v6308 = vxor.u32 %v6236, 2147483648
    %v6309 = vxor.u32 %v6237, 2147483648
    %v6310 = vxor.u32 %v6238, 2147483648
    %v6311 = vxor.u32 %v6239, 2147483648
    %v6312 = vxor.u32 %v6240, 2147483648
    %v6313 = vmul.f32 %v6305, 1.442695
    %v6314 = vpow.pop %v6313
    %v6315 = vmul.f32 %v6306, 1.442695
    %v6316 = vpow.pop %v6315
    %v6317 = vmul.f32 %v6307, 1.442695
    %v6318 = vpow.pop %v6317
    %v6319 = vmul.f32 %v6308, 1.442695
    %v6320 = vpow.pop %v6319
    %v6321 = vmul.f32 %v6309, 1.442695
    %v6322 = vpow.pop %v6321
    %v6323 = vmul.f32 %v6310, 1.442695
    %v6324 = vpow.pop %v6323
    %v6325 = vmul.f32 %v6311, 1.442695
    %v6326 = vpow.pop %v6325
    %v6327 = vmul.f32 %v6312, 1.442695
    %v6328 = vpow.pop %v6327
    %v6329 = vadd.f32 %v6314, 1.0
    %v6330 = vadd.f32 %v6316, 1.0
    %v6331 = vadd.f32 %v6318, 1.0
    %v6332 = vadd.f32 %v6320, 1.0
    %v6333 = vadd.f32 %v6322, 1.0
    %v6334 = vadd.f32 %v6324, 1.0
    %v6335 = vadd.f32 %v6326, 1.0
    %v6336 = vadd.f32 %v6328, 1.0
    %v6337 = vrcp.pop %v6329
    %v6338 = vmul.f32 1.0, %v6337
    %v6339 = vrcp.pop %v6330
    %v6340 = vmul.f32 1.0, %v6339
    %v6341 = vrcp.pop %v6331
    %v6342 = vmul.f32 1.0, %v6341
    %v6343 = vrcp.pop %v6332
    %v6344 = vmul.f32 1.0, %v6343
    %v6345 = vrcp.pop %v6333
    %v6346 = vmul.f32 1.0, %v6345
    %v6347 = vrcp.pop %v6334
    %v6348 = vmul.f32 1.0, %v6347
    %v6349 = vrcp.pop %v6335
    %v6350 = vmul.f32 1.0, %v6349
    %v6351 = vrcp.pop %v6336
    %v6352 = vmul.f32 1.0, %v6351
    %v6353 = vtanh.pop %v6241
    %v6354 = vtanh.pop %v6242
    %v6355 = vtanh.pop %v6243
    %v6356 = vtanh.pop %v6244
    %v6357 = vtanh.pop %v6245
    %v6358 = vtanh.pop %v6246
    %v6359 = vtanh.pop %v6247
    %v6360 = vtanh.pop %v6248
    %v6361 = vxor.u32 %v6249, 2147483648
    %v6362 = vxor.u32 %v6250, 2147483648
    %v6363 = vxor.u32 %v6251, 2147483648
    %v6364 = vxor.u32 %v6252, 2147483648
    %v6365 = vxor.u32 %v6253, 2147483648
    %v6366 = vxor.u32 %v6254, 2147483648
    %v6367 = vxor.u32 %v6255, 2147483648
    %v6368 = vxor.u32 %v6256, 2147483648
    %v6369 = vmul.f32 %v6361, 1.442695
    %v6370 = vpow.pop %v6369
    %v6371 = vmul.f32 %v6362, 1.442695
    %v6372 = vpow.pop %v6371
    %v6373 = vmul.f32 %v6363, 1.442695
    %v6374 = vpow.pop %v6373
    %v6375 = vmul.f32 %v6364, 1.442695
    %v6376 = vpow.pop %v6375
    %v6377 = vmul.f32 %v6365, 1.442695
    %v6378 = vpow.pop %v6377
    %v6379 = vmul.f32 %v6366, 1.442695
    %v6380 = vpow.pop %v6379
    %v6381 = vmul.f32 %v6367, 1.442695
    %v6382 = vpow.pop %v6381
    %v6383 = vmul.f32 %v6368, 1.442695
    %v6384 = vpow.pop %v6383
    %v6385 = vadd.f32 %v6370, 1.0
    %v6386 = vadd.f32 %v6372, 1.0
    %v6387 = vadd.f32 %v6374, 1.0
    %v6388 = vadd.f32 %v6376, 1.0
    %v6389 = vadd.f32 %v6378, 1.0
    %v6390 = vadd.f32 %v6380, 1.0
    %v6391 = vadd.f32 %v6382, 1.0
    %v6392 = vadd.f32 %v6384, 1.0
    %v6393 = vrcp.pop %v6385
    %v6394 = vmul.f32 1.0, %v6393
    %v6395 = vrcp.pop %v6386
    %v6396 = vmul.f32 1.0, %v6395
    %v6397 = vrcp.pop %v6387
    %v6398 = vmul.f32 1.0, %v6397
    %v6399 = vrcp.pop %v6388
    %v6400 = vmul.f32 1.0, %v6399
    %v6401 = vrcp.pop %v6389
    %v6402 = vmul.f32 1.0, %v6401
    %v6403 = vrcp.pop %v6390
    %v6404 = vmul.f32 1.0, %v6403
    %v6405 = vrcp.pop %v6391
    %v6406 = vmul.f32 1.0, %v6405
    %v6407 = vrcp.pop %v6392
    %v6408 = vmul.f32 1.0, %v6407
    %v6409 = vmul.f32 %v6338, %v5944
    %v6410 = vmul.f32 %v6340, %v5945
    %v6411 = vmul.f32 %v6342, %v5946
    %v6412 = vmul.f32 %v6344, %v5947
    %v6413 = vmul.f32 %v6346, %v5948
    %v6414 = vmul.f32 %v6348, %v5949
    %v6415 = vmul.f32 %v6350, %v5950
    %v6416 = vmul.f32 %v6352, %v5951
    %v6417 = vmul.f32 %v6290, %v6353
    %v6418 = vmul.f32 %v6292, %v6354
    %v6419 = vmul.f32 %v6294, %v6355
    %v6420 = vmul.f32 %v6296, %v6356
    %v6421 = vmul.f32 %v6298, %v6357
    %v6422 = vmul.f32 %v6300, %v6358
    %v6423 = vmul.f32 %v6302, %v6359
    %v6424 = vmul.f32 %v6304, %v6360
    %v6425 = vadd.f32 %v6409, %v6417
    %v6426 = vadd.f32 %v6410, %v6418
    %v6427 = vadd.f32 %v6411, %v6419
    %v6428 = vadd.f32 %v6412, %v6420
    %v6429 = vadd.f32 %v6413, %v6421
    %v6430 = vadd.f32 %v6414, %v6422
    %v6431 = vadd.f32 %v6415, %v6423
    %v6432 = vadd.f32 %v6416, %v6424
    %v6433 = vtanh.pop %v6425
    %v6434 = vtanh.pop %v6426
    %v6435 = vtanh.pop %v6427
    %v6436 = vtanh.pop %v6428
    %v6437 = vtanh.pop %v6429
    %v6438 = vtanh.pop %v6430
    %v6439 = vtanh.pop %v6431
    %v6440 = vtanh.pop %v6432
    %v6441 = vmul.f32 %v6394, %v6433
    %v6442 = vmul.f32 %v6396, %v6434
    %v6443 = vmul.f32 %v6398, %v6435
    %v6444 = vmul.f32 %v6400, %v6436
    %v6445 = vmul.f32 %v6402, %v6437
    %v6446 = vmul.f32 %v6404, %v6438
    %v6447 = vmul.f32 %v6406, %v6439
    %v6448 = vmul.f32 %v6408, %v6440
    %v6449 = vld [vmem:[%s4] sm:$0xff]
    %v6450 = vld [vmem:[%s4 + $0x8] sm:$0x3]
    %v6451 = vld [vmem:[%s5] sm:$0xff]
    %v6452 = vld [vmem:[%s5 + $0x8] sm:$0x3]
    %6454 = vset.pattern.permute.xlu0 0
    %6455 = vperm.xlu0 %6454, %v6451
    %v6456 = vpop.permute.xlu0 %6455
    %6459 = vset.pattern.permute.xlu0 0
    %6460 = vperm.xlu0 %6459, %v6452
    %v6461 = vpop.permute.xlu0 %6460
    %v6464 = vsel %vm2536, %v6449, 0
    %v6467 = vsel %vm2536, %v6450, 0
    %6469 = vmatprep.subr.mxu0 0.0
    %6470 = vmatpush1.msra.mxu0 0.0
    %6471 = vmatprep.subr.mxu0 0.0
    %6472 = vmatpush1.msra.mxu0 0.0
    %6473 = vmatprep.subr.mxu0 0.0
    %6474 = vmatpush1.msra.mxu0 0.0
    %6475 = vmatprep.subr.mxu0 0.0
    %6476 = vmatpush1.msra.mxu0 0.0
    %6477 = vmatprep.subr.mxu0 0.0
    %6478 = vmatpush1.msra.mxu0 0.0
    %6479 = vmatprep.subr.mxu0 0.0
    %6480 = vmatpush1.msra.mxu0 0.0
    %6481 = vmatprep.subr.mxu0 0.0
    %6482 = vmatpush1.msra.mxu0 0.0
    %6483 = vmatprep.subr.mxu0 0.0
    %6484 = vmatpush1.msra.mxu0 0.0
    %6485 = vmatprep.subr.mxu0 0.0
    %6486 = vmatpush1.msra.mxu0 %v6448
    %6487 = vmatprep.subr.mxu0 0.0
    %6488 = vmatpush1.msra.mxu0 %v6447
    %6489 = vmatprep.subr.mxu0 0.0
    %6490 = vmatpush1.msra.mxu0 %v6446
    %6491 = vmatprep.subr.mxu0 0.0
    %6492 = vmatpush1.msra.mxu0 %v6445
    %6493 = vmatprep.subr.mxu0 0.0
    %6494 = vmatpush1.msra.mxu0 %v6444
    %6495 = vmatprep.subr.mxu0 0.0
    %6496 = vmatpush1.msra.mxu0 %v6443
    %6497 = vmatprep.subr.mxu0 0.0
    %6498 = vmatpush1.msra.mxu0 %v6442
    %6499 = vmatprep.subr.mxu0 0.0
    %6500 = vmatpush1.msra.mxu0 %v6441
    %6501 = vmatprep.subr.mxu0 0.0
    %6502 = vmatpush2.msra.mxu0 0.0
    %6503 = vmatprep.subr.mxu0 0.0
    %6504 = vmatpush2.msra.mxu0 0.0
    %6505 = vmatprep.subr.mxu0 0.0
    %6506 = vmatpush2.msra.mxu0 0.0
    %6507 = vmatprep.subr.mxu0 0.0
    %6508 = vmatpush2.msra.mxu0 0.0
    %6509 = vmatprep.subr.mxu0 0.0
    %6510 = vmatpush2.msra.mxu0 0.0
    %6511 = vmatprep.subr.mxu0 0.0
    %6512 = vmatpush2.msra.mxu0 0.0
    %6513 = vmatprep.subr.mxu0 0.0
    %6514 = vmatpush2.msra.mxu0 0.0
    %6515 = vmatprep.subr.mxu0 0.0
    %6516 = vmatpush2.msra.mxu0 0.0
    %6517 = vmatprep.subr.mxu0 0.0
    %6518 = vmatpush2.msra.mxu0 0.0
    %6519 = vmatprep.subr.mxu0 0.0
    %6520 = vmatpush2.msra.mxu0 0.0
    %6521 = vmatprep.subr.mxu0 0.0
    %6522 = vmatpush2.msra.mxu0 0.0
    %6523 = vmatprep.subr.mxu0 0.0
    %6524 = vmatpush2.msra.mxu0 0.0
    %6525 = vmatprep.subr.mxu0 0.0
    %6526 = vmatpush2.msra.mxu0 0.0
    %6527 = vmatprep.subr.mxu0 0.0
    %6528 = vmatpush2.msra.mxu0 0.0
    %6529 = vmatprep.subr.mxu0 0.0
    %6530 = vmatpush2.msra.mxu0 0.0
    %6531 = vmatprep.subr.mxu0 0.0
    %6532 = vmatpush2.msra.mxu0 0.0
    %6533 = vmatprep.mubr.f32.mxu0 0.0
    %6534 = vmatmul.mubr.f32.gmra.mxu0 %v6464
    %v6535 = vpop.f32.mrf.mxu0
    %v6536 = vadd.f32 %v6456, %v6535
    %v6537 = vpop.f32.mrf.mxu0
    %6538 = vmatprep.mubr.f32.mxu0 0.0
    %6539 = vmatmul.mubr.f32.gmra.mxu0 %v6467
    %v6540 = vpop.f32.mrf.mxu0
    %v6541 = vadd.f32 %v6461, %v6540
    %v6542 = vpop.f32.mrf.mxu0
    %6543 = vdwg.mxu0
    %6544 = vst [vmem:[#allocation3] sm:$0xff] %v6536
    %6545 = vst [vmem:[#allocation3 + $0x8] sm:$0x3] %v6541
    // Predicated region
    $region26: #{tpu_custom_call.1} parent=1 // pred_check
      _
    $region27: #{tpu_custom_call.1} parent=1 // pred_check_branch
      %6547 = sbr.rel (0) target = $region29
    $region28: #{tpu_custom_call.1} parent=1 // pred_region
      %s6549 = ssub.s32 256, 256
      %6550 = vsyncadd [#allocation4], %s6549
      %s6551 = sshll.u32 [#allocation3], 4
      %s6552 = int_to_ptr.vmem [resolvable:$true] %s6551
      %6557 = dma.vmem_to_hbm [thread:$0]  %s6552, 256, %s6, [#allocation4], 128, 128, 8
    $region29: #{tpu_custom_call.1} parent=1 // pred_fallthru
      _
    // Predicated region
    $region30: #{tpu_custom_call.1} parent=1 // pred_check
      _
    $region31: #{tpu_custom_call.1} parent=1 // pred_check_branch
      %6559 = sbr.rel (0) target = $region33
    $region32: #{tpu_custom_call.1} parent=1 // pred_region
      %6560 = dma.done [#allocation4], 256
    $region33: #{tpu_custom_call.1} parent=1 // pred_fallthru
      _
    %6561 = vsyncpa [#allocation4], 1

</llo_original>
